<compile_context>
chip_gen: v5e
topology: v5e:2x2
jax: 0.10.0
libtpu: 0.0.40
codegen_flags: <defaults>
</compile_context>

<pallas_src>
import jax
import jax.numpy as jnp
from jax.experimental import pallas as pl
from jax.experimental.pallas import tpu as pltpu


# ----------------------------- Pallas kernel --------------------------------

def fused_gru_fc_kernel(x_ref, h0_ref, w_ih_ref, w_hh_ref, b_gi_ref, b_hn_ref,
                        fc_w_ref, fc_b_ref, y_ref, hT_ref, seq_ref, gi0_ref):
    """Fused multi-layer GRU (wavefront schedule) + FC head.

    x_ref    : (T, Bp, Hp)    bf16 padded input sequence (time-major)
    h0_ref   : (L, Bp, Hp)    f32  padded initial hidden states
    w_ih_ref : (L, Hp, 3Hp)   bf16 input weights, gate slabs [r | z | n]
    w_hh_ref : (L, Hp, 3Hp)   bf16 hidden weights, same slab layout
    b_gi_ref : (L, 1, 3Hp)    f32  b_ih with b_hh's r/z slabs folded in
    b_hn_ref : (L, 1, Hp)     f32  b_hh's n slab (scaled by r via gh)
    fc_w_ref : (Hp, Op)       bf16
    fc_b_ref : (1, Op)        f32
    y_ref    : (T*Bp, Op)     f32  FC output (lane-dense)
    hT_ref   : (L, Bp, Hp)    f32  final hidden state per layer
    seq_ref  : (T, Bp, Hp)    bf16 VMEM scratch: top-layer output sequence
    gi0_ref  : (T*Bp, 3Hp)    f32  VMEM scratch: staged layer-0 input proj.
    """
    T, Bp, Hp = x_ref.shape
    L = h0_ref.shape[0]
    G = 3 * Hp

    # Hoisted layer-0 input projection: one big MXU matmul for all T steps,
    # bias folded in, staged to VMEM scratch (read back as static slices).
    gi0_ref[...] = (
        jnp.dot(x_ref[...].reshape(T * Bp, Hp), w_ih_ref[0],
                preferred_element_type=jnp.float32)
        + b_gi_ref[0])

    # Bias broadcasts hoisted out of the unrolled wavefront loop
    # (JAX does not CSE broadcast_in_dim).
    bgi = [None] + [jnp.broadcast_to(b_gi_ref[l], (Bp, G)) for l in range(1, L)]
    bhn = [jnp.broadcast_to(b_hn_ref[l], (Bp, Hp)) for l in range(L)]

    # Hidden-state carries; kept f32 for gate-math accuracy (v5e: no bf16 VPU).
    h = [h0_ref[l] for l in range(L)]

    # Wavefront over (layer, time): at wave w, layer l runs step t = w - l.
    # Within a wave, the active steps are independent (layer l consumes the
    # layer-(l-1) carry produced in the PREVIOUS wave), so their chains overlap.
    for w in range(T + L - 1):
        new_h = {}
        for l in range(L):
            t = w - l
            if not (0 <= t < T):
                continue
            if l == 0:
                gi = gi0_ref[t * Bp:(t + 1) * Bp, :]               # (Bp,3Hp) f32
            else:
                # Per-step input projection for upper layers.
                gi = jnp.dot(h[l - 1].astype(jnp.bfloat16), w_ih_ref[l],
                             preferred_element_type=jnp.float32) + bgi[l]
            gh = jnp.dot(h[l].astype(jnp.bfloat16), w_hh_ref[l],
                         preferred_element_type=jnp.float32)       # (Bp,3Hp)
            # 128-lane-aligned gate slabs; all gate math stays f32.
            r = jax.nn.sigmoid(gi[:, 0:Hp] + gh[:, 0:Hp])
            z = jax.nn.sigmoid(gi[:, Hp:2 * Hp] + gh[:, Hp:2 * Hp])
            n = jnp.tanh(gi[:, 2 * Hp:3 * Hp]
                         + r * (gh[:, 2 * Hp:3 * Hp] + bhn[l]))
            h_new = (1.0 - z) * n + z * h[l]                        # f32 carry
            new_h[l] = h_new
            if l == L - 1:
                seq_ref[t] = h_new.astype(jnp.bfloat16)             # FC input
            if t == T - 1:
                hT_ref[l] = h_new
        for l, v in new_h.items():                                  # commit wave
            h[l] = v

    # Lane-dense FC head over the whole (padded) sequence in one matmul.
    fc_in = seq_ref[...].reshape(T * Bp, Hp)                        # bf16
    y_ref[...] = (jnp.dot(fc_in, fc_w_ref[...],
                          preferred_element_type=jnp.float32) + fc_b_ref[...])


# ------------------------------ JAX wrappers ---------------------------------

_VMEM = pl.BlockSpec(memory_space=pltpu.MemorySpace.VMEM)


def _round_up(x, m):
    return (x + m - 1) // m * m


def _pack_params(params, d_in0, H, L, O, Hp, Op):
    """Pad + repack weights into lane-aligned gate slabs; fold b_hh's r/z slabs
    into the input-side bias; cast MXU operands to bf16."""
    w_ih_p = jnp.zeros((L, Hp, 3 * Hp), jnp.float32)
    w_hh_p = jnp.zeros((L, Hp, 3 * Hp), jnp.float32)
    b_gi_p = jnp.zeros((L, 1, 3 * Hp), jnp.float32)
    b_hn_p = jnp.zeros((L, 1, Hp), jnp.float32)
    for l, (w_ih, w_hh, b_ih, b_hh) in enumerate(params["gru_layers"]):
        d_in = w_ih.shape[0]
        for g in range(3):   # gate order [r, z, n], one 128-lane slab each
            w_ih_p = w_ih_p.at[l, :d_in, g * Hp:g * Hp + H].set(
                w_ih[:, g * H:(g + 1) * H])
            w_hh_p = w_hh_p.at[l, :H, g * Hp:g * Hp + H].set(
                w_hh[:, g * H:(g + 1) * H])
        # r/z slabs of b_hh always add directly to the pre-activation -> fold
        # them into the input-side bias; only the n slab stays with gh.
        b_gi_p = b_gi_p.at[l, :, 0:H].set(b_ih[:, 0:H] + b_hh[:, 0:H])
        b_gi_p = b_gi_p.at[l, :, Hp:Hp + H].set(b_ih[:, H:2 * H] + b_hh[:, H:2 * H])
        b_gi_p = b_gi_p.at[l, :, 2 * Hp:2 * Hp + H].set(b_ih[:, 2 * H:3 * H])
        b_hn_p = b_hn_p.at[l, :, 0:H].set(b_hh[:, 2 * H:3 * H])
    fc_w_p = jnp.zeros((Hp, Op), jnp.float32).at[:H, :O].set(params["fc_w"])
    fc_b_p = jnp.zeros((1, Op), jnp.float32).at[:, :O].set(params["fc_b"])
    return (w_ih_p.astype(jnp.bfloat16), w_hh_p.astype(jnp.bfloat16),
            b_gi_p, b_hn_p, fc_w_p.astype(jnp.bfloat16), fc_b_p)


def gru_model_forward(x, params, hidden_state):
    """Mirrors GRUModel.forward: (output, hidden) = model(x).

    x            : (B, T, input_size)  batch-first
    hidden_state : (num_layers, B, H)
    returns      : output (B, T, output_size), hidden (num_layers, B, H)
    """
    B, T, D = x.shape
    L, _, H = hidden_state.shape
    O = params["fc_w"].shape[1]

    Bp = max(_round_up(B, 16), 16)               # bf16 MXU tiles are (16,128)
    Hp = max(_round_up(max(D, H), 128), 128)     # 128-lane gate slabs
    Op = max(_round_up(O, 128), 128)             # lane-dense FC output

    (w_ih_p, w_hh_p, b_gi_p, b_hn_p,
     fc_w_p, fc_b_p) = _pack_params(params, D, H, L, O, Hp, Op)

    # Input: batch-first -> time-major, zero-padded, bf16 (only feeds bf16 GI
    # matmul; halves DMA bytes and removes an in-kernel cast).
    x_t = jnp.transpose(x, (1, 0, 2))
    x_pad = jnp.zeros((T, Bp, Hp), jnp.bfloat16).at[:, :B, :D].set(
        x_t.astype(jnp.bfloat16))
    h0_pad = jnp.zeros((L, Bp, Hp), jnp.float32).at[:, :B, :H].set(
        hidden_state.astype(jnp.float32))

    flops = (L * 2 * (2 * T * Bp * Hp * 3 * Hp)      # GI + per-step W_hh matmuls
             + 2 * T * Bp * Hp * Op)                 # FC head
    transcendentals = L * T * Bp * 3 * Hp
    bytes_accessed = (2 * (x_pad.size + w_ih_p.size + w_hh_p.size + fc_w_p.size)
                      + 4 * (h0_pad.size + b_gi_p.size + b_hn_p.size
                             + fc_b_p.size + T * Bp * Op + L * Bp * Hp))

    # Single program (no grid): everything fits comfortably under the scoped
    # VMEM default on v5e/v6e/v7x at these shapes.
    # TODO(synk): for large T, stream the time axis via a BlockSpec grid
    # ("arbitrary") and re-budget scratch against v7x's 64 MiB VMEM; for large
    # B, add a batch grid axis with dimension_semantics=("parallel",) so v7x's
    # second TensorCore helps (pure overhead at B=2).
    y_pad, hT_pad = pl.pallas_call(
        fused_gru_fc_kernel,
        out_shape=(jax.ShapeDtypeStruct((T * Bp, Op), jnp.float32),
                   jax.ShapeDtypeStruct((L, Bp, Hp), jnp.float32)),
        in_specs=[_VMEM] * 8,
        out_specs=(_VMEM, _VMEM),
        scratch_shapes=[pltpu.VMEM((T, Bp, Hp), jnp.bfloat16),     # top-layer seq
                        pltpu.VMEM((T * Bp, 3 * Hp), jnp.float32)],  # staged GI0
        cost_estimate=pl.CostEstimate(flops=flops,
                                      transcendentals=transcendentals,
                                      bytes_accessed=bytes_accessed),
    )(x_pad, h0_pad, w_ih_p, w_hh_p, b_gi_p, b_hn_p, fc_w_p, fc_b_p)

    y = y_pad.reshape(T, Bp, Op)[:, :B, :O]           # (T, B, O)
    output = jnp.transpose(y, (1, 0, 2))              # (B, T, O)
    hidden = hT_pad[:, :B, :H]                        # (L, B, H)
    return output, hidden


# --------------------------- Parameter construction --------------------------

def init_params(key, input_size, hidden_dim, num_layers, output_size):
    """Deterministic synthetic parameters (uniform(-1/sqrt(H), 1/sqrt(H)),
    matching nn.GRU / nn.Linear default init scale).  Gate order [r, z, n]."""
    scale = 1.0 / jnp.sqrt(jnp.float32(hidden_dim))
    keys = jax.random.split(key, 4 * num_layers + 2)

    gru_layers = []
    k = 0
    for l in range(num_layers):
        d_in = input_size if l == 0 else hidden_dim
        w_ih = jax.random.uniform(keys[k], (d_in, 3 * hidden_dim),
                                  jnp.float32, -scale, scale); k += 1
        w_hh = jax.random.uniform(keys[k], (hidden_dim, 3 * hidden_dim),
                                  jnp.float32, -scale, scale); k += 1
        b_ih = jax.random.uniform(keys[k], (1, 3 * hidden_dim),
                                  jnp.float32, -scale, scale); k += 1
        b_hh = jax.random.uniform(keys[k], (1, 3 * hidden_dim),
                                  jnp.float32, -scale, scale); k += 1
        gru_layers.append((w_ih, w_hh, b_ih, b_hh))

    fc_w = jax.random.uniform(keys[k], (hidden_dim, output_size),
                              jnp.float32, -scale, scale); k += 1
    fc_b = jax.random.uniform(keys[k], (1, output_size),
                              jnp.float32, -scale, scale)
    return {"gru_layers": gru_layers, "fc_w": fc_w, "fc_b": fc_b}


# ------------------------------ Pure-JAX reference ---------------------------

def gru_model_reference(x, params, hidden_state):
    """fp32 reference mirroring PyTorch GRU semantics (eval mode, no dropout)."""
    B, T, _ = x.shape
    H = hidden_state.shape[-1]
    layer_in = jnp.transpose(x, (1, 0, 2)).astype(jnp.float32)   # (T, B, D)
    h_finals = []
    for l, (w_ih, w_hh, b_ih, b_hh) in enumerate(params["gru_layers"]):
        h = hidden_state[l]
        outs = []
        for t in range(T):
            gi = layer_in[t] @ w_ih + b_ih
            gh = h @ w_hh + b_hh
            r = jax.nn.sigmoid(gi[:, :H] + gh[:, :H])
            z = jax.nn.sigmoid(gi[:, H:2 * H] + gh[:, H:2 * H])
            n = jnp.tanh(gi[:, 2 * H:] + r * gh[:, 2 * H:])
            h = (1.0 - z) * n + z * h
            outs.append(h)
        layer_in = jnp.stack(outs, axis=0)
        h_finals.append(h)
    hidden = jnp.stack(h_finals, axis=0)
    out = jnp.transpose(layer_in, (1, 0, 2))                     # (B, T, H)
    y = out.reshape(B * T, H) @ params["fc_w"] + params["fc_b"]
    return y.reshape(B, T, -1), hidden


# ----------------------------------- Main ------------------------------------

if __name__ == "__main__":
    # Shapes consistent with GRUModel(input_size, output_size, hidden_dim,
    # num_layers, batch_size)
    input_size = 16
    output_size = 4
    hidden_dim = 32
    num_layers = 2
    batch_size = 2
    seq_len = 8

    root = jax.random.PRNGKey(0)
    k_params, k_hidden, k_x = jax.random.split(root, 3)

    params = init_params(k_params, input_size, hidden_dim,
                         num_layers, output_size)
    # init_hidden: randn(num_layers, batch, hidden)
    hidden_state = jax.random.normal(
        k_hidden, (num_layers, batch_size, hidden_dim), jnp.float32)
    x = jax.random.normal(
        k_x, (batch_size, seq_len, input_size), jnp.float32)

    # TODO(synk): nn.GRU inter-layer dropout (training-mode only) and the
    # unused self.relu are not applied; this matches eval-mode forward().
    output, hidden = gru_model_forward(x, params, hidden_state)
    jax.block_until_ready(output)
    jax.block_until_ready(hidden)

    assert output.shape == (batch_size, seq_len, output_size), output.shape
    assert hidden.shape == (num_layers, batch_size, hidden_dim), hidden.shape
    assert bool(jnp.all(jnp.isfinite(output)))
    assert bool(jnp.all(jnp.isfinite(hidden)))

    # Numerical check vs fp32 reference (bf16 MXU operands -> loose tolerance).
    ref_out, ref_hidden = gru_model_reference(x, params, hidden_state)
    max_err_out = float(jnp.max(jnp.abs(output - ref_out)))
    max_err_hid = float(jnp.max(jnp.abs(hidden - ref_hidden)))
    assert max_err_out < 1e-1, max_err_out
    assert max_err_hid < 1e-1, max_err_hid

    print("KERNEL_OK")
</pallas_src>

<mosaic_0001>
module attributes {stable_mosaic.version = 11 : i64} {
  func.func @fused_gru_fc_kernel(%arg0: memref<8x16x128xbf16, #tpu.memory_space<vmem>>, %arg1: memref<2x16x128xf32, #tpu.memory_space<vmem>>, %arg2: memref<2x128x384xbf16, #tpu.memory_space<vmem>>, %arg3: memref<2x128x384xbf16, #tpu.memory_space<vmem>>, %arg4: memref<2x1x384xf32, #tpu.memory_space<vmem>>, %arg5: memref<2x1x128xf32, #tpu.memory_space<vmem>>, %arg6: memref<128x128xbf16, #tpu.memory_space<vmem>>, %arg7: memref<1x128xf32, #tpu.memory_space<vmem>>, %arg8: memref<128x128xf32, #tpu.memory_space<vmem>>, %arg9: memref<2x16x128xf32, #tpu.memory_space<vmem>>, %arg10: memref<8x16x128xbf16, #tpu.memory_space<vmem>>, %arg11: memref<128x384xf32, #tpu.memory_space<vmem>>) attributes {dimension_semantics = [], scalar_prefetch = 0 : i64, scratch_operands = 2 : i64, tpu.core_type = #tpu.core_type<tc>} {
    %c0 = arith.constant 0 : index
    %c0_0 = arith.constant 0 : index
    %c0_1 = arith.constant 0 : index
    %0 = vector.load %arg0[%c0, %c0_0, %c0_1] : memref<8x16x128xbf16, #tpu.memory_space<vmem>>, vector<8x16x128xbf16>
    %1 = vector.shape_cast %0 : vector<8x16x128xbf16> to vector<128x128xbf16>
    %c0_2 = arith.constant 0 : index
    %c0_3 = arith.constant 0 : index
    %c0_4 = arith.constant 0 : index
    %2 = vector.load %arg2[%c0_2, %c0_3, %c0_4] : memref<2x128x384xbf16, #tpu.memory_space<vmem>>, vector<1x128x384xbf16>
    %3 = vector.shape_cast %2 : vector<1x128x384xbf16> to vector<128x384xbf16>
    %cst = arith.constant dense<0.000000e+00> : vector<128x384xf32>
    %4 = tpu.matmul %1, %3, %cst {dimension_numbers = #tpu.dot_dimension_numbers<[1], [0], [0], [1], [0, 0, 1, 1], [], []>} : vector<128x128xbf16>, vector<128x384xbf16>, vector<128x384xf32> -> vector<128x384xf32>
    %c0_5 = arith.constant 0 : index
    %c0_6 = arith.constant 0 : index
    %c0_7 = arith.constant 0 : index
    %5 = vector.load %arg4[%c0_5, %c0_6, %c0_7] : memref<2x1x384xf32, #tpu.memory_space<vmem>>, vector<1x1x384xf32>
    %6 = vector.shape_cast %5 : vector<1x1x384xf32> to vector<1x384xf32>
    %7 = vector.broadcast %6 : vector<1x384xf32> to vector<128x384xf32>
    %8 = arith.addf %4, %7 : vector<128x384xf32>
    %c0_8 = arith.constant 0 : index
    %c0_9 = arith.constant 0 : index
    %9 = vector.load %arg11[%c0_8, %c0_9] : memref<128x384xf32, #tpu.memory_space<vmem>>, vector<128x384xf32>
    tpu.vector_store %arg11[%c0_8, %c0_9], %8 {strides = array<i32>} : memref<128x384xf32, #tpu.memory_space<vmem>>, vector<128x384xf32>,
    %c1 = arith.constant 1 : index
    %c0_10 = arith.constant 0 : index
    %c0_11 = arith.constant 0 : index
    %10 = vector.load %arg4[%c1, %c0_10, %c0_11] : memref<2x1x384xf32, #tpu.memory_space<vmem>>, vector<1x1x384xf32>
    %11 = vector.shape_cast %10 : vector<1x1x384xf32> to vector<1x384xf32>
    %12 = vector.shape_cast %11 : vector<1x384xf32> to vector<1x384xf32>
    %13 = vector.broadcast %12 : vector<1x384xf32> to vector<16x384xf32>
    %c0_12 = arith.constant 0 : index
    %c0_13 = arith.constant 0 : index
    %c0_14 = arith.constant 0 : index
    %14 = vector.load %arg5[%c0_12, %c0_13, %c0_14] : memref<2x1x128xf32, #tpu.memory_space<vmem>>, vector<1x1x128xf32>
    %15 = vector.shape_cast %14 : vector<1x1x128xf32> to vector<1x128xf32>
    %16 = vector.shape_cast %15 : vector<1x128xf32> to vector<1x128xf32>
    %17 = vector.broadcast %16 : vector<1x128xf32> to vector<16x128xf32>
    %c1_15 = arith.constant 1 : index
    %c0_16 = arith.constant 0 : index
    %c0_17 = arith.constant 0 : index
    %18 = vector.load %arg5[%c1_15, %c0_16, %c0_17] : memref<2x1x128xf32, #tpu.memory_space<vmem>>, vector<1x1x128xf32>
    %19 = vector.shape_cast %18 : vector<1x1x128xf32> to vector<1x128xf32>
    %20 = vector.shape_cast %19 : vector<1x128xf32> to vector<1x128xf32>
    %21 = vector.broadcast %20 : vector<1x128xf32> to vector<16x128xf32>
    %c0_18 = arith.constant 0 : index
    %c0_19 = arith.constant 0 : index
    %c0_20 = arith.constant 0 : index
    %22 = vector.load %arg1[%c0_18, %c0_19, %c0_20] : memref<2x16x128xf32, #tpu.memory_space<vmem>>, vector<1x16x128xf32>
    %23 = vector.shape_cast %22 : vector<1x16x128xf32> to vector<16x128xf32>
    %c1_21 = arith.constant 1 : index
    %c0_22 = arith.constant 0 : index
    %c0_23 = arith.constant 0 : index
    %24 = vector.load %arg1[%c1_21, %c0_22, %c0_23] : memref<2x16x128xf32, #tpu.memory_space<vmem>>, vector<1x16x128xf32>
    %25 = vector.shape_cast %24 : vector<1x16x128xf32> to vector<16x128xf32>
    %c0_24 = arith.constant 0 : index
    %c0_25 = arith.constant 0 : index
    %26 = vector.load %arg11[%c0_24, %c0_25] : memref<128x384xf32, #tpu.memory_space<vmem>>, vector<16x384xf32>
    %27 = arith.truncf %23 : vector<16x128xf32> to vector<16x128xbf16>
    %c0_26 = arith.constant 0 : index
    %c0_27 = arith.constant 0 : index
    %c0_28 = arith.constant 0 : index
    %28 = vector.load %arg3[%c0_26, %c0_27, %c0_28] : memref<2x128x384xbf16, #tpu.memory_space<vmem>>, vector<1x128x384xbf16>
    %29 = vector.shape_cast %28 : vector<1x128x384xbf16> to vector<128x384xbf16>
    %cst_29 = arith.constant dense<0.000000e+00> : vector<16x384xf32>
    %30 = tpu.matmul %27, %29, %cst_29 {dimension_numbers = #tpu.dot_dimension_numbers<[1], [0], [0], [1], [0, 0, 1, 1], [], []>} : vector<16x128xbf16>, vector<128x384xbf16>, vector<16x384xf32> -> vector<16x384xf32>
    %31 = vector.extract_strided_slice %26 {offsets = [0, 0], sizes = [16, 128], strides = [1, 1]} : vector<16x384xf32> to vector<16x128xf32>
    %32 = vector.extract_strided_slice %30 {offsets = [0, 0], sizes = [16, 128], strides = [1, 1]} : vector<16x384xf32> to vector<16x128xf32>
    %33 = arith.addf %31, %32 : vector<16x128xf32>
    %34 = arith.negf %33 : vector<16x128xf32>
    %35 = math.exp %34 : vector<16x128xf32>
    %cst_30 = arith.constant 1.000000e+00 : f32
    %36 = vector.broadcast %cst_30 : f32 to vector<16x128xf32>
    %37 = arith.addf %36, %35 : vector<16x128xf32>
    %38 = arith.divf %36, %37 : vector<16x128xf32>
    %39 = vector.extract_strided_slice %26 {offsets = [0, 128], sizes = [16, 128], strides = [1, 1]} : vector<16x384xf32> to vector<16x128xf32>
    %40 = vector.extract_strided_slice %30 {offsets = [0, 128], sizes = [16, 128], strides = [1, 1]} : vector<16x384xf32> to vector<16x128xf32>
    %41 = arith.addf %39, %40 : vector<16x128xf32>
    %42 = arith.negf %41 : vector<16x128xf32>
    %43 = math.exp %42 : vector<16x128xf32>
    %cst_31 = arith.constant 1.000000e+00 : f32
    %44 = vector.broadcast %cst_31 : f32 to vector<16x128xf32>
    %45 = arith.addf %44, %43 : vector<16x128xf32>
    %46 = arith.divf %44, %45 : vector<16x128xf32>
    %47 = vector.extract_strided_slice %26 {offsets = [0, 256], sizes = [16, 128], strides = [1, 1]} : vector<16x384xf32> to vector<16x128xf32>
    %48 = vector.extract_strided_slice %30 {offsets = [0, 256], sizes = [16, 128], strides = [1, 1]} : vector<16x384xf32> to vector<16x128xf32>
    %49 = arith.addf %48, %17 : vector<16x128xf32>
    %50 = arith.mulf %38, %49 : vector<16x128xf32>
    %51 = arith.addf %47, %50 : vector<16x128xf32>
    %52 = math.tanh %51 : vector<16x128xf32>
    %cst_32 = arith.constant 1.000000e+00 : f32
    %53 = vector.broadcast %cst_32 : f32 to vector<16x128xf32>
    %54 = arith.subf %53, %46 : vector<16x128xf32>
    %55 = arith.mulf %54, %52 : vector<16x128xf32>
    %56 = arith.mulf %46, %23 : vector<16x128xf32>
    %57 = arith.addf %55, %56 : vector<16x128xf32>
    %c16 = arith.constant 16 : index
    %c0_33 = arith.constant 0 : index
    %58 = vector.load %arg11[%c16, %c0_33] : memref<128x384xf32, #tpu.memory_space<vmem>>, vector<16x384xf32>
    %59 = arith.truncf %57 : vector<16x128xf32> to vector<16x128xbf16>
    %c0_34 = arith.constant 0 : index
    %c0_35 = arith.constant 0 : index
    %c0_36 = arith.constant 0 : index
    %60 = vector.load %arg3[%c0_34, %c0_35, %c0_36] : memref<2x128x384xbf16, #tpu.memory_space<vmem>>, vector<1x128x384xbf16>
    %61 = vector.shape_cast %60 : vector<1x128x384xbf16> to vector<128x384xbf16>
    %cst_37 = arith.constant dense<0.000000e+00> : vector<16x384xf32>
    %62 = tpu.matmul %59, %61, %cst_37 {dimension_numbers = #tpu.dot_dimension_numbers<[1], [0], [0], [1], [0, 0, 1, 1], [], []>} : vector<16x128xbf16>, vector<128x384xbf16>, vector<16x384xf32> -> vector<16x384xf32>
    %63 = vector.extract_strided_slice %58 {offsets = [0, 0], sizes = [16, 128], strides = [1, 1]} : vector<16x384xf32> to vector<16x128xf32>
    %64 = vector.extract_strided_slice %62 {offsets = [0, 0], sizes = [16, 128], strides = [1, 1]} : vector<16x384xf32> to vector<16x128xf32>
    %65 = arith.addf %63, %64 : vector<16x128xf32>
    %66 = arith.negf %65 : vector<16x128xf32>
    %67 = math.exp %66 : vector<16x128xf32>
    %cst_38 = arith.constant 1.000000e+00 : f32
    %68 = vector.broadcast %cst_38 : f32 to vector<16x128xf32>
    %69 = arith.addf %68, %67 : vector<16x128xf32>
    %70 = arith.divf %68, %69 : vector<16x128xf32>
    %71 = vector.extract_strided_slice %58 {offsets = [0, 128], sizes = [16, 128], strides = [1, 1]} : vector<16x384xf32> to vector<16x128xf32>
    %72 = vector.extract_strided_slice %62 {offsets = [0, 128], sizes = [16, 128], strides = [1, 1]} : vector<16x384xf32> to vector<16x128xf32>
    %73 = arith.addf %71, %72 : vector<16x128xf32>
    %74 = arith.negf %73 : vector<16x128xf32>
    %75 = math.exp %74 : vector<16x128xf32>
    %cst_39 = arith.constant 1.000000e+00 : f32
    %76 = vector.broadcast %cst_39 : f32 to vector<16x128xf32>
    %77 = arith.addf %76, %75 : vector<16x128xf32>
    %78 = arith.divf %76, %77 : vector<16x128xf32>
    %79 = vector.extract_strided_slice %58 {offsets = [0, 256], sizes = [16, 128], strides = [1, 1]} : vector<16x384xf32> to vector<16x128xf32>
    %80 = vector.extract_strided_slice %62 {offsets = [0, 256], sizes = [16, 128], strides = [1, 1]} : vector<16x384xf32> to vector<16x128xf32>
    %81 = arith.addf %80, %17 : vector<16x128xf32>
    %82 = arith.mulf %70, %81 : vector<16x128xf32>
    %83 = arith.addf %79, %82 : vector<16x128xf32>
    %84 = math.tanh %83 : vector<16x128xf32>
    %cst_40 = arith.constant 1.000000e+00 : f32
    %85 = vector.broadcast %cst_40 : f32 to vector<16x128xf32>
    %86 = arith.subf %85, %78 : vector<16x128xf32>
    %87 = arith.mulf %86, %84 : vector<16x128xf32>
    %88 = arith.mulf %78, %57 : vector<16x128xf32>
    %89 = arith.addf %87, %88 : vector<16x128xf32>
    %90 = arith.truncf %57 : vector<16x128xf32> to vector<16x128xbf16>
    %c1_41 = arith.constant 1 : index
    %c0_42 = arith.constant 0 : index
    %c0_43 = arith.constant 0 : index
    %91 = vector.load %arg2[%c1_41, %c0_42, %c0_43] : memref<2x128x384xbf16, #tpu.memory_space<vmem>>, vector<1x128x384xbf16>
    %92 = vector.shape_cast %91 : vector<1x128x384xbf16> to vector<128x384xbf16>
    %cst_44 = arith.constant dense<0.000000e+00> : vector<16x384xf32>
    %93 = tpu.matmul %90, %92, %cst_44 {dimension_numbers = #tpu.dot_dimension_numbers<[1], [0], [0], [1], [0, 0, 1, 1], [], []>} : vector<16x128xbf16>, vector<128x384xbf16>, vector<16x384xf32> -> vector<16x384xf32>
    %94 = arith.addf %93, %13 : vector<16x384xf32>
    %95 = arith.truncf %25 : vector<16x128xf32> to vector<16x128xbf16>
    %c1_45 = arith.constant 1 : index
    %c0_46 = arith.constant 0 : index
    %c0_47 = arith.constant 0 : index
    %96 = vector.load %arg3[%c1_45, %c0_46, %c0_47] : memref<2x128x384xbf16, #tpu.memory_space<vmem>>, vector<1x128x384xbf16>
    %97 = vector.shape_cast %96 : vector<1x128x384xbf16> to vector<128x384xbf16>
    %cst_48 = arith.constant dense<0.000000e+00> : vector<16x384xf32>
    %98 = tpu.matmul %95, %97, %cst_48 {dimension_numbers = #tpu.dot_dimension_numbers<[1], [0], [0], [1], [0, 0, 1, 1], [], []>} : vector<16x128xbf16>, vector<128x384xbf16>, vector<16x384xf32> -> vector<16x384xf32>
    %99 = vector.extract_strided_slice %94 {offsets = [0, 0], sizes = [16, 128], strides = [1, 1]} : vector<16x384xf32> to vector<16x128xf32>
    %100 = vector.extract_strided_slice %98 {offsets = [0, 0], sizes = [16, 128], strides = [1, 1]} : vector<16x384xf32> to vector<16x128xf32>
    %101 = arith.addf %99, %100 : vector<16x128xf32>
    %102 = arith.negf %101 : vector<16x128xf32>
    %103 = math.exp %102 : vector<16x128xf32>
    %cst_49 = arith.constant 1.000000e+00 : f32
    %104 = vector.broadcast %cst_49 : f32 to vector<16x128xf32>
    %105 = arith.addf %104, %103 : vector<16x128xf32>
    %106 = arith.divf %104, %105 : vector<16x128xf32>
    %107 = vector.extract_strided_slice %94 {offsets = [0, 128], sizes = [16, 128], strides = [1, 1]} : vector<16x384xf32> to vector<16x128xf32>
    %108 = vector.extract_strided_slice %98 {offsets = [0, 128], sizes = [16, 128], strides = [1, 1]} : vector<16x384xf32> to vector<16x128xf32>
    %109 = arith.addf %107, %108 : vector<16x128xf32>
    %110 = arith.negf %109 : vector<16x128xf32>
    %111 = math.exp %110 : vector<16x128xf32>
    %cst_50 = arith.constant 1.000000e+00 : f32
    %112 = vector.broadcast %cst_50 : f32 to vector<16x128xf32>
    %113 = arith.addf %112, %111 : vector<16x128xf32>
    %114 = arith.divf %112, %113 : vector<16x128xf32>
    %115 = vector.extract_strided_slice %94 {offsets = [0, 256], sizes = [16, 128], strides = [1, 1]} : vector<16x384xf32> to vector<16x128xf32>
    %116 = vector.extract_strided_slice %98 {offsets = [0, 256], sizes = [16, 128], strides = [1, 1]} : vector<16x384xf32> to vector<16x128xf32>
    %117 = arith.addf %116, %21 : vector<16x128xf32>
    %118 = arith.mulf %106, %117 : vector<16x128xf32>
    %119 = arith.addf %115, %118 : vector<16x128xf32>
    %120 = math.tanh %119 : vector<16x128xf32>
    %cst_51 = arith.constant 1.000000e+00 : f32
    %121 = vector.broadcast %cst_51 : f32 to vector<16x128xf32>
    %122 = arith.subf %121, %114 : vector<16x128xf32>
    %123 = arith.mulf %122, %120 : vector<16x128xf32>
    %124 = arith.mulf %114, %25 : vector<16x128xf32>
    %125 = arith.addf %123, %124 : vector<16x128xf32>
    %126 = arith.truncf %125 : vector<16x128xf32> to vector<16x128xbf16>
    %c0_52 = arith.constant 0 : index
    %c0_53 = arith.constant 0 : index
    %c0_54 = arith.constant 0 : index
    %127 = vector.load %arg10[%c0_52, %c0_53, %c0_54] : memref<8x16x128xbf16, #tpu.memory_space<vmem>>, vector<1x16x128xbf16>
    %128 = vector.shape_cast %127 : vector<1x16x128xbf16> to vector<16x128xbf16>
    %129 = vector.shape_cast %126 : vector<16x128xbf16> to vector<1x16x128xbf16>
    tpu.vector_store %arg10[%c0_52, %c0_53, %c0_54], %129 {strides = array<i32>} : memref<8x16x128xbf16, #tpu.memory_space<vmem>>, vector<1x16x128xbf16>,
    %c32 = arith.constant 32 : index
    %c0_55 = arith.constant 0 : index
    %130 = vector.load %arg11[%c32, %c0_55] : memref<128x384xf32, #tpu.memory_space<vmem>>, vector<16x384xf32>
    %131 = arith.truncf %89 : vector<16x128xf32> to vector<16x128xbf16>
    %c0_56 = arith.constant 0 : index
    %c0_57 = arith.constant 0 : index
    %c0_58 = arith.constant 0 : index
    %132 = vector.load %arg3[%c0_56, %c0_57, %c0_58] : memref<2x128x384xbf16, #tpu.memory_space<vmem>>, vector<1x128x384xbf16>
    %133 = vector.shape_cast %132 : vector<1x128x384xbf16> to vector<128x384xbf16>
    %cst_59 = arith.constant dense<0.000000e+00> : vector<16x384xf32>
    %134 = tpu.matmul %131, %133, %cst_59 {dimension_numbers = #tpu.dot_dimension_numbers<[1], [0], [0], [1], [0, 0, 1, 1], [], []>} : vector<16x128xbf16>, vector<128x384xbf16>, vector<16x384xf32> -> vector<16x384xf32>
    %135 = vector.extract_strided_slice %130 {offsets = [0, 0], sizes = [16, 128], strides = [1, 1]} : vector<16x384xf32> to vector<16x128xf32>
    %136 = vector.extract_strided_slice %134 {offsets = [0, 0], sizes = [16, 128], strides = [1, 1]} : vector<16x384xf32> to vector<16x128xf32>
    %137 = arith.addf %135, %136 : vector<16x128xf32>
    %138 = arith.negf %137 : vector<16x128xf32>
    %139 = math.exp %138 : vector<16x128xf32>
    %cst_60 = arith.constant 1.000000e+00 : f32
    %140 = vector.broadcast %cst_60 : f32 to vector<16x128xf32>
    %141 = arith.addf %140, %139 : vector<16x128xf32>
    %142 = arith.divf %140, %141 : vector<16x128xf32>
    %143 = vector.extract_strided_slice %130 {offsets = [0, 128], sizes = [16, 128], strides = [1, 1]} : vector<16x384xf32> to vector<16x128xf32>
    %144 = vector.extract_strided_slice %134 {offsets = [0, 128], sizes = [16, 128], strides = [1, 1]} : vector<16x384xf32> to vector<16x128xf32>
    %145 = arith.addf %143, %144 : vector<16x128xf32>
    %146 = arith.negf %145 : vector<16x128xf32>
    %147 = math.exp %146 : vector<16x128xf32>
    %cst_61 = arith.constant 1.000000e+00 : f32
    %148 = vector.broadcast %cst_61 : f32 to vector<16x128xf32>
    %149 = arith.addf %148, %147 : vector<16x128xf32>
    %150 = arith.divf %148, %149 : vector<16x128xf32>
    %151 = vector.extract_strided_slice %130 {offsets = [0, 256], sizes = [16, 128], strides = [1, 1]} : vector<16x384xf32> to vector<16x128xf32>
    %152 = vector.extract_strided_slice %134 {offsets = [0, 256], sizes = [16, 128], strides = [1, 1]} : vector<16x384xf32> to vector<16x128xf32>
    %153 = arith.addf %152, %17 : vector<16x128xf32>
    %154 = arith.mulf %142, %153 : vector<16x128xf32>
    %155 = arith.addf %151, %154 : vector<16x128xf32>
    %156 = math.tanh %155 : vector<16x128xf32>
    %cst_62 = arith.constant 1.000000e+00 : f32
    %157 = vector.broadcast %cst_62 : f32 to vector<16x128xf32>
    %158 = arith.subf %157, %150 : vector<16x128xf32>
    %159 = arith.mulf %158, %156 : vector<16x128xf32>
    %160 = arith.mulf %150, %89 : vector<16x128xf32>
    %161 = arith.addf %159, %160 : vector<16x128xf32>
    %162 = arith.truncf %89 : vector<16x128xf32> to vector<16x128xbf16>
    %c1_63 = arith.constant 1 : index
    %c0_64 = arith.constant 0 : index
    %c0_65 = arith.constant 0 : index
    %163 = vector.load %arg2[%c1_63, %c0_64, %c0_65] : memref<2x128x384xbf16, #tpu.memory_space<vmem>>, vector<1x128x384xbf16>
    %164 = vector.shape_cast %163 : vector<1x128x384xbf16> to vector<128x384xbf16>
    %cst_66 = arith.constant dense<0.000000e+00> : vector<16x384xf32>
    %165 = tpu.matmul %162, %164, %cst_66 {dimension_numbers = #tpu.dot_dimension_numbers<[1], [0], [0], [1], [0, 0, 1, 1], [], []>} : vector<16x128xbf16>, vector<128x384xbf16>, vector<16x384xf32> -> vector<16x384xf32>
    %166 = arith.addf %165, %13 : vector<16x384xf32>
    %167 = arith.truncf %125 : vector<16x128xf32> to vector<16x128xbf16>
    %c1_67 = arith.constant 1 : index
    %c0_68 = arith.constant 0 : index
    %c0_69 = arith.constant 0 : index
    %168 = vector.load %arg3[%c1_67, %c0_68, %c0_69] : memref<2x128x384xbf16, #tpu.memory_space<vmem>>, vector<1x128x384xbf16>
    %169 = vector.shape_cast %168 : vector<1x128x384xbf16> to vector<128x384xbf16>
    %cst_70 = arith.constant dense<0.000000e+00> : vector<16x384xf32>
    %170 = tpu.matmul %167, %169, %cst_70 {dimension_numbers = #tpu.dot_dimension_numbers<[1], [0], [0], [1], [0, 0, 1, 1], [], []>} : vector<16x128xbf16>, vector<128x384xbf16>, vector<16x384xf32> -> vector<16x384xf32>
    %171 = vector.extract_strided_slice %166 {offsets = [0, 0], sizes = [16, 128], strides = [1, 1]} : vector<16x384xf32> to vector<16x128xf32>
    %172 = vector.extract_strided_slice %170 {offsets = [0, 0], sizes = [16, 128], strides = [1, 1]} : vector<16x384xf32> to vector<16x128xf32>
    %173 = arith.addf %171, %172 : vector<16x128xf32>
    %174 = arith.negf %173 : vector<16x128xf32>
    %175 = math.exp %174 : vector<16x128xf32>
    %cst_71 = arith.constant 1.000000e+00 : f32
    %176 = vector.broadcast %cst_71 : f32 to vector<16x128xf32>
    %177 = arith.addf %176, %175 : vector<16x128xf32>
    %178 = arith.divf %176, %177 : vector<16x128xf32>
    %179 = vector.extract_strided_slice %166 {offsets = [0, 128], sizes = [16, 128], strides = [1, 1]} : vector<16x384xf32> to vector<16x128xf32>
    %180 = vector.extract_strided_slice %170 {offsets = [0, 128], sizes = [16, 128], strides = [1, 1]} : vector<16x384xf32> to vector<16x128xf32>
    %181 = arith.addf %179, %180 : vector<16x128xf32>
    %182 = arith.negf %181 : vector<16x128xf32>
    %183 = math.exp %182 : vector<16x128xf32>
    %cst_72 = arith.constant 1.000000e+00 : f32
    %184 = vector.broadcast %cst_72 : f32 to vector<16x128xf32>
    %185 = arith.addf %184, %183 : vector<16x128xf32>
    %186 = arith.divf %184, %185 : vector<16x128xf32>
    %187 = vector.extract_strided_slice %166 {offsets = [0, 256], sizes = [16, 128], strides = [1, 1]} : vector<16x384xf32> to vector<16x128xf32>
    %188 = vector.extract_strided_slice %170 {offsets = [0, 256], sizes = [16, 128], strides = [1, 1]} : vector<16x384xf32> to vector<16x128xf32>
    %189 = arith.addf %188, %21 : vector<16x128xf32>
    %190 = arith.mulf %178, %189 : vector<16x128xf32>
    %191 = arith.addf %187, %190 : vector<16x128xf32>
    %192 = math.tanh %191 : vector<16x128xf32>
    %cst_73 = arith.constant 1.000000e+00 : f32
    %193 = vector.broadcast %cst_73 : f32 to vector<16x128xf32>
    %194 = arith.subf %193, %186 : vector<16x128xf32>
    %195 = arith.mulf %194, %192 : vector<16x128xf32>
    %196 = arith.mulf %186, %125 : vector<16x128xf32>
    %197 = arith.addf %195, %196 : vector<16x128xf32>
    %198 = arith.truncf %197 : vector<16x128xf32> to vector<16x128xbf16>
    %c1_74 = arith.constant 1 : index
    %c0_75 = arith.constant 0 : index
    %c0_76 = arith.constant 0 : index
    %199 = vector.load %arg10[%c1_74, %c0_75, %c0_76] : memref<8x16x128xbf16, #tpu.memory_space<vmem>>, vector<1x16x128xbf16>
    %200 = vector.shape_cast %199 : vector<1x16x128xbf16> to vector<16x128xbf16>
    %201 = vector.shape_cast %198 : vector<16x128xbf16> to vector<1x16x128xbf16>
    tpu.vector_store %arg10[%c1_74, %c0_75, %c0_76], %201 {strides = array<i32>} : memref<8x16x128xbf16, #tpu.memory_space<vmem>>, vector<1x16x128xbf16>,
    %c48 = arith.constant 48 : index
    %c0_77 = arith.constant 0 : index
    %202 = vector.load %arg11[%c48, %c0_77] : memref<128x384xf32, #tpu.memory_space<vmem>>, vector<16x384xf32>
    %203 = arith.truncf %161 : vector<16x128xf32> to vector<16x128xbf16>
    %c0_78 = arith.constant 0 : index
    %c0_79 = arith.constant 0 : index
    %c0_80 = arith.constant 0 : index
    %204 = vector.load %arg3[%c0_78, %c0_79, %c0_80] : memref<2x128x384xbf16, #tpu.memory_space<vmem>>, vector<1x128x384xbf16>
    %205 = vector.shape_cast %204 : vector<1x128x384xbf16> to vector<128x384xbf16>
    %cst_81 = arith.constant dense<0.000000e+00> : vector<16x384xf32>
    %206 = tpu.matmul %203, %205, %cst_81 {dimension_numbers = #tpu.dot_dimension_numbers<[1], [0], [0], [1], [0, 0, 1, 1], [], []>} : vector<16x128xbf16>, vector<128x384xbf16>, vector<16x384xf32> -> vector<16x384xf32>
    %207 = vector.extract_strided_slice %202 {offsets = [0, 0], sizes = [16, 128], strides = [1, 1]} : vector<16x384xf32> to vector<16x128xf32>
    %208 = vector.extract_strided_slice %206 {offsets = [0, 0], sizes = [16, 128], strides = [1, 1]} : vector<16x384xf32> to vector<16x128xf32>
    %209 = arith.addf %207, %208 : vector<16x128xf32>
    %210 = arith.negf %209 : vector<16x128xf32>
    %211 = math.exp %210 : vector<16x128xf32>
    %cst_82 = arith.constant 1.000000e+00 : f32
    %212 = vector.broadcast %cst_82 : f32 to vector<16x128xf32>
    %213 = arith.addf %212, %211 : vector<16x128xf32>
    %214 = arith.divf %212, %213 : vector<16x128xf32>
    %215 = vector.extract_strided_slice %202 {offsets = [0, 128], sizes = [16, 128], strides = [1, 1]} : vector<16x384xf32> to vector<16x128xf32>
    %216 = vector.extract_strided_slice %206 {offsets = [0, 128], sizes = [16, 128], strides = [1, 1]} : vector<16x384xf32> to vector<16x128xf32>
    %217 = arith.addf %215, %216 : vector<16x128xf32>
    %218 = arith.negf %217 : vector<16x128xf32>
    %219 = math.exp %218 : vector<16x128xf32>
    %cst_83 = arith.constant 1.000000e+00 : f32
    %220 = vector.broadcast %cst_83 : f32 to vector<16x128xf32>
    %221 = arith.addf %220, %219 : vector<16x128xf32>
    %222 = arith.divf %220, %221 : vector<16x128xf32>
    %223 = vector.extract_strided_slice %202 {offsets = [0, 256], sizes = [16, 128], strides = [1, 1]} : vector<16x384xf32> to vector<16x128xf32>
    %224 = vector.extract_strided_slice %206 {offsets = [0, 256], sizes = [16, 128], strides = [1, 1]} : vector<16x384xf32> to vector<16x128xf32>
    %225 = arith.addf %224, %17 : vector<16x128xf32>
    %226 = arith.mulf %214, %225 : vector<16x128xf32>
    %227 = arith.addf %223, %226 : vector<16x128xf32>
    %228 = math.tanh %227 : vector<16x128xf32>
    %cst_84 = arith.constant 1.000000e+00 : f32
    %229 = vector.broadcast %cst_84 : f32 to vector<16x128xf32>
    %230 = arith.subf %229, %222 : vector<16x128xf32>
    %231 = arith.mulf %230, %228 : vector<16x128xf32>
    %232 = arith.mulf %222, %161 : vector<16x128xf32>
    %233 = arith.addf %231, %232 : vector<16x128xf32>
    %234 = arith.truncf %161 : vector<16x128xf32> to vector<16x128xbf16>
    %c1_85 = arith.constant 1 : index
    %c0_86 = arith.constant 0 : index
    %c0_87 = arith.constant 0 : index
    %235 = vector.load %arg2[%c1_85, %c0_86, %c0_87] : memref<2x128x384xbf16, #tpu.memory_space<vmem>>, vector<1x128x384xbf16>
    %236 = vector.shape_cast %235 : vector<1x128x384xbf16> to vector<128x384xbf16>
    %cst_88 = arith.constant dense<0.000000e+00> : vector<16x384xf32>
    %237 = tpu.matmul %234, %236, %cst_88 {dimension_numbers = #tpu.dot_dimension_numbers<[1], [0], [0], [1], [0, 0, 1, 1], [], []>} : vector<16x128xbf16>, vector<128x384xbf16>, vector<16x384xf32> -> vector<16x384xf32>
    %238 = arith.addf %237, %13 : vector<16x384xf32>
    %239 = arith.truncf %197 : vector<16x128xf32> to vector<16x128xbf16>
    %c1_89 = arith.constant 1 : index
    %c0_90 = arith.constant 0 : index
    %c0_91 = arith.constant 0 : index
    %240 = vector.load %arg3[%c1_89, %c0_90, %c0_91] : memref<2x128x384xbf16, #tpu.memory_space<vmem>>, vector<1x128x384xbf16>
    %241 = vector.shape_cast %240 : vector<1x128x384xbf16> to vector<128x384xbf16>
    %cst_92 = arith.constant dense<0.000000e+00> : vector<16x384xf32>
    %242 = tpu.matmul %239, %241, %cst_92 {dimension_numbers = #tpu.dot_dimension_numbers<[1], [0], [0], [1], [0, 0, 1, 1], [], []>} : vector<16x128xbf16>, vector<128x384xbf16>, vector<16x384xf32> -> vector<16x384xf32>
    %243 = vector.extract_strided_slice %238 {offsets = [0, 0], sizes = [16, 128], strides = [1, 1]} : vector<16x384xf32> to vector<16x128xf32>
    %244 = vector.extract_strided_slice %242 {offsets = [0, 0], sizes = [16, 128], strides = [1, 1]} : vector<16x384xf32> to vector<16x128xf32>
    %245 = arith.addf %243, %244 : vector<16x128xf32>
    %246 = arith.negf %245 : vector<16x128xf32>
    %247 = math.exp %246 : vector<16x128xf32>
    %cst_93 = arith.constant 1.000000e+00 : f32
    %248 = vector.broadcast %cst_93 : f32 to vector<16x128xf32>
    %249 = arith.addf %248, %247 : vector<16x128xf32>
    %250 = arith.divf %248, %249 : vector<16x128xf32>
    %251 = vector.extract_strided_slice %238 {offsets = [0, 128], sizes = [16, 128], strides = [1, 1]} : vector<16x384xf32> to vector<16x128xf32>
    %252 = vector.extract_strided_slice %242 {offsets = [0, 128], sizes = [16, 128], strides = [1, 1]} : vector<16x384xf32> to vector<16x128xf32>
    %253 = arith.addf %251, %252 : vector<16x128xf32>
    %254 = arith.negf %253 : vector<16x128xf32>
    %255 = math.exp %254 : vector<16x128xf32>
    %cst_94 = arith.constant 1.000000e+00 : f32
    %256 = vector.broadcast %cst_94 : f32 to vector<16x128xf32>
    %257 = arith.addf %256, %255 : vector<16x128xf32>
    %258 = arith.divf %256, %257 : vector<16x128xf32>
    %259 = vector.extract_strided_slice %238 {offsets = [0, 256], sizes = [16, 128], strides = [1, 1]} : vector<16x384xf32> to vector<16x128xf32>
    %260 = vector.extract_strided_slice %242 {offsets = [0, 256], sizes = [16, 128], strides = [1, 1]} : vector<16x384xf32> to vector<16x128xf32>
    %261 = arith.addf %260, %21 : vector<16x128xf32>
    %262 = arith.mulf %250, %261 : vector<16x128xf32>
    %263 = arith.addf %259, %262 : vector<16x128xf32>
    %264 = math.tanh %263 : vector<16x128xf32>
    %cst_95 = arith.constant 1.000000e+00 : f32
    %265 = vector.broadcast %cst_95 : f32 to vector<16x128xf32>
    %266 = arith.subf %265, %258 : vector<16x128xf32>
    %267 = arith.mulf %266, %264 : vector<16x128xf32>
    %268 = arith.mulf %258, %197 : vector<16x128xf32>
    %269 = arith.addf %267, %268 : vector<16x128xf32>
    %270 = arith.truncf %269 : vector<16x128xf32> to vector<16x128xbf16>
    %c2 = arith.constant 2 : index
    %c0_96 = arith.constant 0 : index
    %c0_97 = arith.constant 0 : index
    %271 = vector.load %arg10[%c2, %c0_96, %c0_97] : memref<8x16x128xbf16, #tpu.memory_space<vmem>>, vector<1x16x128xbf16>
    %272 = vector.shape_cast %271 : vector<1x16x128xbf16> to vector<16x128xbf16>
    %273 = vector.shape_cast %270 : vector<16x128xbf16> to vector<1x16x128xbf16>
    tpu.vector_store %arg10[%c2, %c0_96, %c0_97], %273 {strides = array<i32>} : memref<8x16x128xbf16, #tpu.memory_space<vmem>>, vector<1x16x128xbf16>,
    %c64 = arith.constant 64 : index
    %c0_98 = arith.constant 0 : index
    %274 = vector.load %arg11[%c64, %c0_98] : memref<128x384xf32, #tpu.memory_space<vmem>>, vector<16x384xf32>
    %275 = arith.truncf %233 : vector<16x128xf32> to vector<16x128xbf16>
    %c0_99 = arith.constant 0 : index
    %c0_100 = arith.constant 0 : index
    %c0_101 = arith.constant 0 : index
    %276 = vector.load %arg3[%c0_99, %c0_100, %c0_101] : memref<2x128x384xbf16, #tpu.memory_space<vmem>>, vector<1x128x384xbf16>
    %277 = vector.shape_cast %276 : vector<1x128x384xbf16> to vector<128x384xbf16>
    %cst_102 = arith.constant dense<0.000000e+00> : vector<16x384xf32>
    %278 = tpu.matmul %275, %277, %cst_102 {dimension_numbers = #tpu.dot_dimension_numbers<[1], [0], [0], [1], [0, 0, 1, 1], [], []>} : vector<16x128xbf16>, vector<128x384xbf16>, vector<16x384xf32> -> vector<16x384xf32>
    %279 = vector.extract_strided_slice %274 {offsets = [0, 0], sizes = [16, 128], strides = [1, 1]} : vector<16x384xf32> to vector<16x128xf32>
    %280 = vector.extract_strided_slice %278 {offsets = [0, 0], sizes = [16, 128], strides = [1, 1]} : vector<16x384xf32> to vector<16x128xf32>
    %281 = arith.addf %279, %280 : vector<16x128xf32>
    %282 = arith.negf %281 : vector<16x128xf32>
    %283 = math.exp %282 : vector<16x128xf32>
    %cst_103 = arith.constant 1.000000e+00 : f32
    %284 = vector.broadcast %cst_103 : f32 to vector<16x128xf32>
    %285 = arith.addf %284, %283 : vector<16x128xf32>
    %286 = arith.divf %284, %285 : vector<16x128xf32>
    %287 = vector.extract_strided_slice %274 {offsets = [0, 128], sizes = [16, 128], strides = [1, 1]} : vector<16x384xf32> to vector<16x128xf32>
    %288 = vector.extract_strided_slice %278 {offsets = [0, 128], sizes = [16, 128], strides = [1, 1]} : vector<16x384xf32> to vector<16x128xf32>
    %289 = arith.addf %287, %288 : vector<16x128xf32>
    %290 = arith.negf %289 : vector<16x128xf32>
    %291 = math.exp %290 : vector<16x128xf32>
    %cst_104 = arith.constant 1.000000e+00 : f32
    %292 = vector.broadcast %cst_104 : f32 to vector<16x128xf32>
    %293 = arith.addf %292, %291 : vector<16x128xf32>
    %294 = arith.divf %292, %293 : vector<16x128xf32>
    %295 = vector.extract_strided_slice %274 {offsets = [0, 256], sizes = [16, 128], strides = [1, 1]} : vector<16x384xf32> to vector<16x128xf32>
    %296 = vector.extract_strided_slice %278 {offsets = [0, 256], sizes = [16, 128], strides = [1, 1]} : vector<16x384xf32> to vector<16x128xf32>
    %297 = arith.addf %296, %17 : vector<16x128xf32>
    %298 = arith.mulf %286, %297 : vector<16x128xf32>
    %299 = arith.addf %295, %298 : vector<16x128xf32>
    %300 = math.tanh %299 : vector<16x128xf32>
    %cst_105 = arith.constant 1.000000e+00 : f32
    %301 = vector.broadcast %cst_105 : f32 to vector<16x128xf32>
    %302 = arith.subf %301, %294 : vector<16x128xf32>
    %303 = arith.mulf %302, %300 : vector<16x128xf32>
    %304 = arith.mulf %294, %233 : vector<16x128xf32>
    %305 = arith.addf %303, %304 : vector<16x128xf32>
    %306 = arith.truncf %233 : vector<16x128xf32> to vector<16x128xbf16>
    %c1_106 = arith.constant 1 : index
    %c0_107 = arith.constant 0 : index
    %c0_108 = arith.constant 0 : index
    %307 = vector.load %arg2[%c1_106, %c0_107, %c0_108] : memref<2x128x384xbf16, #tpu.memory_space<vmem>>, vector<1x128x384xbf16>
    %308 = vector.shape_cast %307 : vector<1x128x384xbf16> to vector<128x384xbf16>
    %cst_109 = arith.constant dense<0.000000e+00> : vector<16x384xf32>
    %309 = tpu.matmul %306, %308, %cst_109 {dimension_numbers = #tpu.dot_dimension_numbers<[1], [0], [0], [1], [0, 0, 1, 1], [], []>} : vector<16x128xbf16>, vector<128x384xbf16>, vector<16x384xf32> -> vector<16x384xf32>
    %310 = arith.addf %309, %13 : vector<16x384xf32>
    %311 = arith.truncf %269 : vector<16x128xf32> to vector<16x128xbf16>
    %c1_110 = arith.constant 1 : index
    %c0_111 = arith.constant 0 : index
    %c0_112 = arith.constant 0 : index
    %312 = vector.load %arg3[%c1_110, %c0_111, %c0_112] : memref<2x128x384xbf16, #tpu.memory_space<vmem>>, vector<1x128x384xbf16>
    %313 = vector.shape_cast %312 : vector<1x128x384xbf16> to vector<128x384xbf16>
    %cst_113 = arith.constant dense<0.000000e+00> : vector<16x384xf32>
    %314 = tpu.matmul %311, %313, %cst_113 {dimension_numbers = #tpu.dot_dimension_numbers<[1], [0], [0], [1], [0, 0, 1, 1], [], []>} : vector<16x128xbf16>, vector<128x384xbf16>, vector<16x384xf32> -> vector<16x384xf32>
    %315 = vector.extract_strided_slice %310 {offsets = [0, 0], sizes = [16, 128], strides = [1, 1]} : vector<16x384xf32> to vector<16x128xf32>
    %316 = vector.extract_strided_slice %314 {offsets = [0, 0], sizes = [16, 128], strides = [1, 1]} : vector<16x384xf32> to vector<16x128xf32>
    %317 = arith.addf %315, %316 : vector<16x128xf32>
    %318 = arith.negf %317 : vector<16x128xf32>
    %319 = math.exp %318 : vector<16x128xf32>
    %cst_114 = arith.constant 1.000000e+00 : f32
    %320 = vector.broadcast %cst_114 : f32 to vector<16x128xf32>
    %321 = arith.addf %320, %319 : vector<16x128xf32>
    %322 = arith.divf %320, %321 : vector<16x128xf32>
    %323 = vector.extract_strided_slice %310 {offsets = [0, 128], sizes = [16, 128], strides = [1, 1]} : vector<16x384xf32> to vector<16x128xf32>
    %324 = vector.extract_strided_slice %314 {offsets = [0, 128], sizes = [16, 128], strides = [1, 1]} : vector<16x384xf32> to vector<16x128xf32>
    %325 = arith.addf %323, %324 : vector<16x128xf32>
    %326 = arith.negf %325 : vector<16x128xf32>
    %327 = math.exp %326 : vector<16x128xf32>
    %cst_115 = arith.constant 1.000000e+00 : f32
    %328 = vector.broadcast %cst_115 : f32 to vector<16x128xf32>
    %329 = arith.addf %328, %327 : vector<16x128xf32>
    %330 = arith.divf %328, %329 : vector<16x128xf32>
    %331 = vector.extract_strided_slice %310 {offsets = [0, 256], sizes = [16, 128], strides = [1, 1]} : vector<16x384xf32> to vector<16x128xf32>
    %332 = vector.extract_strided_slice %314 {offsets = [0, 256], sizes = [16, 128], strides = [1, 1]} : vector<16x384xf32> to vector<16x128xf32>
    %333 = arith.addf %332, %21 : vector<16x128xf32>
    %334 = arith.mulf %322, %333 : vector<16x128xf32>
    %335 = arith.addf %331, %334 : vector<16x128xf32>
    %336 = math.tanh %335 : vector<16x128xf32>
    %cst_116 = arith.constant 1.000000e+00 : f32
    %337 = vector.broadcast %cst_116 : f32 to vector<16x128xf32>
    %338 = arith.subf %337, %330 : vector<16x128xf32>
    %339 = arith.mulf %338, %336 : vector<16x128xf32>
    %340 = arith.mulf %330, %269 : vector<16x128xf32>
    %341 = arith.addf %339, %340 : vector<16x128xf32>
    %342 = arith.truncf %341 : vector<16x128xf32> to vector<16x128xbf16>
    %c3 = arith.constant 3 : index
    %c0_117 = arith.constant 0 : index
    %c0_118 = arith.constant 0 : index
    %343 = vector.load %arg10[%c3, %c0_117, %c0_118] : memref<8x16x128xbf16, #tpu.memory_space<vmem>>, vector<1x16x128xbf16>
    %344 = vector.shape_cast %343 : vector<1x16x128xbf16> to vector<16x128xbf16>
    %345 = vector.shape_cast %342 : vector<16x128xbf16> to vector<1x16x128xbf16>
    tpu.vector_store %arg10[%c3, %c0_117, %c0_118], %345 {strides = array<i32>} : memref<8x16x128xbf16, #tpu.memory_space<vmem>>, vector<1x16x128xbf16>,
    %c80 = arith.constant 80 : index
    %c0_119 = arith.constant 0 : index
    %346 = vector.load %arg11[%c80, %c0_119] : memref<128x384xf32, #tpu.memory_space<vmem>>, vector<16x384xf32>
    %347 = arith.truncf %305 : vector<16x128xf32> to vector<16x128xbf16>
    %c0_120 = arith.constant 0 : index
    %c0_121 = arith.constant 0 : index
    %c0_122 = arith.constant 0 : index
    %348 = vector.load %arg3[%c0_120, %c0_121, %c0_122] : memref<2x128x384xbf16, #tpu.memory_space<vmem>>, vector<1x128x384xbf16>
    %349 = vector.shape_cast %348 : vector<1x128x384xbf16> to vector<128x384xbf16>
    %cst_123 = arith.constant dense<0.000000e+00> : vector<16x384xf32>
    %350 = tpu.matmul %347, %349, %cst_123 {dimension_numbers = #tpu.dot_dimension_numbers<[1], [0], [0], [1], [0, 0, 1, 1], [], []>} : vector<16x128xbf16>, vector<128x384xbf16>, vector<16x384xf32> -> vector<16x384xf32>
    %351 = vector.extract_strided_slice %346 {offsets = [0, 0], sizes = [16, 128], strides = [1, 1]} : vector<16x384xf32> to vector<16x128xf32>
    %352 = vector.extract_strided_slice %350 {offsets = [0, 0], sizes = [16, 128], strides = [1, 1]} : vector<16x384xf32> to vector<16x128xf32>
    %353 = arith.addf %351, %352 : vector<16x128xf32>
    %354 = arith.negf %353 : vector<16x128xf32>
    %355 = math.exp %354 : vector<16x128xf32>
    %cst_124 = arith.constant 1.000000e+00 : f32
    %356 = vector.broadcast %cst_124 : f32 to vector<16x128xf32>
    %357 = arith.addf %356, %355 : vector<16x128xf32>
    %358 = arith.divf %356, %357 : vector<16x128xf32>
    %359 = vector.extract_strided_slice %346 {offsets = [0, 128], sizes = [16, 128], strides = [1, 1]} : vector<16x384xf32> to vector<16x128xf32>
    %360 = vector.extract_strided_slice %350 {offsets = [0, 128], sizes = [16, 128], strides = [1, 1]} : vector<16x384xf32> to vector<16x128xf32>
    %361 = arith.addf %359, %360 : vector<16x128xf32>
    %362 = arith.negf %361 : vector<16x128xf32>
    %363 = math.exp %362 : vector<16x128xf32>
    %cst_125 = arith.constant 1.000000e+00 : f32
    %364 = vector.broadcast %cst_125 : f32 to vector<16x128xf32>
    %365 = arith.addf %364, %363 : vector<16x128xf32>
    %366 = arith.divf %364, %365 : vector<16x128xf32>
    %367 = vector.extract_strided_slice %346 {offsets = [0, 256], sizes = [16, 128], strides = [1, 1]} : vector<16x384xf32> to vector<16x128xf32>
    %368 = vector.extract_strided_slice %350 {offsets = [0, 256], sizes = [16, 128], strides = [1, 1]} : vector<16x384xf32> to vector<16x128xf32>
    %369 = arith.addf %368, %17 : vector<16x128xf32>
    %370 = arith.mulf %358, %369 : vector<16x128xf32>
    %371 = arith.addf %367, %370 : vector<16x128xf32>
    %372 = math.tanh %371 : vector<16x128xf32>
    %cst_126 = arith.constant 1.000000e+00 : f32
    %373 = vector.broadcast %cst_126 : f32 to vector<16x128xf32>
    %374 = arith.subf %373, %366 : vector<16x128xf32>
    %375 = arith.mulf %374, %372 : vector<16x128xf32>
    %376 = arith.mulf %366, %305 : vector<16x128xf32>
    %377 = arith.addf %375, %376 : vector<16x128xf32>
    %378 = arith.truncf %305 : vector<16x128xf32> to vector<16x128xbf16>
    %c1_127 = arith.constant 1 : index
    %c0_128 = arith.constant 0 : index
    %c0_129 = arith.constant 0 : index
    %379 = vector.load %arg2[%c1_127, %c0_128, %c0_129] : memref<2x128x384xbf16, #tpu.memory_space<vmem>>, vector<1x128x384xbf16>
    %380 = vector.shape_cast %379 : vector<1x128x384xbf16> to vector<128x384xbf16>
    %cst_130 = arith.constant dense<0.000000e+00> : vector<16x384xf32>
    %381 = tpu.matmul %378, %380, %cst_130 {dimension_numbers = #tpu.dot_dimension_numbers<[1], [0], [0], [1], [0, 0, 1, 1], [], []>} : vector<16x128xbf16>, vector<128x384xbf16>, vector<16x384xf32> -> vector<16x384xf32>
    %382 = arith.addf %381, %13 : vector<16x384xf32>
    %383 = arith.truncf %341 : vector<16x128xf32> to vector<16x128xbf16>
    %c1_131 = arith.constant 1 : index
    %c0_132 = arith.constant 0 : index
    %c0_133 = arith.constant 0 : index
    %384 = vector.load %arg3[%c1_131, %c0_132, %c0_133] : memref<2x128x384xbf16, #tpu.memory_space<vmem>>, vector<1x128x384xbf16>
    %385 = vector.shape_cast %384 : vector<1x128x384xbf16> to vector<128x384xbf16>
    %cst_134 = arith.constant dense<0.000000e+00> : vector<16x384xf32>
    %386 = tpu.matmul %383, %385, %cst_134 {dimension_numbers = #tpu.dot_dimension_numbers<[1], [0], [0], [1], [0, 0, 1, 1], [], []>} : vector<16x128xbf16>, vector<128x384xbf16>, vector<16x384xf32> -> vector<16x384xf32>
    %387 = vector.extract_strided_slice %382 {offsets = [0, 0], sizes = [16, 128], strides = [1, 1]} : vector<16x384xf32> to vector<16x128xf32>
    %388 = vector.extract_strided_slice %386 {offsets = [0, 0], sizes = [16, 128], strides = [1, 1]} : vector<16x384xf32> to vector<16x128xf32>
    %389 = arith.addf %387, %388 : vector<16x128xf32>
    %390 = arith.negf %389 : vector<16x128xf32>
    %391 = math.exp %390 : vector<16x128xf32>
    %cst_135 = arith.constant 1.000000e+00 : f32
    %392 = vector.broadcast %cst_135 : f32 to vector<16x128xf32>
    %393 = arith.addf %392, %391 : vector<16x128xf32>
    %394 = arith.divf %392, %393 : vector<16x128xf32>
    %395 = vector.extract_strided_slice %382 {offsets = [0, 128], sizes = [16, 128], strides = [1, 1]} : vector<16x384xf32> to vector<16x128xf32>
    %396 = vector.extract_strided_slice %386 {offsets = [0, 128], sizes = [16, 128], strides = [1, 1]} : vector<16x384xf32> to vector<16x128xf32>
    %397 = arith.addf %395, %396 : vector<16x128xf32>
    %398 = arith.negf %397 : vector<16x128xf32>
    %399 = math.exp %398 : vector<16x128xf32>
    %cst_136 = arith.constant 1.000000e+00 : f32
    %400 = vector.broadcast %cst_136 : f32 to vector<16x128xf32>
    %401 = arith.addf %400, %399 : vector<16x128xf32>
    %402 = arith.divf %400, %401 : vector<16x128xf32>
    %403 = vector.extract_strided_slice %382 {offsets = [0, 256], sizes = [16, 128], strides = [1, 1]} : vector<16x384xf32> to vector<16x128xf32>
    %404 = vector.extract_strided_slice %386 {offsets = [0, 256], sizes = [16, 128], strides = [1, 1]} : vector<16x384xf32> to vector<16x128xf32>
    %405 = arith.addf %404, %21 : vector<16x128xf32>
    %406 = arith.mulf %394, %405 : vector<16x128xf32>
    %407 = arith.addf %403, %406 : vector<16x128xf32>
    %408 = math.tanh %407 : vector<16x128xf32>
    %cst_137 = arith.constant 1.000000e+00 : f32
    %409 = vector.broadcast %cst_137 : f32 to vector<16x128xf32>
    %410 = arith.subf %409, %402 : vector<16x128xf32>
    %411 = arith.mulf %410, %408 : vector<16x128xf32>
    %412 = arith.mulf %402, %341 : vector<16x128xf32>
    %413 = arith.addf %411, %412 : vector<16x128xf32>
    %414 = arith.truncf %413 : vector<16x128xf32> to vector<16x128xbf16>
    %c4 = arith.constant 4 : index
    %c0_138 = arith.constant 0 : index
    %c0_139 = arith.constant 0 : index
    %415 = vector.load %arg10[%c4, %c0_138, %c0_139] : memref<8x16x128xbf16, #tpu.memory_space<vmem>>, vector<1x16x128xbf16>
    %416 = vector.shape_cast %415 : vector<1x16x128xbf16> to vector<16x128xbf16>
    %417 = vector.shape_cast %414 : vector<16x128xbf16> to vector<1x16x128xbf16>
    tpu.vector_store %arg10[%c4, %c0_138, %c0_139], %417 {strides = array<i32>} : memref<8x16x128xbf16, #tpu.memory_space<vmem>>, vector<1x16x128xbf16>,
    %c96 = arith.constant 96 : index
    %c0_140 = arith.constant 0 : index
    %418 = vector.load %arg11[%c96, %c0_140] : memref<128x384xf32, #tpu.memory_space<vmem>>, vector<16x384xf32>
    %419 = arith.truncf %377 : vector<16x128xf32> to vector<16x128xbf16>
    %c0_141 = arith.constant 0 : index
    %c0_142 = arith.constant 0 : index
    %c0_143 = arith.constant 0 : index
    %420 = vector.load %arg3[%c0_141, %c0_142, %c0_143] : memref<2x128x384xbf16, #tpu.memory_space<vmem>>, vector<1x128x384xbf16>
    %421 = vector.shape_cast %420 : vector<1x128x384xbf16> to vector<128x384xbf16>
    %cst_144 = arith.constant dense<0.000000e+00> : vector<16x384xf32>
    %422 = tpu.matmul %419, %421, %cst_144 {dimension_numbers = #tpu.dot_dimension_numbers<[1], [0], [0], [1], [0, 0, 1, 1], [], []>} : vector<16x128xbf16>, vector<128x384xbf16>, vector<16x384xf32> -> vector<16x384xf32>
    %423 = vector.extract_strided_slice %418 {offsets = [0, 0], sizes = [16, 128], strides = [1, 1]} : vector<16x384xf32> to vector<16x128xf32>
    %424 = vector.extract_strided_slice %422 {offsets = [0, 0], sizes = [16, 128], strides = [1, 1]} : vector<16x384xf32> to vector<16x128xf32>
    %425 = arith.addf %423, %424 : vector<16x128xf32>
    %426 = arith.negf %425 : vector<16x128xf32>
    %427 = math.exp %426 : vector<16x128xf32>
    %cst_145 = arith.constant 1.000000e+00 : f32
    %428 = vector.broadcast %cst_145 : f32 to vector<16x128xf32>
    %429 = arith.addf %428, %427 : vector<16x128xf32>
    %430 = arith.divf %428, %429 : vector<16x128xf32>
    %431 = vector.extract_strided_slice %418 {offsets = [0, 128], sizes = [16, 128], strides = [1, 1]} : vector<16x384xf32> to vector<16x128xf32>
    %432 = vector.extract_strided_slice %422 {offsets = [0, 128], sizes = [16, 128], strides = [1, 1]} : vector<16x384xf32> to vector<16x128xf32>
    %433 = arith.addf %431, %432 : vector<16x128xf32>
    %434 = arith.negf %433 : vector<16x128xf32>
    %435 = math.exp %434 : vector<16x128xf32>
    %cst_146 = arith.constant 1.000000e+00 : f32
    %436 = vector.broadcast %cst_146 : f32 to vector<16x128xf32>
    %437 = arith.addf %436, %435 : vector<16x128xf32>
    %438 = arith.divf %436, %437 : vector<16x128xf32>
    %439 = vector.extract_strided_slice %418 {offsets = [0, 256], sizes = [16, 128], strides = [1, 1]} : vector<16x384xf32> to vector<16x128xf32>
    %440 = vector.extract_strided_slice %422 {offsets = [0, 256], sizes = [16, 128], strides = [1, 1]} : vector<16x384xf32> to vector<16x128xf32>
    %441 = arith.addf %440, %17 : vector<16x128xf32>
    %442 = arith.mulf %430, %441 : vector<16x128xf32>
    %443 = arith.addf %439, %442 : vector<16x128xf32>
    %444 = math.tanh %443 : vector<16x128xf32>
    %cst_147 = arith.constant 1.000000e+00 : f32
    %445 = vector.broadcast %cst_147 : f32 to vector<16x128xf32>
    %446 = arith.subf %445, %438 : vector<16x128xf32>
    %447 = arith.mulf %446, %444 : vector<16x128xf32>
    %448 = arith.mulf %438, %377 : vector<16x128xf32>
    %449 = arith.addf %447, %448 : vector<16x128xf32>
    %450 = arith.truncf %377 : vector<16x128xf32> to vector<16x128xbf16>
    %c1_148 = arith.constant 1 : index
    %c0_149 = arith.constant 0 : index
    %c0_150 = arith.constant 0 : index
    %451 = vector.load %arg2[%c1_148, %c0_149, %c0_150] : memref<2x128x384xbf16, #tpu.memory_space<vmem>>, vector<1x128x384xbf16>
    %452 = vector.shape_cast %451 : vector<1x128x384xbf16> to vector<128x384xbf16>
    %cst_151 = arith.constant dense<0.000000e+00> : vector<16x384xf32>
    %453 = tpu.matmul %450, %452, %cst_151 {dimension_numbers = #tpu.dot_dimension_numbers<[1], [0], [0], [1], [0, 0, 1, 1], [], []>} : vector<16x128xbf16>, vector<128x384xbf16>, vector<16x384xf32> -> vector<16x384xf32>
    %454 = arith.addf %453, %13 : vector<16x384xf32>
    %455 = arith.truncf %413 : vector<16x128xf32> to vector<16x128xbf16>
    %c1_152 = arith.constant 1 : index
    %c0_153 = arith.constant 0 : index
    %c0_154 = arith.constant 0 : index
    %456 = vector.load %arg3[%c1_152, %c0_153, %c0_154] : memref<2x128x384xbf16, #tpu.memory_space<vmem>>, vector<1x128x384xbf16>
    %457 = vector.shape_cast %456 : vector<1x128x384xbf16> to vector<128x384xbf16>
    %cst_155 = arith.constant dense<0.000000e+00> : vector<16x384xf32>
    %458 = tpu.matmul %455, %457, %cst_155 {dimension_numbers = #tpu.dot_dimension_numbers<[1], [0], [0], [1], [0, 0, 1, 1], [], []>} : vector<16x128xbf16>, vector<128x384xbf16>, vector<16x384xf32> -> vector<16x384xf32>
    %459 = vector.extract_strided_slice %454 {offsets = [0, 0], sizes = [16, 128], strides = [1, 1]} : vector<16x384xf32> to vector<16x128xf32>
    %460 = vector.extract_strided_slice %458 {offsets = [0, 0], sizes = [16, 128], strides = [1, 1]} : vector<16x384xf32> to vector<16x128xf32>
    %461 = arith.addf %459, %460 : vector<16x128xf32>
    %462 = arith.negf %461 : vector<16x128xf32>
    %463 = math.exp %462 : vector<16x128xf32>
    %cst_156 = arith.constant 1.000000e+00 : f32
    %464 = vector.broadcast %cst_156 : f32 to vector<16x128xf32>
    %465 = arith.addf %464, %463 : vector<16x128xf32>
    %466 = arith.divf %464, %465 : vector<16x128xf32>
    %467 = vector.extract_strided_slice %454 {offsets = [0, 128], sizes = [16, 128], strides = [1, 1]} : vector<16x384xf32> to vector<16x128xf32>
    %468 = vector.extract_strided_slice %458 {offsets = [0, 128], sizes = [16, 128], strides = [1, 1]} : vector<16x384xf32> to vector<16x128xf32>
    %469 = arith.addf %467, %468 : vector<16x128xf32>
    %470 = arith.negf %469 : vector<16x128xf32>
    %471 = math.exp %470 : vector<16x128xf32>
    %cst_157 = arith.constant 1.000000e+00 : f32
    %472 = vector.broadcast %cst_157 : f32 to vector<16x128xf32>
    %473 = arith.addf %472, %471 : vector<16x128xf32>
    %474 = arith.divf %472, %473 : vector<16x128xf32>
    %475 = vector.extract_strided_slice %454 {offsets = [0, 256], sizes = [16, 128], strides = [1, 1]} : vector<16x384xf32> to vector<16x128xf32>
    %476 = vector.extract_strided_slice %458 {offsets = [0, 256], sizes = [16, 128], strides = [1, 1]} : vector<16x384xf32> to vector<16x128xf32>
    %477 = arith.addf %476, %21 : vector<16x128xf32>
    %478 = arith.mulf %466, %477 : vector<16x128xf32>
    %479 = arith.addf %475, %478 : vector<16x128xf32>
    %480 = math.tanh %479 : vector<16x128xf32>
    %cst_158 = arith.constant 1.000000e+00 : f32
    %481 = vector.broadcast %cst_158 : f32 to vector<16x128xf32>
    %482 = arith.subf %481, %474 : vector<16x128xf32>
    %483 = arith.mulf %482, %480 : vector<16x128xf32>
    %484 = arith.mulf %474, %413 : vector<16x128xf32>
    %485 = arith.addf %483, %484 : vector<16x128xf32>
    %486 = arith.truncf %485 : vector<16x128xf32> to vector<16x128xbf16>
    %c5 = arith.constant 5 : index
    %c0_159 = arith.constant 0 : index
    %c0_160 = arith.constant 0 : index
    %487 = vector.load %arg10[%c5, %c0_159, %c0_160] : memref<8x16x128xbf16, #tpu.memory_space<vmem>>, vector<1x16x128xbf16>
    %488 = vector.shape_cast %487 : vector<1x16x128xbf16> to vector<16x128xbf16>
    %489 = vector.shape_cast %486 : vector<16x128xbf16> to vector<1x16x128xbf16>
    tpu.vector_store %arg10[%c5, %c0_159, %c0_160], %489 {strides = array<i32>} : memref<8x16x128xbf16, #tpu.memory_space<vmem>>, vector<1x16x128xbf16>,
    %c112 = arith.constant 112 : index
    %c0_161 = arith.constant 0 : index
    %490 = vector.load %arg11[%c112, %c0_161] : memref<128x384xf32, #tpu.memory_space<vmem>>, vector<16x384xf32>
    %491 = arith.truncf %449 : vector<16x128xf32> to vector<16x128xbf16>
    %c0_162 = arith.constant 0 : index
    %c0_163 = arith.constant 0 : index
    %c0_164 = arith.constant 0 : index
    %492 = vector.load %arg3[%c0_162, %c0_163, %c0_164] : memref<2x128x384xbf16, #tpu.memory_space<vmem>>, vector<1x128x384xbf16>
    %493 = vector.shape_cast %492 : vector<1x128x384xbf16> to vector<128x384xbf16>
    %cst_165 = arith.constant dense<0.000000e+00> : vector<16x384xf32>
    %494 = tpu.matmul %491, %493, %cst_165 {dimension_numbers = #tpu.dot_dimension_numbers<[1], [0], [0], [1], [0, 0, 1, 1], [], []>} : vector<16x128xbf16>, vector<128x384xbf16>, vector<16x384xf32> -> vector<16x384xf32>
    %495 = vector.extract_strided_slice %490 {offsets = [0, 0], sizes = [16, 128], strides = [1, 1]} : vector<16x384xf32> to vector<16x128xf32>
    %496 = vector.extract_strided_slice %494 {offsets = [0, 0], sizes = [16, 128], strides = [1, 1]} : vector<16x384xf32> to vector<16x128xf32>
    %497 = arith.addf %495, %496 : vector<16x128xf32>
    %498 = arith.negf %497 : vector<16x128xf32>
    %499 = math.exp %498 : vector<16x128xf32>
    %cst_166 = arith.constant 1.000000e+00 : f32
    %500 = vector.broadcast %cst_166 : f32 to vector<16x128xf32>
    %501 = arith.addf %500, %499 : vector<16x128xf32>
    %502 = arith.divf %500, %501 : vector<16x128xf32>
    %503 = vector.extract_strided_slice %490 {offsets = [0, 128], sizes = [16, 128], strides = [1, 1]} : vector<16x384xf32> to vector<16x128xf32>
    %504 = vector.extract_strided_slice %494 {offsets = [0, 128], sizes = [16, 128], strides = [1, 1]} : vector<16x384xf32> to vector<16x128xf32>
    %505 = arith.addf %503, %504 : vector<16x128xf32>
    %506 = arith.negf %505 : vector<16x128xf32>
    %507 = math.exp %506 : vector<16x128xf32>
    %cst_167 = arith.constant 1.000000e+00 : f32
    %508 = vector.broadcast %cst_167 : f32 to vector<16x128xf32>
    %509 = arith.addf %508, %507 : vector<16x128xf32>
    %510 = arith.divf %508, %509 : vector<16x128xf32>
    %511 = vector.extract_strided_slice %490 {offsets = [0, 256], sizes = [16, 128], strides = [1, 1]} : vector<16x384xf32> to vector<16x128xf32>
    %512 = vector.extract_strided_slice %494 {offsets = [0, 256], sizes = [16, 128], strides = [1, 1]} : vector<16x384xf32> to vector<16x128xf32>
    %513 = arith.addf %512, %17 : vector<16x128xf32>
    %514 = arith.mulf %502, %513 : vector<16x128xf32>
    %515 = arith.addf %511, %514 : vector<16x128xf32>
    %516 = math.tanh %515 : vector<16x128xf32>
    %cst_168 = arith.constant 1.000000e+00 : f32
    %517 = vector.broadcast %cst_168 : f32 to vector<16x128xf32>
    %518 = arith.subf %517, %510 : vector<16x128xf32>
    %519 = arith.mulf %518, %516 : vector<16x128xf32>
    %520 = arith.mulf %510, %449 : vector<16x128xf32>
    %521 = arith.addf %519, %520 : vector<16x128xf32>
    %c0_169 = arith.constant 0 : index
    %c0_170 = arith.constant 0 : index
    %c0_171 = arith.constant 0 : index
    %522 = vector.load %arg9[%c0_169, %c0_170, %c0_171] : memref<2x16x128xf32, #tpu.memory_space<vmem>>, vector<1x16x128xf32>
    %523 = vector.shape_cast %522 : vector<1x16x128xf32> to vector<16x128xf32>
    %524 = vector.shape_cast %521 : vector<16x128xf32> to vector<1x16x128xf32>
    tpu.vector_store %arg9[%c0_169, %c0_170, %c0_171], %524 {strides = array<i32>} : memref<2x16x128xf32, #tpu.memory_space<vmem>>, vector<1x16x128xf32>,
    %525 = arith.truncf %449 : vector<16x128xf32> to vector<16x128xbf16>
    %c1_172 = arith.constant 1 : index
    %c0_173 = arith.constant 0 : index
    %c0_174 = arith.constant 0 : index
    %526 = vector.load %arg2[%c1_172, %c0_173, %c0_174] : memref<2x128x384xbf16, #tpu.memory_space<vmem>>, vector<1x128x384xbf16>
    %527 = vector.shape_cast %526 : vector<1x128x384xbf16> to vector<128x384xbf16>
    %cst_175 = arith.constant dense<0.000000e+00> : vector<16x384xf32>
    %528 = tpu.matmul %525, %527, %cst_175 {dimension_numbers = #tpu.dot_dimension_numbers<[1], [0], [0], [1], [0, 0, 1, 1], [], []>} : vector<16x128xbf16>, vector<128x384xbf16>, vector<16x384xf32> -> vector<16x384xf32>
    %529 = arith.addf %528, %13 : vector<16x384xf32>
    %530 = arith.truncf %485 : vector<16x128xf32> to vector<16x128xbf16>
    %c1_176 = arith.constant 1 : index
    %c0_177 = arith.constant 0 : index
    %c0_178 = arith.constant 0 : index
    %531 = vector.load %arg3[%c1_176, %c0_177, %c0_178] : memref<2x128x384xbf16, #tpu.memory_space<vmem>>, vector<1x128x384xbf16>
    %532 = vector.shape_cast %531 : vector<1x128x384xbf16> to vector<128x384xbf16>
    %cst_179 = arith.constant dense<0.000000e+00> : vector<16x384xf32>
    %533 = tpu.matmul %530, %532, %cst_179 {dimension_numbers = #tpu.dot_dimension_numbers<[1], [0], [0], [1], [0, 0, 1, 1], [], []>} : vector<16x128xbf16>, vector<128x384xbf16>, vector<16x384xf32> -> vector<16x384xf32>
    %534 = vector.extract_strided_slice %529 {offsets = [0, 0], sizes = [16, 128], strides = [1, 1]} : vector<16x384xf32> to vector<16x128xf32>
    %535 = vector.extract_strided_slice %533 {offsets = [0, 0], sizes = [16, 128], strides = [1, 1]} : vector<16x384xf32> to vector<16x128xf32>
    %536 = arith.addf %534, %535 : vector<16x128xf32>
    %537 = arith.negf %536 : vector<16x128xf32>
    %538 = math.exp %537 : vector<16x128xf32>
    %cst_180 = arith.constant 1.000000e+00 : f32
    %539 = vector.broadcast %cst_180 : f32 to vector<16x128xf32>
    %540 = arith.addf %539, %538 : vector<16x128xf32>
    %541 = arith.divf %539, %540 : vector<16x128xf32>
    %542 = vector.extract_strided_slice %529 {offsets = [0, 128], sizes = [16, 128], strides = [1, 1]} : vector<16x384xf32> to vector<16x128xf32>
    %543 = vector.extract_strided_slice %533 {offsets = [0, 128], sizes = [16, 128], strides = [1, 1]} : vector<16x384xf32> to vector<16x128xf32>
    %544 = arith.addf %542, %543 : vector<16x128xf32>
    %545 = arith.negf %544 : vector<16x128xf32>
    %546 = math.exp %545 : vector<16x128xf32>
    %cst_181 = arith.constant 1.000000e+00 : f32
    %547 = vector.broadcast %cst_181 : f32 to vector<16x128xf32>
    %548 = arith.addf %547, %546 : vector<16x128xf32>
    %549 = arith.divf %547, %548 : vector<16x128xf32>
    %550 = vector.extract_strided_slice %529 {offsets = [0, 256], sizes = [16, 128], strides = [1, 1]} : vector<16x384xf32> to vector<16x128xf32>
    %551 = vector.extract_strided_slice %533 {offsets = [0, 256], sizes = [16, 128], strides = [1, 1]} : vector<16x384xf32> to vector<16x128xf32>
    %552 = arith.addf %551, %21 : vector<16x128xf32>
    %553 = arith.mulf %541, %552 : vector<16x128xf32>
    %554 = arith.addf %550, %553 : vector<16x128xf32>
    %555 = math.tanh %554 : vector<16x128xf32>
    %cst_182 = arith.constant 1.000000e+00 : f32
    %556 = vector.broadcast %cst_182 : f32 to vector<16x128xf32>
    %557 = arith.subf %556, %549 : vector<16x128xf32>
    %558 = arith.mulf %557, %555 : vector<16x128xf32>
    %559 = arith.mulf %549, %485 : vector<16x128xf32>
    %560 = arith.addf %558, %559 : vector<16x128xf32>
    %561 = arith.truncf %560 : vector<16x128xf32> to vector<16x128xbf16>
    %c6 = arith.constant 6 : index
    %c0_183 = arith.constant 0 : index
    %c0_184 = arith.constant 0 : index
    %562 = vector.load %arg10[%c6, %c0_183, %c0_184] : memref<8x16x128xbf16, #tpu.memory_space<vmem>>, vector<1x16x128xbf16>
    %563 = vector.shape_cast %562 : vector<1x16x128xbf16> to vector<16x128xbf16>
    %564 = vector.shape_cast %561 : vector<16x128xbf16> to vector<1x16x128xbf16>
    tpu.vector_store %arg10[%c6, %c0_183, %c0_184], %564 {strides = array<i32>} : memref<8x16x128xbf16, #tpu.memory_space<vmem>>, vector<1x16x128xbf16>,
    %565 = arith.truncf %521 : vector<16x128xf32> to vector<16x128xbf16>
    %c1_185 = arith.constant 1 : index
    %c0_186 = arith.constant 0 : index
    %c0_187 = arith.constant 0 : index
    %566 = vector.load %arg2[%c1_185, %c0_186, %c0_187] : memref<2x128x384xbf16, #tpu.memory_space<vmem>>, vector<1x128x384xbf16>
    %567 = vector.shape_cast %566 : vector<1x128x384xbf16> to vector<128x384xbf16>
    %cst_188 = arith.constant dense<0.000000e+00> : vector<16x384xf32>
    %568 = tpu.matmul %565, %567, %cst_188 {dimension_numbers = #tpu.dot_dimension_numbers<[1], [0], [0], [1], [0, 0, 1, 1], [], []>} : vector<16x128xbf16>, vector<128x384xbf16>, vector<16x384xf32> -> vector<16x384xf32>
    %569 = arith.addf %568, %13 : vector<16x384xf32>
    %570 = arith.truncf %560 : vector<16x128xf32> to vector<16x128xbf16>
    %c1_189 = arith.constant 1 : index
    %c0_190 = arith.constant 0 : index
    %c0_191 = arith.constant 0 : index
    %571 = vector.load %arg3[%c1_189, %c0_190, %c0_191] : memref<2x128x384xbf16, #tpu.memory_space<vmem>>, vector<1x128x384xbf16>
    %572 = vector.shape_cast %571 : vector<1x128x384xbf16> to vector<128x384xbf16>
    %cst_192 = arith.constant dense<0.000000e+00> : vector<16x384xf32>
    %573 = tpu.matmul %570, %572, %cst_192 {dimension_numbers = #tpu.dot_dimension_numbers<[1], [0], [0], [1], [0, 0, 1, 1], [], []>} : vector<16x128xbf16>, vector<128x384xbf16>, vector<16x384xf32> -> vector<16x384xf32>
    %574 = vector.extract_strided_slice %569 {offsets = [0, 0], sizes = [16, 128], strides = [1, 1]} : vector<16x384xf32> to vector<16x128xf32>
    %575 = vector.extract_strided_slice %573 {offsets = [0, 0], sizes = [16, 128], strides = [1, 1]} : vector<16x384xf32> to vector<16x128xf32>
    %576 = arith.addf %574, %575 : vector<16x128xf32>
    %577 = arith.negf %576 : vector<16x128xf32>
    %578 = math.exp %577 : vector<16x128xf32>
    %cst_193 = arith.constant 1.000000e+00 : f32
    %579 = vector.broadcast %cst_193 : f32 to vector<16x128xf32>
    %580 = arith.addf %579, %578 : vector<16x128xf32>
    %581 = arith.divf %579, %580 : vector<16x128xf32>
    %582 = vector.extract_strided_slice %569 {offsets = [0, 128], sizes = [16, 128], strides = [1, 1]} : vector<16x384xf32> to vector<16x128xf32>
    %583 = vector.extract_strided_slice %573 {offsets = [0, 128], sizes = [16, 128], strides = [1, 1]} : vector<16x384xf32> to vector<16x128xf32>
    %584 = arith.addf %582, %583 : vector<16x128xf32>
    %585 = arith.negf %584 : vector<16x128xf32>
    %586 = math.exp %585 : vector<16x128xf32>
    %cst_194 = arith.constant 1.000000e+00 : f32
    %587 = vector.broadcast %cst_194 : f32 to vector<16x128xf32>
    %588 = arith.addf %587, %586 : vector<16x128xf32>
    %589 = arith.divf %587, %588 : vector<16x128xf32>
    %590 = vector.extract_strided_slice %569 {offsets = [0, 256], sizes = [16, 128], strides = [1, 1]} : vector<16x384xf32> to vector<16x128xf32>
    %591 = vector.extract_strided_slice %573 {offsets = [0, 256], sizes = [16, 128], strides = [1, 1]} : vector<16x384xf32> to vector<16x128xf32>
    %592 = arith.addf %591, %21 : vector<16x128xf32>
    %593 = arith.mulf %581, %592 : vector<16x128xf32>
    %594 = arith.addf %590, %593 : vector<16x128xf32>
    %595 = math.tanh %594 : vector<16x128xf32>
    %cst_195 = arith.constant 1.000000e+00 : f32
    %596 = vector.broadcast %cst_195 : f32 to vector<16x128xf32>
    %597 = arith.subf %596, %589 : vector<16x128xf32>
    %598 = arith.mulf %597, %595 : vector<16x128xf32>
    %599 = arith.mulf %589, %560 : vector<16x128xf32>
    %600 = arith.addf %598, %599 : vector<16x128xf32>
    %601 = arith.truncf %600 : vector<16x128xf32> to vector<16x128xbf16>
    %c7 = arith.constant 7 : index
    %c0_196 = arith.constant 0 : index
    %c0_197 = arith.constant 0 : index
    %602 = vector.load %arg10[%c7, %c0_196, %c0_197] : memref<8x16x128xbf16, #tpu.memory_space<vmem>>, vector<1x16x128xbf16>
    %603 = vector.shape_cast %602 : vector<1x16x128xbf16> to vector<16x128xbf16>
    %604 = vector.shape_cast %601 : vector<16x128xbf16> to vector<1x16x128xbf16>
    tpu.vector_store %arg10[%c7, %c0_196, %c0_197], %604 {strides = array<i32>} : memref<8x16x128xbf16, #tpu.memory_space<vmem>>, vector<1x16x128xbf16>,
    %c1_198 = arith.constant 1 : index
    %c0_199 = arith.constant 0 : index
    %c0_200 = arith.constant 0 : index
    %605 = vector.load %arg9[%c1_198, %c0_199, %c0_200] : memref<2x16x128xf32, #tpu.memory_space<vmem>>, vector<1x16x128xf32>
    %606 = vector.shape_cast %605 : vector<1x16x128xf32> to vector<16x128xf32>
    %607 = vector.shape_cast %600 : vector<16x128xf32> to vector<1x16x128xf32>
    tpu.vector_store %arg9[%c1_198, %c0_199, %c0_200], %607 {strides = array<i32>} : memref<2x16x128xf32, #tpu.memory_space<vmem>>, vector<1x16x128xf32>,
    %c0_201 = arith.constant 0 : index
    %c0_202 = arith.constant 0 : index
    %c0_203 = arith.constant 0 : index
    %608 = vector.load %arg10[%c0_201, %c0_202, %c0_203] : memref<8x16x128xbf16, #tpu.memory_space<vmem>>, vector<8x16x128xbf16>
    %609 = vector.shape_cast %608 : vector<8x16x128xbf16> to vector<128x128xbf16>
    %c0_204 = arith.constant 0 : index
    %c0_205 = arith.constant 0 : index
    %610 = vector.load %arg6[%c0_204, %c0_205] : memref<128x128xbf16, #tpu.memory_space<vmem>>, vector<128x128xbf16>
    %cst_206 = arith.constant dense<0.000000e+00> : vector<128x128xf32>
    %611 = tpu.matmul %609, %610, %cst_206 {dimension_numbers = #tpu.dot_dimension_numbers<[1], [0], [0], [1], [0, 0, 1, 1], [], []>} : vector<128x128xbf16>, vector<128x128xbf16>, vector<128x128xf32> -> vector<128x128xf32>
    %c0_207 = arith.constant 0 : index
    %c0_208 = arith.constant 0 : index
    %612 = vector.load %arg7[%c0_207, %c0_208] : memref<1x128xf32, #tpu.memory_space<vmem>>, vector<1x128xf32>
    %613 = vector.broadcast %612 : vector<1x128xf32> to vector<128x128xf32>
    %614 = arith.addf %611, %613 : vector<128x128xf32>
    %c0_209 = arith.constant 0 : index
    %c0_210 = arith.constant 0 : index
    %615 = vector.load %arg8[%c0_209, %c0_210] : memref<128x128xf32, #tpu.memory_space<vmem>>, vector<128x128xf32>
    tpu.vector_store %arg8[%c0_209, %c0_210], %614 {strides = array<i32>} : memref<128x128xf32, #tpu.memory_space<vmem>>, vector<128x128xf32>,
    return
  }
}

</mosaic_0001>

<llo_original>
// kernel: tpu_custom_call.1
$region0: #{tpu_custom_call.1}
  #allocation0 [shape = 'u32[]', space=smem, size = 0x4, offset = 0x4, fixed_abs, tag = 'smem constant byte address 0x4 - core index']
  #allocation1 [shape = 'u32[72,128]{1,0:T(1,128)}', space=vmem, size = 0x9000, scoped, tag = 'internal scratch']
  #allocation2 [shape = 'bf16[8,16,128]{2,1,0:T(8,128)(2,1)}', space=vmem, size = 0x8000, scoped, tag = 'scratch operand']
  #allocation3 [shape = 'f32[128,384]{1,0:T(8,128)}', space=vmem, size = 0x30000, scoped, tag = 'scratch operand']
  %s0 = inlined_call_operand.hbm [shape: bf16[8,16,128], index: 0, kind: input, shape index: {}]
  %s1 = inlined_call_operand.hbm [shape: f32[2,16,128], index: 1, kind: input, shape index: {}]
  %s2 = inlined_call_operand.hbm [shape: bf16[2,128,384], index: 2, kind: input, shape index: {}]
  %s3 = inlined_call_operand.hbm [shape: bf16[2,128,384], index: 3, kind: input, shape index: {}]
  %s4 = inlined_call_operand.hbm [shape: f32[2,1,384], index: 4, kind: input, shape index: {}]
  %s5 = inlined_call_operand.vmem [shape: f32[2,1,128], index: 5, kind: input, shape index: {}]
  %s6 = inlined_call_operand.hbm [shape: bf16[128,128], index: 6, kind: input, shape index: {}]
  %s7 = inlined_call_operand.vmem [shape: f32[1,128], index: 7, kind: input, shape index: {}]
  %s8 = inlined_call_operand.hbm [shape: f32[128,128], index: 8, kind: output, shape index: {0}]
  %s9 = inlined_call_operand.hbm [shape: f32[2,16,128], index: 9, kind: output, shape index: {1}]
  %10 = xla_tuple %s8, %s9
  %s11 = sld [smem:[#allocation0]]
  $region74: #{tpu_custom_call.1} parent=0
    _
  %s13 = ssub.s32 1, %s11
  %s14 = scalar_select 0, %s13, %s11
  $region1: #{tpu_custom_call.1} parent=0
    #allocation4 [shape = 'u8[32768]{0}', space=vmem, size = 0x8000, scoped, tag = 'input window, operand 0, single buffered']
    #allocation5 [shape = 's32[1]{0}', space=sflag, size = 0x4, scoped, tag = 'scoped memory for tpu_custom_call.1']
    #allocation6 [shape = 's32[1]{0}', space=sflag, size = 0x4, scoped, tag = 'scoped memory for tpu_custom_call.1']
    #allocation7 [shape = 'u8[16384]{0}', space=vmem, size = 0x4000, scoped, tag = 'input window, operand 1, single buffered']
    #allocation8 [shape = 's32[1]{0}', space=sflag, size = 0x4, scoped, tag = 'scoped memory for tpu_custom_call.1']
    #allocation9 [shape = 'u8[196608]{0}', space=vmem, size = 0x30000, scoped, tag = 'input window, operand 2, single buffered']
    #allocation10 [shape = 'u8[196608]{0}', space=vmem, size = 0x30000, scoped, tag = 'input window, operand 3, single buffered']
    #allocation11 [shape = 's32[1]{0}', space=sflag, size = 0x4, scoped, tag = 'scoped memory for tpu_custom_call.1']
    #allocation12 [shape = 'u8[3072]{0}', space=vmem, size = 0xc00, scoped, tag = 'input window, operand 4, single buffered']
    #allocation13 [shape = 'u8[32768]{0}', space=vmem, size = 0x8000, scoped, tag = 'input window, operand 6, single buffered']
    #allocation14 [shape = 's32[1]{0}', space=sflag, size = 0x4, scoped, tag = 'scoped memory for tpu_custom_call.1']
    #allocation15 [shape = 'u8[65536]{0}', space=vmem, size = 0x10000, scoped, tag = 'output window, operand 0, single buffered']
    #allocation16 [shape = 'u8[16384]{0}', space=vmem, size = 0x4000, scoped, tag = 'output window, operand 1, single buffered']
    #allocation17 [shape = 's32[1]{0}', space=sflag, size = 0x4, scoped, tag = 'scoped memory for tpu_custom_call.1']
    %15 = vsyncpa [#allocation5], 0
    %16 = vsyncpa [#allocation8], 0
    %17 = vsyncpa [#allocation11], 0
    %18 = vsyncpa [#allocation14], 0
    %19 = vsyncpa [#allocation6], 0
    %20 = vsyncpa [#allocation17], 0
    // Predicated region
    $region2: #{tpu_custom_call.1} parent=1 // pred_check
      _
    $region3: #{tpu_custom_call.1} parent=1 // pred_check_branch
      %22 = sbr.rel (0) target = $region5
    $region4: #{tpu_custom_call.1} parent=1 // pred_region
      %24 = vsyncadd [#allocation5], 0
      %s25 = sshll.u32 %s0, 4
      %s26 = int_to_ptr.hbm [resolvable:$true] %s25
      %s27 = sshll.u32 [#allocation4], 4
      %s28 = int_to_ptr.vmem [resolvable:$true] %s27
      %33 = dma.hbm_to_vmem [thread:$0]  %s26, 1024, %s28, [#allocation5], 64, 64, 4
    $region5: #{tpu_custom_call.1} parent=1 // pred_fallthru
      _
    // Predicated region
    $region6: #{tpu_custom_call.1} parent=1 // pred_check
      _
    $region7: #{tpu_custom_call.1} parent=1 // pred_check_branch
      %35 = sbr.rel (0) target = $region9
    $region8: #{tpu_custom_call.1} parent=1 // pred_region
      %37 = vsyncadd [#allocation8], 0
      %s38 = sshll.u32 %s1, 4
      %s39 = int_to_ptr.hbm [resolvable:$true] %s38
      %s40 = sshll.u32 [#allocation7], 4
      %s41 = int_to_ptr.vmem [resolvable:$true] %s40
      %46 = dma.hbm_to_vmem [thread:$0]  %s39, 512, %s41, [#allocation8], 128, 128, 8
    $region9: #{tpu_custom_call.1} parent=1 // pred_fallthru
      _
    // Predicated region
    $region10: #{tpu_custom_call.1} parent=1 // pred_check
      _
    $region11: #{tpu_custom_call.1} parent=1 // pred_check_branch
      %48 = sbr.rel (0) target = $region13
    $region12: #{tpu_custom_call.1} parent=1 // pred_region
      %50 = vsyncadd [#allocation8], 0
      %s51 = sshll.u32 %s2, 4
      %s52 = int_to_ptr.hbm [resolvable:$true] %s51
      %s53 = sshll.u32 [#allocation9], 4
      %s54 = int_to_ptr.vmem [resolvable:$true] %s53
      %59 = dma.hbm_to_vmem [thread:$0]  %s52, 6144, %s54, [#allocation8], 192, 192, 12
    $region13: #{tpu_custom_call.1} parent=1 // pred_fallthru
      _
    // Predicated region
    $region14: #{tpu_custom_call.1} parent=1 // pred_check
      _
    $region15: #{tpu_custom_call.1} parent=1 // pred_check_branch
      %61 = sbr.rel (0) target = $region17
    $region16: #{tpu_custom_call.1} parent=1 // pred_region
      %63 = vsyncadd [#allocation11], 0
      %s64 = sshll.u32 %s3, 4
      %s65 = int_to_ptr.hbm [resolvable:$true] %s64
      %s66 = sshll.u32 [#allocation10], 4
      %s67 = int_to_ptr.vmem [resolvable:$true] %s66
      %72 = dma.hbm_to_vmem [thread:$0]  %s65, 6144, %s67, [#allocation11], 192, 192, 12
    $region17: #{tpu_custom_call.1} parent=1 // pred_fallthru
      _
    // Predicated region
    $region18: #{tpu_custom_call.1} parent=1 // pred_check
      _
    $region19: #{tpu_custom_call.1} parent=1 // pred_check_branch
      %74 = sbr.rel (0) target = $region21
    $region20: #{tpu_custom_call.1} parent=1 // pred_region
      %76 = vsyncadd [#allocation11], 0
      %s77 = sshll.u32 %s4, 4
      %s78 = int_to_ptr.hbm [resolvable:$true] %s77
      %s79 = sshll.u32 [#allocation12], 4
      %s80 = int_to_ptr.vmem [resolvable:$true] %s79
      %85 = dma.hbm_to_vmem [thread:$0]  %s78, 96, %s80, [#allocation11], 48, 48, 3
    $region21: #{tpu_custom_call.1} parent=1 // pred_fallthru
      _
    // Predicated region
    $region22: #{tpu_custom_call.1} parent=1 // pred_check
      _
    $region23: #{tpu_custom_call.1} parent=1 // pred_check_branch
      %87 = sbr.rel (0) target = $region25
    $region24: #{tpu_custom_call.1} parent=1 // pred_region
      _
    $region25: #{tpu_custom_call.1} parent=1 // pred_fallthru
      _
    // Predicated region
    $region26: #{tpu_custom_call.1} parent=1 // pred_check
      _
    $region27: #{tpu_custom_call.1} parent=1 // pred_check_branch
      %89 = sbr.rel (0) target = $region29
    $region28: #{tpu_custom_call.1} parent=1 // pred_region
      %91 = vsyncadd [#allocation14], 0
      %s92 = sshll.u32 %s6, 4
      %s93 = int_to_ptr.hbm [resolvable:$true] %s92
      %s94 = sshll.u32 [#allocation13], 4
      %s95 = int_to_ptr.vmem [resolvable:$true] %s94
      %100 = dma.hbm_to_vmem [thread:$0]  %s93, 1024, %s95, [#allocation14], 64, 64, 4
    $region29: #{tpu_custom_call.1} parent=1 // pred_fallthru
      _
    // Predicated region
    $region30: #{tpu_custom_call.1} parent=1 // pred_check
      _
    $region31: #{tpu_custom_call.1} parent=1 // pred_check_branch
      %102 = sbr.rel (0) target = $region33
    $region32: #{tpu_custom_call.1} parent=1 // pred_region
      _
    $region33: #{tpu_custom_call.1} parent=1 // pred_fallthru
      _
    // Predicated region
    $region34: #{tpu_custom_call.1} parent=1 // pred_check
      _
    $region35: #{tpu_custom_call.1} parent=1 // pred_check_branch
      %104 = sbr.rel (0) target = $region37
    $region36: #{tpu_custom_call.1} parent=1 // pred_region
      %106 = dma.done [#allocation5], 1024
    $region37: #{tpu_custom_call.1} parent=1 // pred_fallthru
      _
    // Predicated region
    $region38: #{tpu_custom_call.1} parent=1 // pred_check
      _
    $region39: #{tpu_custom_call.1} parent=1 // pred_check_branch
      %108 = sbr.rel (0) target = $region41
    $region40: #{tpu_custom_call.1} parent=1 // pred_region
      %110 = dma.done [#allocation8], 512
    $region41: #{tpu_custom_call.1} parent=1 // pred_fallthru
      _
    // Predicated region
    $region42: #{tpu_custom_call.1} parent=1 // pred_check
      _
    $region43: #{tpu_custom_call.1} parent=1 // pred_check_branch
      %112 = sbr.rel (0) target = $region45
    $region44: #{tpu_custom_call.1} parent=1 // pred_region
      %114 = dma.done [#allocation8], 6144
    $region45: #{tpu_custom_call.1} parent=1 // pred_fallthru
      _
    // Predicated region
    $region46: #{tpu_custom_call.1} parent=1 // pred_check
      _
    $region47: #{tpu_custom_call.1} parent=1 // pred_check_branch
      %116 = sbr.rel (0) target = $region49
    $region48: #{tpu_custom_call.1} parent=1 // pred_region
      %118 = dma.done [#allocation11], 6144
    $region49: #{tpu_custom_call.1} parent=1 // pred_fallthru
      _
    // Predicated region
    $region50: #{tpu_custom_call.1} parent=1 // pred_check
      _
    $region51: #{tpu_custom_call.1} parent=1 // pred_check_branch
      %120 = sbr.rel (0) target = $region53
    $region52: #{tpu_custom_call.1} parent=1 // pred_region
      %122 = dma.done [#allocation11], 96
    $region53: #{tpu_custom_call.1} parent=1 // pred_fallthru
      _
    // Predicated region
    $region54: #{tpu_custom_call.1} parent=1 // pred_check
      _
    $region55: #{tpu_custom_call.1} parent=1 // pred_check_branch
      %124 = sbr.rel (0) target = $region57
    $region56: #{tpu_custom_call.1} parent=1 // pred_region
      %126 = dma.done [#allocation14], 1024
    $region57: #{tpu_custom_call.1} parent=1 // pred_fallthru
      _
    %v127 = vld [vmem:[#allocation4] sm:$0xf]
    %v128 = vld [vmem:[#allocation4 + $0x4] sm:$0xf]
    %v129 = vld [vmem:[#allocation4 + $0x8] sm:$0xf]
    %v130 = vld [vmem:[#allocation4 + $0xc] sm:$0xf]
    %v131 = vld [vmem:[#allocation4 + $0x10] sm:$0xf]
    %v132 = vld [vmem:[#allocation4 + $0x14] sm:$0xf]
    %v133 = vld [vmem:[#allocation4 + $0x18] sm:$0xf]
    %v134 = vld [vmem:[#allocation4 + $0x1c] sm:$0xf]
    %v135 = vld [vmem:[#allocation4 + $0x20] sm:$0xf]
    %v136 = vld [vmem:[#allocation4 + $0x24] sm:$0xf]
    %v137 = vld [vmem:[#allocation4 + $0x28] sm:$0xf]
    %v138 = vld [vmem:[#allocation4 + $0x2c] sm:$0xf]
    %v139 = vld [vmem:[#allocation4 + $0x30] sm:$0xf]
    %v140 = vld [vmem:[#allocation4 + $0x34] sm:$0xf]
    %v141 = vld [vmem:[#allocation4 + $0x38] sm:$0xf]
    %v142 = vld [vmem:[#allocation4 + $0x3c] sm:$0xf]
    %v143 = vld [vmem:[#allocation9] sm:$0xff]
    %v144 = vld [vmem:[#allocation9 + $0x8] sm:$0xf]
    %v145 = vld [vmem:[#allocation9 + $0xc] sm:$0xff]
    %v146 = vld [vmem:[#allocation9 + $0x14] sm:$0xf]
    %v147 = vld [vmem:[#allocation9 + $0x18] sm:$0xff]
    %v148 = vld [vmem:[#allocation9 + $0x20] sm:$0xf]
    %v149 = vld [vmem:[#allocation9 + $0x24] sm:$0xff]
    %v150 = vld [vmem:[#allocation9 + $0x2c] sm:$0xf]
    %v151 = vld [vmem:[#allocation9 + $0x30] sm:$0xff]
    %v152 = vld [vmem:[#allocation9 + $0x38] sm:$0xf]
    %v153 = vld [vmem:[#allocation9 + $0x3c] sm:$0xff]
    %v154 = vld [vmem:[#allocation9 + $0x44] sm:$0xf]
    %v155 = vld [vmem:[#allocation9 + $0x48] sm:$0xff]
    %v156 = vld [vmem:[#allocation9 + $0x50] sm:$0xf]
    %v157 = vld [vmem:[#allocation9 + $0x54] sm:$0xff]
    %v158 = vld [vmem:[#allocation9 + $0x5c] sm:$0xf]
    %v159 = vld [vmem:[#allocation9 + $0x60] sm:$0xff]
    %v160 = vld [vmem:[#allocation9 + $0x68] sm:$0xf]
    %v161 = vld [vmem:[#allocation9 + $0x6c] sm:$0xff]
    %v162 = vld [vmem:[#allocation9 + $0x74] sm:$0xf]
    %v163 = vld [vmem:[#allocation9 + $0x78] sm:$0xff]
    %v164 = vld [vmem:[#allocation9 + $0x80] sm:$0xf]
    %v165 = vld [vmem:[#allocation9 + $0x84] sm:$0xff]
    %v166 = vld [vmem:[#allocation9 + $0x8c] sm:$0xf]
    %v167 = vld [vmem:[#allocation9 + $0x90] sm:$0xff]
    %v168 = vld [vmem:[#allocation9 + $0x98] sm:$0xf]
    %v169 = vld [vmem:[#allocation9 + $0x9c] sm:$0xff]
    %v170 = vld [vmem:[#allocation9 + $0xa4] sm:$0xf]
    %v171 = vld [vmem:[#allocation9 + $0xa8] sm:$0xff]
    %v172 = vld [vmem:[#allocation9 + $0xb0] sm:$0xf]
    %v173 = vld [vmem:[#allocation9 + $0xb4] sm:$0xff]
    %v174 = vld [vmem:[#allocation9 + $0xbc] sm:$0xf]
    %v175 = vld [vmem:[#allocation12] sm:$0x7]
    %v177 = vperm.slane %v175, 0
    %v178 = vperm.slane %v175, 1
    %v179 = vperm.slane %v175, 2
    %v199 = vunpack.c.l.b16 %v127
    %v200 = vunpack.c.l.b16 %v128
    %v201 = vunpack.c.l.b16 %v129
    %v202 = vunpack.c.l.b16 %v130
    %v203 = vunpack.c.l.b16 %v131
    %v204 = vunpack.c.l.b16 %v132
    %v205 = vunpack.c.l.b16 %v133
    %v206 = vunpack.c.l.b16 %v134
    %v207 = vunpack.c.l.b16 %v135
    %v208 = vunpack.c.l.b16 %v136
    %v209 = vunpack.c.l.b16 %v137
    %v210 = vunpack.c.l.b16 %v138
    %v211 = vunpack.c.l.b16 %v139
    %v212 = vunpack.c.l.b16 %v140
    %v213 = vunpack.c.l.b16 %v141
    %v214 = vunpack.c.l.b16 %v142
    %v215 = vpack.c.b16 %v200, %v199
    %v216 = vpack.c.b16 %v202, %v201
    %v217 = vpack.c.b16 %v204, %v203
    %v218 = vpack.c.b16 %v206, %v205
    %v219 = vpack.c.b16 %v208, %v207
    %v220 = vpack.c.b16 %v210, %v209
    %v221 = vpack.c.b16 %v212, %v211
    %v222 = vpack.c.b16 %v214, %v213
    %v263 = vunpack.c.l.b16 %v143
    %v264 = vunpack.c.h.b16 %v143
    %v265 = vunpack.c.l.b16 %v144
    %v266 = vunpack.c.l.b16 %v145
    %v267 = vunpack.c.h.b16 %v145
    %v268 = vunpack.c.l.b16 %v146
    %v269 = vunpack.c.l.b16 %v147
    %v270 = vunpack.c.h.b16 %v147
    %v271 = vunpack.c.l.b16 %v148
    %v272 = vunpack.c.l.b16 %v149
    %v273 = vunpack.c.h.b16 %v149
    %v274 = vunpack.c.l.b16 %v150
    %v275 = vunpack.c.l.b16 %v151
    %v276 = vunpack.c.h.b16 %v151
    %v277 = vunpack.c.l.b16 %v152
    %v278 = vunpack.c.l.b16 %v153
    %v279 = vunpack.c.h.b16 %v153
    %v280 = vunpack.c.l.b16 %v154
    %v281 = vunpack.c.l.b16 %v155
    %v282 = vunpack.c.h.b16 %v155
    %v283 = vunpack.c.l.b16 %v156
    %v284 = vunpack.c.l.b16 %v157
    %v285 = vunpack.c.h.b16 %v157
    %v286 = vunpack.c.l.b16 %v158
    %v287 = vunpack.c.l.b16 %v159
    %v288 = vunpack.c.h.b16 %v159
    %v289 = vunpack.c.l.b16 %v160
    %v290 = vunpack.c.l.b16 %v161
    %v291 = vunpack.c.h.b16 %v161
    %v292 = vunpack.c.l.b16 %v162
    %v293 = vunpack.c.l.b16 %v163
    %v294 = vunpack.c.h.b16 %v163
    %v295 = vunpack.c.l.b16 %v164
    %v296 = vunpack.c.l.b16 %v165
    %v297 = vunpack.c.h.b16 %v165
    %v298 = vunpack.c.l.b16 %v166
    %v299 = vunpack.c.l.b16 %v167
    %v300 = vunpack.c.h.b16 %v167
    %v301 = vunpack.c.l.b16 %v168
    %v302 = vunpack.c.l.b16 %v169
    %v303 = vunpack.c.h.b16 %v169
    %v304 = vunpack.c.l.b16 %v170
    %v305 = vunpack.c.l.b16 %v171
    %v306 = vunpack.c.h.b16 %v171
    %v307 = vunpack.c.l.b16 %v172
    %v308 = vunpack.c.l.b16 %v173
    %v309 = vunpack.c.h.b16 %v173
    %v310 = vunpack.c.l.b16 %v174
    %v311 = vpack.c.b16 %v266, %v263
    %v312 = vpack.c.b16 %v267, %v264
    %v313 = vpack.c.b16 %v268, %v265
    %v314 = vpack.c.b16 %v272, %v269
    %v315 = vpack.c.b16 %v273, %v270
    %v316 = vpack.c.b16 %v274, %v271
    %v317 = vpack.c.b16 %v278, %v275
    %v318 = vpack.c.b16 %v279, %v276
    %v319 = vpack.c.b16 %v280, %v277
    %v320 = vpack.c.b16 %v284, %v281
    %v321 = vpack.c.b16 %v285, %v282
    %v322 = vpack.c.b16 %v286, %v283
    %v323 = vpack.c.b16 %v290, %v287
    %v324 = vpack.c.b16 %v291, %v288
    %v325 = vpack.c.b16 %v292, %v289
    %v326 = vpack.c.b16 %v296, %v293
    %v327 = vpack.c.b16 %v297, %v294
    %v328 = vpack.c.b16 %v298, %v295
    %v329 = vpack.c.b16 %v302, %v299
    %v330 = vpack.c.b16 %v303, %v300
    %v331 = vpack.c.b16 %v304, %v301
    %v332 = vpack.c.b16 %v308, %v305
    %v333 = vpack.c.b16 %v309, %v306
    %v334 = vpack.c.b16 %v310, %v307
    %359 = vmatpush.bf16.msra.mxu0 %v332
    %360 = vmatpush.bf16.msra.mxu0 %v329
    %361 = vmatpush.bf16.msra.mxu0 %v326
    %362 = vmatpush.bf16.msra.mxu0 %v323
    %363 = vmatpush.bf16.msra.mxu0 %v320
    %364 = vmatpush.bf16.msra.mxu0 %v317
    %365 = vmatpush.bf16.msra.mxu0 %v314
    %366 = vmatpush.bf16.msra.mxu0 %v311
    %367 = vmatmul.bf16.gmra.mxu0 %v215
    %v368 = vpop.f32.mrf.mxu0
    %v369 = vadd.f32 %v177, %v368
    %v370 = vpop.f32.mrf.mxu0
    %v371 = vadd.f32 %v177, %v370
    %372 = vmatmul.bf16.gmra.mxu0 %v216
    %v373 = vpop.f32.mrf.mxu0
    %v374 = vadd.f32 %v177, %v373
    %v375 = vpop.f32.mrf.mxu0
    %v376 = vadd.f32 %v177, %v375
    %377 = vmatmul.bf16.gmra.mxu0 %v217
    %v378 = vpop.f32.mrf.mxu0
    %v379 = vadd.f32 %v177, %v378
    %v380 = vpop.f32.mrf.mxu0
    %v381 = vadd.f32 %v177, %v380
    %382 = vmatmul.bf16.gmra.mxu0 %v218
    %v383 = vpop.f32.mrf.mxu0
    %v384 = vadd.f32 %v177, %v383
    %v385 = vpop.f32.mrf.mxu0
    %v386 = vadd.f32 %v177, %v385
    %387 = vmatmul.bf16.gmra.mxu0 %v219
    %v388 = vpop.f32.mrf.mxu0
    %v389 = vadd.f32 %v177, %v388
    %v390 = vpop.f32.mrf.mxu0
    %v391 = vadd.f32 %v177, %v390
    %392 = vmatmul.bf16.gmra.mxu0 %v220
    %v393 = vpop.f32.mrf.mxu0
    %v394 = vadd.f32 %v177, %v393
    %v395 = vpop.f32.mrf.mxu0
    %v396 = vadd.f32 %v177, %v395
    %397 = vmatmul.bf16.gmra.mxu0 %v221
    %v398 = vpop.f32.mrf.mxu0
    %v399 = vadd.f32 %v177, %v398
    %v400 = vpop.f32.mrf.mxu0
    %v401 = vadd.f32 %v177, %v400
    %402 = vmatmul.bf16.gmra.mxu0 %v222
    %v403 = vpop.f32.mrf.mxu0
    %v404 = vadd.f32 %v177, %v403
    %v405 = vpop.f32.mrf.mxu0
    %v406 = vadd.f32 %v177, %v405
    %407 = vdwg.mxu0
    %408 = vmatpush.bf16.msra.mxu0 %v333
    %409 = vmatpush.bf16.msra.mxu0 %v330
    %410 = vmatpush.bf16.msra.mxu0 %v327
    %411 = vmatpush.bf16.msra.mxu0 %v324
    %412 = vmatpush.bf16.msra.mxu0 %v321
    %413 = vmatpush.bf16.msra.mxu0 %v318
    %414 = vmatpush.bf16.msra.mxu0 %v315
    %415 = vmatpush.bf16.msra.mxu0 %v312
    %416 = vmatmul.bf16.gmra.mxu0 %v215
    %v417 = vpop.f32.mrf.mxu0
    %v418 = vadd.f32 %v178, %v417
    %v419 = vpop.f32.mrf.mxu0
    %v420 = vadd.f32 %v178, %v419
    %421 = vmatmul.bf16.gmra.mxu0 %v216
    %v422 = vpop.f32.mrf.mxu0
    %v423 = vadd.f32 %v178, %v422
    %v424 = vpop.f32.mrf.mxu0
    %v425 = vadd.f32 %v178, %v424
    %426 = vmatmul.bf16.gmra.mxu0 %v217
    %v427 = vpop.f32.mrf.mxu0
    %v428 = vadd.f32 %v178, %v427
    %v429 = vpop.f32.mrf.mxu0
    %v430 = vadd.f32 %v178, %v429
    %431 = vmatmul.bf16.gmra.mxu0 %v218
    %v432 = vpop.f32.mrf.mxu0
    %v433 = vadd.f32 %v178, %v432
    %v434 = vpop.f32.mrf.mxu0
    %v435 = vadd.f32 %v178, %v434
    %436 = vmatmul.bf16.gmra.mxu0 %v219
    %v437 = vpop.f32.mrf.mxu0
    %v438 = vadd.f32 %v178, %v437
    %v439 = vpop.f32.mrf.mxu0
    %v440 = vadd.f32 %v178, %v439
    %441 = vmatmul.bf16.gmra.mxu0 %v220
    %v442 = vpop.f32.mrf.mxu0
    %v443 = vadd.f32 %v178, %v442
    %v444 = vpop.f32.mrf.mxu0
    %v445 = vadd.f32 %v178, %v444
    %446 = vmatmul.bf16.gmra.mxu0 %v221
    %v447 = vpop.f32.mrf.mxu0
    %v448 = vadd.f32 %v178, %v447
    %v449 = vpop.f32.mrf.mxu0
    %v450 = vadd.f32 %v178, %v449
    %451 = vmatmul.bf16.gmra.mxu0 %v222
    %v452 = vpop.f32.mrf.mxu0
    %v453 = vadd.f32 %v178, %v452
    %v454 = vpop.f32.mrf.mxu0
    %v455 = vadd.f32 %v178, %v454
    %456 = vdwg.mxu0
    %457 = vmatpush.bf16.msra.mxu0 %v334
    %458 = vmatpush.bf16.msra.mxu0 %v331
    %459 = vmatpush.bf16.msra.mxu0 %v328
    %460 = vmatpush.bf16.msra.mxu0 %v325
    %461 = vmatpush.bf16.msra.mxu0 %v322
    %462 = vmatpush.bf16.msra.mxu0 %v319
    %463 = vmatpush.bf16.msra.mxu0 %v316
    %464 = vmatpush.bf16.msra.mxu0 %v313
    %465 = vmatmul.bf16.gmra.mxu0 %v215
    %v466 = vpop.f32.mrf.mxu0
    %v467 = vadd.f32 %v179, %v466
    %v468 = vpop.f32.mrf.mxu0
    %v469 = vadd.f32 %v179, %v468
    %470 = vmatmul.bf16.gmra.mxu0 %v216
    %v471 = vpop.f32.mrf.mxu0
    %v472 = vadd.f32 %v179, %v471
    %v473 = vpop.f32.mrf.mxu0
    %v474 = vadd.f32 %v179, %v473
    %475 = vmatmul.bf16.gmra.mxu0 %v217
    %v476 = vpop.f32.mrf.mxu0
    %v477 = vadd.f32 %v179, %v476
    %v478 = vpop.f32.mrf.mxu0
    %v479 = vadd.f32 %v179, %v478
    %480 = vmatmul.bf16.gmra.mxu0 %v218
    %v481 = vpop.f32.mrf.mxu0
    %v482 = vadd.f32 %v179, %v481
    %v483 = vpop.f32.mrf.mxu0
    %v484 = vadd.f32 %v179, %v483
    %485 = vmatmul.bf16.gmra.mxu0 %v219
    %v486 = vpop.f32.mrf.mxu0
    %v487 = vadd.f32 %v179, %v486
    %v488 = vpop.f32.mrf.mxu0
    %v489 = vadd.f32 %v179, %v488
    %490 = vmatmul.bf16.gmra.mxu0 %v220
    %v491 = vpop.f32.mrf.mxu0
    %v492 = vadd.f32 %v179, %v491
    %v493 = vpop.f32.mrf.mxu0
    %v494 = vadd.f32 %v179, %v493
    %495 = vmatmul.bf16.gmra.mxu0 %v221
    %v496 = vpop.f32.mrf.mxu0
    %v497 = vadd.f32 %v179, %v496
    %v498 = vpop.f32.mrf.mxu0
    %v499 = vadd.f32 %v179, %v498
    %500 = vmatmul.bf16.gmra.mxu0 %v222
    %v501 = vpop.f32.mrf.mxu0
    %v502 = vadd.f32 %v179, %v501
    %v503 = vpop.f32.mrf.mxu0
    %v504 = vadd.f32 %v179, %v503
    %505 = vdwg.mxu0
    %506 = vst [vmem:[#allocation3] sm:$0xff] %v369
    %507 = vst [vmem:[#allocation3 + $0x8] sm:$0xff] %v418
    %508 = vst [vmem:[#allocation3 + $0x10] sm:$0xff] %v467
    %509 = vst [vmem:[#allocation3 + $0x18] sm:$0xff] %v371
    %510 = vst [vmem:[#allocation3 + $0x20] sm:$0xff] %v420
    %511 = vst [vmem:[#allocation3 + $0x28] sm:$0xff] %v469
    %512 = vst [vmem:[#allocation3 + $0x30] sm:$0xff] %v374
    %513 = vst [vmem:[#allocation3 + $0x38] sm:$0xff] %v423
    %514 = vst [vmem:[#allocation3 + $0x40] sm:$0xff] %v472
    %515 = vst [vmem:[#allocation3 + $0x48] sm:$0xff] %v376
    %516 = vst [vmem:[#allocation3 + $0x50] sm:$0xff] %v425
    %517 = vst [vmem:[#allocation3 + $0x58] sm:$0xff] %v474
    %518 = vst [vmem:[#allocation3 + $0x60] sm:$0xff] %v379
    %519 = vst [vmem:[#allocation3 + $0x68] sm:$0xff] %v428
    %520 = vst [vmem:[#allocation3 + $0x70] sm:$0xff] %v477
    %521 = vst [vmem:[#allocation3 + $0x78] sm:$0xff] %v381
    %522 = vst [vmem:[#allocation3 + $0x80] sm:$0xff] %v430
    %523 = vst [vmem:[#allocation3 + $0x88] sm:$0xff] %v479
    %524 = vst [vmem:[#allocation3 + $0x90] sm:$0xff] %v384
    %525 = vst [vmem:[#allocation3 + $0x98] sm:$0xff] %v433
    %526 = vst [vmem:[#allocation3 + $0xa0] sm:$0xff] %v482
    %527 = vst [vmem:[#allocation3 + $0xa8] sm:$0xff] %v386
    %528 = vst [vmem:[#allocation3 + $0xb0] sm:$0xff] %v435
    %529 = vst [vmem:[#allocation3 + $0xb8] sm:$0xff] %v484
    %530 = vst [vmem:[#allocation3 + $0xc0] sm:$0xff] %v389
    %531 = vst [vmem:[#allocation3 + $0xc8] sm:$0xff] %v438
    %532 = vst [vmem:[#allocation3 + $0xd0] sm:$0xff] %v487
    %533 = vst [vmem:[#allocation3 + $0xd8] sm:$0xff] %v391
    %534 = vst [vmem:[#allocation3 + $0xe0] sm:$0xff] %v440
    %535 = vst [vmem:[#allocation3 + $0xe8] sm:$0xff] %v489
    %536 = vst [vmem:[#allocation3 + $0xf0] sm:$0xff] %v394
    %537 = vst [vmem:[#allocation3 + $0xf8] sm:$0xff] %v443
    %538 = vst [vmem:[#allocation3 + $0x100] sm:$0xff] %v492
    %539 = vst [vmem:[#allocation3 + $0x108] sm:$0xff] %v396
    %540 = vst [vmem:[#allocation3 + $0x110] sm:$0xff] %v445
    %541 = vst [vmem:[#allocation3 + $0x118] sm:$0xff] %v494
    %542 = vst [vmem:[#allocation3 + $0x120] sm:$0xff] %v399
    %543 = vst [vmem:[#allocation3 + $0x128] sm:$0xff] %v448
    %544 = vst [vmem:[#allocation3 + $0x130] sm:$0xff] %v497
    %545 = vst [vmem:[#allocation3 + $0x138] sm:$0xff] %v401
    %546 = vst [vmem:[#allocation3 + $0x140] sm:$0xff] %v450
    %547 = vst [vmem:[#allocation3 + $0x148] sm:$0xff] %v499
    %548 = vst [vmem:[#allocation3 + $0x150] sm:$0xff] %v404
    %549 = vst [vmem:[#allocation3 + $0x158] sm:$0xff] %v453
    %550 = vst [vmem:[#allocation3 + $0x160] sm:$0xff] %v502
    %551 = vst [vmem:[#allocation3 + $0x168] sm:$0xff] %v406
    %552 = vst [vmem:[#allocation3 + $0x170] sm:$0xff] %v455
    %553 = vst [vmem:[#allocation3 + $0x178] sm:$0xff] %v504
    %s554 = scalar_lea.vmem [#allocation12], 3
    %v555 = vld [vmem:[%s554] sm:$0x7]
    %v557 = vperm.slane %v555, 0
    %v558 = vperm.slane %v555, 1
    %v559 = vperm.slane %v555, 2
    %v563 = vld [vmem:[%s5] sm:$0x1]
    %v565 = vperm.slane %v563, 0
    %s567 = scalar_lea.vmem %s5, 1
    %v568 = vld [vmem:[%s567] sm:$0x1]
    %v570 = vperm.slane %v568, 0
    %v572 = vld [vmem:[#allocation7] sm:$0xff]
    %v573 = vld [vmem:[#allocation7 + $0x8] sm:$0xff]
    %s574 = scalar_lea.vmem [#allocation7], 16
    %v575 = vld [vmem:[%s574] sm:$0xff]
    %v576 = vld [vmem:[%s574 + $0x8] sm:$0xff]
    %v577 = vld [vmem:[#allocation3] sm:$0xff]
    %v578 = vld [vmem:[#allocation3 + $0x8] sm:$0xff]
    %v579 = vld [vmem:[#allocation3 + $0x10] sm:$0xff]
    %v580 = vld [vmem:[#allocation3 + $0x18] sm:$0xff]
    %v581 = vld [vmem:[#allocation3 + $0x20] sm:$0xff]
    %v582 = vld [vmem:[#allocation3 + $0x28] sm:$0xff]
    %v583 = vpack.c.bf16 %v573, %v572
    %v584 = vld [vmem:[#allocation10] sm:$0xff]
    %v585 = vld [vmem:[#allocation10 + $0x8] sm:$0xf]
    %v586 = vld [vmem:[#allocation10 + $0xc] sm:$0xff]
    %v587 = vld [vmem:[#allocation10 + $0x14] sm:$0xf]
    %v588 = vld [vmem:[#allocation10 + $0x18] sm:$0xff]
    %v589 = vld [vmem:[#allocation10 + $0x20] sm:$0xf]
    %v590 = vld [vmem:[#allocation10 + $0x24] sm:$0xff]
    %v591 = vld [vmem:[#allocation10 + $0x2c] sm:$0xf]
    %v592 = vld [vmem:[#allocation10 + $0x30] sm:$0xff]
    %v593 = vld [vmem:[#allocation10 + $0x38] sm:$0xf]
    %v594 = vld [vmem:[#allocation10 + $0x3c] sm:$0xff]
    %v595 = vld [vmem:[#allocation10 + $0x44] sm:$0xf]
    %v596 = vld [vmem:[#allocation10 + $0x48] sm:$0xff]
    %v597 = vld [vmem:[#allocation10 + $0x50] sm:$0xf]
    %v598 = vld [vmem:[#allocation10 + $0x54] sm:$0xff]
    %v599 = vld [vmem:[#allocation10 + $0x5c] sm:$0xf]
    %v600 = vld [vmem:[#allocation10 + $0x60] sm:$0xff]
    %v601 = vld [vmem:[#allocation10 + $0x68] sm:$0xf]
    %v602 = vld [vmem:[#allocation10 + $0x6c] sm:$0xff]
    %v603 = vld [vmem:[#allocation10 + $0x74] sm:$0xf]
    %v604 = vld [vmem:[#allocation10 + $0x78] sm:$0xff]
    %v605 = vld [vmem:[#allocation10 + $0x80] sm:$0xf]
    %v606 = vld [vmem:[#allocation10 + $0x84] sm:$0xff]
    %v607 = vld [vmem:[#allocation10 + $0x8c] sm:$0xf]
    %v608 = vld [vmem:[#allocation10 + $0x90] sm:$0xff]
    %v609 = vld [vmem:[#allocation10 + $0x98] sm:$0xf]
    %v610 = vld [vmem:[#allocation10 + $0x9c] sm:$0xff]
    %v611 = vld [vmem:[#allocation10 + $0xa4] sm:$0xf]
    %v612 = vld [vmem:[#allocation10 + $0xa8] sm:$0xff]
    %v613 = vld [vmem:[#allocation10 + $0xb0] sm:$0xf]
    %v614 = vld [vmem:[#allocation10 + $0xb4] sm:$0xff]
    %v615 = vld [vmem:[#allocation10 + $0xbc] sm:$0xf]
    %v648 = vunpack.c.l.b16 %v584
    %v649 = vunpack.c.h.b16 %v584
    %v650 = vunpack.c.l.b16 %v585
    %v651 = vunpack.c.l.b16 %v586
    %v652 = vunpack.c.h.b16 %v586
    %v653 = vunpack.c.l.b16 %v587
    %v654 = vunpack.c.l.b16 %v588
    %v655 = vunpack.c.h.b16 %v588
    %v656 = vunpack.c.l.b16 %v589
    %v657 = vunpack.c.l.b16 %v590
    %v658 = vunpack.c.h.b16 %v590
    %v659 = vunpack.c.l.b16 %v591
    %v660 = vunpack.c.l.b16 %v592
    %v661 = vunpack.c.h.b16 %v592
    %v662 = vunpack.c.l.b16 %v593
    %v663 = vunpack.c.l.b16 %v594
    %v664 = vunpack.c.h.b16 %v594
    %v665 = vunpack.c.l.b16 %v595
    %v666 = vunpack.c.l.b16 %v596
    %v667 = vunpack.c.h.b16 %v596
    %v668 = vunpack.c.l.b16 %v597
    %v669 = vunpack.c.l.b16 %v598
    %v670 = vunpack.c.h.b16 %v598
    %v671 = vunpack.c.l.b16 %v599
    %v672 = vunpack.c.l.b16 %v600
    %v673 = vunpack.c.h.b16 %v600
    %v674 = vunpack.c.l.b16 %v601
    %v675 = vunpack.c.l.b16 %v602
    %v676 = vunpack.c.h.b16 %v602
    %v677 = vunpack.c.l.b16 %v603
    %v678 = vunpack.c.l.b16 %v604
    %v679 = vunpack.c.h.b16 %v604
    %v680 = vunpack.c.l.b16 %v605
    %v681 = vunpack.c.l.b16 %v606
    %v682 = vunpack.c.h.b16 %v606
    %v683 = vunpack.c.l.b16 %v607
    %v684 = vunpack.c.l.b16 %v608
    %v685 = vunpack.c.h.b16 %v608
    %v686 = vunpack.c.l.b16 %v609
    %v687 = vunpack.c.l.b16 %v610
    %v688 = vunpack.c.h.b16 %v610
    %v689 = vunpack.c.l.b16 %v611
    %v690 = vunpack.c.l.b16 %v612
    %v691 = vunpack.c.h.b16 %v612
    %v692 = vunpack.c.l.b16 %v613
    %v693 = vunpack.c.l.b16 %v614
    %v694 = vunpack.c.h.b16 %v614
    %v695 = vunpack.c.l.b16 %v615
    %v696 = vpack.c.b16 %v651, %v648
    %v697 = vpack.c.b16 %v652, %v649
    %v698 = vpack.c.b16 %v653, %v650
    %v699 = vpack.c.b16 %v657, %v654
    %v700 = vpack.c.b16 %v658, %v655
    %v701 = vpack.c.b16 %v659, %v656
    %v702 = vpack.c.b16 %v663, %v660
    %v703 = vpack.c.b16 %v664, %v661
    %v704 = vpack.c.b16 %v665, %v662
    %v705 = vpack.c.b16 %v669, %v666
    %v706 = vpack.c.b16 %v670, %v667
    %v707 = vpack.c.b16 %v671, %v668
    %v708 = vpack.c.b16 %v675, %v672
    %v709 = vpack.c.b16 %v676, %v673
    %v710 = vpack.c.b16 %v677, %v674
    %v711 = vpack.c.b16 %v681, %v678
    %v712 = vpack.c.b16 %v682, %v679
    %v713 = vpack.c.b16 %v683, %v680
    %v714 = vpack.c.b16 %v687, %v684
    %v715 = vpack.c.b16 %v688, %v685
    %v716 = vpack.c.b16 %v689, %v686
    %v717 = vpack.c.b16 %v693, %v690
    %v718 = vpack.c.b16 %v694, %v691
    %v719 = vpack.c.b16 %v695, %v692
    %744 = vmatpush.bf16.msra.mxu0 %v717
    %745 = vmatpush.bf16.msra.mxu0 %v714
    %746 = vmatpush.bf16.msra.mxu0 %v711
    %747 = vmatpush.bf16.msra.mxu0 %v708
    %748 = vmatpush.bf16.msra.mxu0 %v705
    %749 = vmatpush.bf16.msra.mxu0 %v702
    %750 = vmatpush.bf16.msra.mxu0 %v699
    %751 = vmatpush.bf16.msra.mxu0 %v696
    %752 = vmatmul.bf16.gmra.mxu0 %v583
    %v753 = vpop.f32.mrf.mxu0
    %v754 = vadd.f32 0.0, %v753
    %v755 = vpop.f32.mrf.mxu0
    %v756 = vadd.f32 0.0, %v755
    %757 = vdwg.mxu0
    %758 = vmatpush.bf16.msra.mxu0 %v718
    %759 = vmatpush.bf16.msra.mxu0 %v715
    %760 = vmatpush.bf16.msra.mxu0 %v712
    %761 = vmatpush.bf16.msra.mxu0 %v709
    %762 = vmatpush.bf16.msra.mxu0 %v706
    %763 = vmatpush.bf16.msra.mxu0 %v703
    %764 = vmatpush.bf16.msra.mxu0 %v700
    %765 = vmatpush.bf16.msra.mxu0 %v697
    %766 = vmatmul.bf16.gmra.mxu0 %v583
    %v767 = vpop.f32.mrf.mxu0
    %v768 = vadd.f32 0.0, %v767
    %v769 = vpop.f32.mrf.mxu0
    %v770 = vadd.f32 0.0, %v769
    %771 = vdwg.mxu0
    %772 = vmatpush.bf16.msra.mxu0 %v719
    %773 = vmatpush.bf16.msra.mxu0 %v716
    %774 = vmatpush.bf16.msra.mxu0 %v713
    %775 = vmatpush.bf16.msra.mxu0 %v710
    %776 = vmatpush.bf16.msra.mxu0 %v707
    %777 = vmatpush.bf16.msra.mxu0 %v704
    %778 = vmatpush.bf16.msra.mxu0 %v701
    %779 = vmatpush.bf16.msra.mxu0 %v698
    %780 = vmatmul.bf16.gmra.mxu0 %v583
    %v781 = vpop.f32.mrf.mxu0
    %v782 = vadd.f32 0.0, %v781
    %v783 = vpop.f32.mrf.mxu0
    %v784 = vadd.f32 0.0, %v783
    %785 = vdwg.mxu0
    %v786 = vadd.f32 %v577, %v754
    %v787 = vadd.f32 %v580, %v756
    %v788 = vxor.u32 %v786, 2147483648
    %v789 = vxor.u32 %v787, 2147483648
    %v790 = vmul.f32 %v788, 1.442695
    %v791 = vpow.pop %v790
    %v792 = vmul.f32 %v789, 1.442695
    %v793 = vpow.pop %v792
    %v794 = vadd.f32 %v791, 1.0
    %v795 = vadd.f32 %v793, 1.0
    %v796 = vrcp.pop %v794
    %v797 = vmul.f32 %v794, %v796
    %v798 = vsub.f32 1.0, %v797
    %v799 = vmul.f32 %v796, %v798
    %v800 = vadd.f32 %v796, %v799
    %vm801 = vweird.f32 %v794
    %vm802 = vweird.f32 %v796
    %vm803 = vmor %vm801, %vm802
    %v804 = vsel %vm803, %v796, %v800
    %v805 = vand.u32 2147483647, %v794
    %vm806 = vcmp.eq.f32.partialorder %v805, 8.507059e+37
    %v807 = vand.u32 %v794, 2147483648
    %v808 = vor.u32 1.1754944e-38, %v807
    %v809 = vsel %vm806, %v808, %v804
    %v810 = vmul.f32 1.0, %v809
    %v811 = vrcp.pop %v795
    %v812 = vmul.f32 %v795, %v811
    %v813 = vsub.f32 1.0, %v812
    %v814 = vmul.f32 %v811, %v813
    %v815 = vadd.f32 %v811, %v814
    %vm816 = vweird.f32 %v795
    %vm817 = vweird.f32 %v811
    %vm818 = vmor %vm816, %vm817
    %v819 = vsel %vm818, %v811, %v815
    %v820 = vand.u32 2147483647, %v795
    %vm821 = vcmp.eq.f32.partialorder %v820, 8.507059e+37
    %v822 = vand.u32 %v795, 2147483648
    %v823 = vor.u32 1.1754944e-38, %v822
    %v824 = vsel %vm821, %v823, %v819
    %v825 = vmul.f32 1.0, %v824
    %v826 = vadd.f32 %v578, %v768
    %v827 = vadd.f32 %v581, %v770
    %v828 = vxor.u32 %v826, 2147483648
    %v829 = vxor.u32 %v827, 2147483648
    %v830 = vmul.f32 %v828, 1.442695
    %v831 = vpow.pop %v830
    %v832 = vmul.f32 %v829, 1.442695
    %v833 = vpow.pop %v832
    %v834 = vadd.f32 %v831, 1.0
    %v835 = vadd.f32 %v833, 1.0
    %v836 = vrcp.pop %v834
    %v837 = vmul.f32 %v834, %v836
    %v838 = vsub.f32 1.0, %v837
    %v839 = vmul.f32 %v836, %v838
    %v840 = vadd.f32 %v836, %v839
    %vm841 = vweird.f32 %v834
    %vm842 = vweird.f32 %v836
    %vm843 = vmor %vm841, %vm842
    %v844 = vsel %vm843, %v836, %v840
    %v845 = vand.u32 2147483647, %v834
    %vm846 = vcmp.eq.f32.partialorder %v845, 8.507059e+37
    %v847 = vand.u32 %v834, 2147483648
    %v848 = vor.u32 1.1754944e-38, %v847
    %v849 = vsel %vm846, %v848, %v844
    %v850 = vmul.f32 1.0, %v849
    %v851 = vrcp.pop %v835
    %v852 = vmul.f32 %v835, %v851
    %v853 = vsub.f32 1.0, %v852
    %v854 = vmul.f32 %v851, %v853
    %v855 = vadd.f32 %v851, %v854
    %vm856 = vweird.f32 %v835
    %vm857 = vweird.f32 %v851
    %vm858 = vmor %vm856, %vm857
    %v859 = vsel %vm858, %v851, %v855
    %v860 = vand.u32 2147483647, %v835
    %vm861 = vcmp.eq.f32.partialorder %v860, 8.507059e+37
    %v862 = vand.u32 %v835, 2147483648
    %v863 = vor.u32 1.1754944e-38, %v862
    %v864 = vsel %vm861, %v863, %v859
    %v865 = vmul.f32 1.0, %v864
    %v866 = vadd.f32 %v782, %v565
    %v867 = vadd.f32 %v784, %v565
    %v868 = vmul.f32 %v810, %v866
    %v869 = vmul.f32 %v825, %v867
    %v870 = vadd.f32 %v579, %v868
    %v871 = vadd.f32 %v582, %v869
    %v872 = vtanh.pop %v870
    %v873 = vtanh.pop %v871
    %v874 = vsub.f32 1.0, %v850
    %v875 = vsub.f32 1.0, %v865
    %v876 = vmul.f32 %v874, %v872
    %v877 = vmul.f32 %v875, %v873
    %v878 = vmul.f32 %v850, %v572
    %v879 = vmul.f32 %v865, %v573
    %v880 = vadd.f32 %v876, %v878
    %v881 = vadd.f32 %v877, %v879
    %v882 = vld [vmem:[#allocation3 + $0x30] sm:$0xff]
    %v883 = vld [vmem:[#allocation3 + $0x38] sm:$0xff]
    %v884 = vld [vmem:[#allocation3 + $0x40] sm:$0xff]
    %v885 = vld [vmem:[#allocation3 + $0x48] sm:$0xff]
    %v886 = vld [vmem:[#allocation3 + $0x50] sm:$0xff]
    %v887 = vld [vmem:[#allocation3 + $0x58] sm:$0xff]
    %v888 = vpack.c.bf16 %v881, %v880
    %889 = vmatpush.bf16.msra.mxu0 %v717
    %890 = vmatpush.bf16.msra.mxu0 %v714
    %891 = vmatpush.bf16.msra.mxu0 %v711
    %892 = vmatpush.bf16.msra.mxu0 %v708
    %893 = vmatpush.bf16.msra.mxu0 %v705
    %894 = vmatpush.bf16.msra.mxu0 %v702
    %895 = vmatpush.bf16.msra.mxu0 %v699
    %896 = vmatpush.bf16.msra.mxu0 %v696
    %897 = vmatmul.bf16.gmra.mxu0 %v888
    %v898 = vpop.f32.mrf.mxu0
    %v899 = vadd.f32 0.0, %v898
    %v900 = vpop.f32.mrf.mxu0
    %v901 = vadd.f32 0.0, %v900
    %902 = vdwg.mxu0
    %903 = vmatpush.bf16.msra.mxu0 %v718
    %904 = vmatpush.bf16.msra.mxu0 %v715
    %905 = vmatpush.bf16.msra.mxu0 %v712
    %906 = vmatpush.bf16.msra.mxu0 %v709
    %907 = vmatpush.bf16.msra.mxu0 %v706
    %908 = vmatpush.bf16.msra.mxu0 %v703
    %909 = vmatpush.bf16.msra.mxu0 %v700
    %910 = vmatpush.bf16.msra.mxu0 %v697
    %911 = vmatmul.bf16.gmra.mxu0 %v888
    %v912 = vpop.f32.mrf.mxu0
    %v913 = vadd.f32 0.0, %v912
    %v914 = vpop.f32.mrf.mxu0
    %v915 = vadd.f32 0.0, %v914
    %916 = vdwg.mxu0
    %917 = vmatpush.bf16.msra.mxu0 %v719
    %918 = vmatpush.bf16.msra.mxu0 %v716
    %919 = vmatpush.bf16.msra.mxu0 %v713
    %920 = vmatpush.bf16.msra.mxu0 %v710
    %921 = vmatpush.bf16.msra.mxu0 %v707
    %922 = vmatpush.bf16.msra.mxu0 %v704
    %923 = vmatpush.bf16.msra.mxu0 %v701
    %924 = vmatpush.bf16.msra.mxu0 %v698
    %925 = vmatmul.bf16.gmra.mxu0 %v888
    %v926 = vpop.f32.mrf.mxu0
    %v927 = vadd.f32 0.0, %v926
    %v928 = vpop.f32.mrf.mxu0
    %v929 = vadd.f32 0.0, %v928
    %930 = vdwg.mxu0
    %v931 = vadd.f32 %v882, %v899
    %v932 = vadd.f32 %v885, %v901
    %v933 = vxor.u32 %v931, 2147483648
    %v934 = vxor.u32 %v932, 2147483648
    %v935 = vmul.f32 %v933, 1.442695
    %v936 = vpow.pop %v935
    %v937 = vmul.f32 %v934, 1.442695
    %v938 = vpow.pop %v937
    %v939 = vadd.f32 %v936, 1.0
    %v940 = vadd.f32 %v938, 1.0
    %v941 = vrcp.pop %v939
    %v942 = vmul.f32 %v939, %v941
    %v943 = vsub.f32 1.0, %v942
    %v944 = vmul.f32 %v941, %v943
    %v945 = vadd.f32 %v941, %v944
    %vm946 = vweird.f32 %v939
    %vm947 = vweird.f32 %v941
    %vm948 = vmor %vm946, %vm947
    %v949 = vsel %vm948, %v941, %v945
    %v950 = vand.u32 2147483647, %v939
    %vm951 = vcmp.eq.f32.partialorder %v950, 8.507059e+37
    %v952 = vand.u32 %v939, 2147483648
    %v953 = vor.u32 1.1754944e-38, %v952
    %v954 = vsel %vm951, %v953, %v949
    %v955 = vmul.f32 1.0, %v954
    %v956 = vrcp.pop %v940
    %v957 = vmul.f32 %v940, %v956
    %v958 = vsub.f32 1.0, %v957
    %v959 = vmul.f32 %v956, %v958
    %v960 = vadd.f32 %v956, %v959
    %vm961 = vweird.f32 %v940
    %vm962 = vweird.f32 %v956
    %vm963 = vmor %vm961, %vm962
    %v964 = vsel %vm963, %v956, %v960
    %v965 = vand.u32 2147483647, %v940
    %vm966 = vcmp.eq.f32.partialorder %v965, 8.507059e+37
    %v967 = vand.u32 %v940, 2147483648
    %v968 = vor.u32 1.1754944e-38, %v967
    %v969 = vsel %vm966, %v968, %v964
    %v970 = vmul.f32 1.0, %v969
    %v971 = vadd.f32 %v883, %v913
    %v972 = vadd.f32 %v886, %v915
    %v973 = vxor.u32 %v971, 2147483648
    %v974 = vxor.u32 %v972, 2147483648
    %v975 = vmul.f32 %v973, 1.442695
    %v976 = vpow.pop %v975
    %v977 = vmul.f32 %v974, 1.442695
    %v978 = vpow.pop %v977
    %v979 = vadd.f32 %v976, 1.0
    %v980 = vadd.f32 %v978, 1.0
    %v981 = vrcp.pop %v979
    %v982 = vmul.f32 %v979, %v981
    %v983 = vsub.f32 1.0, %v982
    %v984 = vmul.f32 %v981, %v983
    %v985 = vadd.f32 %v981, %v984
    %vm986 = vweird.f32 %v979
    %vm987 = vweird.f32 %v981
    %vm988 = vmor %vm986, %vm987
    %v989 = vsel %vm988, %v981, %v985
    %v990 = vand.u32 2147483647, %v979
    %vm991 = vcmp.eq.f32.partialorder %v990, 8.507059e+37
    %v992 = vand.u32 %v979, 2147483648
    %v993 = vor.u32 1.1754944e-38, %v992
    %v994 = vsel %vm991, %v993, %v989
    %v995 = vmul.f32 1.0, %v994
    %v996 = vrcp.pop %v980
    %v997 = vmul.f32 %v980, %v996
    %v998 = vsub.f32 1.0, %v997
    %v999 = vmul.f32 %v996, %v998
    %v1000 = vadd.f32 %v996, %v999
    %vm1001 = vweird.f32 %v980
    %vm1002 = vweird.f32 %v996
    %vm1003 = vmor %vm1001, %vm1002
    %v1004 = vsel %vm1003, %v996, %v1000
    %v1005 = vand.u32 2147483647, %v980
    %vm1006 = vcmp.eq.f32.partialorder %v1005, 8.507059e+37
    %v1007 = vand.u32 %v980, 2147483648
    %v1008 = vor.u32 1.1754944e-38, %v1007
    %v1009 = vsel %vm1006, %v1008, %v1004
    %v1010 = vmul.f32 1.0, %v1009
    %v1011 = vadd.f32 %v927, %v565
    %v1012 = vadd.f32 %v929, %v565
    %v1013 = vmul.f32 %v955, %v1011
    %v1014 = vmul.f32 %v970, %v1012
    %v1015 = vadd.f32 %v884, %v1013
    %v1016 = vadd.f32 %v887, %v1014
    %v1017 = vtanh.pop %v1015
    %v1018 = vtanh.pop %v1016
    %v1019 = vsub.f32 1.0, %v995
    %v1020 = vsub.f32 1.0, %v1010
    %v1021 = vmul.f32 %v1019, %v1017
    %v1022 = vmul.f32 %v1020, %v1018
    %v1023 = vmul.f32 %v995, %v880
    %v1024 = vmul.f32 %v1010, %v881
    %v1025 = vadd.f32 %v1021, %v1023
    %v1026 = vadd.f32 %v1022, %v1024
    %s1027 = scalar_lea.vmem [#allocation9], 192
    %v1028 = vld [vmem:[%s1027] sm:$0xff]
    %v1029 = vld [vmem:[%s1027 + $0x8] sm:$0xf]
    %v1030 = vld [vmem:[%s1027 + $0xc] sm:$0xff]
    %v1031 = vld [vmem:[%s1027 + $0x14] sm:$0xf]
    %v1032 = vld [vmem:[%s1027 + $0x18] sm:$0xff]
    %v1033 = vld [vmem:[%s1027 + $0x20] sm:$0xf]
    %v1034 = vld [vmem:[%s1027 + $0x24] sm:$0xff]
    %v1035 = vld [vmem:[%s1027 + $0x2c] sm:$0xf]
    %v1036 = vld [vmem:[%s1027 + $0x30] sm:$0xff]
    %v1037 = vld [vmem:[%s1027 + $0x38] sm:$0xf]
    %v1038 = vld [vmem:[%s1027 + $0x3c] sm:$0xff]
    %v1039 = vld [vmem:[%s1027 + $0x44] sm:$0xf]
    %v1040 = vld [vmem:[%s1027 + $0x48] sm:$0xff]
    %v1041 = vld [vmem:[%s1027 + $0x50] sm:$0xf]
    %v1042 = vld [vmem:[%s1027 + $0x54] sm:$0xff]
    %v1043 = vld [vmem:[%s1027 + $0x5c] sm:$0xf]
    %v1044 = vld [vmem:[%s1027 + $0x60] sm:$0xff]
    %v1045 = vld [vmem:[%s1027 + $0x68] sm:$0xf]
    %v1046 = vld [vmem:[%s1027 + $0x6c] sm:$0xff]
    %v1047 = vld [vmem:[%s1027 + $0x74] sm:$0xf]
    %v1048 = vld [vmem:[%s1027 + $0x78] sm:$0xff]
    %v1049 = vld [vmem:[%s1027 + $0x80] sm:$0xf]
    %v1050 = vld [vmem:[%s1027 + $0x84] sm:$0xff]
    %v1051 = vld [vmem:[%s1027 + $0x8c] sm:$0xf]
    %v1052 = vld [vmem:[%s1027 + $0x90] sm:$0xff]
    %v1053 = vld [vmem:[%s1027 + $0x98] sm:$0xf]
    %v1054 = vld [vmem:[%s1027 + $0x9c] sm:$0xff]
    %v1055 = vld [vmem:[%s1027 + $0xa4] sm:$0xf]
    %v1056 = vld [vmem:[%s1027 + $0xa8] sm:$0xff]
    %v1057 = vld [vmem:[%s1027 + $0xb0] sm:$0xf]
    %v1058 = vld [vmem:[%s1027 + $0xb4] sm:$0xff]
    %v1059 = vld [vmem:[%s1027 + $0xbc] sm:$0xf]
    %v1092 = vunpack.c.l.b16 %v1028
    %v1093 = vunpack.c.h.b16 %v1028
    %v1094 = vunpack.c.l.b16 %v1029
    %v1095 = vunpack.c.l.b16 %v1030
    %v1096 = vunpack.c.h.b16 %v1030
    %v1097 = vunpack.c.l.b16 %v1031
    %v1098 = vunpack.c.l.b16 %v1032
    %v1099 = vunpack.c.h.b16 %v1032
    %v1100 = vunpack.c.l.b16 %v1033
    %v1101 = vunpack.c.l.b16 %v1034
    %v1102 = vunpack.c.h.b16 %v1034
    %v1103 = vunpack.c.l.b16 %v1035
    %v1104 = vunpack.c.l.b16 %v1036
    %v1105 = vunpack.c.h.b16 %v1036
    %v1106 = vunpack.c.l.b16 %v1037
    %v1107 = vunpack.c.l.b16 %v1038
    %v1108 = vunpack.c.h.b16 %v1038
    %v1109 = vunpack.c.l.b16 %v1039
    %v1110 = vunpack.c.l.b16 %v1040
    %v1111 = vunpack.c.h.b16 %v1040
    %v1112 = vunpack.c.l.b16 %v1041
    %v1113 = vunpack.c.l.b16 %v1042
    %v1114 = vunpack.c.h.b16 %v1042
    %v1115 = vunpack.c.l.b16 %v1043
    %v1116 = vunpack.c.l.b16 %v1044
    %v1117 = vunpack.c.h.b16 %v1044
    %v1118 = vunpack.c.l.b16 %v1045
    %v1119 = vunpack.c.l.b16 %v1046
    %v1120 = vunpack.c.h.b16 %v1046
    %v1121 = vunpack.c.l.b16 %v1047
    %v1122 = vunpack.c.l.b16 %v1048
    %v1123 = vunpack.c.h.b16 %v1048
    %v1124 = vunpack.c.l.b16 %v1049
    %v1125 = vunpack.c.l.b16 %v1050
    %v1126 = vunpack.c.h.b16 %v1050
    %v1127 = vunpack.c.l.b16 %v1051
    %v1128 = vunpack.c.l.b16 %v1052
    %v1129 = vunpack.c.h.b16 %v1052
    %v1130 = vunpack.c.l.b16 %v1053
    %v1131 = vunpack.c.l.b16 %v1054
    %v1132 = vunpack.c.h.b16 %v1054
    %v1133 = vunpack.c.l.b16 %v1055
    %v1134 = vunpack.c.l.b16 %v1056
    %v1135 = vunpack.c.h.b16 %v1056
    %v1136 = vunpack.c.l.b16 %v1057
    %v1137 = vunpack.c.l.b16 %v1058
    %v1138 = vunpack.c.h.b16 %v1058
    %v1139 = vunpack.c.l.b16 %v1059
    %v1140 = vpack.c.b16 %v1095, %v1092
    %v1141 = vpack.c.b16 %v1096, %v1093
    %v1142 = vpack.c.b16 %v1097, %v1094
    %v1143 = vpack.c.b16 %v1101, %v1098
    %v1144 = vpack.c.b16 %v1102, %v1099
    %v1145 = vpack.c.b16 %v1103, %v1100
    %v1146 = vpack.c.b16 %v1107, %v1104
    %v1147 = vpack.c.b16 %v1108, %v1105
    %v1148 = vpack.c.b16 %v1109, %v1106
    %v1149 = vpack.c.b16 %v1113, %v1110
    %v1150 = vpack.c.b16 %v1114, %v1111
    %v1151 = vpack.c.b16 %v1115, %v1112
    %v1152 = vpack.c.b16 %v1119, %v1116
    %v1153 = vpack.c.b16 %v1120, %v1117
    %v1154 = vpack.c.b16 %v1121, %v1118
    %v1155 = vpack.c.b16 %v1125, %v1122
    %v1156 = vpack.c.b16 %v1126, %v1123
    %v1157 = vpack.c.b16 %v1127, %v1124
    %v1158 = vpack.c.b16 %v1131, %v1128
    %v1159 = vpack.c.b16 %v1132, %v1129
    %v1160 = vpack.c.b16 %v1133, %v1130
    %v1161 = vpack.c.b16 %v1137, %v1134
    %v1162 = vpack.c.b16 %v1138, %v1135
    %v1163 = vpack.c.b16 %v1139, %v1136
    %1188 = vmatpush.bf16.msra.mxu0 %v1161
    %1189 = vmatpush.bf16.msra.mxu0 %v1158
    %1190 = vmatpush.bf16.msra.mxu0 %v1155
    %1191 = vmatpush.bf16.msra.mxu0 %v1152
    %1192 = vmatpush.bf16.msra.mxu0 %v1149
    %1193 = vmatpush.bf16.msra.mxu0 %v1146
    %1194 = vmatpush.bf16.msra.mxu0 %v1143
    %1195 = vmatpush.bf16.msra.mxu0 %v1140
    %1196 = vmatmul.bf16.gmra.mxu0 %v888
    %v1197 = vpop.f32.mrf.mxu0
    %v1198 = vadd.f32 %v557, %v1197
    %v1199 = vpop.f32.mrf.mxu0
    %v1200 = vadd.f32 %v557, %v1199
    %1201 = vdwg.mxu0
    %1202 = vmatpush.bf16.msra.mxu0 %v1162
    %1203 = vmatpush.bf16.msra.mxu0 %v1159
    %1204 = vmatpush.bf16.msra.mxu0 %v1156
    %1205 = vmatpush.bf16.msra.mxu0 %v1153
    %1206 = vmatpush.bf16.msra.mxu0 %v1150
    %1207 = vmatpush.bf16.msra.mxu0 %v1147
    %1208 = vmatpush.bf16.msra.mxu0 %v1144
    %1209 = vmatpush.bf16.msra.mxu0 %v1141
    %1210 = vmatmul.bf16.gmra.mxu0 %v888
    %v1211 = vpop.f32.mrf.mxu0
    %v1212 = vadd.f32 %v558, %v1211
    %v1213 = vpop.f32.mrf.mxu0
    %v1214 = vadd.f32 %v558, %v1213
    %1215 = vdwg.mxu0
    %1216 = vmatpush.bf16.msra.mxu0 %v1163
    %1217 = vmatpush.bf16.msra.mxu0 %v1160
    %1218 = vmatpush.bf16.msra.mxu0 %v1157
    %1219 = vmatpush.bf16.msra.mxu0 %v1154
    %1220 = vmatpush.bf16.msra.mxu0 %v1151
    %1221 = vmatpush.bf16.msra.mxu0 %v1148
    %1222 = vmatpush.bf16.msra.mxu0 %v1145
    %1223 = vmatpush.bf16.msra.mxu0 %v1142
    %1224 = vmatmul.bf16.gmra.mxu0 %v888
    %v1225 = vpop.f32.mrf.mxu0
    %v1226 = vadd.f32 %v559, %v1225
    %v1227 = vpop.f32.mrf.mxu0
    %v1228 = vadd.f32 %v559, %v1227
    %1229 = vdwg.mxu0
    %v1230 = vpack.c.bf16 %v576, %v575
    %s1231 = scalar_lea.vmem [#allocation10], 192
    %v1232 = vld [vmem:[%s1231] sm:$0xff]
    %v1233 = vld [vmem:[%s1231 + $0x8] sm:$0xf]
    %v1234 = vld [vmem:[%s1231 + $0xc] sm:$0xff]
    %v1235 = vld [vmem:[%s1231 + $0x14] sm:$0xf]
    %v1236 = vld [vmem:[%s1231 + $0x18] sm:$0xff]
    %v1237 = vld [vmem:[%s1231 + $0x20] sm:$0xf]
    %v1238 = vld [vmem:[%s1231 + $0x24] sm:$0xff]
    %v1239 = vld [vmem:[%s1231 + $0x2c] sm:$0xf]
    %v1240 = vld [vmem:[%s1231 + $0x30] sm:$0xff]
    %v1241 = vld [vmem:[%s1231 + $0x38] sm:$0xf]
    %v1242 = vld [vmem:[%s1231 + $0x3c] sm:$0xff]
    %v1243 = vld [vmem:[%s1231 + $0x44] sm:$0xf]
    %v1244 = vld [vmem:[%s1231 + $0x48] sm:$0xff]
    %v1245 = vld [vmem:[%s1231 + $0x50] sm:$0xf]
    %v1246 = vld [vmem:[%s1231 + $0x54] sm:$0xff]
    %v1247 = vld [vmem:[%s1231 + $0x5c] sm:$0xf]
    %v1248 = vld [vmem:[%s1231 + $0x60] sm:$0xff]
    %v1249 = vld [vmem:[%s1231 + $0x68] sm:$0xf]
    %v1250 = vld [vmem:[%s1231 + $0x6c] sm:$0xff]
    %v1251 = vld [vmem:[%s1231 + $0x74] sm:$0xf]
    %v1252 = vld [vmem:[%s1231 + $0x78] sm:$0xff]
    %v1253 = vld [vmem:[%s1231 + $0x80] sm:$0xf]
    %v1254 = vld [vmem:[%s1231 + $0x84] sm:$0xff]
    %v1255 = vld [vmem:[%s1231 + $0x8c] sm:$0xf]
    %v1256 = vld [vmem:[%s1231 + $0x90] sm:$0xff]
    %v1257 = vld [vmem:[%s1231 + $0x98] sm:$0xf]
    %v1258 = vld [vmem:[%s1231 + $0x9c] sm:$0xff]
    %v1259 = vld [vmem:[%s1231 + $0xa4] sm:$0xf]
    %v1260 = vld [vmem:[%s1231 + $0xa8] sm:$0xff]
    %v1261 = vld [vmem:[%s1231 + $0xb0] sm:$0xf]
    %v1262 = vld [vmem:[%s1231 + $0xb4] sm:$0xff]
    %v1263 = vld [vmem:[%s1231 + $0xbc] sm:$0xf]
    %v1296 = vunpack.c.l.b16 %v1232
    %v1297 = vunpack.c.h.b16 %v1232
    %v1298 = vunpack.c.l.b16 %v1233
    %v1299 = vunpack.c.l.b16 %v1234
    %v1300 = vunpack.c.h.b16 %v1234
    %v1301 = vunpack.c.l.b16 %v1235
    %v1302 = vunpack.c.l.b16 %v1236
    %v1303 = vunpack.c.h.b16 %v1236
    %v1304 = vunpack.c.l.b16 %v1237
    %v1305 = vunpack.c.l.b16 %v1238
    %v1306 = vunpack.c.h.b16 %v1238
    %v1307 = vunpack.c.l.b16 %v1239
    %v1308 = vunpack.c.l.b16 %v1240
    %v1309 = vunpack.c.h.b16 %v1240
    %v1310 = vunpack.c.l.b16 %v1241
    %v1311 = vunpack.c.l.b16 %v1242
    %v1312 = vunpack.c.h.b16 %v1242
    %v1313 = vunpack.c.l.b16 %v1243
    %v1314 = vunpack.c.l.b16 %v1244
    %v1315 = vunpack.c.h.b16 %v1244
    %v1316 = vunpack.c.l.b16 %v1245
    %v1317 = vunpack.c.l.b16 %v1246
    %v1318 = vunpack.c.h.b16 %v1246
    %v1319 = vunpack.c.l.b16 %v1247
    %v1320 = vunpack.c.l.b16 %v1248
    %v1321 = vunpack.c.h.b16 %v1248
    %v1322 = vunpack.c.l.b16 %v1249
    %v1323 = vunpack.c.l.b16 %v1250
    %v1324 = vunpack.c.h.b16 %v1250
    %v1325 = vunpack.c.l.b16 %v1251
    %v1326 = vunpack.c.l.b16 %v1252
    %v1327 = vunpack.c.h.b16 %v1252
    %v1328 = vunpack.c.l.b16 %v1253
    %v1329 = vunpack.c.l.b16 %v1254
    %v1330 = vunpack.c.h.b16 %v1254
    %v1331 = vunpack.c.l.b16 %v1255
    %v1332 = vunpack.c.l.b16 %v1256
    %v1333 = vunpack.c.h.b16 %v1256
    %v1334 = vunpack.c.l.b16 %v1257
    %v1335 = vunpack.c.l.b16 %v1258
    %v1336 = vunpack.c.h.b16 %v1258
    %v1337 = vunpack.c.l.b16 %v1259
    %v1338 = vunpack.c.l.b16 %v1260
    %v1339 = vunpack.c.h.b16 %v1260
    %v1340 = vunpack.c.l.b16 %v1261
    %v1341 = vunpack.c.l.b16 %v1262
    %v1342 = vunpack.c.h.b16 %v1262
    %v1343 = vunpack.c.l.b16 %v1263
    %v1344 = vpack.c.b16 %v1299, %v1296
    %v1345 = vpack.c.b16 %v1300, %v1297
    %v1346 = vpack.c.b16 %v1301, %v1298
    %v1347 = vpack.c.b16 %v1305, %v1302
    %v1348 = vpack.c.b16 %v1306, %v1303
    %v1349 = vpack.c.b16 %v1307, %v1304
    %v1350 = vpack.c.b16 %v1311, %v1308
    %v1351 = vpack.c.b16 %v1312, %v1309
    %v1352 = vpack.c.b16 %v1313, %v1310
    %v1353 = vpack.c.b16 %v1317, %v1314
    %v1354 = vpack.c.b16 %v1318, %v1315
    %v1355 = vpack.c.b16 %v1319, %v1316
    %v1356 = vpack.c.b16 %v1323, %v1320
    %v1357 = vpack.c.b16 %v1324, %v1321
    %v1358 = vpack.c.b16 %v1325, %v1322
    %v1359 = vpack.c.b16 %v1329, %v1326
    %v1360 = vpack.c.b16 %v1330, %v1327
    %v1361 = vpack.c.b16 %v1331, %v1328
    %v1362 = vpack.c.b16 %v1335, %v1332
    %v1363 = vpack.c.b16 %v1336, %v1333
    %v1364 = vpack.c.b16 %v1337, %v1334
    %v1365 = vpack.c.b16 %v1341, %v1338
    %v1366 = vpack.c.b16 %v1342, %v1339
    %v1367 = vpack.c.b16 %v1343, %v1340
    %1392 = vmatpush.bf16.msra.mxu0 %v1365
    %1393 = vmatpush.bf16.msra.mxu0 %v1362
    %1394 = vmatpush.bf16.msra.mxu0 %v1359
    %1395 = vmatpush.bf16.msra.mxu0 %v1356
    %1396 = vmatpush.bf16.msra.mxu0 %v1353
    %1397 = vmatpush.bf16.msra.mxu0 %v1350
    %1398 = vmatpush.bf16.msra.mxu0 %v1347
    %1399 = vmatpush.bf16.msra.mxu0 %v1344
    %1400 = vmatmul.bf16.gmra.mxu0 %v1230
    %v1401 = vpop.f32.mrf.mxu0
    %v1402 = vadd.f32 0.0, %v1401
    %v1403 = vpop.f32.mrf.mxu0
    %v1404 = vadd.f32 0.0, %v1403
    %1405 = vdwg.mxu0
    %1406 = vmatpush.bf16.msra.mxu0 %v1366
    %1407 = vmatpush.bf16.msra.mxu0 %v1363
    %1408 = vmatpush.bf16.msra.mxu0 %v1360
    %1409 = vmatpush.bf16.msra.mxu0 %v1357
    %1410 = vmatpush.bf16.msra.mxu0 %v1354
    %1411 = vmatpush.bf16.msra.mxu0 %v1351
    %1412 = vmatpush.bf16.msra.mxu0 %v1348
    %1413 = vmatpush.bf16.msra.mxu0 %v1345
    %1414 = vmatmul.bf16.gmra.mxu0 %v1230
    %v1415 = vpop.f32.mrf.mxu0
    %v1416 = vadd.f32 0.0, %v1415
    %v1417 = vpop.f32.mrf.mxu0
    %v1418 = vadd.f32 0.0, %v1417
    %1419 = vdwg.mxu0
    %1420 = vmatpush.bf16.msra.mxu0 %v1367
    %1421 = vmatpush.bf16.msra.mxu0 %v1364
    %1422 = vmatpush.bf16.msra.mxu0 %v1361
    %1423 = vmatpush.bf16.msra.mxu0 %v1358
    %1424 = vmatpush.bf16.msra.mxu0 %v1355
    %1425 = vmatpush.bf16.msra.mxu0 %v1352
    %1426 = vmatpush.bf16.msra.mxu0 %v1349
    %1427 = vmatpush.bf16.msra.mxu0 %v1346
    %1428 = vmatmul.bf16.gmra.mxu0 %v1230
    %v1429 = vpop.f32.mrf.mxu0
    %v1430 = vadd.f32 0.0, %v1429
    %v1431 = vpop.f32.mrf.mxu0
    %v1432 = vadd.f32 0.0, %v1431
    %1433 = vdwg.mxu0
    %v1434 = vadd.f32 %v1198, %v1402
    %v1435 = vadd.f32 %v1200, %v1404
    %v1436 = vxor.u32 %v1434, 2147483648
    %v1437 = vxor.u32 %v1435, 2147483648
    %v1438 = vmul.f32 %v1436, 1.442695
    %v1439 = vpow.pop %v1438
    %v1440 = vmul.f32 %v1437, 1.442695
    %v1441 = vpow.pop %v1440
    %v1442 = vadd.f32 %v1439, 1.0
    %v1443 = vadd.f32 %v1441, 1.0
    %v1444 = vrcp.pop %v1442
    %v1445 = vmul.f32 %v1442, %v1444
    %v1446 = vsub.f32 1.0, %v1445
    %v1447 = vmul.f32 %v1444, %v1446
    %v1448 = vadd.f32 %v1444, %v1447
    %vm1449 = vweird.f32 %v1442
    %vm1450 = vweird.f32 %v1444
    %vm1451 = vmor %vm1449, %vm1450
    %v1452 = vsel %vm1451, %v1444, %v1448
    %v1453 = vand.u32 2147483647, %v1442
    %vm1454 = vcmp.eq.f32.partialorder %v1453, 8.507059e+37
    %v1455 = vand.u32 %v1442, 2147483648
    %v1456 = vor.u32 1.1754944e-38, %v1455
    %v1457 = vsel %vm1454, %v1456, %v1452
    %v1458 = vmul.f32 1.0, %v1457
    %v1459 = vrcp.pop %v1443
    %v1460 = vmul.f32 %v1443, %v1459
    %v1461 = vsub.f32 1.0, %v1460
    %v1462 = vmul.f32 %v1459, %v1461
    %v1463 = vadd.f32 %v1459, %v1462
    %vm1464 = vweird.f32 %v1443
    %vm1465 = vweird.f32 %v1459
    %vm1466 = vmor %vm1464, %vm1465
    %v1467 = vsel %vm1466, %v1459, %v1463
    %v1468 = vand.u32 2147483647, %v1443
    %vm1469 = vcmp.eq.f32.partialorder %v1468, 8.507059e+37
    %v1470 = vand.u32 %v1443, 2147483648
    %v1471 = vor.u32 1.1754944e-38, %v1470
    %v1472 = vsel %vm1469, %v1471, %v1467
    %v1473 = vmul.f32 1.0, %v1472
    %v1474 = vadd.f32 %v1212, %v1416
    %v1475 = vadd.f32 %v1214, %v1418
    %v1476 = vxor.u32 %v1474, 2147483648
    %v1477 = vxor.u32 %v1475, 2147483648
    %v1478 = vmul.f32 %v1476, 1.442695
    %v1479 = vpow.pop %v1478
    %v1480 = vmul.f32 %v1477, 1.442695
    %v1481 = vpow.pop %v1480
    %v1482 = vadd.f32 %v1479, 1.0
    %v1483 = vadd.f32 %v1481, 1.0
    %v1484 = vrcp.pop %v1482
    %v1485 = vmul.f32 %v1482, %v1484
    %v1486 = vsub.f32 1.0, %v1485
    %v1487 = vmul.f32 %v1484, %v1486
    %v1488 = vadd.f32 %v1484, %v1487
    %vm1489 = vweird.f32 %v1482
    %vm1490 = vweird.f32 %v1484
    %vm1491 = vmor %vm1489, %vm1490
    %v1492 = vsel %vm1491, %v1484, %v1488
    %v1493 = vand.u32 2147483647, %v1482
    %vm1494 = vcmp.eq.f32.partialorder %v1493, 8.507059e+37
    %v1495 = vand.u32 %v1482, 2147483648
    %v1496 = vor.u32 1.1754944e-38, %v1495
    %v1497 = vsel %vm1494, %v1496, %v1492
    %v1498 = vmul.f32 1.0, %v1497
    %v1499 = vrcp.pop %v1483
    %v1500 = vmul.f32 %v1483, %v1499
    %v1501 = vsub.f32 1.0, %v1500
    %v1502 = vmul.f32 %v1499, %v1501
    %v1503 = vadd.f32 %v1499, %v1502
    %vm1504 = vweird.f32 %v1483
    %vm1505 = vweird.f32 %v1499
    %vm1506 = vmor %vm1504, %vm1505
    %v1507 = vsel %vm1506, %v1499, %v1503
    %v1508 = vand.u32 2147483647, %v1483
    %vm1509 = vcmp.eq.f32.partialorder %v1508, 8.507059e+37
    %v1510 = vand.u32 %v1483, 2147483648
    %v1511 = vor.u32 1.1754944e-38, %v1510
    %v1512 = vsel %vm1509, %v1511, %v1507
    %v1513 = vmul.f32 1.0, %v1512
    %v1514 = vadd.f32 %v1430, %v570
    %v1515 = vadd.f32 %v1432, %v570
    %v1516 = vmul.f32 %v1458, %v1514
    %v1517 = vmul.f32 %v1473, %v1515
    %v1518 = vadd.f32 %v1226, %v1516
    %v1519 = vadd.f32 %v1228, %v1517
    %v1520 = vtanh.pop %v1518
    %v1521 = vtanh.pop %v1519
    %v1522 = vsub.f32 1.0, %v1498
    %v1523 = vsub.f32 1.0, %v1513
    %v1524 = vmul.f32 %v1522, %v1520
    %v1525 = vmul.f32 %v1523, %v1521
    %v1526 = vmul.f32 %v1498, %v575
    %v1527 = vmul.f32 %v1513, %v576
    %v1528 = vadd.f32 %v1524, %v1526
    %v1529 = vadd.f32 %v1525, %v1527
    %v1530 = vpack.c.bf16 %v1528, %v1528
    %v1531 = vpack.c.bf16 %v1529, %v1529
    %1532 = vst [vmem:[#allocation2] sm:$0xf] %v1530
    %1533 = vst [vmem:[#allocation2 + $0x4] sm:$0xf] %v1531
    %v1534 = vld [vmem:[#allocation3 + $0x60] sm:$0xff]
    %v1535 = vld [vmem:[#allocation3 + $0x68] sm:$0xff]
    %v1536 = vld [vmem:[#allocation3 + $0x70] sm:$0xff]
    %v1537 = vld [vmem:[#allocation3 + $0x78] sm:$0xff]
    %v1538 = vld [vmem:[#allocation3 + $0x80] sm:$0xff]
    %v1539 = vld [vmem:[#allocation3 + $0x88] sm:$0xff]
    %v1540 = vpack.c.bf16 %v1026, %v1025
    %v1541 = vld [vmem:[#allocation10] sm:$0xff]
    %v1542 = vld [vmem:[#allocation10 + $0x8] sm:$0xf]
    %v1543 = vld [vmem:[#allocation10 + $0xc] sm:$0xff]
    %v1544 = vld [vmem:[#allocation10 + $0x14] sm:$0xf]
    %v1545 = vld [vmem:[#allocation10 + $0x18] sm:$0xff]
    %v1546 = vld [vmem:[#allocation10 + $0x20] sm:$0xf]
    %v1547 = vld [vmem:[#allocation10 + $0x24] sm:$0xff]
    %v1548 = vld [vmem:[#allocation10 + $0x2c] sm:$0xf]
    %v1549 = vld [vmem:[#allocation10 + $0x30] sm:$0xff]
    %v1550 = vld [vmem:[#allocation10 + $0x38] sm:$0xf]
    %v1551 = vld [vmem:[#allocation10 + $0x3c] sm:$0xff]
    %v1552 = vld [vmem:[#allocation10 + $0x44] sm:$0xf]
    %v1553 = vld [vmem:[#allocation10 + $0x48] sm:$0xff]
    %v1554 = vld [vmem:[#allocation10 + $0x50] sm:$0xf]
    %v1555 = vld [vmem:[#allocation10 + $0x54] sm:$0xff]
    %v1556 = vld [vmem:[#allocation10 + $0x5c] sm:$0xf]
    %v1557 = vld [vmem:[#allocation10 + $0x60] sm:$0xff]
    %v1558 = vld [vmem:[#allocation10 + $0x68] sm:$0xf]
    %v1559 = vld [vmem:[#allocation10 + $0x6c] sm:$0xff]
    %v1560 = vld [vmem:[#allocation10 + $0x74] sm:$0xf]
    %v1561 = vld [vmem:[#allocation10 + $0x78] sm:$0xff]
    %v1562 = vld [vmem:[#allocation10 + $0x80] sm:$0xf]
    %v1563 = vld [vmem:[#allocation10 + $0x84] sm:$0xff]
    %v1564 = vld [vmem:[#allocation10 + $0x8c] sm:$0xf]
    %v1565 = vld [vmem:[#allocation10 + $0x90] sm:$0xff]
    %v1566 = vld [vmem:[#allocation10 + $0x98] sm:$0xf]
    %v1567 = vld [vmem:[#allocation10 + $0x9c] sm:$0xff]
    %v1568 = vld [vmem:[#allocation10 + $0xa4] sm:$0xf]
    %v1569 = vld [vmem:[#allocation10 + $0xa8] sm:$0xff]
    %v1570 = vld [vmem:[#allocation10 + $0xb0] sm:$0xf]
    %v1571 = vld [vmem:[#allocation10 + $0xb4] sm:$0xff]
    %v1572 = vld [vmem:[#allocation10 + $0xbc] sm:$0xf]
    %v1605 = vunpack.c.l.b16 %v1541
    %v1606 = vunpack.c.h.b16 %v1541
    %v1607 = vunpack.c.l.b16 %v1542
    %v1608 = vunpack.c.l.b16 %v1543
    %v1609 = vunpack.c.h.b16 %v1543
    %v1610 = vunpack.c.l.b16 %v1544
    %v1611 = vunpack.c.l.b16 %v1545
    %v1612 = vunpack.c.h.b16 %v1545
    %v1613 = vunpack.c.l.b16 %v1546
    %v1614 = vunpack.c.l.b16 %v1547
    %v1615 = vunpack.c.h.b16 %v1547
    %v1616 = vunpack.c.l.b16 %v1548
    %v1617 = vunpack.c.l.b16 %v1549
    %v1618 = vunpack.c.h.b16 %v1549
    %v1619 = vunpack.c.l.b16 %v1550
    %v1620 = vunpack.c.l.b16 %v1551
    %v1621 = vunpack.c.h.b16 %v1551
    %v1622 = vunpack.c.l.b16 %v1552
    %v1623 = vunpack.c.l.b16 %v1553
    %v1624 = vunpack.c.h.b16 %v1553
    %v1625 = vunpack.c.l.b16 %v1554
    %v1626 = vunpack.c.l.b16 %v1555
    %v1627 = vunpack.c.h.b16 %v1555
    %v1628 = vunpack.c.l.b16 %v1556
    %v1629 = vunpack.c.l.b16 %v1557
    %v1630 = vunpack.c.h.b16 %v1557
    %v1631 = vunpack.c.l.b16 %v1558
    %v1632 = vunpack.c.l.b16 %v1559
    %v1633 = vunpack.c.h.b16 %v1559
    %v1634 = vunpack.c.l.b16 %v1560
    %v1635 = vunpack.c.l.b16 %v1561
    %v1636 = vunpack.c.h.b16 %v1561
    %v1637 = vunpack.c.l.b16 %v1562
    %v1638 = vunpack.c.l.b16 %v1563
    %v1639 = vunpack.c.h.b16 %v1563
    %v1640 = vunpack.c.l.b16 %v1564
    %v1641 = vunpack.c.l.b16 %v1565
    %v1642 = vunpack.c.h.b16 %v1565
    %v1643 = vunpack.c.l.b16 %v1566
    %v1644 = vunpack.c.l.b16 %v1567
    %v1645 = vunpack.c.h.b16 %v1567
    %v1646 = vunpack.c.l.b16 %v1568
    %v1647 = vunpack.c.l.b16 %v1569
    %v1648 = vunpack.c.h.b16 %v1569
    %v1649 = vunpack.c.l.b16 %v1570
    %v1650 = vunpack.c.l.b16 %v1571
    %v1651 = vunpack.c.h.b16 %v1571
    %v1652 = vunpack.c.l.b16 %v1572
    %v1653 = vpack.c.b16 %v1608, %v1605
    %v1654 = vpack.c.b16 %v1609, %v1606
    %v1655 = vpack.c.b16 %v1610, %v1607
    %v1656 = vpack.c.b16 %v1614, %v1611
    %v1657 = vpack.c.b16 %v1615, %v1612
    %v1658 = vpack.c.b16 %v1616, %v1613
    %v1659 = vpack.c.b16 %v1620, %v1617
    %v1660 = vpack.c.b16 %v1621, %v1618
    %v1661 = vpack.c.b16 %v1622, %v1619
    %v1662 = vpack.c.b16 %v1626, %v1623
    %v1663 = vpack.c.b16 %v1627, %v1624
    %v1664 = vpack.c.b16 %v1628, %v1625
    %v1665 = vpack.c.b16 %v1632, %v1629
    %v1666 = vpack.c.b16 %v1633, %v1630
    %v1667 = vpack.c.b16 %v1634, %v1631
    %v1668 = vpack.c.b16 %v1638, %v1635
    %v1669 = vpack.c.b16 %v1639, %v1636
    %v1670 = vpack.c.b16 %v1640, %v1637
    %v1671 = vpack.c.b16 %v1644, %v1641
    %v1672 = vpack.c.b16 %v1645, %v1642
    %v1673 = vpack.c.b16 %v1646, %v1643
    %v1674 = vpack.c.b16 %v1650, %v1647
    %v1675 = vpack.c.b16 %v1651, %v1648
    %v1676 = vpack.c.b16 %v1652, %v1649
    %1701 = vmatpush.bf16.msra.mxu0 %v1674
    %1702 = vmatpush.bf16.msra.mxu0 %v1671
    %1703 = vmatpush.bf16.msra.mxu0 %v1668
    %1704 = vmatpush.bf16.msra.mxu0 %v1665
    %1705 = vmatpush.bf16.msra.mxu0 %v1662
    %1706 = vmatpush.bf16.msra.mxu0 %v1659
    %1707 = vmatpush.bf16.msra.mxu0 %v1656
    %1708 = vmatpush.bf16.msra.mxu0 %v1653
    %1709 = vmatmul.bf16.gmra.mxu0 %v1540
    %v1710 = vpop.f32.mrf.mxu0
    %v1711 = vadd.f32 0.0, %v1710
    %v1712 = vpop.f32.mrf.mxu0
    %v1713 = vadd.f32 0.0, %v1712
    %1714 = vdwg.mxu0
    %1715 = vmatpush.bf16.msra.mxu0 %v1675
    %1716 = vmatpush.bf16.msra.mxu0 %v1672
    %1717 = vmatpush.bf16.msra.mxu0 %v1669
    %1718 = vmatpush.bf16.msra.mxu0 %v1666
    %1719 = vmatpush.bf16.msra.mxu0 %v1663
    %1720 = vmatpush.bf16.msra.mxu0 %v1660
    %1721 = vmatpush.bf16.msra.mxu0 %v1657
    %1722 = vmatpush.bf16.msra.mxu0 %v1654
    %1723 = vmatmul.bf16.gmra.mxu0 %v1540
    %v1724 = vpop.f32.mrf.mxu0
    %v1725 = vadd.f32 0.0, %v1724
    %v1726 = vpop.f32.mrf.mxu0
    %v1727 = vadd.f32 0.0, %v1726
    %1728 = vdwg.mxu0
    %1729 = vmatpush.bf16.msra.mxu0 %v1676
    %1730 = vmatpush.bf16.msra.mxu0 %v1673
    %1731 = vmatpush.bf16.msra.mxu0 %v1670
    %1732 = vmatpush.bf16.msra.mxu0 %v1667
    %1733 = vmatpush.bf16.msra.mxu0 %v1664
    %1734 = vmatpush.bf16.msra.mxu0 %v1661
    %1735 = vmatpush.bf16.msra.mxu0 %v1658
    %1736 = vmatpush.bf16.msra.mxu0 %v1655
    %1737 = vmatmul.bf16.gmra.mxu0 %v1540
    %v1738 = vpop.f32.mrf.mxu0
    %v1739 = vadd.f32 0.0, %v1738
    %v1740 = vpop.f32.mrf.mxu0
    %v1741 = vadd.f32 0.0, %v1740
    %1742 = vdwg.mxu0
    %v1743 = vadd.f32 %v1534, %v1711
    %v1744 = vadd.f32 %v1537, %v1713
    %v1745 = vxor.u32 %v1743, 2147483648
    %v1746 = vxor.u32 %v1744, 2147483648
    %v1747 = vmul.f32 %v1745, 1.442695
    %v1748 = vpow.pop %v1747
    %v1749 = vmul.f32 %v1746, 1.442695
    %v1750 = vpow.pop %v1749
    %v1751 = vadd.f32 %v1748, 1.0
    %v1752 = vadd.f32 %v1750, 1.0
    %v1753 = vrcp.pop %v1751
    %v1754 = vmul.f32 %v1751, %v1753
    %v1755 = vsub.f32 1.0, %v1754
    %v1756 = vmul.f32 %v1753, %v1755
    %v1757 = vadd.f32 %v1753, %v1756
    %vm1758 = vweird.f32 %v1751
    %vm1759 = vweird.f32 %v1753
    %vm1760 = vmor %vm1758, %vm1759
    %v1761 = vsel %vm1760, %v1753, %v1757
    %v1762 = vand.u32 2147483647, %v1751
    %vm1763 = vcmp.eq.f32.partialorder %v1762, 8.507059e+37
    %v1764 = vand.u32 %v1751, 2147483648
    %v1765 = vor.u32 1.1754944e-38, %v1764
    %v1766 = vsel %vm1763, %v1765, %v1761
    %v1767 = vmul.f32 1.0, %v1766
    %v1768 = vrcp.pop %v1752
    %v1769 = vmul.f32 %v1752, %v1768
    %v1770 = vsub.f32 1.0, %v1769
    %v1771 = vmul.f32 %v1768, %v1770
    %v1772 = vadd.f32 %v1768, %v1771
    %vm1773 = vweird.f32 %v1752
    %vm1774 = vweird.f32 %v1768
    %vm1775 = vmor %vm1773, %vm1774
    %v1776 = vsel %vm1775, %v1768, %v1772
    %v1777 = vand.u32 2147483647, %v1752
    %vm1778 = vcmp.eq.f32.partialorder %v1777, 8.507059e+37
    %v1779 = vand.u32 %v1752, 2147483648
    %v1780 = vor.u32 1.1754944e-38, %v1779
    %v1781 = vsel %vm1778, %v1780, %v1776
    %v1782 = vmul.f32 1.0, %v1781
    %v1783 = vadd.f32 %v1535, %v1725
    %v1784 = vadd.f32 %v1538, %v1727
    %v1785 = vxor.u32 %v1783, 2147483648
    %v1786 = vxor.u32 %v1784, 2147483648
    %v1787 = vmul.f32 %v1785, 1.442695
    %v1788 = vpow.pop %v1787
    %v1789 = vmul.f32 %v1786, 1.442695
    %v1790 = vpow.pop %v1789
    %v1791 = vadd.f32 %v1788, 1.0
    %v1792 = vadd.f32 %v1790, 1.0
    %v1793 = vrcp.pop %v1791
    %v1794 = vmul.f32 %v1791, %v1793
    %v1795 = vsub.f32 1.0, %v1794
    %v1796 = vmul.f32 %v1793, %v1795
    %v1797 = vadd.f32 %v1793, %v1796
    %vm1798 = vweird.f32 %v1791
    %vm1799 = vweird.f32 %v1793
    %vm1800 = vmor %vm1798, %vm1799
    %v1801 = vsel %vm1800, %v1793, %v1797
    %v1802 = vand.u32 2147483647, %v1791
    %vm1803 = vcmp.eq.f32.partialorder %v1802, 8.507059e+37
    %v1804 = vand.u32 %v1791, 2147483648
    %v1805 = vor.u32 1.1754944e-38, %v1804
    %v1806 = vsel %vm1803, %v1805, %v1801
    %v1807 = vmul.f32 1.0, %v1806
    %v1808 = vrcp.pop %v1792
    %v1809 = vmul.f32 %v1792, %v1808
    %v1810 = vsub.f32 1.0, %v1809
    %v1811 = vmul.f32 %v1808, %v1810
    %v1812 = vadd.f32 %v1808, %v1811
    %vm1813 = vweird.f32 %v1792
    %vm1814 = vweird.f32 %v1808
    %vm1815 = vmor %vm1813, %vm1814
    %v1816 = vsel %vm1815, %v1808, %v1812
    %v1817 = vand.u32 2147483647, %v1792
    %vm1818 = vcmp.eq.f32.partialorder %v1817, 8.507059e+37
    %v1819 = vand.u32 %v1792, 2147483648
    %v1820 = vor.u32 1.1754944e-38, %v1819
    %v1821 = vsel %vm1818, %v1820, %v1816
    %v1822 = vmul.f32 1.0, %v1821
    %v1823 = vadd.f32 %v1739, %v565
    %v1824 = vadd.f32 %v1741, %v565
    %v1825 = vmul.f32 %v1767, %v1823
    %v1826 = vmul.f32 %v1782, %v1824
    %v1827 = vadd.f32 %v1536, %v1825
    %v1828 = vadd.f32 %v1539, %v1826
    %v1829 = vtanh.pop %v1827
    %v1830 = vtanh.pop %v1828
    %v1831 = vsub.f32 1.0, %v1807
    %v1832 = vsub.f32 1.0, %v1822
    %v1833 = vmul.f32 %v1831, %v1829
    %v1834 = vmul.f32 %v1832, %v1830
    %v1835 = vmul.f32 %v1807, %v1025
    %v1836 = vmul.f32 %v1822, %v1026
    %v1837 = vadd.f32 %v1833, %v1835
    %v1838 = vadd.f32 %v1834, %v1836
    %v1839 = vld [vmem:[%s1027] sm:$0xff]
    %v1840 = vld [vmem:[%s1027 + $0x8] sm:$0xf]
    %v1841 = vld [vmem:[%s1027 + $0xc] sm:$0xff]
    %v1842 = vld [vmem:[%s1027 + $0x14] sm:$0xf]
    %v1843 = vld [vmem:[%s1027 + $0x18] sm:$0xff]
    %v1844 = vld [vmem:[%s1027 + $0x20] sm:$0xf]
    %v1845 = vld [vmem:[%s1027 + $0x24] sm:$0xff]
    %v1846 = vld [vmem:[%s1027 + $0x2c] sm:$0xf]
    %v1847 = vld [vmem:[%s1027 + $0x30] sm:$0xff]
    %v1848 = vld [vmem:[%s1027 + $0x38] sm:$0xf]
    %v1849 = vld [vmem:[%s1027 + $0x3c] sm:$0xff]
    %v1850 = vld [vmem:[%s1027 + $0x44] sm:$0xf]
    %v1851 = vld [vmem:[%s1027 + $0x48] sm:$0xff]
    %v1852 = vld [vmem:[%s1027 + $0x50] sm:$0xf]
    %v1853 = vld [vmem:[%s1027 + $0x54] sm:$0xff]
    %v1854 = vld [vmem:[%s1027 + $0x5c] sm:$0xf]
    %v1855 = vld [vmem:[%s1027 + $0x60] sm:$0xff]
    %v1856 = vld [vmem:[%s1027 + $0x68] sm:$0xf]
    %v1857 = vld [vmem:[%s1027 + $0x6c] sm:$0xff]
    %v1858 = vld [vmem:[%s1027 + $0x74] sm:$0xf]
    %v1859 = vld [vmem:[%s1027 + $0x78] sm:$0xff]
    %v1860 = vld [vmem:[%s1027 + $0x80] sm:$0xf]
    %v1861 = vld [vmem:[%s1027 + $0x84] sm:$0xff]
    %v1862 = vld [vmem:[%s1027 + $0x8c] sm:$0xf]
    %v1863 = vld [vmem:[%s1027 + $0x90] sm:$0xff]
    %v1864 = vld [vmem:[%s1027 + $0x98] sm:$0xf]
    %v1865 = vld [vmem:[%s1027 + $0x9c] sm:$0xff]
    %v1866 = vld [vmem:[%s1027 + $0xa4] sm:$0xf]
    %v1867 = vld [vmem:[%s1027 + $0xa8] sm:$0xff]
    %v1868 = vld [vmem:[%s1027 + $0xb0] sm:$0xf]
    %v1869 = vld [vmem:[%s1027 + $0xb4] sm:$0xff]
    %v1870 = vld [vmem:[%s1027 + $0xbc] sm:$0xf]
    %v1903 = vunpack.c.l.b16 %v1839
    %v1904 = vunpack.c.h.b16 %v1839
    %v1905 = vunpack.c.l.b16 %v1840
    %v1906 = vunpack.c.l.b16 %v1841
    %v1907 = vunpack.c.h.b16 %v1841
    %v1908 = vunpack.c.l.b16 %v1842
    %v1909 = vunpack.c.l.b16 %v1843
    %v1910 = vunpack.c.h.b16 %v1843
    %v1911 = vunpack.c.l.b16 %v1844
    %v1912 = vunpack.c.l.b16 %v1845
    %v1913 = vunpack.c.h.b16 %v1845
    %v1914 = vunpack.c.l.b16 %v1846
    %v1915 = vunpack.c.l.b16 %v1847
    %v1916 = vunpack.c.h.b16 %v1847
    %v1917 = vunpack.c.l.b16 %v1848
    %v1918 = vunpack.c.l.b16 %v1849
    %v1919 = vunpack.c.h.b16 %v1849
    %v1920 = vunpack.c.l.b16 %v1850
    %v1921 = vunpack.c.l.b16 %v1851
    %v1922 = vunpack.c.h.b16 %v1851
    %v1923 = vunpack.c.l.b16 %v1852
    %v1924 = vunpack.c.l.b16 %v1853
    %v1925 = vunpack.c.h.b16 %v1853
    %v1926 = vunpack.c.l.b16 %v1854
    %v1927 = vunpack.c.l.b16 %v1855
    %v1928 = vunpack.c.h.b16 %v1855
    %v1929 = vunpack.c.l.b16 %v1856
    %v1930 = vunpack.c.l.b16 %v1857
    %v1931 = vunpack.c.h.b16 %v1857
    %v1932 = vunpack.c.l.b16 %v1858
    %v1933 = vunpack.c.l.b16 %v1859
    %v1934 = vunpack.c.h.b16 %v1859
    %v1935 = vunpack.c.l.b16 %v1860
    %v1936 = vunpack.c.l.b16 %v1861
    %v1937 = vunpack.c.h.b16 %v1861
    %v1938 = vunpack.c.l.b16 %v1862
    %v1939 = vunpack.c.l.b16 %v1863
    %v1940 = vunpack.c.h.b16 %v1863
    %v1941 = vunpack.c.l.b16 %v1864
    %v1942 = vunpack.c.l.b16 %v1865
    %v1943 = vunpack.c.h.b16 %v1865
    %v1944 = vunpack.c.l.b16 %v1866
    %v1945 = vunpack.c.l.b16 %v1867
    %v1946 = vunpack.c.h.b16 %v1867
    %v1947 = vunpack.c.l.b16 %v1868
    %v1948 = vunpack.c.l.b16 %v1869
    %v1949 = vunpack.c.h.b16 %v1869
    %v1950 = vunpack.c.l.b16 %v1870
    %v1951 = vpack.c.b16 %v1906, %v1903
    %v1952 = vpack.c.b16 %v1907, %v1904
    %v1953 = vpack.c.b16 %v1908, %v1905
    %v1954 = vpack.c.b16 %v1912, %v1909
    %v1955 = vpack.c.b16 %v1913, %v1910
    %v1956 = vpack.c.b16 %v1914, %v1911
    %v1957 = vpack.c.b16 %v1918, %v1915
    %v1958 = vpack.c.b16 %v1919, %v1916
    %v1959 = vpack.c.b16 %v1920, %v1917
    %v1960 = vpack.c.b16 %v1924, %v1921
    %v1961 = vpack.c.b16 %v1925, %v1922
    %v1962 = vpack.c.b16 %v1926, %v1923
    %v1963 = vpack.c.b16 %v1930, %v1927
    %v1964 = vpack.c.b16 %v1931, %v1928
    %v1965 = vpack.c.b16 %v1932, %v1929
    %v1966 = vpack.c.b16 %v1936, %v1933
    %v1967 = vpack.c.b16 %v1937, %v1934
    %v1968 = vpack.c.b16 %v1938, %v1935
    %v1969 = vpack.c.b16 %v1942, %v1939
    %v1970 = vpack.c.b16 %v1943, %v1940
    %v1971 = vpack.c.b16 %v1944, %v1941
    %v1972 = vpack.c.b16 %v1948, %v1945
    %v1973 = vpack.c.b16 %v1949, %v1946
    %v1974 = vpack.c.b16 %v1950, %v1947
    %1999 = vmatpush.bf16.msra.mxu0 %v1972
    %2000 = vmatpush.bf16.msra.mxu0 %v1969
    %2001 = vmatpush.bf16.msra.mxu0 %v1966
    %2002 = vmatpush.bf16.msra.mxu0 %v1963
    %2003 = vmatpush.bf16.msra.mxu0 %v1960
    %2004 = vmatpush.bf16.msra.mxu0 %v1957
    %2005 = vmatpush.bf16.msra.mxu0 %v1954
    %2006 = vmatpush.bf16.msra.mxu0 %v1951
    %2007 = vmatmul.bf16.gmra.mxu0 %v1540
    %v2008 = vpop.f32.mrf.mxu0
    %v2009 = vadd.f32 %v557, %v2008
    %v2010 = vpop.f32.mrf.mxu0
    %v2011 = vadd.f32 %v557, %v2010
    %2012 = vdwg.mxu0
    %2013 = vmatpush.bf16.msra.mxu0 %v1973
    %2014 = vmatpush.bf16.msra.mxu0 %v1970
    %2015 = vmatpush.bf16.msra.mxu0 %v1967
    %2016 = vmatpush.bf16.msra.mxu0 %v1964
    %2017 = vmatpush.bf16.msra.mxu0 %v1961
    %2018 = vmatpush.bf16.msra.mxu0 %v1958
    %2019 = vmatpush.bf16.msra.mxu0 %v1955
    %2020 = vmatpush.bf16.msra.mxu0 %v1952
    %2021 = vmatmul.bf16.gmra.mxu0 %v1540
    %v2022 = vpop.f32.mrf.mxu0
    %v2023 = vadd.f32 %v558, %v2022
    %v2024 = vpop.f32.mrf.mxu0
    %v2025 = vadd.f32 %v558, %v2024
    %2026 = vdwg.mxu0
    %2027 = vmatpush.bf16.msra.mxu0 %v1974
    %2028 = vmatpush.bf16.msra.mxu0 %v1971
    %2029 = vmatpush.bf16.msra.mxu0 %v1968
    %2030 = vmatpush.bf16.msra.mxu0 %v1965
    %2031 = vmatpush.bf16.msra.mxu0 %v1962
    %2032 = vmatpush.bf16.msra.mxu0 %v1959
    %2033 = vmatpush.bf16.msra.mxu0 %v1956
    %2034 = vmatpush.bf16.msra.mxu0 %v1953
    %2035 = vmatmul.bf16.gmra.mxu0 %v1540
    %v2036 = vpop.f32.mrf.mxu0
    %v2037 = vadd.f32 %v559, %v2036
    %v2038 = vpop.f32.mrf.mxu0
    %v2039 = vadd.f32 %v559, %v2038
    %2040 = vdwg.mxu0
    %v2041 = vld [vmem:[%s1231] sm:$0xff]
    %v2042 = vld [vmem:[%s1231 + $0x8] sm:$0xf]
    %v2043 = vld [vmem:[%s1231 + $0xc] sm:$0xff]
    %v2044 = vld [vmem:[%s1231 + $0x14] sm:$0xf]
    %v2045 = vld [vmem:[%s1231 + $0x18] sm:$0xff]
    %v2046 = vld [vmem:[%s1231 + $0x20] sm:$0xf]
    %v2047 = vld [vmem:[%s1231 + $0x24] sm:$0xff]
    %v2048 = vld [vmem:[%s1231 + $0x2c] sm:$0xf]
    %v2049 = vld [vmem:[%s1231 + $0x30] sm:$0xff]
    %v2050 = vld [vmem:[%s1231 + $0x38] sm:$0xf]
    %v2051 = vld [vmem:[%s1231 + $0x3c] sm:$0xff]
    %v2052 = vld [vmem:[%s1231 + $0x44] sm:$0xf]
    %v2053 = vld [vmem:[%s1231 + $0x48] sm:$0xff]
    %v2054 = vld [vmem:[%s1231 + $0x50] sm:$0xf]
    %v2055 = vld [vmem:[%s1231 + $0x54] sm:$0xff]
    %v2056 = vld [vmem:[%s1231 + $0x5c] sm:$0xf]
    %v2057 = vld [vmem:[%s1231 + $0x60] sm:$0xff]
    %v2058 = vld [vmem:[%s1231 + $0x68] sm:$0xf]
    %v2059 = vld [vmem:[%s1231 + $0x6c] sm:$0xff]
    %v2060 = vld [vmem:[%s1231 + $0x74] sm:$0xf]
    %v2061 = vld [vmem:[%s1231 + $0x78] sm:$0xff]
    %v2062 = vld [vmem:[%s1231 + $0x80] sm:$0xf]
    %v2063 = vld [vmem:[%s1231 + $0x84] sm:$0xff]
    %v2064 = vld [vmem:[%s1231 + $0x8c] sm:$0xf]
    %v2065 = vld [vmem:[%s1231 + $0x90] sm:$0xff]
    %v2066 = vld [vmem:[%s1231 + $0x98] sm:$0xf]
    %v2067 = vld [vmem:[%s1231 + $0x9c] sm:$0xff]
    %v2068 = vld [vmem:[%s1231 + $0xa4] sm:$0xf]
    %v2069 = vld [vmem:[%s1231 + $0xa8] sm:$0xff]
    %v2070 = vld [vmem:[%s1231 + $0xb0] sm:$0xf]
    %v2071 = vld [vmem:[%s1231 + $0xb4] sm:$0xff]
    %v2072 = vld [vmem:[%s1231 + $0xbc] sm:$0xf]
    %v2075 = vunpack.c.l.b16 %v1530
    %v2076 = vunpack.c.l.b16 %v1531
    %v2077 = vpack.c.b16 %v2076, %v2075
    %v2111 = vunpack.c.l.b16 %v2041
    %v2112 = vunpack.c.h.b16 %v2041
    %v2113 = vunpack.c.l.b16 %v2042
    %v2114 = vunpack.c.l.b16 %v2043
    %v2115 = vunpack.c.h.b16 %v2043
    %v2116 = vunpack.c.l.b16 %v2044
    %v2117 = vunpack.c.l.b16 %v2045
    %v2118 = vunpack.c.h.b16 %v2045
    %v2119 = vunpack.c.l.b16 %v2046
    %v2120 = vunpack.c.l.b16 %v2047
    %v2121 = vunpack.c.h.b16 %v2047
    %v2122 = vunpack.c.l.b16 %v2048
    %v2123 = vunpack.c.l.b16 %v2049
    %v2124 = vunpack.c.h.b16 %v2049
    %v2125 = vunpack.c.l.b16 %v2050
    %v2126 = vunpack.c.l.b16 %v2051
    %v2127 = vunpack.c.h.b16 %v2051
    %v2128 = vunpack.c.l.b16 %v2052
    %v2129 = vunpack.c.l.b16 %v2053
    %v2130 = vunpack.c.h.b16 %v2053
    %v2131 = vunpack.c.l.b16 %v2054
    %v2132 = vunpack.c.l.b16 %v2055
    %v2133 = vunpack.c.h.b16 %v2055
    %v2134 = vunpack.c.l.b16 %v2056
    %v2135 = vunpack.c.l.b16 %v2057
    %v2136 = vunpack.c.h.b16 %v2057
    %v2137 = vunpack.c.l.b16 %v2058
    %v2138 = vunpack.c.l.b16 %v2059
    %v2139 = vunpack.c.h.b16 %v2059
    %v2140 = vunpack.c.l.b16 %v2060
    %v2141 = vunpack.c.l.b16 %v2061
    %v2142 = vunpack.c.h.b16 %v2061
    %v2143 = vunpack.c.l.b16 %v2062
    %v2144 = vunpack.c.l.b16 %v2063
    %v2145 = vunpack.c.h.b16 %v2063
    %v2146 = vunpack.c.l.b16 %v2064
    %v2147 = vunpack.c.l.b16 %v2065
    %v2148 = vunpack.c.h.b16 %v2065
    %v2149 = vunpack.c.l.b16 %v2066
    %v2150 = vunpack.c.l.b16 %v2067
    %v2151 = vunpack.c.h.b16 %v2067
    %v2152 = vunpack.c.l.b16 %v2068
    %v2153 = vunpack.c.l.b16 %v2069
    %v2154 = vunpack.c.h.b16 %v2069
    %v2155 = vunpack.c.l.b16 %v2070
    %v2156 = vunpack.c.l.b16 %v2071
    %v2157 = vunpack.c.h.b16 %v2071
    %v2158 = vunpack.c.l.b16 %v2072
    %v2159 = vpack.c.b16 %v2114, %v2111
    %v2160 = vpack.c.b16 %v2115, %v2112
    %v2161 = vpack.c.b16 %v2116, %v2113
    %v2162 = vpack.c.b16 %v2120, %v2117
    %v2163 = vpack.c.b16 %v2121, %v2118
    %v2164 = vpack.c.b16 %v2122, %v2119
    %v2165 = vpack.c.b16 %v2126, %v2123
    %v2166 = vpack.c.b16 %v2127, %v2124
    %v2167 = vpack.c.b16 %v2128, %v2125
    %v2168 = vpack.c.b16 %v2132, %v2129
    %v2169 = vpack.c.b16 %v2133, %v2130
    %v2170 = vpack.c.b16 %v2134, %v2131
    %v2171 = vpack.c.b16 %v2138, %v2135
    %v2172 = vpack.c.b16 %v2139, %v2136
    %v2173 = vpack.c.b16 %v2140, %v2137
    %v2174 = vpack.c.b16 %v2144, %v2141
    %v2175 = vpack.c.b16 %v2145, %v2142
    %v2176 = vpack.c.b16 %v2146, %v2143
    %v2177 = vpack.c.b16 %v2150, %v2147
    %v2178 = vpack.c.b16 %v2151, %v2148
    %v2179 = vpack.c.b16 %v2152, %v2149
    %v2180 = vpack.c.b16 %v2156, %v2153
    %v2181 = vpack.c.b16 %v2157, %v2154
    %v2182 = vpack.c.b16 %v2158, %v2155
    %2207 = vmatpush.bf16.msra.mxu0 %v2180
    %2208 = vmatpush.bf16.msra.mxu0 %v2177
    %2209 = vmatpush.bf16.msra.mxu0 %v2174
    %2210 = vmatpush.bf16.msra.mxu0 %v2171
    %2211 = vmatpush.bf16.msra.mxu0 %v2168
    %2212 = vmatpush.bf16.msra.mxu0 %v2165
    %2213 = vmatpush.bf16.msra.mxu0 %v2162
    %2214 = vmatpush.bf16.msra.mxu0 %v2159
    %2215 = vmatmul.bf16.gmra.mxu0 %v2077
    %v2216 = vpop.f32.mrf.mxu0
    %v2217 = vadd.f32 0.0, %v2216
    %v2218 = vpop.f32.mrf.mxu0
    %v2219 = vadd.f32 0.0, %v2218
    %2220 = vdwg.mxu0
    %2221 = vmatpush.bf16.msra.mxu0 %v2181
    %2222 = vmatpush.bf16.msra.mxu0 %v2178
    %2223 = vmatpush.bf16.msra.mxu0 %v2175
    %2224 = vmatpush.bf16.msra.mxu0 %v2172
    %2225 = vmatpush.bf16.msra.mxu0 %v2169
    %2226 = vmatpush.bf16.msra.mxu0 %v2166
    %2227 = vmatpush.bf16.msra.mxu0 %v2163
    %2228 = vmatpush.bf16.msra.mxu0 %v2160
    %2229 = vmatmul.bf16.gmra.mxu0 %v2077
    %v2230 = vpop.f32.mrf.mxu0
    %v2231 = vadd.f32 0.0, %v2230
    %v2232 = vpop.f32.mrf.mxu0
    %v2233 = vadd.f32 0.0, %v2232
    %2234 = vdwg.mxu0
    %2235 = vmatpush.bf16.msra.mxu0 %v2182
    %2236 = vmatpush.bf16.msra.mxu0 %v2179
    %2237 = vmatpush.bf16.msra.mxu0 %v2176
    %2238 = vmatpush.bf16.msra.mxu0 %v2173
    %2239 = vmatpush.bf16.msra.mxu0 %v2170
    %2240 = vmatpush.bf16.msra.mxu0 %v2167
    %2241 = vmatpush.bf16.msra.mxu0 %v2164
    %2242 = vmatpush.bf16.msra.mxu0 %v2161
    %2243 = vmatmul.bf16.gmra.mxu0 %v2077
    %v2244 = vpop.f32.mrf.mxu0
    %v2245 = vadd.f32 0.0, %v2244
    %v2246 = vpop.f32.mrf.mxu0
    %v2247 = vadd.f32 0.0, %v2246
    %2248 = vdwg.mxu0
    %v2249 = vadd.f32 %v2009, %v2217
    %v2250 = vadd.f32 %v2011, %v2219
    %v2251 = vxor.u32 %v2249, 2147483648
    %v2252 = vxor.u32 %v2250, 2147483648
    %v2253 = vmul.f32 %v2251, 1.442695
    %v2254 = vpow.pop %v2253
    %v2255 = vmul.f32 %v2252, 1.442695
    %v2256 = vpow.pop %v2255
    %v2257 = vadd.f32 %v2254, 1.0
    %v2258 = vadd.f32 %v2256, 1.0
    %v2259 = vrcp.pop %v2257
    %v2260 = vmul.f32 %v2257, %v2259
    %v2261 = vsub.f32 1.0, %v2260
    %v2262 = vmul.f32 %v2259, %v2261
    %v2263 = vadd.f32 %v2259, %v2262
    %vm2264 = vweird.f32 %v2257
    %vm2265 = vweird.f32 %v2259
    %vm2266 = vmor %vm2264, %vm2265
    %v2267 = vsel %vm2266, %v2259, %v2263
    %v2268 = vand.u32 2147483647, %v2257
    %vm2269 = vcmp.eq.f32.partialorder %v2268, 8.507059e+37
    %v2270 = vand.u32 %v2257, 2147483648
    %v2271 = vor.u32 1.1754944e-38, %v2270
    %v2272 = vsel %vm2269, %v2271, %v2267
    %v2273 = vmul.f32 1.0, %v2272
    %v2274 = vrcp.pop %v2258
    %v2275 = vmul.f32 %v2258, %v2274
    %v2276 = vsub.f32 1.0, %v2275
    %v2277 = vmul.f32 %v2274, %v2276
    %v2278 = vadd.f32 %v2274, %v2277
    %vm2279 = vweird.f32 %v2258
    %vm2280 = vweird.f32 %v2274
    %vm2281 = vmor %vm2279, %vm2280
    %v2282 = vsel %vm2281, %v2274, %v2278
    %v2283 = vand.u32 2147483647, %v2258
    %vm2284 = vcmp.eq.f32.partialorder %v2283, 8.507059e+37
    %v2285 = vand.u32 %v2258, 2147483648
    %v2286 = vor.u32 1.1754944e-38, %v2285
    %v2287 = vsel %vm2284, %v2286, %v2282
    %v2288 = vmul.f32 1.0, %v2287
    %v2289 = vadd.f32 %v2023, %v2231
    %v2290 = vadd.f32 %v2025, %v2233
    %v2291 = vxor.u32 %v2289, 2147483648
    %v2292 = vxor.u32 %v2290, 2147483648
    %v2293 = vmul.f32 %v2291, 1.442695
    %v2294 = vpow.pop %v2293
    %v2295 = vmul.f32 %v2292, 1.442695
    %v2296 = vpow.pop %v2295
    %v2297 = vadd.f32 %v2294, 1.0
    %v2298 = vadd.f32 %v2296, 1.0
    %v2299 = vrcp.pop %v2297
    %v2300 = vmul.f32 %v2297, %v2299
    %v2301 = vsub.f32 1.0, %v2300
    %v2302 = vmul.f32 %v2299, %v2301
    %v2303 = vadd.f32 %v2299, %v2302
    %vm2304 = vweird.f32 %v2297
    %vm2305 = vweird.f32 %v2299
    %vm2306 = vmor %vm2304, %vm2305
    %v2307 = vsel %vm2306, %v2299, %v2303
    %v2308 = vand.u32 2147483647, %v2297
    %vm2309 = vcmp.eq.f32.partialorder %v2308, 8.507059e+37
    %v2310 = vand.u32 %v2297, 2147483648
    %v2311 = vor.u32 1.1754944e-38, %v2310
    %v2312 = vsel %vm2309, %v2311, %v2307
    %v2313 = vmul.f32 1.0, %v2312
    %v2314 = vrcp.pop %v2298
    %v2315 = vmul.f32 %v2298, %v2314
    %v2316 = vsub.f32 1.0, %v2315
    %v2317 = vmul.f32 %v2314, %v2316
    %v2318 = vadd.f32 %v2314, %v2317
    %vm2319 = vweird.f32 %v2298
    %vm2320 = vweird.f32 %v2314
    %vm2321 = vmor %vm2319, %vm2320
    %v2322 = vsel %vm2321, %v2314, %v2318
    %v2323 = vand.u32 2147483647, %v2298
    %vm2324 = vcmp.eq.f32.partialorder %v2323, 8.507059e+37
    %v2325 = vand.u32 %v2298, 2147483648
    %v2326 = vor.u32 1.1754944e-38, %v2325
    %v2327 = vsel %vm2324, %v2326, %v2322
    %v2328 = vmul.f32 1.0, %v2327
    %v2329 = vadd.f32 %v2245, %v570
    %v2330 = vadd.f32 %v2247, %v570
    %v2331 = vmul.f32 %v2273, %v2329
    %v2332 = vmul.f32 %v2288, %v2330
    %v2333 = vadd.f32 %v2037, %v2331
    %v2334 = vadd.f32 %v2039, %v2332
    %v2335 = vtanh.pop %v2333
    %v2336 = vtanh.pop %v2334
    %v2337 = vsub.f32 1.0, %v2313
    %v2338 = vsub.f32 1.0, %v2328
    %v2339 = vmul.f32 %v2337, %v2335
    %v2340 = vmul.f32 %v2338, %v2336
    %v2341 = vmul.f32 %v2313, %v1528
    %v2342 = vmul.f32 %v2328, %v1529
    %v2343 = vadd.f32 %v2339, %v2341
    %v2344 = vadd.f32 %v2340, %v2342
    %v2345 = vpack.c.bf16 %v2343, %v2343
    %v2346 = vpack.c.bf16 %v2344, %v2344
    %s2347 = scalar_lea.vmem [#allocation2], 8
    %2348 = vst [vmem:[%s2347] sm:$0xf] %v2345
    %2349 = vst [vmem:[%s2347 + $0x4] sm:$0xf] %v2346
    %v2350 = vld [vmem:[#allocation3 + $0x90] sm:$0xff]
    %v2351 = vld [vmem:[#allocation3 + $0x98] sm:$0xff]
    %v2352 = vld [vmem:[#allocation3 + $0xa0] sm:$0xff]
    %v2353 = vld [vmem:[#allocation3 + $0xa8] sm:$0xff]
    %v2354 = vld [vmem:[#allocation3 + $0xb0] sm:$0xff]
    %v2355 = vld [vmem:[#allocation3 + $0xb8] sm:$0xff]
    %v2356 = vpack.c.bf16 %v1838, %v1837
    %v2357 = vld [vmem:[#allocation10] sm:$0xff]
    %v2358 = vld [vmem:[#allocation10 + $0x8] sm:$0xf]
    %v2359 = vld [vmem:[#allocation10 + $0xc] sm:$0xff]
    %v2360 = vld [vmem:[#allocation10 + $0x14] sm:$0xf]
    %v2361 = vld [vmem:[#allocation10 + $0x18] sm:$0xff]
    %v2362 = vld [vmem:[#allocation10 + $0x20] sm:$0xf]
    %v2363 = vld [vmem:[#allocation10 + $0x24] sm:$0xff]
    %v2364 = vld [vmem:[#allocation10 + $0x2c] sm:$0xf]
    %v2365 = vld [vmem:[#allocation10 + $0x30] sm:$0xff]
    %v2366 = vld [vmem:[#allocation10 + $0x38] sm:$0xf]
    %v2367 = vld [vmem:[#allocation10 + $0x3c] sm:$0xff]
    %v2368 = vld [vmem:[#allocation10 + $0x44] sm:$0xf]
    %v2369 = vld [vmem:[#allocation10 + $0x48] sm:$0xff]
    %v2370 = vld [vmem:[#allocation10 + $0x50] sm:$0xf]
    %v2371 = vld [vmem:[#allocation10 + $0x54] sm:$0xff]
    %v2372 = vld [vmem:[#allocation10 + $0x5c] sm:$0xf]
    %v2373 = vld [vmem:[#allocation10 + $0x60] sm:$0xff]
    %v2374 = vld [vmem:[#allocation10 + $0x68] sm:$0xf]
    %v2375 = vld [vmem:[#allocation10 + $0x6c] sm:$0xff]
    %v2376 = vld [vmem:[#allocation10 + $0x74] sm:$0xf]
    %v2377 = vld [vmem:[#allocation10 + $0x78] sm:$0xff]
    %v2378 = vld [vmem:[#allocation10 + $0x80] sm:$0xf]
    %v2379 = vld [vmem:[#allocation10 + $0x84] sm:$0xff]
    %v2380 = vld [vmem:[#allocation10 + $0x8c] sm:$0xf]
    %v2381 = vld [vmem:[#allocation10 + $0x90] sm:$0xff]
    %v2382 = vld [vmem:[#allocation10 + $0x98] sm:$0xf]
    %v2383 = vld [vmem:[#allocation10 + $0x9c] sm:$0xff]
    %v2384 = vld [vmem:[#allocation10 + $0xa4] sm:$0xf]
    %v2385 = vld [vmem:[#allocation10 + $0xa8] sm:$0xff]
    %v2386 = vld [vmem:[#allocation10 + $0xb0] sm:$0xf]
    %v2387 = vld [vmem:[#allocation10 + $0xb4] sm:$0xff]
    %v2388 = vld [vmem:[#allocation10 + $0xbc] sm:$0xf]
    %v2421 = vunpack.c.l.b16 %v2357
    %v2422 = vunpack.c.h.b16 %v2357
    %v2423 = vunpack.c.l.b16 %v2358
    %v2424 = vunpack.c.l.b16 %v2359
    %v2425 = vunpack.c.h.b16 %v2359
    %v2426 = vunpack.c.l.b16 %v2360
    %v2427 = vunpack.c.l.b16 %v2361
    %v2428 = vunpack.c.h.b16 %v2361
    %v2429 = vunpack.c.l.b16 %v2362
    %v2430 = vunpack.c.l.b16 %v2363
    %v2431 = vunpack.c.h.b16 %v2363
    %v2432 = vunpack.c.l.b16 %v2364
    %v2433 = vunpack.c.l.b16 %v2365
    %v2434 = vunpack.c.h.b16 %v2365
    %v2435 = vunpack.c.l.b16 %v2366
    %v2436 = vunpack.c.l.b16 %v2367
    %v2437 = vunpack.c.h.b16 %v2367
    %v2438 = vunpack.c.l.b16 %v2368
    %v2439 = vunpack.c.l.b16 %v2369
    %v2440 = vunpack.c.h.b16 %v2369
    %v2441 = vunpack.c.l.b16 %v2370
    %v2442 = vunpack.c.l.b16 %v2371
    %v2443 = vunpack.c.h.b16 %v2371
    %v2444 = vunpack.c.l.b16 %v2372
    %v2445 = vunpack.c.l.b16 %v2373
    %v2446 = vunpack.c.h.b16 %v2373
    %v2447 = vunpack.c.l.b16 %v2374
    %v2448 = vunpack.c.l.b16 %v2375
    %v2449 = vunpack.c.h.b16 %v2375
    %v2450 = vunpack.c.l.b16 %v2376
    %v2451 = vunpack.c.l.b16 %v2377
    %v2452 = vunpack.c.h.b16 %v2377
    %v2453 = vunpack.c.l.b16 %v2378
    %v2454 = vunpack.c.l.b16 %v2379
    %v2455 = vunpack.c.h.b16 %v2379
    %v2456 = vunpack.c.l.b16 %v2380
    %v2457 = vunpack.c.l.b16 %v2381
    %v2458 = vunpack.c.h.b16 %v2381
    %v2459 = vunpack.c.l.b16 %v2382
    %v2460 = vunpack.c.l.b16 %v2383
    %v2461 = vunpack.c.h.b16 %v2383
    %v2462 = vunpack.c.l.b16 %v2384
    %v2463 = vunpack.c.l.b16 %v2385
    %v2464 = vunpack.c.h.b16 %v2385
    %v2465 = vunpack.c.l.b16 %v2386
    %v2466 = vunpack.c.l.b16 %v2387
    %v2467 = vunpack.c.h.b16 %v2387
    %v2468 = vunpack.c.l.b16 %v2388
    %v2469 = vpack.c.b16 %v2424, %v2421
    %v2470 = vpack.c.b16 %v2425, %v2422
    %v2471 = vpack.c.b16 %v2426, %v2423
    %v2472 = vpack.c.b16 %v2430, %v2427
    %v2473 = vpack.c.b16 %v2431, %v2428
    %v2474 = vpack.c.b16 %v2432, %v2429
    %v2475 = vpack.c.b16 %v2436, %v2433
    %v2476 = vpack.c.b16 %v2437, %v2434
    %v2477 = vpack.c.b16 %v2438, %v2435
    %v2478 = vpack.c.b16 %v2442, %v2439
    %v2479 = vpack.c.b16 %v2443, %v2440
    %v2480 = vpack.c.b16 %v2444, %v2441
    %v2481 = vpack.c.b16 %v2448, %v2445
    %v2482 = vpack.c.b16 %v2449, %v2446
    %v2483 = vpack.c.b16 %v2450, %v2447
    %v2484 = vpack.c.b16 %v2454, %v2451
    %v2485 = vpack.c.b16 %v2455, %v2452
    %v2486 = vpack.c.b16 %v2456, %v2453
    %v2487 = vpack.c.b16 %v2460, %v2457
    %v2488 = vpack.c.b16 %v2461, %v2458
    %v2489 = vpack.c.b16 %v2462, %v2459
    %v2490 = vpack.c.b16 %v2466, %v2463
    %v2491 = vpack.c.b16 %v2467, %v2464
    %v2492 = vpack.c.b16 %v2468, %v2465
    %2517 = vmatpush.bf16.msra.mxu0 %v2490
    %2518 = vmatpush.bf16.msra.mxu0 %v2487
    %2519 = vmatpush.bf16.msra.mxu0 %v2484
    %2520 = vmatpush.bf16.msra.mxu0 %v2481
    %2521 = vmatpush.bf16.msra.mxu0 %v2478
    %2522 = vmatpush.bf16.msra.mxu0 %v2475
    %2523 = vmatpush.bf16.msra.mxu0 %v2472
    %2524 = vmatpush.bf16.msra.mxu0 %v2469
    %2525 = vmatmul.bf16.gmra.mxu0 %v2356
    %v2526 = vpop.f32.mrf.mxu0
    %v2527 = vadd.f32 0.0, %v2526
    %v2528 = vpop.f32.mrf.mxu0
    %v2529 = vadd.f32 0.0, %v2528
    %2530 = vdwg.mxu0
    %2531 = vmatpush.bf16.msra.mxu0 %v2491
    %2532 = vmatpush.bf16.msra.mxu0 %v2488
    %2533 = vmatpush.bf16.msra.mxu0 %v2485
    %2534 = vmatpush.bf16.msra.mxu0 %v2482
    %2535 = vmatpush.bf16.msra.mxu0 %v2479
    %2536 = vmatpush.bf16.msra.mxu0 %v2476
    %2537 = vmatpush.bf16.msra.mxu0 %v2473
    %2538 = vmatpush.bf16.msra.mxu0 %v2470
    %2539 = vmatmul.bf16.gmra.mxu0 %v2356
    %v2540 = vpop.f32.mrf.mxu0
    %v2541 = vadd.f32 0.0, %v2540
    %v2542 = vpop.f32.mrf.mxu0
    %v2543 = vadd.f32 0.0, %v2542
    %2544 = vdwg.mxu0
    %2545 = vmatpush.bf16.msra.mxu0 %v2492
    %2546 = vmatpush.bf16.msra.mxu0 %v2489
    %2547 = vmatpush.bf16.msra.mxu0 %v2486
    %2548 = vmatpush.bf16.msra.mxu0 %v2483
    %2549 = vmatpush.bf16.msra.mxu0 %v2480
    %2550 = vmatpush.bf16.msra.mxu0 %v2477
    %2551 = vmatpush.bf16.msra.mxu0 %v2474
    %2552 = vmatpush.bf16.msra.mxu0 %v2471
    %2553 = vmatmul.bf16.gmra.mxu0 %v2356
    %v2554 = vpop.f32.mrf.mxu0
    %v2555 = vadd.f32 0.0, %v2554
    %v2556 = vpop.f32.mrf.mxu0
    %v2557 = vadd.f32 0.0, %v2556
    %2558 = vdwg.mxu0
    %v2559 = vadd.f32 %v2350, %v2527
    %v2560 = vadd.f32 %v2353, %v2529
    %v2561 = vxor.u32 %v2559, 2147483648
    %v2562 = vxor.u32 %v2560, 2147483648
    %v2563 = vmul.f32 %v2561, 1.442695
    %v2564 = vpow.pop %v2563
    %v2565 = vmul.f32 %v2562, 1.442695
    %v2566 = vpow.pop %v2565
    %v2567 = vadd.f32 %v2564, 1.0
    %v2568 = vadd.f32 %v2566, 1.0
    %v2569 = vrcp.pop %v2567
    %v2570 = vmul.f32 %v2567, %v2569
    %v2571 = vsub.f32 1.0, %v2570
    %v2572 = vmul.f32 %v2569, %v2571
    %v2573 = vadd.f32 %v2569, %v2572
    %vm2574 = vweird.f32 %v2567
    %vm2575 = vweird.f32 %v2569
    %vm2576 = vmor %vm2574, %vm2575
    %v2577 = vsel %vm2576, %v2569, %v2573
    %v2578 = vand.u32 2147483647, %v2567
    %vm2579 = vcmp.eq.f32.partialorder %v2578, 8.507059e+37
    %v2580 = vand.u32 %v2567, 2147483648
    %v2581 = vor.u32 1.1754944e-38, %v2580
    %v2582 = vsel %vm2579, %v2581, %v2577
    %v2583 = vmul.f32 1.0, %v2582
    %v2584 = vrcp.pop %v2568
    %v2585 = vmul.f32 %v2568, %v2584
    %v2586 = vsub.f32 1.0, %v2585
    %v2587 = vmul.f32 %v2584, %v2586
    %v2588 = vadd.f32 %v2584, %v2587
    %vm2589 = vweird.f32 %v2568
    %vm2590 = vweird.f32 %v2584
    %vm2591 = vmor %vm2589, %vm2590
    %v2592 = vsel %vm2591, %v2584, %v2588
    %v2593 = vand.u32 2147483647, %v2568
    %vm2594 = vcmp.eq.f32.partialorder %v2593, 8.507059e+37
    %v2595 = vand.u32 %v2568, 2147483648
    %v2596 = vor.u32 1.1754944e-38, %v2595
    %v2597 = vsel %vm2594, %v2596, %v2592
    %v2598 = vmul.f32 1.0, %v2597
    %v2599 = vadd.f32 %v2351, %v2541
    %v2600 = vadd.f32 %v2354, %v2543
    %v2601 = vxor.u32 %v2599, 2147483648
    %v2602 = vxor.u32 %v2600, 2147483648
    %v2603 = vmul.f32 %v2601, 1.442695
    %v2604 = vpow.pop %v2603
    %v2605 = vmul.f32 %v2602, 1.442695
    %v2606 = vpow.pop %v2605
    %v2607 = vadd.f32 %v2604, 1.0
    %v2608 = vadd.f32 %v2606, 1.0
    %v2609 = vrcp.pop %v2607
    %v2610 = vmul.f32 %v2607, %v2609
    %v2611 = vsub.f32 1.0, %v2610
    %v2612 = vmul.f32 %v2609, %v2611
    %v2613 = vadd.f32 %v2609, %v2612
    %vm2614 = vweird.f32 %v2607
    %vm2615 = vweird.f32 %v2609
    %vm2616 = vmor %vm2614, %vm2615
    %v2617 = vsel %vm2616, %v2609, %v2613
    %v2618 = vand.u32 2147483647, %v2607
    %vm2619 = vcmp.eq.f32.partialorder %v2618, 8.507059e+37
    %v2620 = vand.u32 %v2607, 2147483648
    %v2621 = vor.u32 1.1754944e-38, %v2620
    %v2622 = vsel %vm2619, %v2621, %v2617
    %v2623 = vmul.f32 1.0, %v2622
    %v2624 = vrcp.pop %v2608
    %v2625 = vmul.f32 %v2608, %v2624
    %v2626 = vsub.f32 1.0, %v2625
    %v2627 = vmul.f32 %v2624, %v2626
    %v2628 = vadd.f32 %v2624, %v2627
    %vm2629 = vweird.f32 %v2608
    %vm2630 = vweird.f32 %v2624
    %vm2631 = vmor %vm2629, %vm2630
    %v2632 = vsel %vm2631, %v2624, %v2628
    %v2633 = vand.u32 2147483647, %v2608
    %vm2634 = vcmp.eq.f32.partialorder %v2633, 8.507059e+37
    %v2635 = vand.u32 %v2608, 2147483648
    %v2636 = vor.u32 1.1754944e-38, %v2635
    %v2637 = vsel %vm2634, %v2636, %v2632
    %v2638 = vmul.f32 1.0, %v2637
    %v2639 = vadd.f32 %v2555, %v565
    %v2640 = vadd.f32 %v2557, %v565
    %v2641 = vmul.f32 %v2583, %v2639
    %v2642 = vmul.f32 %v2598, %v2640
    %v2643 = vadd.f32 %v2352, %v2641
    %v2644 = vadd.f32 %v2355, %v2642
    %v2645 = vtanh.pop %v2643
    %v2646 = vtanh.pop %v2644
    %v2647 = vsub.f32 1.0, %v2623
    %v2648 = vsub.f32 1.0, %v2638
    %v2649 = vmul.f32 %v2647, %v2645
    %v2650 = vmul.f32 %v2648, %v2646
    %v2651 = vmul.f32 %v2623, %v1837
    %v2652 = vmul.f32 %v2638, %v1838
    %v2653 = vadd.f32 %v2649, %v2651
    %v2654 = vadd.f32 %v2650, %v2652
    %v2655 = vld [vmem:[%s1027] sm:$0xff]
    %v2656 = vld [vmem:[%s1027 + $0x8] sm:$0xf]
    %v2657 = vld [vmem:[%s1027 + $0xc] sm:$0xff]
    %v2658 = vld [vmem:[%s1027 + $0x14] sm:$0xf]
    %v2659 = vld [vmem:[%s1027 + $0x18] sm:$0xff]
    %v2660 = vld [vmem:[%s1027 + $0x20] sm:$0xf]
    %v2661 = vld [vmem:[%s1027 + $0x24] sm:$0xff]
    %v2662 = vld [vmem:[%s1027 + $0x2c] sm:$0xf]
    %v2663 = vld [vmem:[%s1027 + $0x30] sm:$0xff]
    %v2664 = vld [vmem:[%s1027 + $0x38] sm:$0xf]
    %v2665 = vld [vmem:[%s1027 + $0x3c] sm:$0xff]
    %v2666 = vld [vmem:[%s1027 + $0x44] sm:$0xf]
    %v2667 = vld [vmem:[%s1027 + $0x48] sm:$0xff]
    %v2668 = vld [vmem:[%s1027 + $0x50] sm:$0xf]
    %v2669 = vld [vmem:[%s1027 + $0x54] sm:$0xff]
    %v2670 = vld [vmem:[%s1027 + $0x5c] sm:$0xf]
    %v2671 = vld [vmem:[%s1027 + $0x60] sm:$0xff]
    %v2672 = vld [vmem:[%s1027 + $0x68] sm:$0xf]
    %v2673 = vld [vmem:[%s1027 + $0x6c] sm:$0xff]
    %v2674 = vld [vmem:[%s1027 + $0x74] sm:$0xf]
    %v2675 = vld [vmem:[%s1027 + $0x78] sm:$0xff]
    %v2676 = vld [vmem:[%s1027 + $0x80] sm:$0xf]
    %v2677 = vld [vmem:[%s1027 + $0x84] sm:$0xff]
    %v2678 = vld [vmem:[%s1027 + $0x8c] sm:$0xf]
    %v2679 = vld [vmem:[%s1027 + $0x90] sm:$0xff]
    %v2680 = vld [vmem:[%s1027 + $0x98] sm:$0xf]
    %v2681 = vld [vmem:[%s1027 + $0x9c] sm:$0xff]
    %v2682 = vld [vmem:[%s1027 + $0xa4] sm:$0xf]
    %v2683 = vld [vmem:[%s1027 + $0xa8] sm:$0xff]
    %v2684 = vld [vmem:[%s1027 + $0xb0] sm:$0xf]
    %v2685 = vld [vmem:[%s1027 + $0xb4] sm:$0xff]
    %v2686 = vld [vmem:[%s1027 + $0xbc] sm:$0xf]
    %v2719 = vunpack.c.l.b16 %v2655
    %v2720 = vunpack.c.h.b16 %v2655
    %v2721 = vunpack.c.l.b16 %v2656
    %v2722 = vunpack.c.l.b16 %v2657
    %v2723 = vunpack.c.h.b16 %v2657
    %v2724 = vunpack.c.l.b16 %v2658
    %v2725 = vunpack.c.l.b16 %v2659
    %v2726 = vunpack.c.h.b16 %v2659
    %v2727 = vunpack.c.l.b16 %v2660
    %v2728 = vunpack.c.l.b16 %v2661
    %v2729 = vunpack.c.h.b16 %v2661
    %v2730 = vunpack.c.l.b16 %v2662
    %v2731 = vunpack.c.l.b16 %v2663
    %v2732 = vunpack.c.h.b16 %v2663
    %v2733 = vunpack.c.l.b16 %v2664
    %v2734 = vunpack.c.l.b16 %v2665
    %v2735 = vunpack.c.h.b16 %v2665
    %v2736 = vunpack.c.l.b16 %v2666
    %v2737 = vunpack.c.l.b16 %v2667
    %v2738 = vunpack.c.h.b16 %v2667
    %v2739 = vunpack.c.l.b16 %v2668
    %v2740 = vunpack.c.l.b16 %v2669
    %v2741 = vunpack.c.h.b16 %v2669
    %v2742 = vunpack.c.l.b16 %v2670
    %v2743 = vunpack.c.l.b16 %v2671
    %v2744 = vunpack.c.h.b16 %v2671
    %v2745 = vunpack.c.l.b16 %v2672
    %v2746 = vunpack.c.l.b16 %v2673
    %v2747 = vunpack.c.h.b16 %v2673
    %v2748 = vunpack.c.l.b16 %v2674
    %v2749 = vunpack.c.l.b16 %v2675
    %v2750 = vunpack.c.h.b16 %v2675
    %v2751 = vunpack.c.l.b16 %v2676
    %v2752 = vunpack.c.l.b16 %v2677
    %v2753 = vunpack.c.h.b16 %v2677
    %v2754 = vunpack.c.l.b16 %v2678
    %v2755 = vunpack.c.l.b16 %v2679
    %v2756 = vunpack.c.h.b16 %v2679
    %v2757 = vunpack.c.l.b16 %v2680
    %v2758 = vunpack.c.l.b16 %v2681
    %v2759 = vunpack.c.h.b16 %v2681
    %v2760 = vunpack.c.l.b16 %v2682
    %v2761 = vunpack.c.l.b16 %v2683
    %v2762 = vunpack.c.h.b16 %v2683
    %v2763 = vunpack.c.l.b16 %v2684
    %v2764 = vunpack.c.l.b16 %v2685
    %v2765 = vunpack.c.h.b16 %v2685
    %v2766 = vunpack.c.l.b16 %v2686
    %v2767 = vpack.c.b16 %v2722, %v2719
    %v2768 = vpack.c.b16 %v2723, %v2720
    %v2769 = vpack.c.b16 %v2724, %v2721
    %v2770 = vpack.c.b16 %v2728, %v2725
    %v2771 = vpack.c.b16 %v2729, %v2726
    %v2772 = vpack.c.b16 %v2730, %v2727
    %v2773 = vpack.c.b16 %v2734, %v2731
    %v2774 = vpack.c.b16 %v2735, %v2732
    %v2775 = vpack.c.b16 %v2736, %v2733
    %v2776 = vpack.c.b16 %v2740, %v2737
    %v2777 = vpack.c.b16 %v2741, %v2738
    %v2778 = vpack.c.b16 %v2742, %v2739
    %v2779 = vpack.c.b16 %v2746, %v2743
    %v2780 = vpack.c.b16 %v2747, %v2744
    %v2781 = vpack.c.b16 %v2748, %v2745
    %v2782 = vpack.c.b16 %v2752, %v2749
    %v2783 = vpack.c.b16 %v2753, %v2750
    %v2784 = vpack.c.b16 %v2754, %v2751
    %v2785 = vpack.c.b16 %v2758, %v2755
    %v2786 = vpack.c.b16 %v2759, %v2756
    %v2787 = vpack.c.b16 %v2760, %v2757
    %v2788 = vpack.c.b16 %v2764, %v2761
    %v2789 = vpack.c.b16 %v2765, %v2762
    %v2790 = vpack.c.b16 %v2766, %v2763
    %2815 = vmatpush.bf16.msra.mxu0 %v2788
    %2816 = vmatpush.bf16.msra.mxu0 %v2785
    %2817 = vmatpush.bf16.msra.mxu0 %v2782
    %2818 = vmatpush.bf16.msra.mxu0 %v2779
    %2819 = vmatpush.bf16.msra.mxu0 %v2776
    %2820 = vmatpush.bf16.msra.mxu0 %v2773
    %2821 = vmatpush.bf16.msra.mxu0 %v2770
    %2822 = vmatpush.bf16.msra.mxu0 %v2767
    %2823 = vmatmul.bf16.gmra.mxu0 %v2356
    %v2824 = vpop.f32.mrf.mxu0
    %v2825 = vadd.f32 %v557, %v2824
    %v2826 = vpop.f32.mrf.mxu0
    %v2827 = vadd.f32 %v557, %v2826
    %2828 = vdwg.mxu0
    %2829 = vmatpush.bf16.msra.mxu0 %v2789
    %2830 = vmatpush.bf16.msra.mxu0 %v2786
    %2831 = vmatpush.bf16.msra.mxu0 %v2783
    %2832 = vmatpush.bf16.msra.mxu0 %v2780
    %2833 = vmatpush.bf16.msra.mxu0 %v2777
    %2834 = vmatpush.bf16.msra.mxu0 %v2774
    %2835 = vmatpush.bf16.msra.mxu0 %v2771
    %2836 = vmatpush.bf16.msra.mxu0 %v2768
    %2837 = vmatmul.bf16.gmra.mxu0 %v2356
    %v2838 = vpop.f32.mrf.mxu0
    %v2839 = vadd.f32 %v558, %v2838
    %v2840 = vpop.f32.mrf.mxu0
    %v2841 = vadd.f32 %v558, %v2840
    %2842 = vdwg.mxu0
    %2843 = vmatpush.bf16.msra.mxu0 %v2790
    %2844 = vmatpush.bf16.msra.mxu0 %v2787
    %2845 = vmatpush.bf16.msra.mxu0 %v2784
    %2846 = vmatpush.bf16.msra.mxu0 %v2781
    %2847 = vmatpush.bf16.msra.mxu0 %v2778
    %2848 = vmatpush.bf16.msra.mxu0 %v2775
    %2849 = vmatpush.bf16.msra.mxu0 %v2772
    %2850 = vmatpush.bf16.msra.mxu0 %v2769
    %2851 = vmatmul.bf16.gmra.mxu0 %v2356
    %v2852 = vpop.f32.mrf.mxu0
    %v2853 = vadd.f32 %v559, %v2852
    %v2854 = vpop.f32.mrf.mxu0
    %v2855 = vadd.f32 %v559, %v2854
    %2856 = vdwg.mxu0
    %v2857 = vld [vmem:[%s1231] sm:$0xff]
    %v2858 = vld [vmem:[%s1231 + $0x8] sm:$0xf]
    %v2859 = vld [vmem:[%s1231 + $0xc] sm:$0xff]
    %v2860 = vld [vmem:[%s1231 + $0x14] sm:$0xf]
    %v2861 = vld [vmem:[%s1231 + $0x18] sm:$0xff]
    %v2862 = vld [vmem:[%s1231 + $0x20] sm:$0xf]
    %v2863 = vld [vmem:[%s1231 + $0x24] sm:$0xff]
    %v2864 = vld [vmem:[%s1231 + $0x2c] sm:$0xf]
    %v2865 = vld [vmem:[%s1231 + $0x30] sm:$0xff]
    %v2866 = vld [vmem:[%s1231 + $0x38] sm:$0xf]
    %v2867 = vld [vmem:[%s1231 + $0x3c] sm:$0xff]
    %v2868 = vld [vmem:[%s1231 + $0x44] sm:$0xf]
    %v2869 = vld [vmem:[%s1231 + $0x48] sm:$0xff]
    %v2870 = vld [vmem:[%s1231 + $0x50] sm:$0xf]
    %v2871 = vld [vmem:[%s1231 + $0x54] sm:$0xff]
    %v2872 = vld [vmem:[%s1231 + $0x5c] sm:$0xf]
    %v2873 = vld [vmem:[%s1231 + $0x60] sm:$0xff]
    %v2874 = vld [vmem:[%s1231 + $0x68] sm:$0xf]
    %v2875 = vld [vmem:[%s1231 + $0x6c] sm:$0xff]
    %v2876 = vld [vmem:[%s1231 + $0x74] sm:$0xf]
    %v2877 = vld [vmem:[%s1231 + $0x78] sm:$0xff]
    %v2878 = vld [vmem:[%s1231 + $0x80] sm:$0xf]
    %v2879 = vld [vmem:[%s1231 + $0x84] sm:$0xff]
    %v2880 = vld [vmem:[%s1231 + $0x8c] sm:$0xf]
    %v2881 = vld [vmem:[%s1231 + $0x90] sm:$0xff]
    %v2882 = vld [vmem:[%s1231 + $0x98] sm:$0xf]
    %v2883 = vld [vmem:[%s1231 + $0x9c] sm:$0xff]
    %v2884 = vld [vmem:[%s1231 + $0xa4] sm:$0xf]
    %v2885 = vld [vmem:[%s1231 + $0xa8] sm:$0xff]
    %v2886 = vld [vmem:[%s1231 + $0xb0] sm:$0xf]
    %v2887 = vld [vmem:[%s1231 + $0xb4] sm:$0xff]
    %v2888 = vld [vmem:[%s1231 + $0xbc] sm:$0xf]
    %v2891 = vunpack.c.l.b16 %v2345
    %v2892 = vunpack.c.l.b16 %v2346
    %v2893 = vpack.c.b16 %v2892, %v2891
    %v2927 = vunpack.c.l.b16 %v2857
    %v2928 = vunpack.c.h.b16 %v2857
    %v2929 = vunpack.c.l.b16 %v2858
    %v2930 = vunpack.c.l.b16 %v2859
    %v2931 = vunpack.c.h.b16 %v2859
    %v2932 = vunpack.c.l.b16 %v2860
    %v2933 = vunpack.c.l.b16 %v2861
    %v2934 = vunpack.c.h.b16 %v2861
    %v2935 = vunpack.c.l.b16 %v2862
    %v2936 = vunpack.c.l.b16 %v2863
    %v2937 = vunpack.c.h.b16 %v2863
    %v2938 = vunpack.c.l.b16 %v2864
    %v2939 = vunpack.c.l.b16 %v2865
    %v2940 = vunpack.c.h.b16 %v2865
    %v2941 = vunpack.c.l.b16 %v2866
    %v2942 = vunpack.c.l.b16 %v2867
    %v2943 = vunpack.c.h.b16 %v2867
    %v2944 = vunpack.c.l.b16 %v2868
    %v2945 = vunpack.c.l.b16 %v2869
    %v2946 = vunpack.c.h.b16 %v2869
    %v2947 = vunpack.c.l.b16 %v2870
    %v2948 = vunpack.c.l.b16 %v2871
    %v2949 = vunpack.c.h.b16 %v2871
    %v2950 = vunpack.c.l.b16 %v2872
    %v2951 = vunpack.c.l.b16 %v2873
    %v2952 = vunpack.c.h.b16 %v2873
    %v2953 = vunpack.c.l.b16 %v2874
    %v2954 = vunpack.c.l.b16 %v2875
    %v2955 = vunpack.c.h.b16 %v2875
    %v2956 = vunpack.c.l.b16 %v2876
    %v2957 = vunpack.c.l.b16 %v2877
    %v2958 = vunpack.c.h.b16 %v2877
    %v2959 = vunpack.c.l.b16 %v2878
    %v2960 = vunpack.c.l.b16 %v2879
    %v2961 = vunpack.c.h.b16 %v2879
    %v2962 = vunpack.c.l.b16 %v2880
    %v2963 = vunpack.c.l.b16 %v2881
    %v2964 = vunpack.c.h.b16 %v2881
    %v2965 = vunpack.c.l.b16 %v2882
    %v2966 = vunpack.c.l.b16 %v2883
    %v2967 = vunpack.c.h.b16 %v2883
    %v2968 = vunpack.c.l.b16 %v2884
    %v2969 = vunpack.c.l.b16 %v2885
    %v2970 = vunpack.c.h.b16 %v2885
    %v2971 = vunpack.c.l.b16 %v2886
    %v2972 = vunpack.c.l.b16 %v2887
    %v2973 = vunpack.c.h.b16 %v2887
    %v2974 = vunpack.c.l.b16 %v2888
    %v2975 = vpack.c.b16 %v2930, %v2927
    %v2976 = vpack.c.b16 %v2931, %v2928
    %v2977 = vpack.c.b16 %v2932, %v2929
    %v2978 = vpack.c.b16 %v2936, %v2933
    %v2979 = vpack.c.b16 %v2937, %v2934
    %v2980 = vpack.c.b16 %v2938, %v2935
    %v2981 = vpack.c.b16 %v2942, %v2939
    %v2982 = vpack.c.b16 %v2943, %v2940
    %v2983 = vpack.c.b16 %v2944, %v2941
    %v2984 = vpack.c.b16 %v2948, %v2945
    %v2985 = vpack.c.b16 %v2949, %v2946
    %v2986 = vpack.c.b16 %v2950, %v2947
    %v2987 = vpack.c.b16 %v2954, %v2951
    %v2988 = vpack.c.b16 %v2955, %v2952
    %v2989 = vpack.c.b16 %v2956, %v2953
    %v2990 = vpack.c.b16 %v2960, %v2957
    %v2991 = vpack.c.b16 %v2961, %v2958
    %v2992 = vpack.c.b16 %v2962, %v2959
    %v2993 = vpack.c.b16 %v2966, %v2963
    %v2994 = vpack.c.b16 %v2967, %v2964
    %v2995 = vpack.c.b16 %v2968, %v2965
    %v2996 = vpack.c.b16 %v2972, %v2969
    %v2997 = vpack.c.b16 %v2973, %v2970
    %v2998 = vpack.c.b16 %v2974, %v2971
    %3023 = vmatpush.bf16.msra.mxu0 %v2996
    %3024 = vmatpush.bf16.msra.mxu0 %v2993
    %3025 = vmatpush.bf16.msra.mxu0 %v2990
    %3026 = vmatpush.bf16.msra.mxu0 %v2987
    %3027 = vmatpush.bf16.msra.mxu0 %v2984
    %3028 = vmatpush.bf16.msra.mxu0 %v2981
    %3029 = vmatpush.bf16.msra.mxu0 %v2978
    %3030 = vmatpush.bf16.msra.mxu0 %v2975
    %3031 = vmatmul.bf16.gmra.mxu0 %v2893
    %v3032 = vpop.f32.mrf.mxu0
    %v3033 = vadd.f32 0.0, %v3032
    %v3034 = vpop.f32.mrf.mxu0
    %v3035 = vadd.f32 0.0, %v3034
    %3036 = vdwg.mxu0
    %3037 = vmatpush.bf16.msra.mxu0 %v2997
    %3038 = vmatpush.bf16.msra.mxu0 %v2994
    %3039 = vmatpush.bf16.msra.mxu0 %v2991
    %3040 = vmatpush.bf16.msra.mxu0 %v2988
    %3041 = vmatpush.bf16.msra.mxu0 %v2985
    %3042 = vmatpush.bf16.msra.mxu0 %v2982
    %3043 = vmatpush.bf16.msra.mxu0 %v2979
    %3044 = vmatpush.bf16.msra.mxu0 %v2976
    %3045 = vmatmul.bf16.gmra.mxu0 %v2893
    %v3046 = vpop.f32.mrf.mxu0
    %v3047 = vadd.f32 0.0, %v3046
    %v3048 = vpop.f32.mrf.mxu0
    %v3049 = vadd.f32 0.0, %v3048
    %3050 = vdwg.mxu0
    %3051 = vmatpush.bf16.msra.mxu0 %v2998
    %3052 = vmatpush.bf16.msra.mxu0 %v2995
    %3053 = vmatpush.bf16.msra.mxu0 %v2992
    %3054 = vmatpush.bf16.msra.mxu0 %v2989
    %3055 = vmatpush.bf16.msra.mxu0 %v2986
    %3056 = vmatpush.bf16.msra.mxu0 %v2983
    %3057 = vmatpush.bf16.msra.mxu0 %v2980
    %3058 = vmatpush.bf16.msra.mxu0 %v2977
    %3059 = vmatmul.bf16.gmra.mxu0 %v2893
    %v3060 = vpop.f32.mrf.mxu0
    %v3061 = vadd.f32 0.0, %v3060
    %v3062 = vpop.f32.mrf.mxu0
    %v3063 = vadd.f32 0.0, %v3062
    %3064 = vdwg.mxu0
    %v3065 = vadd.f32 %v2825, %v3033
    %v3066 = vadd.f32 %v2827, %v3035
    %v3067 = vxor.u32 %v3065, 2147483648
    %v3068 = vxor.u32 %v3066, 2147483648
    %v3069 = vmul.f32 %v3067, 1.442695
    %v3070 = vpow.pop %v3069
    %v3071 = vmul.f32 %v3068, 1.442695
    %v3072 = vpow.pop %v3071
    %v3073 = vadd.f32 %v3070, 1.0
    %v3074 = vadd.f32 %v3072, 1.0
    %v3075 = vrcp.pop %v3073
    %v3076 = vmul.f32 %v3073, %v3075
    %v3077 = vsub.f32 1.0, %v3076
    %v3078 = vmul.f32 %v3075, %v3077
    %v3079 = vadd.f32 %v3075, %v3078
    %vm3080 = vweird.f32 %v3073
    %vm3081 = vweird.f32 %v3075
    %vm3082 = vmor %vm3080, %vm3081
    %v3083 = vsel %vm3082, %v3075, %v3079
    %v3084 = vand.u32 2147483647, %v3073
    %vm3085 = vcmp.eq.f32.partialorder %v3084, 8.507059e+37
    %v3086 = vand.u32 %v3073, 2147483648
    %v3087 = vor.u32 1.1754944e-38, %v3086
    %v3088 = vsel %vm3085, %v3087, %v3083
    %v3089 = vmul.f32 1.0, %v3088
    %v3090 = vrcp.pop %v3074
    %v3091 = vmul.f32 %v3074, %v3090
    %v3092 = vsub.f32 1.0, %v3091
    %v3093 = vmul.f32 %v3090, %v3092
    %v3094 = vadd.f32 %v3090, %v3093
    %vm3095 = vweird.f32 %v3074
    %vm3096 = vweird.f32 %v3090
    %vm3097 = vmor %vm3095, %vm3096
    %v3098 = vsel %vm3097, %v3090, %v3094
    %v3099 = vand.u32 2147483647, %v3074
    %vm3100 = vcmp.eq.f32.partialorder %v3099, 8.507059e+37
    %v3101 = vand.u32 %v3074, 2147483648
    %v3102 = vor.u32 1.1754944e-38, %v3101
    %v3103 = vsel %vm3100, %v3102, %v3098
    %v3104 = vmul.f32 1.0, %v3103
    %v3105 = vadd.f32 %v2839, %v3047
    %v3106 = vadd.f32 %v2841, %v3049
    %v3107 = vxor.u32 %v3105, 2147483648
    %v3108 = vxor.u32 %v3106, 2147483648
    %v3109 = vmul.f32 %v3107, 1.442695
    %v3110 = vpow.pop %v3109
    %v3111 = vmul.f32 %v3108, 1.442695
    %v3112 = vpow.pop %v3111
    %v3113 = vadd.f32 %v3110, 1.0
    %v3114 = vadd.f32 %v3112, 1.0
    %v3115 = vrcp.pop %v3113
    %v3116 = vmul.f32 %v3113, %v3115
    %v3117 = vsub.f32 1.0, %v3116
    %v3118 = vmul.f32 %v3115, %v3117
    %v3119 = vadd.f32 %v3115, %v3118
    %vm3120 = vweird.f32 %v3113
    %vm3121 = vweird.f32 %v3115
    %vm3122 = vmor %vm3120, %vm3121
    %v3123 = vsel %vm3122, %v3115, %v3119
    %v3124 = vand.u32 2147483647, %v3113
    %vm3125 = vcmp.eq.f32.partialorder %v3124, 8.507059e+37
    %v3126 = vand.u32 %v3113, 2147483648
    %v3127 = vor.u32 1.1754944e-38, %v3126
    %v3128 = vsel %vm3125, %v3127, %v3123
    %v3129 = vmul.f32 1.0, %v3128
    %v3130 = vrcp.pop %v3114
    %v3131 = vmul.f32 %v3114, %v3130
    %v3132 = vsub.f32 1.0, %v3131
    %v3133 = vmul.f32 %v3130, %v3132
    %v3134 = vadd.f32 %v3130, %v3133
    %vm3135 = vweird.f32 %v3114
    %vm3136 = vweird.f32 %v3130
    %vm3137 = vmor %vm3135, %vm3136
    %v3138 = vsel %vm3137, %v3130, %v3134
    %v3139 = vand.u32 2147483647, %v3114
    %vm3140 = vcmp.eq.f32.partialorder %v3139, 8.507059e+37
    %v3141 = vand.u32 %v3114, 2147483648
    %v3142 = vor.u32 1.1754944e-38, %v3141
    %v3143 = vsel %vm3140, %v3142, %v3138
    %v3144 = vmul.f32 1.0, %v3143
    %v3145 = vadd.f32 %v3061, %v570
    %v3146 = vadd.f32 %v3063, %v570
    %v3147 = vmul.f32 %v3089, %v3145
    %v3148 = vmul.f32 %v3104, %v3146
    %v3149 = vadd.f32 %v2853, %v3147
    %v3150 = vadd.f32 %v2855, %v3148
    %v3151 = vtanh.pop %v3149
    %v3152 = vtanh.pop %v3150
    %v3153 = vsub.f32 1.0, %v3129
    %v3154 = vsub.f32 1.0, %v3144
    %v3155 = vmul.f32 %v3153, %v3151
    %v3156 = vmul.f32 %v3154, %v3152
    %v3157 = vmul.f32 %v3129, %v2343
    %v3158 = vmul.f32 %v3144, %v2344
    %v3159 = vadd.f32 %v3155, %v3157
    %v3160 = vadd.f32 %v3156, %v3158
    %v3161 = vpack.c.bf16 %v3159, %v3159
    %v3162 = vpack.c.bf16 %v3160, %v3160
    %s3163 = scalar_lea.vmem [#allocation2], 16
    %3164 = vst [vmem:[%s3163] sm:$0xf] %v3161
    %3165 = vst [vmem:[%s3163 + $0x4] sm:$0xf] %v3162
    %v3166 = vld [vmem:[#allocation3 + $0xc0] sm:$0xff]
    %v3167 = vld [vmem:[#allocation3 + $0xc8] sm:$0xff]
    %v3168 = vld [vmem:[#allocation3 + $0xd0] sm:$0xff]
    %v3169 = vld [vmem:[#allocation3 + $0xd8] sm:$0xff]
    %v3170 = vld [vmem:[#allocation3 + $0xe0] sm:$0xff]
    %v3171 = vld [vmem:[#allocation3 + $0xe8] sm:$0xff]
    %v3172 = vpack.c.bf16 %v2654, %v2653
    %v3173 = vld [vmem:[#allocation10] sm:$0xff]
    %v3174 = vld [vmem:[#allocation10 + $0x8] sm:$0xf]
    %v3175 = vld [vmem:[#allocation10 + $0xc] sm:$0xff]
    %v3176 = vld [vmem:[#allocation10 + $0x14] sm:$0xf]
    %v3177 = vld [vmem:[#allocation10 + $0x18] sm:$0xff]
    %v3178 = vld [vmem:[#allocation10 + $0x20] sm:$0xf]
    %v3179 = vld [vmem:[#allocation10 + $0x24] sm:$0xff]
    %v3180 = vld [vmem:[#allocation10 + $0x2c] sm:$0xf]
    %v3181 = vld [vmem:[#allocation10 + $0x30] sm:$0xff]
    %v3182 = vld [vmem:[#allocation10 + $0x38] sm:$0xf]
    %v3183 = vld [vmem:[#allocation10 + $0x3c] sm:$0xff]
    %v3184 = vld [vmem:[#allocation10 + $0x44] sm:$0xf]
    %v3185 = vld [vmem:[#allocation10 + $0x48] sm:$0xff]
    %v3186 = vld [vmem:[#allocation10 + $0x50] sm:$0xf]
    %v3187 = vld [vmem:[#allocation10 + $0x54] sm:$0xff]
    %v3188 = vld [vmem:[#allocation10 + $0x5c] sm:$0xf]
    %v3189 = vld [vmem:[#allocation10 + $0x60] sm:$0xff]
    %v3190 = vld [vmem:[#allocation10 + $0x68] sm:$0xf]
    %v3191 = vld [vmem:[#allocation10 + $0x6c] sm:$0xff]
    %v3192 = vld [vmem:[#allocation10 + $0x74] sm:$0xf]
    %v3193 = vld [vmem:[#allocation10 + $0x78] sm:$0xff]
    %v3194 = vld [vmem:[#allocation10 + $0x80] sm:$0xf]
    %v3195 = vld [vmem:[#allocation10 + $0x84] sm:$0xff]
    %v3196 = vld [vmem:[#allocation10 + $0x8c] sm:$0xf]
    %v3197 = vld [vmem:[#allocation10 + $0x90] sm:$0xff]
    %v3198 = vld [vmem:[#allocation10 + $0x98] sm:$0xf]
    %v3199 = vld [vmem:[#allocation10 + $0x9c] sm:$0xff]
    %v3200 = vld [vmem:[#allocation10 + $0xa4] sm:$0xf]
    %v3201 = vld [vmem:[#allocation10 + $0xa8] sm:$0xff]
    %v3202 = vld [vmem:[#allocation10 + $0xb0] sm:$0xf]
    %v3203 = vld [vmem:[#allocation10 + $0xb4] sm:$0xff]
    %v3204 = vld [vmem:[#allocation10 + $0xbc] sm:$0xf]
    %v3237 = vunpack.c.l.b16 %v3173
    %v3238 = vunpack.c.h.b16 %v3173
    %v3239 = vunpack.c.l.b16 %v3174
    %v3240 = vunpack.c.l.b16 %v3175
    %v3241 = vunpack.c.h.b16 %v3175
    %v3242 = vunpack.c.l.b16 %v3176
    %v3243 = vunpack.c.l.b16 %v3177
    %v3244 = vunpack.c.h.b16 %v3177
    %v3245 = vunpack.c.l.b16 %v3178
    %v3246 = vunpack.c.l.b16 %v3179
    %v3247 = vunpack.c.h.b16 %v3179
    %v3248 = vunpack.c.l.b16 %v3180
    %v3249 = vunpack.c.l.b16 %v3181
    %v3250 = vunpack.c.h.b16 %v3181
    %v3251 = vunpack.c.l.b16 %v3182
    %v3252 = vunpack.c.l.b16 %v3183
    %v3253 = vunpack.c.h.b16 %v3183
    %v3254 = vunpack.c.l.b16 %v3184
    %v3255 = vunpack.c.l.b16 %v3185
    %v3256 = vunpack.c.h.b16 %v3185
    %v3257 = vunpack.c.l.b16 %v3186
    %v3258 = vunpack.c.l.b16 %v3187
    %v3259 = vunpack.c.h.b16 %v3187
    %v3260 = vunpack.c.l.b16 %v3188
    %v3261 = vunpack.c.l.b16 %v3189
    %v3262 = vunpack.c.h.b16 %v3189
    %v3263 = vunpack.c.l.b16 %v3190
    %v3264 = vunpack.c.l.b16 %v3191
    %v3265 = vunpack.c.h.b16 %v3191
    %v3266 = vunpack.c.l.b16 %v3192
    %v3267 = vunpack.c.l.b16 %v3193
    %v3268 = vunpack.c.h.b16 %v3193
    %v3269 = vunpack.c.l.b16 %v3194
    %v3270 = vunpack.c.l.b16 %v3195
    %v3271 = vunpack.c.h.b16 %v3195
    %v3272 = vunpack.c.l.b16 %v3196
    %v3273 = vunpack.c.l.b16 %v3197
    %v3274 = vunpack.c.h.b16 %v3197
    %v3275 = vunpack.c.l.b16 %v3198
    %v3276 = vunpack.c.l.b16 %v3199
    %v3277 = vunpack.c.h.b16 %v3199
    %v3278 = vunpack.c.l.b16 %v3200
    %v3279 = vunpack.c.l.b16 %v3201
    %v3280 = vunpack.c.h.b16 %v3201
    %v3281 = vunpack.c.l.b16 %v3202
    %v3282 = vunpack.c.l.b16 %v3203
    %v3283 = vunpack.c.h.b16 %v3203
    %v3284 = vunpack.c.l.b16 %v3204
    %v3285 = vpack.c.b16 %v3240, %v3237
    %v3286 = vpack.c.b16 %v3241, %v3238
    %v3287 = vpack.c.b16 %v3242, %v3239
    %v3288 = vpack.c.b16 %v3246, %v3243
    %v3289 = vpack.c.b16 %v3247, %v3244
    %v3290 = vpack.c.b16 %v3248, %v3245
    %v3291 = vpack.c.b16 %v3252, %v3249
    %v3292 = vpack.c.b16 %v3253, %v3250
    %v3293 = vpack.c.b16 %v3254, %v3251
    %v3294 = vpack.c.b16 %v3258, %v3255
    %v3295 = vpack.c.b16 %v3259, %v3256
    %v3296 = vpack.c.b16 %v3260, %v3257
    %v3297 = vpack.c.b16 %v3264, %v3261
    %v3298 = vpack.c.b16 %v3265, %v3262
    %v3299 = vpack.c.b16 %v3266, %v3263
    %v3300 = vpack.c.b16 %v3270, %v3267
    %v3301 = vpack.c.b16 %v3271, %v3268
    %v3302 = vpack.c.b16 %v3272, %v3269
    %v3303 = vpack.c.b16 %v3276, %v3273
    %v3304 = vpack.c.b16 %v3277, %v3274
    %v3305 = vpack.c.b16 %v3278, %v3275
    %v3306 = vpack.c.b16 %v3282, %v3279
    %v3307 = vpack.c.b16 %v3283, %v3280
    %v3308 = vpack.c.b16 %v3284, %v3281
    %3333 = vmatpush.bf16.msra.mxu0 %v3306
    %3334 = vmatpush.bf16.msra.mxu0 %v3303
    %3335 = vmatpush.bf16.msra.mxu0 %v3300
    %3336 = vmatpush.bf16.msra.mxu0 %v3297
    %3337 = vmatpush.bf16.msra.mxu0 %v3294
    %3338 = vmatpush.bf16.msra.mxu0 %v3291
    %3339 = vmatpush.bf16.msra.mxu0 %v3288
    %3340 = vmatpush.bf16.msra.mxu0 %v3285
    %3341 = vmatmul.bf16.gmra.mxu0 %v3172
    %v3342 = vpop.f32.mrf.mxu0
    %v3343 = vadd.f32 0.0, %v3342
    %v3344 = vpop.f32.mrf.mxu0
    %v3345 = vadd.f32 0.0, %v3344
    %3346 = vdwg.mxu0
    %3347 = vmatpush.bf16.msra.mxu0 %v3307
    %3348 = vmatpush.bf16.msra.mxu0 %v3304
    %3349 = vmatpush.bf16.msra.mxu0 %v3301
    %3350 = vmatpush.bf16.msra.mxu0 %v3298
    %3351 = vmatpush.bf16.msra.mxu0 %v3295
    %3352 = vmatpush.bf16.msra.mxu0 %v3292
    %3353 = vmatpush.bf16.msra.mxu0 %v3289
    %3354 = vmatpush.bf16.msra.mxu0 %v3286
    %3355 = vmatmul.bf16.gmra.mxu0 %v3172
    %v3356 = vpop.f32.mrf.mxu0
    %v3357 = vadd.f32 0.0, %v3356
    %v3358 = vpop.f32.mrf.mxu0
    %v3359 = vadd.f32 0.0, %v3358
    %3360 = vdwg.mxu0
    %3361 = vmatpush.bf16.msra.mxu0 %v3308
    %3362 = vmatpush.bf16.msra.mxu0 %v3305
    %3363 = vmatpush.bf16.msra.mxu0 %v3302
    %3364 = vmatpush.bf16.msra.mxu0 %v3299
    %3365 = vmatpush.bf16.msra.mxu0 %v3296
    %3366 = vmatpush.bf16.msra.mxu0 %v3293
    %3367 = vmatpush.bf16.msra.mxu0 %v3290
    %3368 = vmatpush.bf16.msra.mxu0 %v3287
    %3369 = vmatmul.bf16.gmra.mxu0 %v3172
    %v3370 = vpop.f32.mrf.mxu0
    %v3371 = vadd.f32 0.0, %v3370
    %v3372 = vpop.f32.mrf.mxu0
    %v3373 = vadd.f32 0.0, %v3372
    %3374 = vdwg.mxu0
    %v3375 = vadd.f32 %v3166, %v3343
    %v3376 = vadd.f32 %v3169, %v3345
    %v3377 = vxor.u32 %v3375, 2147483648
    %v3378 = vxor.u32 %v3376, 2147483648
    %v3379 = vmul.f32 %v3377, 1.442695
    %v3380 = vpow.pop %v3379
    %v3381 = vmul.f32 %v3378, 1.442695
    %v3382 = vpow.pop %v3381
    %v3383 = vadd.f32 %v3380, 1.0
    %v3384 = vadd.f32 %v3382, 1.0
    %v3385 = vrcp.pop %v3383
    %v3386 = vmul.f32 %v3383, %v3385
    %v3387 = vsub.f32 1.0, %v3386
    %v3388 = vmul.f32 %v3385, %v3387
    %v3389 = vadd.f32 %v3385, %v3388
    %vm3390 = vweird.f32 %v3383
    %vm3391 = vweird.f32 %v3385
    %vm3392 = vmor %vm3390, %vm3391
    %v3393 = vsel %vm3392, %v3385, %v3389
    %v3394 = vand.u32 2147483647, %v3383
    %vm3395 = vcmp.eq.f32.partialorder %v3394, 8.507059e+37
    %v3396 = vand.u32 %v3383, 2147483648
    %v3397 = vor.u32 1.1754944e-38, %v3396
    %v3398 = vsel %vm3395, %v3397, %v3393
    %v3399 = vmul.f32 1.0, %v3398
    %v3400 = vrcp.pop %v3384
    %v3401 = vmul.f32 %v3384, %v3400
    %v3402 = vsub.f32 1.0, %v3401
    %v3403 = vmul.f32 %v3400, %v3402
    %v3404 = vadd.f32 %v3400, %v3403
    %vm3405 = vweird.f32 %v3384
    %vm3406 = vweird.f32 %v3400
    %vm3407 = vmor %vm3405, %vm3406
    %v3408 = vsel %vm3407, %v3400, %v3404
    %v3409 = vand.u32 2147483647, %v3384
    %vm3410 = vcmp.eq.f32.partialorder %v3409, 8.507059e+37
    %v3411 = vand.u32 %v3384, 2147483648
    %v3412 = vor.u32 1.1754944e-38, %v3411
    %v3413 = vsel %vm3410, %v3412, %v3408
    %v3414 = vmul.f32 1.0, %v3413
    %v3415 = vadd.f32 %v3167, %v3357
    %v3416 = vadd.f32 %v3170, %v3359
    %v3417 = vxor.u32 %v3415, 2147483648
    %v3418 = vxor.u32 %v3416, 2147483648
    %v3419 = vmul.f32 %v3417, 1.442695
    %v3420 = vpow.pop %v3419
    %v3421 = vmul.f32 %v3418, 1.442695
    %v3422 = vpow.pop %v3421
    %v3423 = vadd.f32 %v3420, 1.0
    %v3424 = vadd.f32 %v3422, 1.0
    %v3425 = vrcp.pop %v3423
    %v3426 = vmul.f32 %v3423, %v3425
    %v3427 = vsub.f32 1.0, %v3426
    %v3428 = vmul.f32 %v3425, %v3427
    %v3429 = vadd.f32 %v3425, %v3428
    %vm3430 = vweird.f32 %v3423
    %vm3431 = vweird.f32 %v3425
    %vm3432 = vmor %vm3430, %vm3431
    %v3433 = vsel %vm3432, %v3425, %v3429
    %v3434 = vand.u32 2147483647, %v3423
    %vm3435 = vcmp.eq.f32.partialorder %v3434, 8.507059e+37
    %v3436 = vand.u32 %v3423, 2147483648
    %v3437 = vor.u32 1.1754944e-38, %v3436
    %v3438 = vsel %vm3435, %v3437, %v3433
    %v3439 = vmul.f32 1.0, %v3438
    %v3440 = vrcp.pop %v3424
    %v3441 = vmul.f32 %v3424, %v3440
    %v3442 = vsub.f32 1.0, %v3441
    %v3443 = vmul.f32 %v3440, %v3442
    %v3444 = vadd.f32 %v3440, %v3443
    %vm3445 = vweird.f32 %v3424
    %vm3446 = vweird.f32 %v3440
    %vm3447 = vmor %vm3445, %vm3446
    %v3448 = vsel %vm3447, %v3440, %v3444
    %v3449 = vand.u32 2147483647, %v3424
    %vm3450 = vcmp.eq.f32.partialorder %v3449, 8.507059e+37
    %v3451 = vand.u32 %v3424, 2147483648
    %v3452 = vor.u32 1.1754944e-38, %v3451
    %v3453 = vsel %vm3450, %v3452, %v3448
    %v3454 = vmul.f32 1.0, %v3453
    %v3455 = vadd.f32 %v3371, %v565
    %v3456 = vadd.f32 %v3373, %v565
    %v3457 = vmul.f32 %v3399, %v3455
    %v3458 = vmul.f32 %v3414, %v3456
    %v3459 = vadd.f32 %v3168, %v3457
    %v3460 = vadd.f32 %v3171, %v3458
    %v3461 = vtanh.pop %v3459
    %v3462 = vtanh.pop %v3460
    %v3463 = vsub.f32 1.0, %v3439
    %v3464 = vsub.f32 1.0, %v3454
    %v3465 = vmul.f32 %v3463, %v3461
    %v3466 = vmul.f32 %v3464, %v3462
    %v3467 = vmul.f32 %v3439, %v2653
    %v3468 = vmul.f32 %v3454, %v2654
    %v3469 = vadd.f32 %v3465, %v3467
    %v3470 = vadd.f32 %v3466, %v3468
    %v3471 = vld [vmem:[%s1027] sm:$0xff]
    %v3472 = vld [vmem:[%s1027 + $0x8] sm:$0xf]
    %v3473 = vld [vmem:[%s1027 + $0xc] sm:$0xff]
    %v3474 = vld [vmem:[%s1027 + $0x14] sm:$0xf]
    %v3475 = vld [vmem:[%s1027 + $0x18] sm:$0xff]
    %v3476 = vld [vmem:[%s1027 + $0x20] sm:$0xf]
    %v3477 = vld [vmem:[%s1027 + $0x24] sm:$0xff]
    %v3478 = vld [vmem:[%s1027 + $0x2c] sm:$0xf]
    %v3479 = vld [vmem:[%s1027 + $0x30] sm:$0xff]
    %v3480 = vld [vmem:[%s1027 + $0x38] sm:$0xf]
    %v3481 = vld [vmem:[%s1027 + $0x3c] sm:$0xff]
    %v3482 = vld [vmem:[%s1027 + $0x44] sm:$0xf]
    %v3483 = vld [vmem:[%s1027 + $0x48] sm:$0xff]
    %v3484 = vld [vmem:[%s1027 + $0x50] sm:$0xf]
    %v3485 = vld [vmem:[%s1027 + $0x54] sm:$0xff]
    %v3486 = vld [vmem:[%s1027 + $0x5c] sm:$0xf]
    %v3487 = vld [vmem:[%s1027 + $0x60] sm:$0xff]
    %v3488 = vld [vmem:[%s1027 + $0x68] sm:$0xf]
    %v3489 = vld [vmem:[%s1027 + $0x6c] sm:$0xff]
    %v3490 = vld [vmem:[%s1027 + $0x74] sm:$0xf]
    %v3491 = vld [vmem:[%s1027 + $0x78] sm:$0xff]
    %v3492 = vld [vmem:[%s1027 + $0x80] sm:$0xf]
    %v3493 = vld [vmem:[%s1027 + $0x84] sm:$0xff]
    %v3494 = vld [vmem:[%s1027 + $0x8c] sm:$0xf]
    %v3495 = vld [vmem:[%s1027 + $0x90] sm:$0xff]
    %v3496 = vld [vmem:[%s1027 + $0x98] sm:$0xf]
    %v3497 = vld [vmem:[%s1027 + $0x9c] sm:$0xff]
    %v3498 = vld [vmem:[%s1027 + $0xa4] sm:$0xf]
    %v3499 = vld [vmem:[%s1027 + $0xa8] sm:$0xff]
    %v3500 = vld [vmem:[%s1027 + $0xb0] sm:$0xf]
    %v3501 = vld [vmem:[%s1027 + $0xb4] sm:$0xff]
    %v3502 = vld [vmem:[%s1027 + $0xbc] sm:$0xf]
    %v3535 = vunpack.c.l.b16 %v3471
    %v3536 = vunpack.c.h.b16 %v3471
    %v3537 = vunpack.c.l.b16 %v3472
    %v3538 = vunpack.c.l.b16 %v3473
    %v3539 = vunpack.c.h.b16 %v3473
    %v3540 = vunpack.c.l.b16 %v3474
    %v3541 = vunpack.c.l.b16 %v3475
    %v3542 = vunpack.c.h.b16 %v3475
    %v3543 = vunpack.c.l.b16 %v3476
    %v3544 = vunpack.c.l.b16 %v3477
    %v3545 = vunpack.c.h.b16 %v3477
    %v3546 = vunpack.c.l.b16 %v3478
    %v3547 = vunpack.c.l.b16 %v3479
    %v3548 = vunpack.c.h.b16 %v3479
    %v3549 = vunpack.c.l.b16 %v3480
    %v3550 = vunpack.c.l.b16 %v3481
    %v3551 = vunpack.c.h.b16 %v3481
    %v3552 = vunpack.c.l.b16 %v3482
    %v3553 = vunpack.c.l.b16 %v3483
    %v3554 = vunpack.c.h.b16 %v3483
    %v3555 = vunpack.c.l.b16 %v3484
    %v3556 = vunpack.c.l.b16 %v3485
    %v3557 = vunpack.c.h.b16 %v3485
    %v3558 = vunpack.c.l.b16 %v3486
    %v3559 = vunpack.c.l.b16 %v3487
    %v3560 = vunpack.c.h.b16 %v3487
    %v3561 = vunpack.c.l.b16 %v3488
    %v3562 = vunpack.c.l.b16 %v3489
    %v3563 = vunpack.c.h.b16 %v3489
    %v3564 = vunpack.c.l.b16 %v3490
    %v3565 = vunpack.c.l.b16 %v3491
    %v3566 = vunpack.c.h.b16 %v3491
    %v3567 = vunpack.c.l.b16 %v3492
    %v3568 = vunpack.c.l.b16 %v3493
    %v3569 = vunpack.c.h.b16 %v3493
    %v3570 = vunpack.c.l.b16 %v3494
    %v3571 = vunpack.c.l.b16 %v3495
    %v3572 = vunpack.c.h.b16 %v3495
    %v3573 = vunpack.c.l.b16 %v3496
    %v3574 = vunpack.c.l.b16 %v3497
    %v3575 = vunpack.c.h.b16 %v3497
    %v3576 = vunpack.c.l.b16 %v3498
    %v3577 = vunpack.c.l.b16 %v3499
    %v3578 = vunpack.c.h.b16 %v3499
    %v3579 = vunpack.c.l.b16 %v3500
    %v3580 = vunpack.c.l.b16 %v3501
    %v3581 = vunpack.c.h.b16 %v3501
    %v3582 = vunpack.c.l.b16 %v3502
    %v3583 = vpack.c.b16 %v3538, %v3535
    %v3584 = vpack.c.b16 %v3539, %v3536
    %v3585 = vpack.c.b16 %v3540, %v3537
    %v3586 = vpack.c.b16 %v3544, %v3541
    %v3587 = vpack.c.b16 %v3545, %v3542
    %v3588 = vpack.c.b16 %v3546, %v3543
    %v3589 = vpack.c.b16 %v3550, %v3547
    %v3590 = vpack.c.b16 %v3551, %v3548
    %v3591 = vpack.c.b16 %v3552, %v3549
    %v3592 = vpack.c.b16 %v3556, %v3553
    %v3593 = vpack.c.b16 %v3557, %v3554
    %v3594 = vpack.c.b16 %v3558, %v3555
    %v3595 = vpack.c.b16 %v3562, %v3559
    %v3596 = vpack.c.b16 %v3563, %v3560
    %v3597 = vpack.c.b16 %v3564, %v3561
    %v3598 = vpack.c.b16 %v3568, %v3565
    %v3599 = vpack.c.b16 %v3569, %v3566
    %v3600 = vpack.c.b16 %v3570, %v3567
    %v3601 = vpack.c.b16 %v3574, %v3571
    %v3602 = vpack.c.b16 %v3575, %v3572
    %v3603 = vpack.c.b16 %v3576, %v3573
    %v3604 = vpack.c.b16 %v3580, %v3577
    %v3605 = vpack.c.b16 %v3581, %v3578
    %v3606 = vpack.c.b16 %v3582, %v3579
    %3631 = vmatpush.bf16.msra.mxu0 %v3604
    %3632 = vmatpush.bf16.msra.mxu0 %v3601
    %3633 = vmatpush.bf16.msra.mxu0 %v3598
    %3634 = vmatpush.bf16.msra.mxu0 %v3595
    %3635 = vmatpush.bf16.msra.mxu0 %v3592
    %3636 = vmatpush.bf16.msra.mxu0 %v3589
    %3637 = vmatpush.bf16.msra.mxu0 %v3586
    %3638 = vmatpush.bf16.msra.mxu0 %v3583
    %3639 = vmatmul.bf16.gmra.mxu0 %v3172
    %v3640 = vpop.f32.mrf.mxu0
    %v3641 = vadd.f32 %v557, %v3640
    %v3642 = vpop.f32.mrf.mxu0
    %v3643 = vadd.f32 %v557, %v3642
    %3644 = vdwg.mxu0
    %3645 = vmatpush.bf16.msra.mxu0 %v3605
    %3646 = vmatpush.bf16.msra.mxu0 %v3602
    %3647 = vmatpush.bf16.msra.mxu0 %v3599
    %3648 = vmatpush.bf16.msra.mxu0 %v3596
    %3649 = vmatpush.bf16.msra.mxu0 %v3593
    %3650 = vmatpush.bf16.msra.mxu0 %v3590
    %3651 = vmatpush.bf16.msra.mxu0 %v3587
    %3652 = vmatpush.bf16.msra.mxu0 %v3584
    %3653 = vmatmul.bf16.gmra.mxu0 %v3172
    %v3654 = vpop.f32.mrf.mxu0
    %v3655 = vadd.f32 %v558, %v3654
    %v3656 = vpop.f32.mrf.mxu0
    %v3657 = vadd.f32 %v558, %v3656
    %3658 = vdwg.mxu0
    %3659 = vmatpush.bf16.msra.mxu0 %v3606
    %3660 = vmatpush.bf16.msra.mxu0 %v3603
    %3661 = vmatpush.bf16.msra.mxu0 %v3600
    %3662 = vmatpush.bf16.msra.mxu0 %v3597
    %3663 = vmatpush.bf16.msra.mxu0 %v3594
    %3664 = vmatpush.bf16.msra.mxu0 %v3591
    %3665 = vmatpush.bf16.msra.mxu0 %v3588
    %3666 = vmatpush.bf16.msra.mxu0 %v3585
    %3667 = vmatmul.bf16.gmra.mxu0 %v3172
    %v3668 = vpop.f32.mrf.mxu0
    %v3669 = vadd.f32 %v559, %v3668
    %v3670 = vpop.f32.mrf.mxu0
    %v3671 = vadd.f32 %v559, %v3670
    %3672 = vdwg.mxu0
    %v3673 = vld [vmem:[%s1231] sm:$0xff]
    %v3674 = vld [vmem:[%s1231 + $0x8] sm:$0xf]
    %v3675 = vld [vmem:[%s1231 + $0xc] sm:$0xff]
    %v3676 = vld [vmem:[%s1231 + $0x14] sm:$0xf]
    %v3677 = vld [vmem:[%s1231 + $0x18] sm:$0xff]
    %v3678 = vld [vmem:[%s1231 + $0x20] sm:$0xf]
    %v3679 = vld [vmem:[%s1231 + $0x24] sm:$0xff]
    %v3680 = vld [vmem:[%s1231 + $0x2c] sm:$0xf]
    %v3681 = vld [vmem:[%s1231 + $0x30] sm:$0xff]
    %v3682 = vld [vmem:[%s1231 + $0x38] sm:$0xf]
    %v3683 = vld [vmem:[%s1231 + $0x3c] sm:$0xff]
    %v3684 = vld [vmem:[%s1231 + $0x44] sm:$0xf]
    %v3685 = vld [vmem:[%s1231 + $0x48] sm:$0xff]
    %v3686 = vld [vmem:[%s1231 + $0x50] sm:$0xf]
    %v3687 = vld [vmem:[%s1231 + $0x54] sm:$0xff]
    %v3688 = vld [vmem:[%s1231 + $0x5c] sm:$0xf]
    %v3689 = vld [vmem:[%s1231 + $0x60] sm:$0xff]
    %v3690 = vld [vmem:[%s1231 + $0x68] sm:$0xf]
    %v3691 = vld [vmem:[%s1231 + $0x6c] sm:$0xff]
    %v3692 = vld [vmem:[%s1231 + $0x74] sm:$0xf]
    %v3693 = vld [vmem:[%s1231 + $0x78] sm:$0xff]
    %v3694 = vld [vmem:[%s1231 + $0x80] sm:$0xf]
    %v3695 = vld [vmem:[%s1231 + $0x84] sm:$0xff]
    %v3696 = vld [vmem:[%s1231 + $0x8c] sm:$0xf]
    %v3697 = vld [vmem:[%s1231 + $0x90] sm:$0xff]
    %v3698 = vld [vmem:[%s1231 + $0x98] sm:$0xf]
    %v3699 = vld [vmem:[%s1231 + $0x9c] sm:$0xff]
    %v3700 = vld [vmem:[%s1231 + $0xa4] sm:$0xf]
    %v3701 = vld [vmem:[%s1231 + $0xa8] sm:$0xff]
    %v3702 = vld [vmem:[%s1231 + $0xb0] sm:$0xf]
    %v3703 = vld [vmem:[%s1231 + $0xb4] sm:$0xff]
    %v3704 = vld [vmem:[%s1231 + $0xbc] sm:$0xf]
    %v3707 = vunpack.c.l.b16 %v3161
    %v3708 = vunpack.c.l.b16 %v3162
    %v3709 = vpack.c.b16 %v3708, %v3707
    %v3743 = vunpack.c.l.b16 %v3673
    %v3744 = vunpack.c.h.b16 %v3673
    %v3745 = vunpack.c.l.b16 %v3674
    %v3746 = vunpack.c.l.b16 %v3675
    %v3747 = vunpack.c.h.b16 %v3675
    %v3748 = vunpack.c.l.b16 %v3676
    %v3749 = vunpack.c.l.b16 %v3677
    %v3750 = vunpack.c.h.b16 %v3677
    %v3751 = vunpack.c.l.b16 %v3678
    %v3752 = vunpack.c.l.b16 %v3679
    %v3753 = vunpack.c.h.b16 %v3679
    %v3754 = vunpack.c.l.b16 %v3680
    %v3755 = vunpack.c.l.b16 %v3681
    %v3756 = vunpack.c.h.b16 %v3681
    %v3757 = vunpack.c.l.b16 %v3682
    %v3758 = vunpack.c.l.b16 %v3683
    %v3759 = vunpack.c.h.b16 %v3683
    %v3760 = vunpack.c.l.b16 %v3684
    %v3761 = vunpack.c.l.b16 %v3685
    %v3762 = vunpack.c.h.b16 %v3685
    %v3763 = vunpack.c.l.b16 %v3686
    %v3764 = vunpack.c.l.b16 %v3687
    %v3765 = vunpack.c.h.b16 %v3687
    %v3766 = vunpack.c.l.b16 %v3688
    %v3767 = vunpack.c.l.b16 %v3689
    %v3768 = vunpack.c.h.b16 %v3689
    %v3769 = vunpack.c.l.b16 %v3690
    %v3770 = vunpack.c.l.b16 %v3691
    %v3771 = vunpack.c.h.b16 %v3691
    %v3772 = vunpack.c.l.b16 %v3692
    %v3773 = vunpack.c.l.b16 %v3693
    %v3774 = vunpack.c.h.b16 %v3693
    %v3775 = vunpack.c.l.b16 %v3694
    %v3776 = vunpack.c.l.b16 %v3695
    %v3777 = vunpack.c.h.b16 %v3695
    %v3778 = vunpack.c.l.b16 %v3696
    %v3779 = vunpack.c.l.b16 %v3697
    %v3780 = vunpack.c.h.b16 %v3697
    %v3781 = vunpack.c.l.b16 %v3698
    %v3782 = vunpack.c.l.b16 %v3699
    %v3783 = vunpack.c.h.b16 %v3699
    %v3784 = vunpack.c.l.b16 %v3700
    %v3785 = vunpack.c.l.b16 %v3701
    %v3786 = vunpack.c.h.b16 %v3701
    %v3787 = vunpack.c.l.b16 %v3702
    %v3788 = vunpack.c.l.b16 %v3703
    %v3789 = vunpack.c.h.b16 %v3703
    %v3790 = vunpack.c.l.b16 %v3704
    %v3791 = vpack.c.b16 %v3746, %v3743
    %v3792 = vpack.c.b16 %v3747, %v3744
    %v3793 = vpack.c.b16 %v3748, %v3745
    %v3794 = vpack.c.b16 %v3752, %v3749
    %v3795 = vpack.c.b16 %v3753, %v3750
    %v3796 = vpack.c.b16 %v3754, %v3751
    %v3797 = vpack.c.b16 %v3758, %v3755
    %v3798 = vpack.c.b16 %v3759, %v3756
    %v3799 = vpack.c.b16 %v3760, %v3757
    %v3800 = vpack.c.b16 %v3764, %v3761
    %v3801 = vpack.c.b16 %v3765, %v3762
    %v3802 = vpack.c.b16 %v3766, %v3763
    %v3803 = vpack.c.b16 %v3770, %v3767
    %v3804 = vpack.c.b16 %v3771, %v3768
    %v3805 = vpack.c.b16 %v3772, %v3769
    %v3806 = vpack.c.b16 %v3776, %v3773
    %v3807 = vpack.c.b16 %v3777, %v3774
    %v3808 = vpack.c.b16 %v3778, %v3775
    %v3809 = vpack.c.b16 %v3782, %v3779
    %v3810 = vpack.c.b16 %v3783, %v3780
    %v3811 = vpack.c.b16 %v3784, %v3781
    %v3812 = vpack.c.b16 %v3788, %v3785
    %v3813 = vpack.c.b16 %v3789, %v3786
    %v3814 = vpack.c.b16 %v3790, %v3787
    %3839 = vmatpush.bf16.msra.mxu0 %v3812
    %3840 = vmatpush.bf16.msra.mxu0 %v3809
    %3841 = vmatpush.bf16.msra.mxu0 %v3806
    %3842 = vmatpush.bf16.msra.mxu0 %v3803
    %3843 = vmatpush.bf16.msra.mxu0 %v3800
    %3844 = vmatpush.bf16.msra.mxu0 %v3797
    %3845 = vmatpush.bf16.msra.mxu0 %v3794
    %3846 = vmatpush.bf16.msra.mxu0 %v3791
    %3847 = vmatmul.bf16.gmra.mxu0 %v3709
    %v3848 = vpop.f32.mrf.mxu0
    %v3849 = vadd.f32 0.0, %v3848
    %v3850 = vpop.f32.mrf.mxu0
    %v3851 = vadd.f32 0.0, %v3850
    %3852 = vdwg.mxu0
    %3853 = vmatpush.bf16.msra.mxu0 %v3813
    %3854 = vmatpush.bf16.msra.mxu0 %v3810
    %3855 = vmatpush.bf16.msra.mxu0 %v3807
    %3856 = vmatpush.bf16.msra.mxu0 %v3804
    %3857 = vmatpush.bf16.msra.mxu0 %v3801
    %3858 = vmatpush.bf16.msra.mxu0 %v3798
    %3859 = vmatpush.bf16.msra.mxu0 %v3795
    %3860 = vmatpush.bf16.msra.mxu0 %v3792
    %3861 = vmatmul.bf16.gmra.mxu0 %v3709
    %v3862 = vpop.f32.mrf.mxu0
    %v3863 = vadd.f32 0.0, %v3862
    %v3864 = vpop.f32.mrf.mxu0
    %v3865 = vadd.f32 0.0, %v3864
    %3866 = vdwg.mxu0
    %3867 = vmatpush.bf16.msra.mxu0 %v3814
    %3868 = vmatpush.bf16.msra.mxu0 %v3811
    %3869 = vmatpush.bf16.msra.mxu0 %v3808
    %3870 = vmatpush.bf16.msra.mxu0 %v3805
    %3871 = vmatpush.bf16.msra.mxu0 %v3802
    %3872 = vmatpush.bf16.msra.mxu0 %v3799
    %3873 = vmatpush.bf16.msra.mxu0 %v3796
    %3874 = vmatpush.bf16.msra.mxu0 %v3793
    %3875 = vmatmul.bf16.gmra.mxu0 %v3709
    %v3876 = vpop.f32.mrf.mxu0
    %v3877 = vadd.f32 0.0, %v3876
    %v3878 = vpop.f32.mrf.mxu0
    %v3879 = vadd.f32 0.0, %v3878
    %3880 = vdwg.mxu0
    %v3881 = vadd.f32 %v3641, %v3849
    %v3882 = vadd.f32 %v3643, %v3851
    %v3883 = vxor.u32 %v3881, 2147483648
    %v3884 = vxor.u32 %v3882, 2147483648
    %v3885 = vmul.f32 %v3883, 1.442695
    %v3886 = vpow.pop %v3885
    %v3887 = vmul.f32 %v3884, 1.442695
    %v3888 = vpow.pop %v3887
    %v3889 = vadd.f32 %v3886, 1.0
    %v3890 = vadd.f32 %v3888, 1.0
    %v3891 = vrcp.pop %v3889
    %v3892 = vmul.f32 %v3889, %v3891
    %v3893 = vsub.f32 1.0, %v3892
    %v3894 = vmul.f32 %v3891, %v3893
    %v3895 = vadd.f32 %v3891, %v3894
    %vm3896 = vweird.f32 %v3889
    %vm3897 = vweird.f32 %v3891
    %vm3898 = vmor %vm3896, %vm3897
    %v3899 = vsel %vm3898, %v3891, %v3895
    %v3900 = vand.u32 2147483647, %v3889
    %vm3901 = vcmp.eq.f32.partialorder %v3900, 8.507059e+37
    %v3902 = vand.u32 %v3889, 2147483648
    %v3903 = vor.u32 1.1754944e-38, %v3902
    %v3904 = vsel %vm3901, %v3903, %v3899
    %v3905 = vmul.f32 1.0, %v3904
    %v3906 = vrcp.pop %v3890
    %v3907 = vmul.f32 %v3890, %v3906
    %v3908 = vsub.f32 1.0, %v3907
    %v3909 = vmul.f32 %v3906, %v3908
    %v3910 = vadd.f32 %v3906, %v3909
    %vm3911 = vweird.f32 %v3890
    %vm3912 = vweird.f32 %v3906
    %vm3913 = vmor %vm3911, %vm3912
    %v3914 = vsel %vm3913, %v3906, %v3910
    %v3915 = vand.u32 2147483647, %v3890
    %vm3916 = vcmp.eq.f32.partialorder %v3915, 8.507059e+37
    %v3917 = vand.u32 %v3890, 2147483648
    %v3918 = vor.u32 1.1754944e-38, %v3917
    %v3919 = vsel %vm3916, %v3918, %v3914
    %v3920 = vmul.f32 1.0, %v3919
    %v3921 = vadd.f32 %v3655, %v3863
    %v3922 = vadd.f32 %v3657, %v3865
    %v3923 = vxor.u32 %v3921, 2147483648
    %v3924 = vxor.u32 %v3922, 2147483648
    %v3925 = vmul.f32 %v3923, 1.442695
    %v3926 = vpow.pop %v3925
    %v3927 = vmul.f32 %v3924, 1.442695
    %v3928 = vpow.pop %v3927
    %v3929 = vadd.f32 %v3926, 1.0
    %v3930 = vadd.f32 %v3928, 1.0
    %v3931 = vrcp.pop %v3929
    %v3932 = vmul.f32 %v3929, %v3931
    %v3933 = vsub.f32 1.0, %v3932
    %v3934 = vmul.f32 %v3931, %v3933
    %v3935 = vadd.f32 %v3931, %v3934
    %vm3936 = vweird.f32 %v3929
    %vm3937 = vweird.f32 %v3931
    %vm3938 = vmor %vm3936, %vm3937
    %v3939 = vsel %vm3938, %v3931, %v3935
    %v3940 = vand.u32 2147483647, %v3929
    %vm3941 = vcmp.eq.f32.partialorder %v3940, 8.507059e+37
    %v3942 = vand.u32 %v3929, 2147483648
    %v3943 = vor.u32 1.1754944e-38, %v3942
    %v3944 = vsel %vm3941, %v3943, %v3939
    %v3945 = vmul.f32 1.0, %v3944
    %v3946 = vrcp.pop %v3930
    %v3947 = vmul.f32 %v3930, %v3946
    %v3948 = vsub.f32 1.0, %v3947
    %v3949 = vmul.f32 %v3946, %v3948
    %v3950 = vadd.f32 %v3946, %v3949
    %vm3951 = vweird.f32 %v3930
    %vm3952 = vweird.f32 %v3946
    %vm3953 = vmor %vm3951, %vm3952
    %v3954 = vsel %vm3953, %v3946, %v3950
    %v3955 = vand.u32 2147483647, %v3930
    %vm3956 = vcmp.eq.f32.partialorder %v3955, 8.507059e+37
    %v3957 = vand.u32 %v3930, 2147483648
    %v3958 = vor.u32 1.1754944e-38, %v3957
    %v3959 = vsel %vm3956, %v3958, %v3954
    %v3960 = vmul.f32 1.0, %v3959
    %v3961 = vadd.f32 %v3877, %v570
    %v3962 = vadd.f32 %v3879, %v570
    %v3963 = vmul.f32 %v3905, %v3961
    %v3964 = vmul.f32 %v3920, %v3962
    %v3965 = vadd.f32 %v3669, %v3963
    %v3966 = vadd.f32 %v3671, %v3964
    %v3967 = vtanh.pop %v3965
    %v3968 = vtanh.pop %v3966
    %v3969 = vsub.f32 1.0, %v3945
    %v3970 = vsub.f32 1.0, %v3960
    %v3971 = vmul.f32 %v3969, %v3967
    %v3972 = vmul.f32 %v3970, %v3968
    %v3973 = vmul.f32 %v3945, %v3159
    %v3974 = vmul.f32 %v3960, %v3160
    %v3975 = vadd.f32 %v3971, %v3973
    %v3976 = vadd.f32 %v3972, %v3974
    %v3977 = vpack.c.bf16 %v3975, %v3975
    %v3978 = vpack.c.bf16 %v3976, %v3976
    %s3979 = scalar_lea.vmem [#allocation2], 24
    %3980 = vst [vmem:[%s3979] sm:$0xf] %v3977
    %3981 = vst [vmem:[%s3979 + $0x4] sm:$0xf] %v3978
    %v3982 = vld [vmem:[#allocation3 + $0xf0] sm:$0xff]
    %v3983 = vld [vmem:[#allocation3 + $0xf8] sm:$0xff]
    %v3984 = vld [vmem:[#allocation3 + $0x100] sm:$0xff]
    %v3985 = vld [vmem:[#allocation3 + $0x108] sm:$0xff]
    %v3986 = vld [vmem:[#allocation3 + $0x110] sm:$0xff]
    %v3987 = vld [vmem:[#allocation3 + $0x118] sm:$0xff]
    %v3988 = vpack.c.bf16 %v3470, %v3469
    %v3989 = vld [vmem:[#allocation10] sm:$0xff]
    %v3990 = vld [vmem:[#allocation10 + $0x8] sm:$0xf]
    %v3991 = vld [vmem:[#allocation10 + $0xc] sm:$0xff]
    %v3992 = vld [vmem:[#allocation10 + $0x14] sm:$0xf]
    %v3993 = vld [vmem:[#allocation10 + $0x18] sm:$0xff]
    %v3994 = vld [vmem:[#allocation10 + $0x20] sm:$0xf]
    %v3995 = vld [vmem:[#allocation10 + $0x24] sm:$0xff]
    %v3996 = vld [vmem:[#allocation10 + $0x2c] sm:$0xf]
    %v3997 = vld [vmem:[#allocation10 + $0x30] sm:$0xff]
    %v3998 = vld [vmem:[#allocation10 + $0x38] sm:$0xf]
    %v3999 = vld [vmem:[#allocation10 + $0x3c] sm:$0xff]
    %v4000 = vld [vmem:[#allocation10 + $0x44] sm:$0xf]
    %v4001 = vld [vmem:[#allocation10 + $0x48] sm:$0xff]
    %v4002 = vld [vmem:[#allocation10 + $0x50] sm:$0xf]
    %v4003 = vld [vmem:[#allocation10 + $0x54] sm:$0xff]
    %v4004 = vld [vmem:[#allocation10 + $0x5c] sm:$0xf]
    %v4005 = vld [vmem:[#allocation10 + $0x60] sm:$0xff]
    %v4006 = vld [vmem:[#allocation10 + $0x68] sm:$0xf]
    %v4007 = vld [vmem:[#allocation10 + $0x6c] sm:$0xff]
    %v4008 = vld [vmem:[#allocation10 + $0x74] sm:$0xf]
    %v4009 = vld [vmem:[#allocation10 + $0x78] sm:$0xff]
    %v4010 = vld [vmem:[#allocation10 + $0x80] sm:$0xf]
    %v4011 = vld [vmem:[#allocation10 + $0x84] sm:$0xff]
    %v4012 = vld [vmem:[#allocation10 + $0x8c] sm:$0xf]
    %v4013 = vld [vmem:[#allocation10 + $0x90] sm:$0xff]
    %v4014 = vld [vmem:[#allocation10 + $0x98] sm:$0xf]
    %v4015 = vld [vmem:[#allocation10 + $0x9c] sm:$0xff]
    %v4016 = vld [vmem:[#allocation10 + $0xa4] sm:$0xf]
    %v4017 = vld [vmem:[#allocation10 + $0xa8] sm:$0xff]
    %v4018 = vld [vmem:[#allocation10 + $0xb0] sm:$0xf]
    %v4019 = vld [vmem:[#allocation10 + $0xb4] sm:$0xff]
    %v4020 = vld [vmem:[#allocation10 + $0xbc] sm:$0xf]
    %v4053 = vunpack.c.l.b16 %v3989
    %v4054 = vunpack.c.h.b16 %v3989
    %v4055 = vunpack.c.l.b16 %v3990
    %v4056 = vunpack.c.l.b16 %v3991
    %v4057 = vunpack.c.h.b16 %v3991
    %v4058 = vunpack.c.l.b16 %v3992
    %v4059 = vunpack.c.l.b16 %v3993
    %v4060 = vunpack.c.h.b16 %v3993
    %v4061 = vunpack.c.l.b16 %v3994
    %v4062 = vunpack.c.l.b16 %v3995
    %v4063 = vunpack.c.h.b16 %v3995
    %v4064 = vunpack.c.l.b16 %v3996
    %v4065 = vunpack.c.l.b16 %v3997
    %v4066 = vunpack.c.h.b16 %v3997
    %v4067 = vunpack.c.l.b16 %v3998
    %v4068 = vunpack.c.l.b16 %v3999
    %v4069 = vunpack.c.h.b16 %v3999
    %v4070 = vunpack.c.l.b16 %v4000
    %v4071 = vunpack.c.l.b16 %v4001
    %v4072 = vunpack.c.h.b16 %v4001
    %v4073 = vunpack.c.l.b16 %v4002
    %v4074 = vunpack.c.l.b16 %v4003
    %v4075 = vunpack.c.h.b16 %v4003
    %v4076 = vunpack.c.l.b16 %v4004
    %v4077 = vunpack.c.l.b16 %v4005
    %v4078 = vunpack.c.h.b16 %v4005
    %v4079 = vunpack.c.l.b16 %v4006
    %v4080 = vunpack.c.l.b16 %v4007
    %v4081 = vunpack.c.h.b16 %v4007
    %v4082 = vunpack.c.l.b16 %v4008
    %v4083 = vunpack.c.l.b16 %v4009
    %v4084 = vunpack.c.h.b16 %v4009
    %v4085 = vunpack.c.l.b16 %v4010
    %v4086 = vunpack.c.l.b16 %v4011
    %v4087 = vunpack.c.h.b16 %v4011
    %v4088 = vunpack.c.l.b16 %v4012
    %v4089 = vunpack.c.l.b16 %v4013
    %v4090 = vunpack.c.h.b16 %v4013
    %v4091 = vunpack.c.l.b16 %v4014
    %v4092 = vunpack.c.l.b16 %v4015
    %v4093 = vunpack.c.h.b16 %v4015
    %v4094 = vunpack.c.l.b16 %v4016
    %v4095 = vunpack.c.l.b16 %v4017
    %v4096 = vunpack.c.h.b16 %v4017
    %v4097 = vunpack.c.l.b16 %v4018
    %v4098 = vunpack.c.l.b16 %v4019
    %v4099 = vunpack.c.h.b16 %v4019
    %v4100 = vunpack.c.l.b16 %v4020
    %v4101 = vpack.c.b16 %v4056, %v4053
    %v4102 = vpack.c.b16 %v4057, %v4054
    %v4103 = vpack.c.b16 %v4058, %v4055
    %v4104 = vpack.c.b16 %v4062, %v4059
    %v4105 = vpack.c.b16 %v4063, %v4060
    %v4106 = vpack.c.b16 %v4064, %v4061
    %v4107 = vpack.c.b16 %v4068, %v4065
    %v4108 = vpack.c.b16 %v4069, %v4066
    %v4109 = vpack.c.b16 %v4070, %v4067
    %v4110 = vpack.c.b16 %v4074, %v4071
    %v4111 = vpack.c.b16 %v4075, %v4072
    %v4112 = vpack.c.b16 %v4076, %v4073
    %v4113 = vpack.c.b16 %v4080, %v4077
    %v4114 = vpack.c.b16 %v4081, %v4078
    %v4115 = vpack.c.b16 %v4082, %v4079
    %v4116 = vpack.c.b16 %v4086, %v4083
    %v4117 = vpack.c.b16 %v4087, %v4084
    %v4118 = vpack.c.b16 %v4088, %v4085
    %v4119 = vpack.c.b16 %v4092, %v4089
    %v4120 = vpack.c.b16 %v4093, %v4090
    %v4121 = vpack.c.b16 %v4094, %v4091
    %v4122 = vpack.c.b16 %v4098, %v4095
    %v4123 = vpack.c.b16 %v4099, %v4096
    %v4124 = vpack.c.b16 %v4100, %v4097
    %4149 = vmatpush.bf16.msra.mxu0 %v4122
    %4150 = vmatpush.bf16.msra.mxu0 %v4119
    %4151 = vmatpush.bf16.msra.mxu0 %v4116
    %4152 = vmatpush.bf16.msra.mxu0 %v4113
    %4153 = vmatpush.bf16.msra.mxu0 %v4110
    %4154 = vmatpush.bf16.msra.mxu0 %v4107
    %4155 = vmatpush.bf16.msra.mxu0 %v4104
    %4156 = vmatpush.bf16.msra.mxu0 %v4101
    %4157 = vmatmul.bf16.gmra.mxu0 %v3988
    %v4158 = vpop.f32.mrf.mxu0
    %v4159 = vadd.f32 0.0, %v4158
    %v4160 = vpop.f32.mrf.mxu0
    %v4161 = vadd.f32 0.0, %v4160
    %4162 = vdwg.mxu0
    %4163 = vmatpush.bf16.msra.mxu0 %v4123
    %4164 = vmatpush.bf16.msra.mxu0 %v4120
    %4165 = vmatpush.bf16.msra.mxu0 %v4117
    %4166 = vmatpush.bf16.msra.mxu0 %v4114
    %4167 = vmatpush.bf16.msra.mxu0 %v4111
    %4168 = vmatpush.bf16.msra.mxu0 %v4108
    %4169 = vmatpush.bf16.msra.mxu0 %v4105
    %4170 = vmatpush.bf16.msra.mxu0 %v4102
    %4171 = vmatmul.bf16.gmra.mxu0 %v3988
    %v4172 = vpop.f32.mrf.mxu0
    %v4173 = vadd.f32 0.0, %v4172
    %v4174 = vpop.f32.mrf.mxu0
    %v4175 = vadd.f32 0.0, %v4174
    %4176 = vdwg.mxu0
    %4177 = vmatpush.bf16.msra.mxu0 %v4124
    %4178 = vmatpush.bf16.msra.mxu0 %v4121
    %4179 = vmatpush.bf16.msra.mxu0 %v4118
    %4180 = vmatpush.bf16.msra.mxu0 %v4115
    %4181 = vmatpush.bf16.msra.mxu0 %v4112
    %4182 = vmatpush.bf16.msra.mxu0 %v4109
    %4183 = vmatpush.bf16.msra.mxu0 %v4106
    %4184 = vmatpush.bf16.msra.mxu0 %v4103
    %4185 = vmatmul.bf16.gmra.mxu0 %v3988
    %v4186 = vpop.f32.mrf.mxu0
    %v4187 = vadd.f32 0.0, %v4186
    %v4188 = vpop.f32.mrf.mxu0
    %v4189 = vadd.f32 0.0, %v4188
    %4190 = vdwg.mxu0
    %v4191 = vadd.f32 %v3982, %v4159
    %v4192 = vadd.f32 %v3985, %v4161
    %v4193 = vxor.u32 %v4191, 2147483648
    %v4194 = vxor.u32 %v4192, 2147483648
    %v4195 = vmul.f32 %v4193, 1.442695
    %v4196 = vpow.pop %v4195
    %v4197 = vmul.f32 %v4194, 1.442695
    %v4198 = vpow.pop %v4197
    %v4199 = vadd.f32 %v4196, 1.0
    %v4200 = vadd.f32 %v4198, 1.0
    %v4201 = vrcp.pop %v4199
    %v4202 = vmul.f32 %v4199, %v4201
    %v4203 = vsub.f32 1.0, %v4202
    %v4204 = vmul.f32 %v4201, %v4203
    %v4205 = vadd.f32 %v4201, %v4204
    %vm4206 = vweird.f32 %v4199
    %vm4207 = vweird.f32 %v4201
    %vm4208 = vmor %vm4206, %vm4207
    %v4209 = vsel %vm4208, %v4201, %v4205
    %v4210 = vand.u32 2147483647, %v4199
    %vm4211 = vcmp.eq.f32.partialorder %v4210, 8.507059e+37
    %v4212 = vand.u32 %v4199, 2147483648
    %v4213 = vor.u32 1.1754944e-38, %v4212
    %v4214 = vsel %vm4211, %v4213, %v4209
    %v4215 = vmul.f32 1.0, %v4214
    %v4216 = vrcp.pop %v4200
    %v4217 = vmul.f32 %v4200, %v4216
    %v4218 = vsub.f32 1.0, %v4217
    %v4219 = vmul.f32 %v4216, %v4218
    %v4220 = vadd.f32 %v4216, %v4219
    %vm4221 = vweird.f32 %v4200
    %vm4222 = vweird.f32 %v4216
    %vm4223 = vmor %vm4221, %vm4222
    %v4224 = vsel %vm4223, %v4216, %v4220
    %v4225 = vand.u32 2147483647, %v4200
    %vm4226 = vcmp.eq.f32.partialorder %v4225, 8.507059e+37
    %v4227 = vand.u32 %v4200, 2147483648
    %v4228 = vor.u32 1.1754944e-38, %v4227
    %v4229 = vsel %vm4226, %v4228, %v4224
    %v4230 = vmul.f32 1.0, %v4229
    %v4231 = vadd.f32 %v3983, %v4173
    %v4232 = vadd.f32 %v3986, %v4175
    %v4233 = vxor.u32 %v4231, 2147483648
    %v4234 = vxor.u32 %v4232, 2147483648
    %v4235 = vmul.f32 %v4233, 1.442695
    %v4236 = vpow.pop %v4235
    %v4237 = vmul.f32 %v4234, 1.442695
    %v4238 = vpow.pop %v4237
    %v4239 = vadd.f32 %v4236, 1.0
    %v4240 = vadd.f32 %v4238, 1.0
    %v4241 = vrcp.pop %v4239
    %v4242 = vmul.f32 %v4239, %v4241
    %v4243 = vsub.f32 1.0, %v4242
    %v4244 = vmul.f32 %v4241, %v4243
    %v4245 = vadd.f32 %v4241, %v4244
    %vm4246 = vweird.f32 %v4239
    %vm4247 = vweird.f32 %v4241
    %vm4248 = vmor %vm4246, %vm4247
    %v4249 = vsel %vm4248, %v4241, %v4245
    %v4250 = vand.u32 2147483647, %v4239
    %vm4251 = vcmp.eq.f32.partialorder %v4250, 8.507059e+37
    %v4252 = vand.u32 %v4239, 2147483648
    %v4253 = vor.u32 1.1754944e-38, %v4252
    %v4254 = vsel %vm4251, %v4253, %v4249
    %v4255 = vmul.f32 1.0, %v4254
    %v4256 = vrcp.pop %v4240
    %v4257 = vmul.f32 %v4240, %v4256
    %v4258 = vsub.f32 1.0, %v4257
    %v4259 = vmul.f32 %v4256, %v4258
    %v4260 = vadd.f32 %v4256, %v4259
    %vm4261 = vweird.f32 %v4240
    %vm4262 = vweird.f32 %v4256
    %vm4263 = vmor %vm4261, %vm4262
    %v4264 = vsel %vm4263, %v4256, %v4260
    %v4265 = vand.u32 2147483647, %v4240
    %vm4266 = vcmp.eq.f32.partialorder %v4265, 8.507059e+37
    %v4267 = vand.u32 %v4240, 2147483648
    %v4268 = vor.u32 1.1754944e-38, %v4267
    %v4269 = vsel %vm4266, %v4268, %v4264
    %v4270 = vmul.f32 1.0, %v4269
    %v4271 = vadd.f32 %v4187, %v565
    %v4272 = vadd.f32 %v4189, %v565
    %v4273 = vmul.f32 %v4215, %v4271
    %v4274 = vmul.f32 %v4230, %v4272
    %v4275 = vadd.f32 %v3984, %v4273
    %v4276 = vadd.f32 %v3987, %v4274
    %v4277 = vtanh.pop %v4275
    %v4278 = vtanh.pop %v4276
    %v4279 = vsub.f32 1.0, %v4255
    %v4280 = vsub.f32 1.0, %v4270
    %v4281 = vmul.f32 %v4279, %v4277
    %v4282 = vmul.f32 %v4280, %v4278
    %v4283 = vmul.f32 %v4255, %v3469
    %v4284 = vmul.f32 %v4270, %v3470
    %v4285 = vadd.f32 %v4281, %v4283
    %v4286 = vadd.f32 %v4282, %v4284
    %v4287 = vld [vmem:[%s1027] sm:$0xff]
    %v4288 = vld [vmem:[%s1027 + $0x8] sm:$0xf]
    %v4289 = vld [vmem:[%s1027 + $0xc] sm:$0xff]
    %v4290 = vld [vmem:[%s1027 + $0x14] sm:$0xf]
    %v4291 = vld [vmem:[%s1027 + $0x18] sm:$0xff]
    %v4292 = vld [vmem:[%s1027 + $0x20] sm:$0xf]
    %v4293 = vld [vmem:[%s1027 + $0x24] sm:$0xff]
    %v4294 = vld [vmem:[%s1027 + $0x2c] sm:$0xf]
    %v4295 = vld [vmem:[%s1027 + $0x30] sm:$0xff]
    %v4296 = vld [vmem:[%s1027 + $0x38] sm:$0xf]
    %v4297 = vld [vmem:[%s1027 + $0x3c] sm:$0xff]
    %v4298 = vld [vmem:[%s1027 + $0x44] sm:$0xf]
    %v4299 = vld [vmem:[%s1027 + $0x48] sm:$0xff]
    %v4300 = vld [vmem:[%s1027 + $0x50] sm:$0xf]
    %v4301 = vld [vmem:[%s1027 + $0x54] sm:$0xff]
    %v4302 = vld [vmem:[%s1027 + $0x5c] sm:$0xf]
    %v4303 = vld [vmem:[%s1027 + $0x60] sm:$0xff]
    %v4304 = vld [vmem:[%s1027 + $0x68] sm:$0xf]
    %v4305 = vld [vmem:[%s1027 + $0x6c] sm:$0xff]
    %v4306 = vld [vmem:[%s1027 + $0x74] sm:$0xf]
    %v4307 = vld [vmem:[%s1027 + $0x78] sm:$0xff]
    %v4308 = vld [vmem:[%s1027 + $0x80] sm:$0xf]
    %v4309 = vld [vmem:[%s1027 + $0x84] sm:$0xff]
    %v4310 = vld [vmem:[%s1027 + $0x8c] sm:$0xf]
    %v4311 = vld [vmem:[%s1027 + $0x90] sm:$0xff]
    %v4312 = vld [vmem:[%s1027 + $0x98] sm:$0xf]
    %v4313 = vld [vmem:[%s1027 + $0x9c] sm:$0xff]
    %v4314 = vld [vmem:[%s1027 + $0xa4] sm:$0xf]
    %v4315 = vld [vmem:[%s1027 + $0xa8] sm:$0xff]
    %v4316 = vld [vmem:[%s1027 + $0xb0] sm:$0xf]
    %v4317 = vld [vmem:[%s1027 + $0xb4] sm:$0xff]
    %v4318 = vld [vmem:[%s1027 + $0xbc] sm:$0xf]
    %v4351 = vunpack.c.l.b16 %v4287
    %v4352 = vunpack.c.h.b16 %v4287
    %v4353 = vunpack.c.l.b16 %v4288
    %v4354 = vunpack.c.l.b16 %v4289
    %v4355 = vunpack.c.h.b16 %v4289
    %v4356 = vunpack.c.l.b16 %v4290
    %v4357 = vunpack.c.l.b16 %v4291
    %v4358 = vunpack.c.h.b16 %v4291
    %v4359 = vunpack.c.l.b16 %v4292
    %v4360 = vunpack.c.l.b16 %v4293
    %v4361 = vunpack.c.h.b16 %v4293
    %v4362 = vunpack.c.l.b16 %v4294
    %v4363 = vunpack.c.l.b16 %v4295
    %v4364 = vunpack.c.h.b16 %v4295
    %v4365 = vunpack.c.l.b16 %v4296
    %v4366 = vunpack.c.l.b16 %v4297
    %v4367 = vunpack.c.h.b16 %v4297
    %v4368 = vunpack.c.l.b16 %v4298
    %v4369 = vunpack.c.l.b16 %v4299
    %v4370 = vunpack.c.h.b16 %v4299
    %v4371 = vunpack.c.l.b16 %v4300
    %v4372 = vunpack.c.l.b16 %v4301
    %v4373 = vunpack.c.h.b16 %v4301
    %v4374 = vunpack.c.l.b16 %v4302
    %v4375 = vunpack.c.l.b16 %v4303
    %v4376 = vunpack.c.h.b16 %v4303
    %v4377 = vunpack.c.l.b16 %v4304
    %v4378 = vunpack.c.l.b16 %v4305
    %v4379 = vunpack.c.h.b16 %v4305
    %v4380 = vunpack.c.l.b16 %v4306
    %v4381 = vunpack.c.l.b16 %v4307
    %v4382 = vunpack.c.h.b16 %v4307
    %v4383 = vunpack.c.l.b16 %v4308
    %v4384 = vunpack.c.l.b16 %v4309
    %v4385 = vunpack.c.h.b16 %v4309
    %v4386 = vunpack.c.l.b16 %v4310
    %v4387 = vunpack.c.l.b16 %v4311
    %v4388 = vunpack.c.h.b16 %v4311
    %v4389 = vunpack.c.l.b16 %v4312
    %v4390 = vunpack.c.l.b16 %v4313
    %v4391 = vunpack.c.h.b16 %v4313
    %v4392 = vunpack.c.l.b16 %v4314
    %v4393 = vunpack.c.l.b16 %v4315
    %v4394 = vunpack.c.h.b16 %v4315
    %v4395 = vunpack.c.l.b16 %v4316
    %v4396 = vunpack.c.l.b16 %v4317
    %v4397 = vunpack.c.h.b16 %v4317
    %v4398 = vunpack.c.l.b16 %v4318
    %v4399 = vpack.c.b16 %v4354, %v4351
    %v4400 = vpack.c.b16 %v4355, %v4352
    %v4401 = vpack.c.b16 %v4356, %v4353
    %v4402 = vpack.c.b16 %v4360, %v4357
    %v4403 = vpack.c.b16 %v4361, %v4358
    %v4404 = vpack.c.b16 %v4362, %v4359
    %v4405 = vpack.c.b16 %v4366, %v4363
    %v4406 = vpack.c.b16 %v4367, %v4364
    %v4407 = vpack.c.b16 %v4368, %v4365
    %v4408 = vpack.c.b16 %v4372, %v4369
    %v4409 = vpack.c.b16 %v4373, %v4370
    %v4410 = vpack.c.b16 %v4374, %v4371
    %v4411 = vpack.c.b16 %v4378, %v4375
    %v4412 = vpack.c.b16 %v4379, %v4376
    %v4413 = vpack.c.b16 %v4380, %v4377
    %v4414 = vpack.c.b16 %v4384, %v4381
    %v4415 = vpack.c.b16 %v4385, %v4382
    %v4416 = vpack.c.b16 %v4386, %v4383
    %v4417 = vpack.c.b16 %v4390, %v4387
    %v4418 = vpack.c.b16 %v4391, %v4388
    %v4419 = vpack.c.b16 %v4392, %v4389
    %v4420 = vpack.c.b16 %v4396, %v4393
    %v4421 = vpack.c.b16 %v4397, %v4394
    %v4422 = vpack.c.b16 %v4398, %v4395
    %4447 = vmatpush.bf16.msra.mxu0 %v4420
    %4448 = vmatpush.bf16.msra.mxu0 %v4417
    %4449 = vmatpush.bf16.msra.mxu0 %v4414
    %4450 = vmatpush.bf16.msra.mxu0 %v4411
    %4451 = vmatpush.bf16.msra.mxu0 %v4408
    %4452 = vmatpush.bf16.msra.mxu0 %v4405
    %4453 = vmatpush.bf16.msra.mxu0 %v4402
    %4454 = vmatpush.bf16.msra.mxu0 %v4399
    %4455 = vmatmul.bf16.gmra.mxu0 %v3988
    %v4456 = vpop.f32.mrf.mxu0
    %v4457 = vadd.f32 %v557, %v4456
    %v4458 = vpop.f32.mrf.mxu0
    %v4459 = vadd.f32 %v557, %v4458
    %4460 = vdwg.mxu0
    %4461 = vmatpush.bf16.msra.mxu0 %v4421
    %4462 = vmatpush.bf16.msra.mxu0 %v4418
    %4463 = vmatpush.bf16.msra.mxu0 %v4415
    %4464 = vmatpush.bf16.msra.mxu0 %v4412
    %4465 = vmatpush.bf16.msra.mxu0 %v4409
    %4466 = vmatpush.bf16.msra.mxu0 %v4406
    %4467 = vmatpush.bf16.msra.mxu0 %v4403
    %4468 = vmatpush.bf16.msra.mxu0 %v4400
    %4469 = vmatmul.bf16.gmra.mxu0 %v3988
    %v4470 = vpop.f32.mrf.mxu0
    %v4471 = vadd.f32 %v558, %v4470
    %v4472 = vpop.f32.mrf.mxu0
    %v4473 = vadd.f32 %v558, %v4472
    %4474 = vdwg.mxu0
    %4475 = vmatpush.bf16.msra.mxu0 %v4422
    %4476 = vmatpush.bf16.msra.mxu0 %v4419
    %4477 = vmatpush.bf16.msra.mxu0 %v4416
    %4478 = vmatpush.bf16.msra.mxu0 %v4413
    %4479 = vmatpush.bf16.msra.mxu0 %v4410
    %4480 = vmatpush.bf16.msra.mxu0 %v4407
    %4481 = vmatpush.bf16.msra.mxu0 %v4404
    %4482 = vmatpush.bf16.msra.mxu0 %v4401
    %4483 = vmatmul.bf16.gmra.mxu0 %v3988
    %v4484 = vpop.f32.mrf.mxu0
    %v4485 = vadd.f32 %v559, %v4484
    %v4486 = vpop.f32.mrf.mxu0
    %v4487 = vadd.f32 %v559, %v4486
    %4488 = vdwg.mxu0
    %v4489 = vld [vmem:[%s1231] sm:$0xff]
    %v4490 = vld [vmem:[%s1231 + $0x8] sm:$0xf]
    %v4491 = vld [vmem:[%s1231 + $0xc] sm:$0xff]
    %v4492 = vld [vmem:[%s1231 + $0x14] sm:$0xf]
    %v4493 = vld [vmem:[%s1231 + $0x18] sm:$0xff]
    %v4494 = vld [vmem:[%s1231 + $0x20] sm:$0xf]
    %v4495 = vld [vmem:[%s1231 + $0x24] sm:$0xff]
    %v4496 = vld [vmem:[%s1231 + $0x2c] sm:$0xf]
    %v4497 = vld [vmem:[%s1231 + $0x30] sm:$0xff]
    %v4498 = vld [vmem:[%s1231 + $0x38] sm:$0xf]
    %v4499 = vld [vmem:[%s1231 + $0x3c] sm:$0xff]
    %v4500 = vld [vmem:[%s1231 + $0x44] sm:$0xf]
    %v4501 = vld [vmem:[%s1231 + $0x48] sm:$0xff]
    %v4502 = vld [vmem:[%s1231 + $0x50] sm:$0xf]
    %v4503 = vld [vmem:[%s1231 + $0x54] sm:$0xff]
    %v4504 = vld [vmem:[%s1231 + $0x5c] sm:$0xf]
    %v4505 = vld [vmem:[%s1231 + $0x60] sm:$0xff]
    %v4506 = vld [vmem:[%s1231 + $0x68] sm:$0xf]
    %v4507 = vld [vmem:[%s1231 + $0x6c] sm:$0xff]
    %v4508 = vld [vmem:[%s1231 + $0x74] sm:$0xf]
    %v4509 = vld [vmem:[%s1231 + $0x78] sm:$0xff]
    %v4510 = vld [vmem:[%s1231 + $0x80] sm:$0xf]
    %v4511 = vld [vmem:[%s1231 + $0x84] sm:$0xff]
    %v4512 = vld [vmem:[%s1231 + $0x8c] sm:$0xf]
    %v4513 = vld [vmem:[%s1231 + $0x90] sm:$0xff]
    %v4514 = vld [vmem:[%s1231 + $0x98] sm:$0xf]
    %v4515 = vld [vmem:[%s1231 + $0x9c] sm:$0xff]
    %v4516 = vld [vmem:[%s1231 + $0xa4] sm:$0xf]
    %v4517 = vld [vmem:[%s1231 + $0xa8] sm:$0xff]
    %v4518 = vld [vmem:[%s1231 + $0xb0] sm:$0xf]
    %v4519 = vld [vmem:[%s1231 + $0xb4] sm:$0xff]
    %v4520 = vld [vmem:[%s1231 + $0xbc] sm:$0xf]
    %v4523 = vunpack.c.l.b16 %v3977
    %v4524 = vunpack.c.l.b16 %v3978
    %v4525 = vpack.c.b16 %v4524, %v4523
    %v4559 = vunpack.c.l.b16 %v4489
    %v4560 = vunpack.c.h.b16 %v4489
    %v4561 = vunpack.c.l.b16 %v4490
    %v4562 = vunpack.c.l.b16 %v4491
    %v4563 = vunpack.c.h.b16 %v4491
    %v4564 = vunpack.c.l.b16 %v4492
    %v4565 = vunpack.c.l.b16 %v4493
    %v4566 = vunpack.c.h.b16 %v4493
    %v4567 = vunpack.c.l.b16 %v4494
    %v4568 = vunpack.c.l.b16 %v4495
    %v4569 = vunpack.c.h.b16 %v4495
    %v4570 = vunpack.c.l.b16 %v4496
    %v4571 = vunpack.c.l.b16 %v4497
    %v4572 = vunpack.c.h.b16 %v4497
    %v4573 = vunpack.c.l.b16 %v4498
    %v4574 = vunpack.c.l.b16 %v4499
    %v4575 = vunpack.c.h.b16 %v4499
    %v4576 = vunpack.c.l.b16 %v4500
    %v4577 = vunpack.c.l.b16 %v4501
    %v4578 = vunpack.c.h.b16 %v4501
    %v4579 = vunpack.c.l.b16 %v4502
    %v4580 = vunpack.c.l.b16 %v4503
    %v4581 = vunpack.c.h.b16 %v4503
    %v4582 = vunpack.c.l.b16 %v4504
    %v4583 = vunpack.c.l.b16 %v4505
    %v4584 = vunpack.c.h.b16 %v4505
    %v4585 = vunpack.c.l.b16 %v4506
    %v4586 = vunpack.c.l.b16 %v4507
    %v4587 = vunpack.c.h.b16 %v4507
    %v4588 = vunpack.c.l.b16 %v4508
    %v4589 = vunpack.c.l.b16 %v4509
    %v4590 = vunpack.c.h.b16 %v4509
    %v4591 = vunpack.c.l.b16 %v4510
    %v4592 = vunpack.c.l.b16 %v4511
    %v4593 = vunpack.c.h.b16 %v4511
    %v4594 = vunpack.c.l.b16 %v4512
    %v4595 = vunpack.c.l.b16 %v4513
    %v4596 = vunpack.c.h.b16 %v4513
    %v4597 = vunpack.c.l.b16 %v4514
    %v4598 = vunpack.c.l.b16 %v4515
    %v4599 = vunpack.c.h.b16 %v4515
    %v4600 = vunpack.c.l.b16 %v4516
    %v4601 = vunpack.c.l.b16 %v4517
    %v4602 = vunpack.c.h.b16 %v4517
    %v4603 = vunpack.c.l.b16 %v4518
    %v4604 = vunpack.c.l.b16 %v4519
    %v4605 = vunpack.c.h.b16 %v4519
    %v4606 = vunpack.c.l.b16 %v4520
    %v4607 = vpack.c.b16 %v4562, %v4559
    %v4608 = vpack.c.b16 %v4563, %v4560
    %v4609 = vpack.c.b16 %v4564, %v4561
    %v4610 = vpack.c.b16 %v4568, %v4565
    %v4611 = vpack.c.b16 %v4569, %v4566
    %v4612 = vpack.c.b16 %v4570, %v4567
    %v4613 = vpack.c.b16 %v4574, %v4571
    %v4614 = vpack.c.b16 %v4575, %v4572
    %v4615 = vpack.c.b16 %v4576, %v4573
    %v4616 = vpack.c.b16 %v4580, %v4577
    %v4617 = vpack.c.b16 %v4581, %v4578
    %v4618 = vpack.c.b16 %v4582, %v4579
    %v4619 = vpack.c.b16 %v4586, %v4583
    %v4620 = vpack.c.b16 %v4587, %v4584
    %v4621 = vpack.c.b16 %v4588, %v4585
    %v4622 = vpack.c.b16 %v4592, %v4589
    %v4623 = vpack.c.b16 %v4593, %v4590
    %v4624 = vpack.c.b16 %v4594, %v4591
    %v4625 = vpack.c.b16 %v4598, %v4595
    %v4626 = vpack.c.b16 %v4599, %v4596
    %v4627 = vpack.c.b16 %v4600, %v4597
    %v4628 = vpack.c.b16 %v4604, %v4601
    %v4629 = vpack.c.b16 %v4605, %v4602
    %v4630 = vpack.c.b16 %v4606, %v4603
    %4655 = vmatpush.bf16.msra.mxu0 %v4628
    %4656 = vmatpush.bf16.msra.mxu0 %v4625
    %4657 = vmatpush.bf16.msra.mxu0 %v4622
    %4658 = vmatpush.bf16.msra.mxu0 %v4619
    %4659 = vmatpush.bf16.msra.mxu0 %v4616
    %4660 = vmatpush.bf16.msra.mxu0 %v4613
    %4661 = vmatpush.bf16.msra.mxu0 %v4610
    %4662 = vmatpush.bf16.msra.mxu0 %v4607
    %4663 = vmatmul.bf16.gmra.mxu0 %v4525
    %v4664 = vpop.f32.mrf.mxu0
    %v4665 = vadd.f32 0.0, %v4664
    %v4666 = vpop.f32.mrf.mxu0
    %v4667 = vadd.f32 0.0, %v4666
    %4668 = vdwg.mxu0
    %4669 = vmatpush.bf16.msra.mxu0 %v4629
    %4670 = vmatpush.bf16.msra.mxu0 %v4626
    %4671 = vmatpush.bf16.msra.mxu0 %v4623
    %4672 = vmatpush.bf16.msra.mxu0 %v4620
    %4673 = vmatpush.bf16.msra.mxu0 %v4617
    %4674 = vmatpush.bf16.msra.mxu0 %v4614
    %4675 = vmatpush.bf16.msra.mxu0 %v4611
    %4676 = vmatpush.bf16.msra.mxu0 %v4608
    %4677 = vmatmul.bf16.gmra.mxu0 %v4525
    %v4678 = vpop.f32.mrf.mxu0
    %v4679 = vadd.f32 0.0, %v4678
    %v4680 = vpop.f32.mrf.mxu0
    %v4681 = vadd.f32 0.0, %v4680
    %4682 = vdwg.mxu0
    %4683 = vmatpush.bf16.msra.mxu0 %v4630
    %4684 = vmatpush.bf16.msra.mxu0 %v4627
    %4685 = vmatpush.bf16.msra.mxu0 %v4624
    %4686 = vmatpush.bf16.msra.mxu0 %v4621
    %4687 = vmatpush.bf16.msra.mxu0 %v4618
    %4688 = vmatpush.bf16.msra.mxu0 %v4615
    %4689 = vmatpush.bf16.msra.mxu0 %v4612
    %4690 = vmatpush.bf16.msra.mxu0 %v4609
    %4691 = vmatmul.bf16.gmra.mxu0 %v4525
    %v4692 = vpop.f32.mrf.mxu0
    %v4693 = vadd.f32 0.0, %v4692
    %v4694 = vpop.f32.mrf.mxu0
    %v4695 = vadd.f32 0.0, %v4694
    %4696 = vdwg.mxu0
    %v4697 = vadd.f32 %v4457, %v4665
    %v4698 = vadd.f32 %v4459, %v4667
    %v4699 = vxor.u32 %v4697, 2147483648
    %v4700 = vxor.u32 %v4698, 2147483648
    %v4701 = vmul.f32 %v4699, 1.442695
    %v4702 = vpow.pop %v4701
    %v4703 = vmul.f32 %v4700, 1.442695
    %v4704 = vpow.pop %v4703
    %v4705 = vadd.f32 %v4702, 1.0
    %v4706 = vadd.f32 %v4704, 1.0
    %v4707 = vrcp.pop %v4705
    %v4708 = vmul.f32 %v4705, %v4707
    %v4709 = vsub.f32 1.0, %v4708
    %v4710 = vmul.f32 %v4707, %v4709
    %v4711 = vadd.f32 %v4707, %v4710
    %vm4712 = vweird.f32 %v4705
    %vm4713 = vweird.f32 %v4707
    %vm4714 = vmor %vm4712, %vm4713
    %v4715 = vsel %vm4714, %v4707, %v4711
    %v4716 = vand.u32 2147483647, %v4705
    %vm4717 = vcmp.eq.f32.partialorder %v4716, 8.507059e+37
    %v4718 = vand.u32 %v4705, 2147483648
    %v4719 = vor.u32 1.1754944e-38, %v4718
    %v4720 = vsel %vm4717, %v4719, %v4715
    %v4721 = vmul.f32 1.0, %v4720
    %v4722 = vrcp.pop %v4706
    %v4723 = vmul.f32 %v4706, %v4722
    %v4724 = vsub.f32 1.0, %v4723
    %v4725 = vmul.f32 %v4722, %v4724
    %v4726 = vadd.f32 %v4722, %v4725
    %vm4727 = vweird.f32 %v4706
    %vm4728 = vweird.f32 %v4722
    %vm4729 = vmor %vm4727, %vm4728
    %v4730 = vsel %vm4729, %v4722, %v4726
    %v4731 = vand.u32 2147483647, %v4706
    %vm4732 = vcmp.eq.f32.partialorder %v4731, 8.507059e+37
    %v4733 = vand.u32 %v4706, 2147483648
    %v4734 = vor.u32 1.1754944e-38, %v4733
    %v4735 = vsel %vm4732, %v4734, %v4730
    %v4736 = vmul.f32 1.0, %v4735
    %v4737 = vadd.f32 %v4471, %v4679
    %v4738 = vadd.f32 %v4473, %v4681
    %v4739 = vxor.u32 %v4737, 2147483648
    %v4740 = vxor.u32 %v4738, 2147483648
    %v4741 = vmul.f32 %v4739, 1.442695
    %v4742 = vpow.pop %v4741
    %v4743 = vmul.f32 %v4740, 1.442695
    %v4744 = vpow.pop %v4743
    %v4745 = vadd.f32 %v4742, 1.0
    %v4746 = vadd.f32 %v4744, 1.0
    %v4747 = vrcp.pop %v4745
    %v4748 = vmul.f32 %v4745, %v4747
    %v4749 = vsub.f32 1.0, %v4748
    %v4750 = vmul.f32 %v4747, %v4749
    %v4751 = vadd.f32 %v4747, %v4750
    %vm4752 = vweird.f32 %v4745
    %vm4753 = vweird.f32 %v4747
    %vm4754 = vmor %vm4752, %vm4753
    %v4755 = vsel %vm4754, %v4747, %v4751
    %v4756 = vand.u32 2147483647, %v4745
    %vm4757 = vcmp.eq.f32.partialorder %v4756, 8.507059e+37
    %v4758 = vand.u32 %v4745, 2147483648
    %v4759 = vor.u32 1.1754944e-38, %v4758
    %v4760 = vsel %vm4757, %v4759, %v4755
    %v4761 = vmul.f32 1.0, %v4760
    %v4762 = vrcp.pop %v4746
    %v4763 = vmul.f32 %v4746, %v4762
    %v4764 = vsub.f32 1.0, %v4763
    %v4765 = vmul.f32 %v4762, %v4764
    %v4766 = vadd.f32 %v4762, %v4765
    %vm4767 = vweird.f32 %v4746
    %vm4768 = vweird.f32 %v4762
    %vm4769 = vmor %vm4767, %vm4768
    %v4770 = vsel %vm4769, %v4762, %v4766
    %v4771 = vand.u32 2147483647, %v4746
    %vm4772 = vcmp.eq.f32.partialorder %v4771, 8.507059e+37
    %v4773 = vand.u32 %v4746, 2147483648
    %v4774 = vor.u32 1.1754944e-38, %v4773
    %v4775 = vsel %vm4772, %v4774, %v4770
    %v4776 = vmul.f32 1.0, %v4775
    %v4777 = vadd.f32 %v4693, %v570
    %v4778 = vadd.f32 %v4695, %v570
    %v4779 = vmul.f32 %v4721, %v4777
    %v4780 = vmul.f32 %v4736, %v4778
    %v4781 = vadd.f32 %v4485, %v4779
    %v4782 = vadd.f32 %v4487, %v4780
    %v4783 = vtanh.pop %v4781
    %v4784 = vtanh.pop %v4782
    %v4785 = vsub.f32 1.0, %v4761
    %v4786 = vsub.f32 1.0, %v4776
    %v4787 = vmul.f32 %v4785, %v4783
    %v4788 = vmul.f32 %v4786, %v4784
    %v4789 = vmul.f32 %v4761, %v3975
    %v4790 = vmul.f32 %v4776, %v3976
    %v4791 = vadd.f32 %v4787, %v4789
    %v4792 = vadd.f32 %v4788, %v4790
    %v4793 = vpack.c.bf16 %v4791, %v4791
    %v4794 = vpack.c.bf16 %v4792, %v4792
    %s4795 = scalar_lea.vmem [#allocation2], 32
    %4796 = vst [vmem:[%s4795] sm:$0xf] %v4793
    %4797 = vst [vmem:[%s4795 + $0x4] sm:$0xf] %v4794
    %v4798 = vld [vmem:[#allocation3 + $0x120] sm:$0xff]
    %v4799 = vld [vmem:[#allocation3 + $0x128] sm:$0xff]
    %v4800 = vld [vmem:[#allocation3 + $0x130] sm:$0xff]
    %v4801 = vld [vmem:[#allocation3 + $0x138] sm:$0xff]
    %v4802 = vld [vmem:[#allocation3 + $0x140] sm:$0xff]
    %v4803 = vld [vmem:[#allocation3 + $0x148] sm:$0xff]
    %v4804 = vpack.c.bf16 %v4286, %v4285
    %v4805 = vld [vmem:[#allocation10] sm:$0xff]
    %v4806 = vld [vmem:[#allocation10 + $0x8] sm:$0xf]
    %v4807 = vld [vmem:[#allocation10 + $0xc] sm:$0xff]
    %v4808 = vld [vmem:[#allocation10 + $0x14] sm:$0xf]
    %v4809 = vld [vmem:[#allocation10 + $0x18] sm:$0xff]
    %v4810 = vld [vmem:[#allocation10 + $0x20] sm:$0xf]
    %v4811 = vld [vmem:[#allocation10 + $0x24] sm:$0xff]
    %v4812 = vld [vmem:[#allocation10 + $0x2c] sm:$0xf]
    %v4813 = vld [vmem:[#allocation10 + $0x30] sm:$0xff]
    %v4814 = vld [vmem:[#allocation10 + $0x38] sm:$0xf]
    %v4815 = vld [vmem:[#allocation10 + $0x3c] sm:$0xff]
    %v4816 = vld [vmem:[#allocation10 + $0x44] sm:$0xf]
    %v4817 = vld [vmem:[#allocation10 + $0x48] sm:$0xff]
    %v4818 = vld [vmem:[#allocation10 + $0x50] sm:$0xf]
    %v4819 = vld [vmem:[#allocation10 + $0x54] sm:$0xff]
    %v4820 = vld [vmem:[#allocation10 + $0x5c] sm:$0xf]
    %v4821 = vld [vmem:[#allocation10 + $0x60] sm:$0xff]
    %v4822 = vld [vmem:[#allocation10 + $0x68] sm:$0xf]
    %v4823 = vld [vmem:[#allocation10 + $0x6c] sm:$0xff]
    %v4824 = vld [vmem:[#allocation10 + $0x74] sm:$0xf]
    %v4825 = vld [vmem:[#allocation10 + $0x78] sm:$0xff]
    %v4826 = vld [vmem:[#allocation10 + $0x80] sm:$0xf]
    %v4827 = vld [vmem:[#allocation10 + $0x84] sm:$0xff]
    %v4828 = vld [vmem:[#allocation10 + $0x8c] sm:$0xf]
    %v4829 = vld [vmem:[#allocation10 + $0x90] sm:$0xff]
    %v4830 = vld [vmem:[#allocation10 + $0x98] sm:$0xf]
    %v4831 = vld [vmem:[#allocation10 + $0x9c] sm:$0xff]
    %v4832 = vld [vmem:[#allocation10 + $0xa4] sm:$0xf]
    %v4833 = vld [vmem:[#allocation10 + $0xa8] sm:$0xff]
    %v4834 = vld [vmem:[#allocation10 + $0xb0] sm:$0xf]
    %v4835 = vld [vmem:[#allocation10 + $0xb4] sm:$0xff]
    %v4836 = vld [vmem:[#allocation10 + $0xbc] sm:$0xf]
    %v4869 = vunpack.c.l.b16 %v4805
    %v4870 = vunpack.c.h.b16 %v4805
    %v4871 = vunpack.c.l.b16 %v4806
    %v4872 = vunpack.c.l.b16 %v4807
    %v4873 = vunpack.c.h.b16 %v4807
    %v4874 = vunpack.c.l.b16 %v4808
    %v4875 = vunpack.c.l.b16 %v4809
    %v4876 = vunpack.c.h.b16 %v4809
    %v4877 = vunpack.c.l.b16 %v4810
    %v4878 = vunpack.c.l.b16 %v4811
    %v4879 = vunpack.c.h.b16 %v4811
    %v4880 = vunpack.c.l.b16 %v4812
    %v4881 = vunpack.c.l.b16 %v4813
    %v4882 = vunpack.c.h.b16 %v4813
    %v4883 = vunpack.c.l.b16 %v4814
    %v4884 = vunpack.c.l.b16 %v4815
    %v4885 = vunpack.c.h.b16 %v4815
    %v4886 = vunpack.c.l.b16 %v4816
    %v4887 = vunpack.c.l.b16 %v4817
    %v4888 = vunpack.c.h.b16 %v4817
    %v4889 = vunpack.c.l.b16 %v4818
    %v4890 = vunpack.c.l.b16 %v4819
    %v4891 = vunpack.c.h.b16 %v4819
    %v4892 = vunpack.c.l.b16 %v4820
    %v4893 = vunpack.c.l.b16 %v4821
    %v4894 = vunpack.c.h.b16 %v4821
    %v4895 = vunpack.c.l.b16 %v4822
    %v4896 = vunpack.c.l.b16 %v4823
    %v4897 = vunpack.c.h.b16 %v4823
    %v4898 = vunpack.c.l.b16 %v4824
    %v4899 = vunpack.c.l.b16 %v4825
    %v4900 = vunpack.c.h.b16 %v4825
    %v4901 = vunpack.c.l.b16 %v4826
    %v4902 = vunpack.c.l.b16 %v4827
    %v4903 = vunpack.c.h.b16 %v4827
    %v4904 = vunpack.c.l.b16 %v4828
    %v4905 = vunpack.c.l.b16 %v4829
    %v4906 = vunpack.c.h.b16 %v4829
    %v4907 = vunpack.c.l.b16 %v4830
    %v4908 = vunpack.c.l.b16 %v4831
    %v4909 = vunpack.c.h.b16 %v4831
    %v4910 = vunpack.c.l.b16 %v4832
    %v4911 = vunpack.c.l.b16 %v4833
    %v4912 = vunpack.c.h.b16 %v4833
    %v4913 = vunpack.c.l.b16 %v4834
    %v4914 = vunpack.c.l.b16 %v4835
    %v4915 = vunpack.c.h.b16 %v4835
    %v4916 = vunpack.c.l.b16 %v4836
    %v4917 = vpack.c.b16 %v4872, %v4869
    %v4918 = vpack.c.b16 %v4873, %v4870
    %v4919 = vpack.c.b16 %v4874, %v4871
    %v4920 = vpack.c.b16 %v4878, %v4875
    %v4921 = vpack.c.b16 %v4879, %v4876
    %v4922 = vpack.c.b16 %v4880, %v4877
    %v4923 = vpack.c.b16 %v4884, %v4881
    %v4924 = vpack.c.b16 %v4885, %v4882
    %v4925 = vpack.c.b16 %v4886, %v4883
    %v4926 = vpack.c.b16 %v4890, %v4887
    %v4927 = vpack.c.b16 %v4891, %v4888
    %v4928 = vpack.c.b16 %v4892, %v4889
    %v4929 = vpack.c.b16 %v4896, %v4893
    %v4930 = vpack.c.b16 %v4897, %v4894
    %v4931 = vpack.c.b16 %v4898, %v4895
    %v4932 = vpack.c.b16 %v4902, %v4899
    %v4933 = vpack.c.b16 %v4903, %v4900
    %v4934 = vpack.c.b16 %v4904, %v4901
    %v4935 = vpack.c.b16 %v4908, %v4905
    %v4936 = vpack.c.b16 %v4909, %v4906
    %v4937 = vpack.c.b16 %v4910, %v4907
    %v4938 = vpack.c.b16 %v4914, %v4911
    %v4939 = vpack.c.b16 %v4915, %v4912
    %v4940 = vpack.c.b16 %v4916, %v4913
    %4965 = vmatpush.bf16.msra.mxu0 %v4938
    %4966 = vmatpush.bf16.msra.mxu0 %v4935
    %4967 = vmatpush.bf16.msra.mxu0 %v4932
    %4968 = vmatpush.bf16.msra.mxu0 %v4929
    %4969 = vmatpush.bf16.msra.mxu0 %v4926
    %4970 = vmatpush.bf16.msra.mxu0 %v4923
    %4971 = vmatpush.bf16.msra.mxu0 %v4920
    %4972 = vmatpush.bf16.msra.mxu0 %v4917
    %4973 = vmatmul.bf16.gmra.mxu0 %v4804
    %v4974 = vpop.f32.mrf.mxu0
    %v4975 = vadd.f32 0.0, %v4974
    %v4976 = vpop.f32.mrf.mxu0
    %v4977 = vadd.f32 0.0, %v4976
    %4978 = vdwg.mxu0
    %4979 = vmatpush.bf16.msra.mxu0 %v4939
    %4980 = vmatpush.bf16.msra.mxu0 %v4936
    %4981 = vmatpush.bf16.msra.mxu0 %v4933
    %4982 = vmatpush.bf16.msra.mxu0 %v4930
    %4983 = vmatpush.bf16.msra.mxu0 %v4927
    %4984 = vmatpush.bf16.msra.mxu0 %v4924
    %4985 = vmatpush.bf16.msra.mxu0 %v4921
    %4986 = vmatpush.bf16.msra.mxu0 %v4918
    %4987 = vmatmul.bf16.gmra.mxu0 %v4804
    %v4988 = vpop.f32.mrf.mxu0
    %v4989 = vadd.f32 0.0, %v4988
    %v4990 = vpop.f32.mrf.mxu0
    %v4991 = vadd.f32 0.0, %v4990
    %4992 = vdwg.mxu0
    %4993 = vmatpush.bf16.msra.mxu0 %v4940
    %4994 = vmatpush.bf16.msra.mxu0 %v4937
    %4995 = vmatpush.bf16.msra.mxu0 %v4934
    %4996 = vmatpush.bf16.msra.mxu0 %v4931
    %4997 = vmatpush.bf16.msra.mxu0 %v4928
    %4998 = vmatpush.bf16.msra.mxu0 %v4925
    %4999 = vmatpush.bf16.msra.mxu0 %v4922
    %5000 = vmatpush.bf16.msra.mxu0 %v4919
    %5001 = vmatmul.bf16.gmra.mxu0 %v4804
    %v5002 = vpop.f32.mrf.mxu0
    %v5003 = vadd.f32 0.0, %v5002
    %v5004 = vpop.f32.mrf.mxu0
    %v5005 = vadd.f32 0.0, %v5004
    %5006 = vdwg.mxu0
    %v5007 = vadd.f32 %v4798, %v4975
    %v5008 = vadd.f32 %v4801, %v4977
    %v5009 = vxor.u32 %v5007, 2147483648
    %v5010 = vxor.u32 %v5008, 2147483648
    %v5011 = vmul.f32 %v5009, 1.442695
    %v5012 = vpow.pop %v5011
    %v5013 = vmul.f32 %v5010, 1.442695
    %v5014 = vpow.pop %v5013
    %v5015 = vadd.f32 %v5012, 1.0
    %v5016 = vadd.f32 %v5014, 1.0
    %v5017 = vrcp.pop %v5015
    %v5018 = vmul.f32 %v5015, %v5017
    %v5019 = vsub.f32 1.0, %v5018
    %v5020 = vmul.f32 %v5017, %v5019
    %v5021 = vadd.f32 %v5017, %v5020
    %vm5022 = vweird.f32 %v5015
    %vm5023 = vweird.f32 %v5017
    %vm5024 = vmor %vm5022, %vm5023
    %v5025 = vsel %vm5024, %v5017, %v5021
    %v5026 = vand.u32 2147483647, %v5015
    %vm5027 = vcmp.eq.f32.partialorder %v5026, 8.507059e+37
    %v5028 = vand.u32 %v5015, 2147483648
    %v5029 = vor.u32 1.1754944e-38, %v5028
    %v5030 = vsel %vm5027, %v5029, %v5025
    %v5031 = vmul.f32 1.0, %v5030
    %v5032 = vrcp.pop %v5016
    %v5033 = vmul.f32 %v5016, %v5032
    %v5034 = vsub.f32 1.0, %v5033
    %v5035 = vmul.f32 %v5032, %v5034
    %v5036 = vadd.f32 %v5032, %v5035
    %vm5037 = vweird.f32 %v5016
    %vm5038 = vweird.f32 %v5032
    %vm5039 = vmor %vm5037, %vm5038
    %v5040 = vsel %vm5039, %v5032, %v5036
    %v5041 = vand.u32 2147483647, %v5016
    %vm5042 = vcmp.eq.f32.partialorder %v5041, 8.507059e+37
    %v5043 = vand.u32 %v5016, 2147483648
    %v5044 = vor.u32 1.1754944e-38, %v5043
    %v5045 = vsel %vm5042, %v5044, %v5040
    %v5046 = vmul.f32 1.0, %v5045
    %v5047 = vadd.f32 %v4799, %v4989
    %v5048 = vadd.f32 %v4802, %v4991
    %v5049 = vxor.u32 %v5047, 2147483648
    %v5050 = vxor.u32 %v5048, 2147483648
    %v5051 = vmul.f32 %v5049, 1.442695
    %v5052 = vpow.pop %v5051
    %v5053 = vmul.f32 %v5050, 1.442695
    %v5054 = vpow.pop %v5053
    %v5055 = vadd.f32 %v5052, 1.0
    %v5056 = vadd.f32 %v5054, 1.0
    %v5057 = vrcp.pop %v5055
    %v5058 = vmul.f32 %v5055, %v5057
    %v5059 = vsub.f32 1.0, %v5058
    %v5060 = vmul.f32 %v5057, %v5059
    %v5061 = vadd.f32 %v5057, %v5060
    %vm5062 = vweird.f32 %v5055
    %vm5063 = vweird.f32 %v5057
    %vm5064 = vmor %vm5062, %vm5063
    %v5065 = vsel %vm5064, %v5057, %v5061
    %v5066 = vand.u32 2147483647, %v5055
    %vm5067 = vcmp.eq.f32.partialorder %v5066, 8.507059e+37
    %v5068 = vand.u32 %v5055, 2147483648
    %v5069 = vor.u32 1.1754944e-38, %v5068
    %v5070 = vsel %vm5067, %v5069, %v5065
    %v5071 = vmul.f32 1.0, %v5070
    %v5072 = vrcp.pop %v5056
    %v5073 = vmul.f32 %v5056, %v5072
    %v5074 = vsub.f32 1.0, %v5073
    %v5075 = vmul.f32 %v5072, %v5074
    %v5076 = vadd.f32 %v5072, %v5075
    %vm5077 = vweird.f32 %v5056
    %vm5078 = vweird.f32 %v5072
    %vm5079 = vmor %vm5077, %vm5078
    %v5080 = vsel %vm5079, %v5072, %v5076
    %v5081 = vand.u32 2147483647, %v5056
    %vm5082 = vcmp.eq.f32.partialorder %v5081, 8.507059e+37
    %v5083 = vand.u32 %v5056, 2147483648
    %v5084 = vor.u32 1.1754944e-38, %v5083
    %v5085 = vsel %vm5082, %v5084, %v5080
    %v5086 = vmul.f32 1.0, %v5085
    %v5087 = vadd.f32 %v5003, %v565
    %v5088 = vadd.f32 %v5005, %v565
    %v5089 = vmul.f32 %v5031, %v5087
    %v5090 = vmul.f32 %v5046, %v5088
    %v5091 = vadd.f32 %v4800, %v5089
    %v5092 = vadd.f32 %v4803, %v5090
    %v5093 = vtanh.pop %v5091
    %v5094 = vtanh.pop %v5092
    %v5095 = vsub.f32 1.0, %v5071
    %v5096 = vsub.f32 1.0, %v5086
    %v5097 = vmul.f32 %v5095, %v5093
    %v5098 = vmul.f32 %v5096, %v5094
    %v5099 = vmul.f32 %v5071, %v4285
    %v5100 = vmul.f32 %v5086, %v4286
    %v5101 = vadd.f32 %v5097, %v5099
    %v5102 = vadd.f32 %v5098, %v5100
    %v5103 = vld [vmem:[%s1027] sm:$0xff]
    %v5104 = vld [vmem:[%s1027 + $0x8] sm:$0xf]
    %v5105 = vld [vmem:[%s1027 + $0xc] sm:$0xff]
    %v5106 = vld [vmem:[%s1027 + $0x14] sm:$0xf]
    %v5107 = vld [vmem:[%s1027 + $0x18] sm:$0xff]
    %v5108 = vld [vmem:[%s1027 + $0x20] sm:$0xf]
    %v5109 = vld [vmem:[%s1027 + $0x24] sm:$0xff]
    %v5110 = vld [vmem:[%s1027 + $0x2c] sm:$0xf]
    %v5111 = vld [vmem:[%s1027 + $0x30] sm:$0xff]
    %v5112 = vld [vmem:[%s1027 + $0x38] sm:$0xf]
    %v5113 = vld [vmem:[%s1027 + $0x3c] sm:$0xff]
    %v5114 = vld [vmem:[%s1027 + $0x44] sm:$0xf]
    %v5115 = vld [vmem:[%s1027 + $0x48] sm:$0xff]
    %v5116 = vld [vmem:[%s1027 + $0x50] sm:$0xf]
    %v5117 = vld [vmem:[%s1027 + $0x54] sm:$0xff]
    %v5118 = vld [vmem:[%s1027 + $0x5c] sm:$0xf]
    %v5119 = vld [vmem:[%s1027 + $0x60] sm:$0xff]
    %v5120 = vld [vmem:[%s1027 + $0x68] sm:$0xf]
    %v5121 = vld [vmem:[%s1027 + $0x6c] sm:$0xff]
    %v5122 = vld [vmem:[%s1027 + $0x74] sm:$0xf]
    %v5123 = vld [vmem:[%s1027 + $0x78] sm:$0xff]
    %v5124 = vld [vmem:[%s1027 + $0x80] sm:$0xf]
    %v5125 = vld [vmem:[%s1027 + $0x84] sm:$0xff]
    %v5126 = vld [vmem:[%s1027 + $0x8c] sm:$0xf]
    %v5127 = vld [vmem:[%s1027 + $0x90] sm:$0xff]
    %v5128 = vld [vmem:[%s1027 + $0x98] sm:$0xf]
    %v5129 = vld [vmem:[%s1027 + $0x9c] sm:$0xff]
    %v5130 = vld [vmem:[%s1027 + $0xa4] sm:$0xf]
    %v5131 = vld [vmem:[%s1027 + $0xa8] sm:$0xff]
    %v5132 = vld [vmem:[%s1027 + $0xb0] sm:$0xf]
    %v5133 = vld [vmem:[%s1027 + $0xb4] sm:$0xff]
    %v5134 = vld [vmem:[%s1027 + $0xbc] sm:$0xf]
    %v5167 = vunpack.c.l.b16 %v5103
    %v5168 = vunpack.c.h.b16 %v5103
    %v5169 = vunpack.c.l.b16 %v5104
    %v5170 = vunpack.c.l.b16 %v5105
    %v5171 = vunpack.c.h.b16 %v5105
    %v5172 = vunpack.c.l.b16 %v5106
    %v5173 = vunpack.c.l.b16 %v5107
    %v5174 = vunpack.c.h.b16 %v5107
    %v5175 = vunpack.c.l.b16 %v5108
    %v5176 = vunpack.c.l.b16 %v5109
    %v5177 = vunpack.c.h.b16 %v5109
    %v5178 = vunpack.c.l.b16 %v5110
    %v5179 = vunpack.c.l.b16 %v5111
    %v5180 = vunpack.c.h.b16 %v5111
    %v5181 = vunpack.c.l.b16 %v5112
    %v5182 = vunpack.c.l.b16 %v5113
    %v5183 = vunpack.c.h.b16 %v5113
    %v5184 = vunpack.c.l.b16 %v5114
    %v5185 = vunpack.c.l.b16 %v5115
    %v5186 = vunpack.c.h.b16 %v5115
    %v5187 = vunpack.c.l.b16 %v5116
    %v5188 = vunpack.c.l.b16 %v5117
    %v5189 = vunpack.c.h.b16 %v5117
    %v5190 = vunpack.c.l.b16 %v5118
    %v5191 = vunpack.c.l.b16 %v5119
    %v5192 = vunpack.c.h.b16 %v5119
    %v5193 = vunpack.c.l.b16 %v5120
    %v5194 = vunpack.c.l.b16 %v5121
    %v5195 = vunpack.c.h.b16 %v5121
    %v5196 = vunpack.c.l.b16 %v5122
    %v5197 = vunpack.c.l.b16 %v5123
    %v5198 = vunpack.c.h.b16 %v5123
    %v5199 = vunpack.c.l.b16 %v5124
    %v5200 = vunpack.c.l.b16 %v5125
    %v5201 = vunpack.c.h.b16 %v5125
    %v5202 = vunpack.c.l.b16 %v5126
    %v5203 = vunpack.c.l.b16 %v5127
    %v5204 = vunpack.c.h.b16 %v5127
    %v5205 = vunpack.c.l.b16 %v5128
    %v5206 = vunpack.c.l.b16 %v5129
    %v5207 = vunpack.c.h.b16 %v5129
    %v5208 = vunpack.c.l.b16 %v5130
    %v5209 = vunpack.c.l.b16 %v5131
    %v5210 = vunpack.c.h.b16 %v5131
    %v5211 = vunpack.c.l.b16 %v5132
    %v5212 = vunpack.c.l.b16 %v5133
    %v5213 = vunpack.c.h.b16 %v5133
    %v5214 = vunpack.c.l.b16 %v5134
    %v5215 = vpack.c.b16 %v5170, %v5167
    %v5216 = vpack.c.b16 %v5171, %v5168
    %v5217 = vpack.c.b16 %v5172, %v5169
    %v5218 = vpack.c.b16 %v5176, %v5173
    %v5219 = vpack.c.b16 %v5177, %v5174
    %v5220 = vpack.c.b16 %v5178, %v5175
    %v5221 = vpack.c.b16 %v5182, %v5179
    %v5222 = vpack.c.b16 %v5183, %v5180
    %v5223 = vpack.c.b16 %v5184, %v5181
    %v5224 = vpack.c.b16 %v5188, %v5185
    %v5225 = vpack.c.b16 %v5189, %v5186
    %v5226 = vpack.c.b16 %v5190, %v5187
    %v5227 = vpack.c.b16 %v5194, %v5191
    %v5228 = vpack.c.b16 %v5195, %v5192
    %v5229 = vpack.c.b16 %v5196, %v5193
    %v5230 = vpack.c.b16 %v5200, %v5197
    %v5231 = vpack.c.b16 %v5201, %v5198
    %v5232 = vpack.c.b16 %v5202, %v5199
    %v5233 = vpack.c.b16 %v5206, %v5203
    %v5234 = vpack.c.b16 %v5207, %v5204
    %v5235 = vpack.c.b16 %v5208, %v5205
    %v5236 = vpack.c.b16 %v5212, %v5209
    %v5237 = vpack.c.b16 %v5213, %v5210
    %v5238 = vpack.c.b16 %v5214, %v5211
    %5263 = vmatpush.bf16.msra.mxu0 %v5236
    %5264 = vmatpush.bf16.msra.mxu0 %v5233
    %5265 = vmatpush.bf16.msra.mxu0 %v5230
    %5266 = vmatpush.bf16.msra.mxu0 %v5227
    %5267 = vmatpush.bf16.msra.mxu0 %v5224
    %5268 = vmatpush.bf16.msra.mxu0 %v5221
    %5269 = vmatpush.bf16.msra.mxu0 %v5218
    %5270 = vmatpush.bf16.msra.mxu0 %v5215
    %5271 = vmatmul.bf16.gmra.mxu0 %v4804
    %v5272 = vpop.f32.mrf.mxu0
    %v5273 = vadd.f32 %v557, %v5272
    %v5274 = vpop.f32.mrf.mxu0
    %v5275 = vadd.f32 %v557, %v5274
    %5276 = vdwg.mxu0
    %5277 = vmatpush.bf16.msra.mxu0 %v5237
    %5278 = vmatpush.bf16.msra.mxu0 %v5234
    %5279 = vmatpush.bf16.msra.mxu0 %v5231
    %5280 = vmatpush.bf16.msra.mxu0 %v5228
    %5281 = vmatpush.bf16.msra.mxu0 %v5225
    %5282 = vmatpush.bf16.msra.mxu0 %v5222
    %5283 = vmatpush.bf16.msra.mxu0 %v5219
    %5284 = vmatpush.bf16.msra.mxu0 %v5216
    %5285 = vmatmul.bf16.gmra.mxu0 %v4804
    %v5286 = vpop.f32.mrf.mxu0
    %v5287 = vadd.f32 %v558, %v5286
    %v5288 = vpop.f32.mrf.mxu0
    %v5289 = vadd.f32 %v558, %v5288
    %5290 = vdwg.mxu0
    %5291 = vmatpush.bf16.msra.mxu0 %v5238
    %5292 = vmatpush.bf16.msra.mxu0 %v5235
    %5293 = vmatpush.bf16.msra.mxu0 %v5232
    %5294 = vmatpush.bf16.msra.mxu0 %v5229
    %5295 = vmatpush.bf16.msra.mxu0 %v5226
    %5296 = vmatpush.bf16.msra.mxu0 %v5223
    %5297 = vmatpush.bf16.msra.mxu0 %v5220
    %5298 = vmatpush.bf16.msra.mxu0 %v5217
    %5299 = vmatmul.bf16.gmra.mxu0 %v4804
    %v5300 = vpop.f32.mrf.mxu0
    %v5301 = vadd.f32 %v559, %v5300
    %v5302 = vpop.f32.mrf.mxu0
    %v5303 = vadd.f32 %v559, %v5302
    %5304 = vdwg.mxu0
    %v5305 = vld [vmem:[%s1231] sm:$0xff]
    %v5306 = vld [vmem:[%s1231 + $0x8] sm:$0xf]
    %v5307 = vld [vmem:[%s1231 + $0xc] sm:$0xff]
    %v5308 = vld [vmem:[%s1231 + $0x14] sm:$0xf]
    %v5309 = vld [vmem:[%s1231 + $0x18] sm:$0xff]
    %v5310 = vld [vmem:[%s1231 + $0x20] sm:$0xf]
    %v5311 = vld [vmem:[%s1231 + $0x24] sm:$0xff]
    %v5312 = vld [vmem:[%s1231 + $0x2c] sm:$0xf]
    %v5313 = vld [vmem:[%s1231 + $0x30] sm:$0xff]
    %v5314 = vld [vmem:[%s1231 + $0x38] sm:$0xf]
    %v5315 = vld [vmem:[%s1231 + $0x3c] sm:$0xff]
    %v5316 = vld [vmem:[%s1231 + $0x44] sm:$0xf]
    %v5317 = vld [vmem:[%s1231 + $0x48] sm:$0xff]
    %v5318 = vld [vmem:[%s1231 + $0x50] sm:$0xf]
    %v5319 = vld [vmem:[%s1231 + $0x54] sm:$0xff]
    %v5320 = vld [vmem:[%s1231 + $0x5c] sm:$0xf]
    %v5321 = vld [vmem:[%s1231 + $0x60] sm:$0xff]
    %v5322 = vld [vmem:[%s1231 + $0x68] sm:$0xf]
    %v5323 = vld [vmem:[%s1231 + $0x6c] sm:$0xff]
    %v5324 = vld [vmem:[%s1231 + $0x74] sm:$0xf]
    %v5325 = vld [vmem:[%s1231 + $0x78] sm:$0xff]
    %v5326 = vld [vmem:[%s1231 + $0x80] sm:$0xf]
    %v5327 = vld [vmem:[%s1231 + $0x84] sm:$0xff]
    %v5328 = vld [vmem:[%s1231 + $0x8c] sm:$0xf]
    %v5329 = vld [vmem:[%s1231 + $0x90] sm:$0xff]
    %v5330 = vld [vmem:[%s1231 + $0x98] sm:$0xf]
    %v5331 = vld [vmem:[%s1231 + $0x9c] sm:$0xff]
    %v5332 = vld [vmem:[%s1231 + $0xa4] sm:$0xf]
    %v5333 = vld [vmem:[%s1231 + $0xa8] sm:$0xff]
    %v5334 = vld [vmem:[%s1231 + $0xb0] sm:$0xf]
    %v5335 = vld [vmem:[%s1231 + $0xb4] sm:$0xff]
    %v5336 = vld [vmem:[%s1231 + $0xbc] sm:$0xf]
    %v5339 = vunpack.c.l.b16 %v4793
    %v5340 = vunpack.c.l.b16 %v4794
    %v5341 = vpack.c.b16 %v5340, %v5339
    %v5375 = vunpack.c.l.b16 %v5305
    %v5376 = vunpack.c.h.b16 %v5305
    %v5377 = vunpack.c.l.b16 %v5306
    %v5378 = vunpack.c.l.b16 %v5307
    %v5379 = vunpack.c.h.b16 %v5307
    %v5380 = vunpack.c.l.b16 %v5308
    %v5381 = vunpack.c.l.b16 %v5309
    %v5382 = vunpack.c.h.b16 %v5309
    %v5383 = vunpack.c.l.b16 %v5310
    %v5384 = vunpack.c.l.b16 %v5311
    %v5385 = vunpack.c.h.b16 %v5311
    %v5386 = vunpack.c.l.b16 %v5312
    %v5387 = vunpack.c.l.b16 %v5313
    %v5388 = vunpack.c.h.b16 %v5313
    %v5389 = vunpack.c.l.b16 %v5314
    %v5390 = vunpack.c.l.b16 %v5315
    %v5391 = vunpack.c.h.b16 %v5315
    %v5392 = vunpack.c.l.b16 %v5316
    %v5393 = vunpack.c.l.b16 %v5317
    %v5394 = vunpack.c.h.b16 %v5317
    %v5395 = vunpack.c.l.b16 %v5318
    %v5396 = vunpack.c.l.b16 %v5319
    %v5397 = vunpack.c.h.b16 %v5319
    %v5398 = vunpack.c.l.b16 %v5320
    %v5399 = vunpack.c.l.b16 %v5321
    %v5400 = vunpack.c.h.b16 %v5321
    %v5401 = vunpack.c.l.b16 %v5322
    %v5402 = vunpack.c.l.b16 %v5323
    %v5403 = vunpack.c.h.b16 %v5323
    %v5404 = vunpack.c.l.b16 %v5324
    %v5405 = vunpack.c.l.b16 %v5325
    %v5406 = vunpack.c.h.b16 %v5325
    %v5407 = vunpack.c.l.b16 %v5326
    %v5408 = vunpack.c.l.b16 %v5327
    %v5409 = vunpack.c.h.b16 %v5327
    %v5410 = vunpack.c.l.b16 %v5328
    %v5411 = vunpack.c.l.b16 %v5329
    %v5412 = vunpack.c.h.b16 %v5329
    %v5413 = vunpack.c.l.b16 %v5330
    %v5414 = vunpack.c.l.b16 %v5331
    %v5415 = vunpack.c.h.b16 %v5331
    %v5416 = vunpack.c.l.b16 %v5332
    %v5417 = vunpack.c.l.b16 %v5333
    %v5418 = vunpack.c.h.b16 %v5333
    %v5419 = vunpack.c.l.b16 %v5334
    %v5420 = vunpack.c.l.b16 %v5335
    %v5421 = vunpack.c.h.b16 %v5335
    %v5422 = vunpack.c.l.b16 %v5336
    %v5423 = vpack.c.b16 %v5378, %v5375
    %v5424 = vpack.c.b16 %v5379, %v5376
    %v5425 = vpack.c.b16 %v5380, %v5377
    %v5426 = vpack.c.b16 %v5384, %v5381
    %v5427 = vpack.c.b16 %v5385, %v5382
    %v5428 = vpack.c.b16 %v5386, %v5383
    %v5429 = vpack.c.b16 %v5390, %v5387
    %v5430 = vpack.c.b16 %v5391, %v5388
    %v5431 = vpack.c.b16 %v5392, %v5389
    %v5432 = vpack.c.b16 %v5396, %v5393
    %v5433 = vpack.c.b16 %v5397, %v5394
    %v5434 = vpack.c.b16 %v5398, %v5395
    %v5435 = vpack.c.b16 %v5402, %v5399
    %v5436 = vpack.c.b16 %v5403, %v5400
    %v5437 = vpack.c.b16 %v5404, %v5401
    %v5438 = vpack.c.b16 %v5408, %v5405
    %v5439 = vpack.c.b16 %v5409, %v5406
    %v5440 = vpack.c.b16 %v5410, %v5407
    %v5441 = vpack.c.b16 %v5414, %v5411
    %v5442 = vpack.c.b16 %v5415, %v5412
    %v5443 = vpack.c.b16 %v5416, %v5413
    %v5444 = vpack.c.b16 %v5420, %v5417
    %v5445 = vpack.c.b16 %v5421, %v5418
    %v5446 = vpack.c.b16 %v5422, %v5419
    %5471 = vmatpush.bf16.msra.mxu0 %v5444
    %5472 = vmatpush.bf16.msra.mxu0 %v5441
    %5473 = vmatpush.bf16.msra.mxu0 %v5438
    %5474 = vmatpush.bf16.msra.mxu0 %v5435
    %5475 = vmatpush.bf16.msra.mxu0 %v5432
    %5476 = vmatpush.bf16.msra.mxu0 %v5429
    %5477 = vmatpush.bf16.msra.mxu0 %v5426
    %5478 = vmatpush.bf16.msra.mxu0 %v5423
    %5479 = vmatmul.bf16.gmra.mxu0 %v5341
    %v5480 = vpop.f32.mrf.mxu0
    %v5481 = vadd.f32 0.0, %v5480
    %v5482 = vpop.f32.mrf.mxu0
    %v5483 = vadd.f32 0.0, %v5482
    %5484 = vdwg.mxu0
    %5485 = vmatpush.bf16.msra.mxu0 %v5445
    %5486 = vmatpush.bf16.msra.mxu0 %v5442
    %5487 = vmatpush.bf16.msra.mxu0 %v5439
    %5488 = vmatpush.bf16.msra.mxu0 %v5436
    %5489 = vmatpush.bf16.msra.mxu0 %v5433
    %5490 = vmatpush.bf16.msra.mxu0 %v5430
    %5491 = vmatpush.bf16.msra.mxu0 %v5427
    %5492 = vmatpush.bf16.msra.mxu0 %v5424
    %5493 = vmatmul.bf16.gmra.mxu0 %v5341
    %v5494 = vpop.f32.mrf.mxu0
    %v5495 = vadd.f32 0.0, %v5494
    %v5496 = vpop.f32.mrf.mxu0
    %v5497 = vadd.f32 0.0, %v5496
    %5498 = vdwg.mxu0
    %5499 = vmatpush.bf16.msra.mxu0 %v5446
    %5500 = vmatpush.bf16.msra.mxu0 %v5443
    %5501 = vmatpush.bf16.msra.mxu0 %v5440
    %5502 = vmatpush.bf16.msra.mxu0 %v5437
    %5503 = vmatpush.bf16.msra.mxu0 %v5434
    %5504 = vmatpush.bf16.msra.mxu0 %v5431
    %5505 = vmatpush.bf16.msra.mxu0 %v5428
    %5506 = vmatpush.bf16.msra.mxu0 %v5425
    %5507 = vmatmul.bf16.gmra.mxu0 %v5341
    %v5508 = vpop.f32.mrf.mxu0
    %v5509 = vadd.f32 0.0, %v5508
    %v5510 = vpop.f32.mrf.mxu0
    %v5511 = vadd.f32 0.0, %v5510
    %5512 = vdwg.mxu0
    %v5513 = vadd.f32 %v5273, %v5481
    %v5514 = vadd.f32 %v5275, %v5483
    %v5515 = vxor.u32 %v5513, 2147483648
    %v5516 = vxor.u32 %v5514, 2147483648
    %v5517 = vmul.f32 %v5515, 1.442695
    %v5518 = vpow.pop %v5517
    %v5519 = vmul.f32 %v5516, 1.442695
    %v5520 = vpow.pop %v5519
    %v5521 = vadd.f32 %v5518, 1.0
    %v5522 = vadd.f32 %v5520, 1.0
    %v5523 = vrcp.pop %v5521
    %v5524 = vmul.f32 %v5521, %v5523
    %v5525 = vsub.f32 1.0, %v5524
    %v5526 = vmul.f32 %v5523, %v5525
    %v5527 = vadd.f32 %v5523, %v5526
    %vm5528 = vweird.f32 %v5521
    %vm5529 = vweird.f32 %v5523
    %vm5530 = vmor %vm5528, %vm5529
    %v5531 = vsel %vm5530, %v5523, %v5527
    %v5532 = vand.u32 2147483647, %v5521
    %vm5533 = vcmp.eq.f32.partialorder %v5532, 8.507059e+37
    %v5534 = vand.u32 %v5521, 2147483648
    %v5535 = vor.u32 1.1754944e-38, %v5534
    %v5536 = vsel %vm5533, %v5535, %v5531
    %v5537 = vmul.f32 1.0, %v5536
    %v5538 = vrcp.pop %v5522
    %v5539 = vmul.f32 %v5522, %v5538
    %v5540 = vsub.f32 1.0, %v5539
    %v5541 = vmul.f32 %v5538, %v5540
    %v5542 = vadd.f32 %v5538, %v5541
    %vm5543 = vweird.f32 %v5522
    %vm5544 = vweird.f32 %v5538
    %vm5545 = vmor %vm5543, %vm5544
    %v5546 = vsel %vm5545, %v5538, %v5542
    %v5547 = vand.u32 2147483647, %v5522
    %vm5548 = vcmp.eq.f32.partialorder %v5547, 8.507059e+37
    %v5549 = vand.u32 %v5522, 2147483648
    %v5550 = vor.u32 1.1754944e-38, %v5549
    %v5551 = vsel %vm5548, %v5550, %v5546
    %v5552 = vmul.f32 1.0, %v5551
    %v5553 = vadd.f32 %v5287, %v5495
    %v5554 = vadd.f32 %v5289, %v5497
    %v5555 = vxor.u32 %v5553, 2147483648
    %v5556 = vxor.u32 %v5554, 2147483648
    %v5557 = vmul.f32 %v5555, 1.442695
    %v5558 = vpow.pop %v5557
    %v5559 = vmul.f32 %v5556, 1.442695
    %v5560 = vpow.pop %v5559
    %v5561 = vadd.f32 %v5558, 1.0
    %v5562 = vadd.f32 %v5560, 1.0
    %v5563 = vrcp.pop %v5561
    %v5564 = vmul.f32 %v5561, %v5563
    %v5565 = vsub.f32 1.0, %v5564
    %v5566 = vmul.f32 %v5563, %v5565
    %v5567 = vadd.f32 %v5563, %v5566
    %vm5568 = vweird.f32 %v5561
    %vm5569 = vweird.f32 %v5563
    %vm5570 = vmor %vm5568, %vm5569
    %v5571 = vsel %vm5570, %v5563, %v5567
    %v5572 = vand.u32 2147483647, %v5561
    %vm5573 = vcmp.eq.f32.partialorder %v5572, 8.507059e+37
    %v5574 = vand.u32 %v5561, 2147483648
    %v5575 = vor.u32 1.1754944e-38, %v5574
    %v5576 = vsel %vm5573, %v5575, %v5571
    %v5577 = vmul.f32 1.0, %v5576
    %v5578 = vrcp.pop %v5562
    %v5579 = vmul.f32 %v5562, %v5578
    %v5580 = vsub.f32 1.0, %v5579
    %v5581 = vmul.f32 %v5578, %v5580
    %v5582 = vadd.f32 %v5578, %v5581
    %vm5583 = vweird.f32 %v5562
    %vm5584 = vweird.f32 %v5578
    %vm5585 = vmor %vm5583, %vm5584
    %v5586 = vsel %vm5585, %v5578, %v5582
    %v5587 = vand.u32 2147483647, %v5562
    %vm5588 = vcmp.eq.f32.partialorder %v5587, 8.507059e+37
    %v5589 = vand.u32 %v5562, 2147483648
    %v5590 = vor.u32 1.1754944e-38, %v5589
    %v5591 = vsel %vm5588, %v5590, %v5586
    %v5592 = vmul.f32 1.0, %v5591
    %v5593 = vadd.f32 %v5509, %v570
    %v5594 = vadd.f32 %v5511, %v570
    %v5595 = vmul.f32 %v5537, %v5593
    %v5596 = vmul.f32 %v5552, %v5594
    %v5597 = vadd.f32 %v5301, %v5595
    %v5598 = vadd.f32 %v5303, %v5596
    %v5599 = vtanh.pop %v5597
    %v5600 = vtanh.pop %v5598
    %v5601 = vsub.f32 1.0, %v5577
    %v5602 = vsub.f32 1.0, %v5592
    %v5603 = vmul.f32 %v5601, %v5599
    %v5604 = vmul.f32 %v5602, %v5600
    %v5605 = vmul.f32 %v5577, %v4791
    %v5606 = vmul.f32 %v5592, %v4792
    %v5607 = vadd.f32 %v5603, %v5605
    %v5608 = vadd.f32 %v5604, %v5606
    %v5609 = vpack.c.bf16 %v5607, %v5607
    %v5610 = vpack.c.bf16 %v5608, %v5608
    %s5611 = scalar_lea.vmem [#allocation2], 40
    %5612 = vst [vmem:[%s5611] sm:$0xf] %v5609
    %5613 = vst [vmem:[%s5611 + $0x4] sm:$0xf] %v5610
    %v5614 = vld [vmem:[#allocation3 + $0x150] sm:$0xff]
    %v5615 = vld [vmem:[#allocation3 + $0x158] sm:$0xff]
    %v5616 = vld [vmem:[#allocation3 + $0x160] sm:$0xff]
    %v5617 = vld [vmem:[#allocation3 + $0x168] sm:$0xff]
    %v5618 = vld [vmem:[#allocation3 + $0x170] sm:$0xff]
    %v5619 = vld [vmem:[#allocation3 + $0x178] sm:$0xff]
    %v5620 = vpack.c.bf16 %v5102, %v5101
    %v5621 = vld [vmem:[#allocation10] sm:$0xff]
    %v5622 = vld [vmem:[#allocation10 + $0x8] sm:$0xf]
    %v5623 = vld [vmem:[#allocation10 + $0xc] sm:$0xff]
    %v5624 = vld [vmem:[#allocation10 + $0x14] sm:$0xf]
    %v5625 = vld [vmem:[#allocation10 + $0x18] sm:$0xff]
    %v5626 = vld [vmem:[#allocation10 + $0x20] sm:$0xf]
    %v5627 = vld [vmem:[#allocation10 + $0x24] sm:$0xff]
    %v5628 = vld [vmem:[#allocation10 + $0x2c] sm:$0xf]
    %v5629 = vld [vmem:[#allocation10 + $0x30] sm:$0xff]
    %v5630 = vld [vmem:[#allocation10 + $0x38] sm:$0xf]
    %v5631 = vld [vmem:[#allocation10 + $0x3c] sm:$0xff]
    %v5632 = vld [vmem:[#allocation10 + $0x44] sm:$0xf]
    %v5633 = vld [vmem:[#allocation10 + $0x48] sm:$0xff]
    %v5634 = vld [vmem:[#allocation10 + $0x50] sm:$0xf]
    %v5635 = vld [vmem:[#allocation10 + $0x54] sm:$0xff]
    %v5636 = vld [vmem:[#allocation10 + $0x5c] sm:$0xf]
    %v5637 = vld [vmem:[#allocation10 + $0x60] sm:$0xff]
    %v5638 = vld [vmem:[#allocation10 + $0x68] sm:$0xf]
    %v5639 = vld [vmem:[#allocation10 + $0x6c] sm:$0xff]
    %v5640 = vld [vmem:[#allocation10 + $0x74] sm:$0xf]
    %v5641 = vld [vmem:[#allocation10 + $0x78] sm:$0xff]
    %v5642 = vld [vmem:[#allocation10 + $0x80] sm:$0xf]
    %v5643 = vld [vmem:[#allocation10 + $0x84] sm:$0xff]
    %v5644 = vld [vmem:[#allocation10 + $0x8c] sm:$0xf]
    %v5645 = vld [vmem:[#allocation10 + $0x90] sm:$0xff]
    %v5646 = vld [vmem:[#allocation10 + $0x98] sm:$0xf]
    %v5647 = vld [vmem:[#allocation10 + $0x9c] sm:$0xff]
    %v5648 = vld [vmem:[#allocation10 + $0xa4] sm:$0xf]
    %v5649 = vld [vmem:[#allocation10 + $0xa8] sm:$0xff]
    %v5650 = vld [vmem:[#allocation10 + $0xb0] sm:$0xf]
    %v5651 = vld [vmem:[#allocation10 + $0xb4] sm:$0xff]
    %v5652 = vld [vmem:[#allocation10 + $0xbc] sm:$0xf]
    %v5685 = vunpack.c.l.b16 %v5621
    %v5686 = vunpack.c.h.b16 %v5621
    %v5687 = vunpack.c.l.b16 %v5622
    %v5688 = vunpack.c.l.b16 %v5623
    %v5689 = vunpack.c.h.b16 %v5623
    %v5690 = vunpack.c.l.b16 %v5624
    %v5691 = vunpack.c.l.b16 %v5625
    %v5692 = vunpack.c.h.b16 %v5625
    %v5693 = vunpack.c.l.b16 %v5626
    %v5694 = vunpack.c.l.b16 %v5627
    %v5695 = vunpack.c.h.b16 %v5627
    %v5696 = vunpack.c.l.b16 %v5628
    %v5697 = vunpack.c.l.b16 %v5629
    %v5698 = vunpack.c.h.b16 %v5629
    %v5699 = vunpack.c.l.b16 %v5630
    %v5700 = vunpack.c.l.b16 %v5631
    %v5701 = vunpack.c.h.b16 %v5631
    %v5702 = vunpack.c.l.b16 %v5632
    %v5703 = vunpack.c.l.b16 %v5633
    %v5704 = vunpack.c.h.b16 %v5633
    %v5705 = vunpack.c.l.b16 %v5634
    %v5706 = vunpack.c.l.b16 %v5635
    %v5707 = vunpack.c.h.b16 %v5635
    %v5708 = vunpack.c.l.b16 %v5636
    %v5709 = vunpack.c.l.b16 %v5637
    %v5710 = vunpack.c.h.b16 %v5637
    %v5711 = vunpack.c.l.b16 %v5638
    %v5712 = vunpack.c.l.b16 %v5639
    %v5713 = vunpack.c.h.b16 %v5639
    %v5714 = vunpack.c.l.b16 %v5640
    %v5715 = vunpack.c.l.b16 %v5641
    %v5716 = vunpack.c.h.b16 %v5641
    %v5717 = vunpack.c.l.b16 %v5642
    %v5718 = vunpack.c.l.b16 %v5643
    %v5719 = vunpack.c.h.b16 %v5643
    %v5720 = vunpack.c.l.b16 %v5644
    %v5721 = vunpack.c.l.b16 %v5645
    %v5722 = vunpack.c.h.b16 %v5645
    %v5723 = vunpack.c.l.b16 %v5646
    %v5724 = vunpack.c.l.b16 %v5647
    %v5725 = vunpack.c.h.b16 %v5647
    %v5726 = vunpack.c.l.b16 %v5648
    %v5727 = vunpack.c.l.b16 %v5649
    %v5728 = vunpack.c.h.b16 %v5649
    %v5729 = vunpack.c.l.b16 %v5650
    %v5730 = vunpack.c.l.b16 %v5651
    %v5731 = vunpack.c.h.b16 %v5651
    %v5732 = vunpack.c.l.b16 %v5652
    %v5733 = vpack.c.b16 %v5688, %v5685
    %v5734 = vpack.c.b16 %v5689, %v5686
    %v5735 = vpack.c.b16 %v5690, %v5687
    %v5736 = vpack.c.b16 %v5694, %v5691
    %v5737 = vpack.c.b16 %v5695, %v5692
    %v5738 = vpack.c.b16 %v5696, %v5693
    %v5739 = vpack.c.b16 %v5700, %v5697
    %v5740 = vpack.c.b16 %v5701, %v5698
    %v5741 = vpack.c.b16 %v5702, %v5699
    %v5742 = vpack.c.b16 %v5706, %v5703
    %v5743 = vpack.c.b16 %v5707, %v5704
    %v5744 = vpack.c.b16 %v5708, %v5705
    %v5745 = vpack.c.b16 %v5712, %v5709
    %v5746 = vpack.c.b16 %v5713, %v5710
    %v5747 = vpack.c.b16 %v5714, %v5711
    %v5748 = vpack.c.b16 %v5718, %v5715
    %v5749 = vpack.c.b16 %v5719, %v5716
    %v5750 = vpack.c.b16 %v5720, %v5717
    %v5751 = vpack.c.b16 %v5724, %v5721
    %v5752 = vpack.c.b16 %v5725, %v5722
    %v5753 = vpack.c.b16 %v5726, %v5723
    %v5754 = vpack.c.b16 %v5730, %v5727
    %v5755 = vpack.c.b16 %v5731, %v5728
    %v5756 = vpack.c.b16 %v5732, %v5729
    %5781 = vmatpush.bf16.msra.mxu0 %v5754
    %5782 = vmatpush.bf16.msra.mxu0 %v5751
    %5783 = vmatpush.bf16.msra.mxu0 %v5748
    %5784 = vmatpush.bf16.msra.mxu0 %v5745
    %5785 = vmatpush.bf16.msra.mxu0 %v5742
    %5786 = vmatpush.bf16.msra.mxu0 %v5739
    %5787 = vmatpush.bf16.msra.mxu0 %v5736
    %5788 = vmatpush.bf16.msra.mxu0 %v5733
    %5789 = vmatmul.bf16.gmra.mxu0 %v5620
    %v5790 = vpop.f32.mrf.mxu0
    %v5791 = vadd.f32 0.0, %v5790
    %v5792 = vpop.f32.mrf.mxu0
    %v5793 = vadd.f32 0.0, %v5792
    %5794 = vdwg.mxu0
    %5795 = vmatpush.bf16.msra.mxu0 %v5755
    %5796 = vmatpush.bf16.msra.mxu0 %v5752
    %5797 = vmatpush.bf16.msra.mxu0 %v5749
    %5798 = vmatpush.bf16.msra.mxu0 %v5746
    %5799 = vmatpush.bf16.msra.mxu0 %v5743
    %5800 = vmatpush.bf16.msra.mxu0 %v5740
    %5801 = vmatpush.bf16.msra.mxu0 %v5737
    %5802 = vmatpush.bf16.msra.mxu0 %v5734
    %5803 = vmatmul.bf16.gmra.mxu0 %v5620
    %v5804 = vpop.f32.mrf.mxu0
    %v5805 = vadd.f32 0.0, %v5804
    %v5806 = vpop.f32.mrf.mxu0
    %v5807 = vadd.f32 0.0, %v5806
    %5808 = vdwg.mxu0
    %5809 = vmatpush.bf16.msra.mxu0 %v5756
    %5810 = vmatpush.bf16.msra.mxu0 %v5753
    %5811 = vmatpush.bf16.msra.mxu0 %v5750
    %5812 = vmatpush.bf16.msra.mxu0 %v5747
    %5813 = vmatpush.bf16.msra.mxu0 %v5744
    %5814 = vmatpush.bf16.msra.mxu0 %v5741
    %5815 = vmatpush.bf16.msra.mxu0 %v5738
    %5816 = vmatpush.bf16.msra.mxu0 %v5735
    %5817 = vmatmul.bf16.gmra.mxu0 %v5620
    %v5818 = vpop.f32.mrf.mxu0
    %v5819 = vadd.f32 0.0, %v5818
    %v5820 = vpop.f32.mrf.mxu0
    %v5821 = vadd.f32 0.0, %v5820
    %5822 = vdwg.mxu0
    %v5823 = vadd.f32 %v5614, %v5791
    %v5824 = vadd.f32 %v5617, %v5793
    %v5825 = vxor.u32 %v5823, 2147483648
    %v5826 = vxor.u32 %v5824, 2147483648
    %v5827 = vmul.f32 %v5825, 1.442695
    %v5828 = vpow.pop %v5827
    %v5829 = vmul.f32 %v5826, 1.442695
    %v5830 = vpow.pop %v5829
    %v5831 = vadd.f32 %v5828, 1.0
    %v5832 = vadd.f32 %v5830, 1.0
    %v5833 = vrcp.pop %v5831
    %v5834 = vmul.f32 %v5831, %v5833
    %v5835 = vsub.f32 1.0, %v5834
    %v5836 = vmul.f32 %v5833, %v5835
    %v5837 = vadd.f32 %v5833, %v5836
    %vm5838 = vweird.f32 %v5831
    %vm5839 = vweird.f32 %v5833
    %vm5840 = vmor %vm5838, %vm5839
    %v5841 = vsel %vm5840, %v5833, %v5837
    %v5842 = vand.u32 2147483647, %v5831
    %vm5843 = vcmp.eq.f32.partialorder %v5842, 8.507059e+37
    %v5844 = vand.u32 %v5831, 2147483648
    %v5845 = vor.u32 1.1754944e-38, %v5844
    %v5846 = vsel %vm5843, %v5845, %v5841
    %v5847 = vmul.f32 1.0, %v5846
    %v5848 = vrcp.pop %v5832
    %v5849 = vmul.f32 %v5832, %v5848
    %v5850 = vsub.f32 1.0, %v5849
    %v5851 = vmul.f32 %v5848, %v5850
    %v5852 = vadd.f32 %v5848, %v5851
    %vm5853 = vweird.f32 %v5832
    %vm5854 = vweird.f32 %v5848
    %vm5855 = vmor %vm5853, %vm5854
    %v5856 = vsel %vm5855, %v5848, %v5852
    %v5857 = vand.u32 2147483647, %v5832
    %vm5858 = vcmp.eq.f32.partialorder %v5857, 8.507059e+37
    %v5859 = vand.u32 %v5832, 2147483648
    %v5860 = vor.u32 1.1754944e-38, %v5859
    %v5861 = vsel %vm5858, %v5860, %v5856
    %v5862 = vmul.f32 1.0, %v5861
    %v5863 = vadd.f32 %v5615, %v5805
    %v5864 = vadd.f32 %v5618, %v5807
    %v5865 = vxor.u32 %v5863, 2147483648
    %v5866 = vxor.u32 %v5864, 2147483648
    %v5867 = vmul.f32 %v5865, 1.442695
    %v5868 = vpow.pop %v5867
    %v5869 = vmul.f32 %v5866, 1.442695
    %v5870 = vpow.pop %v5869
    %v5871 = vadd.f32 %v5868, 1.0
    %v5872 = vadd.f32 %v5870, 1.0
    %v5873 = vrcp.pop %v5871
    %v5874 = vmul.f32 %v5871, %v5873
    %v5875 = vsub.f32 1.0, %v5874
    %v5876 = vmul.f32 %v5873, %v5875
    %v5877 = vadd.f32 %v5873, %v5876
    %vm5878 = vweird.f32 %v5871
    %vm5879 = vweird.f32 %v5873
    %vm5880 = vmor %vm5878, %vm5879
    %v5881 = vsel %vm5880, %v5873, %v5877
    %v5882 = vand.u32 2147483647, %v5871
    %vm5883 = vcmp.eq.f32.partialorder %v5882, 8.507059e+37
    %v5884 = vand.u32 %v5871, 2147483648
    %v5885 = vor.u32 1.1754944e-38, %v5884
    %v5886 = vsel %vm5883, %v5885, %v5881
    %v5887 = vmul.f32 1.0, %v5886
    %v5888 = vrcp.pop %v5872
    %v5889 = vmul.f32 %v5872, %v5888
    %v5890 = vsub.f32 1.0, %v5889
    %v5891 = vmul.f32 %v5888, %v5890
    %v5892 = vadd.f32 %v5888, %v5891
    %vm5893 = vweird.f32 %v5872
    %vm5894 = vweird.f32 %v5888
    %vm5895 = vmor %vm5893, %vm5894
    %v5896 = vsel %vm5895, %v5888, %v5892
    %v5897 = vand.u32 2147483647, %v5872
    %vm5898 = vcmp.eq.f32.partialorder %v5897, 8.507059e+37
    %v5899 = vand.u32 %v5872, 2147483648
    %v5900 = vor.u32 1.1754944e-38, %v5899
    %v5901 = vsel %vm5898, %v5900, %v5896
    %v5902 = vmul.f32 1.0, %v5901
    %v5903 = vadd.f32 %v5819, %v565
    %v5904 = vadd.f32 %v5821, %v565
    %v5905 = vmul.f32 %v5847, %v5903
    %v5906 = vmul.f32 %v5862, %v5904
    %v5907 = vadd.f32 %v5616, %v5905
    %v5908 = vadd.f32 %v5619, %v5906
    %v5909 = vtanh.pop %v5907
    %v5910 = vtanh.pop %v5908
    %v5911 = vsub.f32 1.0, %v5887
    %v5912 = vsub.f32 1.0, %v5902
    %v5913 = vmul.f32 %v5911, %v5909
    %v5914 = vmul.f32 %v5912, %v5910
    %v5915 = vmul.f32 %v5887, %v5101
    %v5916 = vmul.f32 %v5902, %v5102
    %v5917 = vadd.f32 %v5913, %v5915
    %v5918 = vadd.f32 %v5914, %v5916
    %5919 = vst [vmem:[#allocation16] sm:$0xff] %v5917
    %5920 = vst [vmem:[#allocation16 + $0x8] sm:$0xff] %v5918
    %v5921 = vld [vmem:[%s1027] sm:$0xff]
    %v5922 = vld [vmem:[%s1027 + $0x8] sm:$0xf]
    %v5923 = vld [vmem:[%s1027 + $0xc] sm:$0xff]
    %v5924 = vld [vmem:[%s1027 + $0x14] sm:$0xf]
    %v5925 = vld [vmem:[%s1027 + $0x18] sm:$0xff]
    %v5926 = vld [vmem:[%s1027 + $0x20] sm:$0xf]
    %v5927 = vld [vmem:[%s1027 + $0x24] sm:$0xff]
    %v5928 = vld [vmem:[%s1027 + $0x2c] sm:$0xf]
    %v5929 = vld [vmem:[%s1027 + $0x30] sm:$0xff]
    %v5930 = vld [vmem:[%s1027 + $0x38] sm:$0xf]
    %v5931 = vld [vmem:[%s1027 + $0x3c] sm:$0xff]
    %v5932 = vld [vmem:[%s1027 + $0x44] sm:$0xf]
    %v5933 = vld [vmem:[%s1027 + $0x48] sm:$0xff]
    %v5934 = vld [vmem:[%s1027 + $0x50] sm:$0xf]
    %v5935 = vld [vmem:[%s1027 + $0x54] sm:$0xff]
    %v5936 = vld [vmem:[%s1027 + $0x5c] sm:$0xf]
    %v5937 = vld [vmem:[%s1027 + $0x60] sm:$0xff]
    %v5938 = vld [vmem:[%s1027 + $0x68] sm:$0xf]
    %v5939 = vld [vmem:[%s1027 + $0x6c] sm:$0xff]
    %v5940 = vld [vmem:[%s1027 + $0x74] sm:$0xf]
    %v5941 = vld [vmem:[%s1027 + $0x78] sm:$0xff]
    %v5942 = vld [vmem:[%s1027 + $0x80] sm:$0xf]
    %v5943 = vld [vmem:[%s1027 + $0x84] sm:$0xff]
    %v5944 = vld [vmem:[%s1027 + $0x8c] sm:$0xf]
    %v5945 = vld [vmem:[%s1027 + $0x90] sm:$0xff]
    %v5946 = vld [vmem:[%s1027 + $0x98] sm:$0xf]
    %v5947 = vld [vmem:[%s1027 + $0x9c] sm:$0xff]
    %v5948 = vld [vmem:[%s1027 + $0xa4] sm:$0xf]
    %v5949 = vld [vmem:[%s1027 + $0xa8] sm:$0xff]
    %v5950 = vld [vmem:[%s1027 + $0xb0] sm:$0xf]
    %v5951 = vld [vmem:[%s1027 + $0xb4] sm:$0xff]
    %v5952 = vld [vmem:[%s1027 + $0xbc] sm:$0xf]
    %v5985 = vunpack.c.l.b16 %v5921
    %v5986 = vunpack.c.h.b16 %v5921
    %v5987 = vunpack.c.l.b16 %v5922
    %v5988 = vunpack.c.l.b16 %v5923
    %v5989 = vunpack.c.h.b16 %v5923
    %v5990 = vunpack.c.l.b16 %v5924
    %v5991 = vunpack.c.l.b16 %v5925
    %v5992 = vunpack.c.h.b16 %v5925
    %v5993 = vunpack.c.l.b16 %v5926
    %v5994 = vunpack.c.l.b16 %v5927
    %v5995 = vunpack.c.h.b16 %v5927
    %v5996 = vunpack.c.l.b16 %v5928
    %v5997 = vunpack.c.l.b16 %v5929
    %v5998 = vunpack.c.h.b16 %v5929
    %v5999 = vunpack.c.l.b16 %v5930
    %v6000 = vunpack.c.l.b16 %v5931
    %v6001 = vunpack.c.h.b16 %v5931
    %v6002 = vunpack.c.l.b16 %v5932
    %v6003 = vunpack.c.l.b16 %v5933
    %v6004 = vunpack.c.h.b16 %v5933
    %v6005 = vunpack.c.l.b16 %v5934
    %v6006 = vunpack.c.l.b16 %v5935
    %v6007 = vunpack.c.h.b16 %v5935
    %v6008 = vunpack.c.l.b16 %v5936
    %v6009 = vunpack.c.l.b16 %v5937
    %v6010 = vunpack.c.h.b16 %v5937
    %v6011 = vunpack.c.l.b16 %v5938
    %v6012 = vunpack.c.l.b16 %v5939
    %v6013 = vunpack.c.h.b16 %v5939
    %v6014 = vunpack.c.l.b16 %v5940
    %v6015 = vunpack.c.l.b16 %v5941
    %v6016 = vunpack.c.h.b16 %v5941
    %v6017 = vunpack.c.l.b16 %v5942
    %v6018 = vunpack.c.l.b16 %v5943
    %v6019 = vunpack.c.h.b16 %v5943
    %v6020 = vunpack.c.l.b16 %v5944
    %v6021 = vunpack.c.l.b16 %v5945
    %v6022 = vunpack.c.h.b16 %v5945
    %v6023 = vunpack.c.l.b16 %v5946
    %v6024 = vunpack.c.l.b16 %v5947
    %v6025 = vunpack.c.h.b16 %v5947
    %v6026 = vunpack.c.l.b16 %v5948
    %v6027 = vunpack.c.l.b16 %v5949
    %v6028 = vunpack.c.h.b16 %v5949
    %v6029 = vunpack.c.l.b16 %v5950
    %v6030 = vunpack.c.l.b16 %v5951
    %v6031 = vunpack.c.h.b16 %v5951
    %v6032 = vunpack.c.l.b16 %v5952
    %v6033 = vpack.c.b16 %v5988, %v5985
    %v6034 = vpack.c.b16 %v5989, %v5986
    %v6035 = vpack.c.b16 %v5990, %v5987
    %v6036 = vpack.c.b16 %v5994, %v5991
    %v6037 = vpack.c.b16 %v5995, %v5992
    %v6038 = vpack.c.b16 %v5996, %v5993
    %v6039 = vpack.c.b16 %v6000, %v5997
    %v6040 = vpack.c.b16 %v6001, %v5998
    %v6041 = vpack.c.b16 %v6002, %v5999
    %v6042 = vpack.c.b16 %v6006, %v6003
    %v6043 = vpack.c.b16 %v6007, %v6004
    %v6044 = vpack.c.b16 %v6008, %v6005
    %v6045 = vpack.c.b16 %v6012, %v6009
    %v6046 = vpack.c.b16 %v6013, %v6010
    %v6047 = vpack.c.b16 %v6014, %v6011
    %v6048 = vpack.c.b16 %v6018, %v6015
    %v6049 = vpack.c.b16 %v6019, %v6016
    %v6050 = vpack.c.b16 %v6020, %v6017
    %v6051 = vpack.c.b16 %v6024, %v6021
    %v6052 = vpack.c.b16 %v6025, %v6022
    %v6053 = vpack.c.b16 %v6026, %v6023
    %v6054 = vpack.c.b16 %v6030, %v6027
    %v6055 = vpack.c.b16 %v6031, %v6028
    %v6056 = vpack.c.b16 %v6032, %v6029
    %6081 = vmatpush.bf16.msra.mxu0 %v6054
    %6082 = vmatpush.bf16.msra.mxu0 %v6051
    %6083 = vmatpush.bf16.msra.mxu0 %v6048
    %6084 = vmatpush.bf16.msra.mxu0 %v6045
    %6085 = vmatpush.bf16.msra.mxu0 %v6042
    %6086 = vmatpush.bf16.msra.mxu0 %v6039
    %6087 = vmatpush.bf16.msra.mxu0 %v6036
    %6088 = vmatpush.bf16.msra.mxu0 %v6033
    %6089 = vmatmul.bf16.gmra.mxu0 %v5620
    %v6090 = vpop.f32.mrf.mxu0
    %v6091 = vadd.f32 %v557, %v6090
    %v6092 = vpop.f32.mrf.mxu0
    %v6093 = vadd.f32 %v557, %v6092
    %6094 = vdwg.mxu0
    %6095 = vmatpush.bf16.msra.mxu0 %v6055
    %6096 = vmatpush.bf16.msra.mxu0 %v6052
    %6097 = vmatpush.bf16.msra.mxu0 %v6049
    %6098 = vmatpush.bf16.msra.mxu0 %v6046
    %6099 = vmatpush.bf16.msra.mxu0 %v6043
    %6100 = vmatpush.bf16.msra.mxu0 %v6040
    %6101 = vmatpush.bf16.msra.mxu0 %v6037
    %6102 = vmatpush.bf16.msra.mxu0 %v6034
    %6103 = vmatmul.bf16.gmra.mxu0 %v5620
    %v6104 = vpop.f32.mrf.mxu0
    %v6105 = vadd.f32 %v558, %v6104
    %v6106 = vpop.f32.mrf.mxu0
    %v6107 = vadd.f32 %v558, %v6106
    %6108 = vdwg.mxu0
    %6109 = vmatpush.bf16.msra.mxu0 %v6056
    %6110 = vmatpush.bf16.msra.mxu0 %v6053
    %6111 = vmatpush.bf16.msra.mxu0 %v6050
    %6112 = vmatpush.bf16.msra.mxu0 %v6047
    %6113 = vmatpush.bf16.msra.mxu0 %v6044
    %6114 = vmatpush.bf16.msra.mxu0 %v6041
    %6115 = vmatpush.bf16.msra.mxu0 %v6038
    %6116 = vmatpush.bf16.msra.mxu0 %v6035
    %6117 = vmatmul.bf16.gmra.mxu0 %v5620
    %v6118 = vpop.f32.mrf.mxu0
    %v6119 = vadd.f32 %v559, %v6118
    %v6120 = vpop.f32.mrf.mxu0
    %v6121 = vadd.f32 %v559, %v6120
    %6122 = vdwg.mxu0
    %v6123 = vld [vmem:[%s1231] sm:$0xff]
    %v6124 = vld [vmem:[%s1231 + $0x8] sm:$0xf]
    %v6125 = vld [vmem:[%s1231 + $0xc] sm:$0xff]
    %v6126 = vld [vmem:[%s1231 + $0x14] sm:$0xf]
    %v6127 = vld [vmem:[%s1231 + $0x18] sm:$0xff]
    %v6128 = vld [vmem:[%s1231 + $0x20] sm:$0xf]
    %v6129 = vld [vmem:[%s1231 + $0x24] sm:$0xff]
    %v6130 = vld [vmem:[%s1231 + $0x2c] sm:$0xf]
    %v6131 = vld [vmem:[%s1231 + $0x30] sm:$0xff]
    %v6132 = vld [vmem:[%s1231 + $0x38] sm:$0xf]
    %v6133 = vld [vmem:[%s1231 + $0x3c] sm:$0xff]
    %v6134 = vld [vmem:[%s1231 + $0x44] sm:$0xf]
    %v6135 = vld [vmem:[%s1231 + $0x48] sm:$0xff]
    %v6136 = vld [vmem:[%s1231 + $0x50] sm:$0xf]
    %v6137 = vld [vmem:[%s1231 + $0x54] sm:$0xff]
    %v6138 = vld [vmem:[%s1231 + $0x5c] sm:$0xf]
    %v6139 = vld [vmem:[%s1231 + $0x60] sm:$0xff]
    %v6140 = vld [vmem:[%s1231 + $0x68] sm:$0xf]
    %v6141 = vld [vmem:[%s1231 + $0x6c] sm:$0xff]
    %v6142 = vld [vmem:[%s1231 + $0x74] sm:$0xf]
    %v6143 = vld [vmem:[%s1231 + $0x78] sm:$0xff]
    %v6144 = vld [vmem:[%s1231 + $0x80] sm:$0xf]
    %v6145 = vld [vmem:[%s1231 + $0x84] sm:$0xff]
    %v6146 = vld [vmem:[%s1231 + $0x8c] sm:$0xf]
    %v6147 = vld [vmem:[%s1231 + $0x90] sm:$0xff]
    %v6148 = vld [vmem:[%s1231 + $0x98] sm:$0xf]
    %v6149 = vld [vmem:[%s1231 + $0x9c] sm:$0xff]
    %v6150 = vld [vmem:[%s1231 + $0xa4] sm:$0xf]
    %v6151 = vld [vmem:[%s1231 + $0xa8] sm:$0xff]
    %v6152 = vld [vmem:[%s1231 + $0xb0] sm:$0xf]
    %v6153 = vld [vmem:[%s1231 + $0xb4] sm:$0xff]
    %v6154 = vld [vmem:[%s1231 + $0xbc] sm:$0xf]
    %v6157 = vunpack.c.l.b16 %v5609
    %v6158 = vunpack.c.l.b16 %v5610
    %v6159 = vpack.c.b16 %v6158, %v6157
    %v6193 = vunpack.c.l.b16 %v6123
    %v6194 = vunpack.c.h.b16 %v6123
    %v6195 = vunpack.c.l.b16 %v6124
    %v6196 = vunpack.c.l.b16 %v6125
    %v6197 = vunpack.c.h.b16 %v6125
    %v6198 = vunpack.c.l.b16 %v6126
    %v6199 = vunpack.c.l.b16 %v6127
    %v6200 = vunpack.c.h.b16 %v6127
    %v6201 = vunpack.c.l.b16 %v6128
    %v6202 = vunpack.c.l.b16 %v6129
    %v6203 = vunpack.c.h.b16 %v6129
    %v6204 = vunpack.c.l.b16 %v6130
    %v6205 = vunpack.c.l.b16 %v6131
    %v6206 = vunpack.c.h.b16 %v6131
    %v6207 = vunpack.c.l.b16 %v6132
    %v6208 = vunpack.c.l.b16 %v6133
    %v6209 = vunpack.c.h.b16 %v6133
    %v6210 = vunpack.c.l.b16 %v6134
    %v6211 = vunpack.c.l.b16 %v6135
    %v6212 = vunpack.c.h.b16 %v6135
    %v6213 = vunpack.c.l.b16 %v6136
    %v6214 = vunpack.c.l.b16 %v6137
    %v6215 = vunpack.c.h.b16 %v6137
    %v6216 = vunpack.c.l.b16 %v6138
    %v6217 = vunpack.c.l.b16 %v6139
    %v6218 = vunpack.c.h.b16 %v6139
    %v6219 = vunpack.c.l.b16 %v6140
    %v6220 = vunpack.c.l.b16 %v6141
    %v6221 = vunpack.c.h.b16 %v6141
    %v6222 = vunpack.c.l.b16 %v6142
    %v6223 = vunpack.c.l.b16 %v6143
    %v6224 = vunpack.c.h.b16 %v6143
    %v6225 = vunpack.c.l.b16 %v6144
    %v6226 = vunpack.c.l.b16 %v6145
    %v6227 = vunpack.c.h.b16 %v6145
    %v6228 = vunpack.c.l.b16 %v6146
    %v6229 = vunpack.c.l.b16 %v6147
    %v6230 = vunpack.c.h.b16 %v6147
    %v6231 = vunpack.c.l.b16 %v6148
    %v6232 = vunpack.c.l.b16 %v6149
    %v6233 = vunpack.c.h.b16 %v6149
    %v6234 = vunpack.c.l.b16 %v6150
    %v6235 = vunpack.c.l.b16 %v6151
    %v6236 = vunpack.c.h.b16 %v6151
    %v6237 = vunpack.c.l.b16 %v6152
    %v6238 = vunpack.c.l.b16 %v6153
    %v6239 = vunpack.c.h.b16 %v6153
    %v6240 = vunpack.c.l.b16 %v6154
    %v6241 = vpack.c.b16 %v6196, %v6193
    %v6242 = vpack.c.b16 %v6197, %v6194
    %v6243 = vpack.c.b16 %v6198, %v6195
    %v6244 = vpack.c.b16 %v6202, %v6199
    %v6245 = vpack.c.b16 %v6203, %v6200
    %v6246 = vpack.c.b16 %v6204, %v6201
    %v6247 = vpack.c.b16 %v6208, %v6205
    %v6248 = vpack.c.b16 %v6209, %v6206
    %v6249 = vpack.c.b16 %v6210, %v6207
    %v6250 = vpack.c.b16 %v6214, %v6211
    %v6251 = vpack.c.b16 %v6215, %v6212
    %v6252 = vpack.c.b16 %v6216, %v6213
    %v6253 = vpack.c.b16 %v6220, %v6217
    %v6254 = vpack.c.b16 %v6221, %v6218
    %v6255 = vpack.c.b16 %v6222, %v6219
    %v6256 = vpack.c.b16 %v6226, %v6223
    %v6257 = vpack.c.b16 %v6227, %v6224
    %v6258 = vpack.c.b16 %v6228, %v6225
    %v6259 = vpack.c.b16 %v6232, %v6229
    %v6260 = vpack.c.b16 %v6233, %v6230
    %v6261 = vpack.c.b16 %v6234, %v6231
    %v6262 = vpack.c.b16 %v6238, %v6235
    %v6263 = vpack.c.b16 %v6239, %v6236
    %v6264 = vpack.c.b16 %v6240, %v6237
    %6289 = vmatpush.bf16.msra.mxu0 %v6262
    %6290 = vmatpush.bf16.msra.mxu0 %v6259
    %6291 = vmatpush.bf16.msra.mxu0 %v6256
    %6292 = vmatpush.bf16.msra.mxu0 %v6253
    %6293 = vmatpush.bf16.msra.mxu0 %v6250
    %6294 = vmatpush.bf16.msra.mxu0 %v6247
    %6295 = vmatpush.bf16.msra.mxu0 %v6244
    %6296 = vmatpush.bf16.msra.mxu0 %v6241
    %6297 = vmatmul.bf16.gmra.mxu0 %v6159
    %v6298 = vpop.f32.mrf.mxu0
    %v6299 = vadd.f32 0.0, %v6298
    %v6300 = vpop.f32.mrf.mxu0
    %v6301 = vadd.f32 0.0, %v6300
    %6302 = vdwg.mxu0
    %6303 = vmatpush.bf16.msra.mxu0 %v6263
    %6304 = vmatpush.bf16.msra.mxu0 %v6260
    %6305 = vmatpush.bf16.msra.mxu0 %v6257
    %6306 = vmatpush.bf16.msra.mxu0 %v6254
    %6307 = vmatpush.bf16.msra.mxu0 %v6251
    %6308 = vmatpush.bf16.msra.mxu0 %v6248
    %6309 = vmatpush.bf16.msra.mxu0 %v6245
    %6310 = vmatpush.bf16.msra.mxu0 %v6242
    %6311 = vmatmul.bf16.gmra.mxu0 %v6159
    %v6312 = vpop.f32.mrf.mxu0
    %v6313 = vadd.f32 0.0, %v6312
    %v6314 = vpop.f32.mrf.mxu0
    %v6315 = vadd.f32 0.0, %v6314
    %6316 = vdwg.mxu0
    %6317 = vmatpush.bf16.msra.mxu0 %v6264
    %6318 = vmatpush.bf16.msra.mxu0 %v6261
    %6319 = vmatpush.bf16.msra.mxu0 %v6258
    %6320 = vmatpush.bf16.msra.mxu0 %v6255
    %6321 = vmatpush.bf16.msra.mxu0 %v6252
    %6322 = vmatpush.bf16.msra.mxu0 %v6249
    %6323 = vmatpush.bf16.msra.mxu0 %v6246
    %6324 = vmatpush.bf16.msra.mxu0 %v6243
    %6325 = vmatmul.bf16.gmra.mxu0 %v6159
    %v6326 = vpop.f32.mrf.mxu0
    %v6327 = vadd.f32 0.0, %v6326
    %v6328 = vpop.f32.mrf.mxu0
    %v6329 = vadd.f32 0.0, %v6328
    %6330 = vdwg.mxu0
    %v6331 = vadd.f32 %v6091, %v6299
    %v6332 = vadd.f32 %v6093, %v6301
    %v6333 = vxor.u32 %v6331, 2147483648
    %v6334 = vxor.u32 %v6332, 2147483648
    %v6335 = vmul.f32 %v6333, 1.442695
    %v6336 = vpow.pop %v6335
    %v6337 = vmul.f32 %v6334, 1.442695
    %v6338 = vpow.pop %v6337
    %v6339 = vadd.f32 %v6336, 1.0
    %v6340 = vadd.f32 %v6338, 1.0
    %v6341 = vrcp.pop %v6339
    %v6342 = vmul.f32 %v6339, %v6341
    %v6343 = vsub.f32 1.0, %v6342
    %v6344 = vmul.f32 %v6341, %v6343
    %v6345 = vadd.f32 %v6341, %v6344
    %vm6346 = vweird.f32 %v6339
    %vm6347 = vweird.f32 %v6341
    %vm6348 = vmor %vm6346, %vm6347
    %v6349 = vsel %vm6348, %v6341, %v6345
    %v6350 = vand.u32 2147483647, %v6339
    %vm6351 = vcmp.eq.f32.partialorder %v6350, 8.507059e+37
    %v6352 = vand.u32 %v6339, 2147483648
    %v6353 = vor.u32 1.1754944e-38, %v6352
    %v6354 = vsel %vm6351, %v6353, %v6349
    %v6355 = vmul.f32 1.0, %v6354
    %v6356 = vrcp.pop %v6340
    %v6357 = vmul.f32 %v6340, %v6356
    %v6358 = vsub.f32 1.0, %v6357
    %v6359 = vmul.f32 %v6356, %v6358
    %v6360 = vadd.f32 %v6356, %v6359
    %vm6361 = vweird.f32 %v6340
    %vm6362 = vweird.f32 %v6356
    %vm6363 = vmor %vm6361, %vm6362
    %v6364 = vsel %vm6363, %v6356, %v6360
    %v6365 = vand.u32 2147483647, %v6340
    %vm6366 = vcmp.eq.f32.partialorder %v6365, 8.507059e+37
    %v6367 = vand.u32 %v6340, 2147483648
    %v6368 = vor.u32 1.1754944e-38, %v6367
    %v6369 = vsel %vm6366, %v6368, %v6364
    %v6370 = vmul.f32 1.0, %v6369
    %v6371 = vadd.f32 %v6105, %v6313
    %v6372 = vadd.f32 %v6107, %v6315
    %v6373 = vxor.u32 %v6371, 2147483648
    %v6374 = vxor.u32 %v6372, 2147483648
    %v6375 = vmul.f32 %v6373, 1.442695
    %v6376 = vpow.pop %v6375
    %v6377 = vmul.f32 %v6374, 1.442695
    %v6378 = vpow.pop %v6377
    %v6379 = vadd.f32 %v6376, 1.0
    %v6380 = vadd.f32 %v6378, 1.0
    %v6381 = vrcp.pop %v6379
    %v6382 = vmul.f32 %v6379, %v6381
    %v6383 = vsub.f32 1.0, %v6382
    %v6384 = vmul.f32 %v6381, %v6383
    %v6385 = vadd.f32 %v6381, %v6384
    %vm6386 = vweird.f32 %v6379
    %vm6387 = vweird.f32 %v6381
    %vm6388 = vmor %vm6386, %vm6387
    %v6389 = vsel %vm6388, %v6381, %v6385
    %v6390 = vand.u32 2147483647, %v6379
    %vm6391 = vcmp.eq.f32.partialorder %v6390, 8.507059e+37
    %v6392 = vand.u32 %v6379, 2147483648
    %v6393 = vor.u32 1.1754944e-38, %v6392
    %v6394 = vsel %vm6391, %v6393, %v6389
    %v6395 = vmul.f32 1.0, %v6394
    %v6396 = vrcp.pop %v6380
    %v6397 = vmul.f32 %v6380, %v6396
    %v6398 = vsub.f32 1.0, %v6397
    %v6399 = vmul.f32 %v6396, %v6398
    %v6400 = vadd.f32 %v6396, %v6399
    %vm6401 = vweird.f32 %v6380
    %vm6402 = vweird.f32 %v6396
    %vm6403 = vmor %vm6401, %vm6402
    %v6404 = vsel %vm6403, %v6396, %v6400
    %v6405 = vand.u32 2147483647, %v6380
    %vm6406 = vcmp.eq.f32.partialorder %v6405, 8.507059e+37
    %v6407 = vand.u32 %v6380, 2147483648
    %v6408 = vor.u32 1.1754944e-38, %v6407
    %v6409 = vsel %vm6406, %v6408, %v6404
    %v6410 = vmul.f32 1.0, %v6409
    %v6411 = vadd.f32 %v6327, %v570
    %v6412 = vadd.f32 %v6329, %v570
    %v6413 = vmul.f32 %v6355, %v6411
    %v6414 = vmul.f32 %v6370, %v6412
    %v6415 = vadd.f32 %v6119, %v6413
    %v6416 = vadd.f32 %v6121, %v6414
    %v6417 = vtanh.pop %v6415
    %v6418 = vtanh.pop %v6416
    %v6419 = vsub.f32 1.0, %v6395
    %v6420 = vsub.f32 1.0, %v6410
    %v6421 = vmul.f32 %v6419, %v6417
    %v6422 = vmul.f32 %v6420, %v6418
    %v6423 = vmul.f32 %v6395, %v5607
    %v6424 = vmul.f32 %v6410, %v5608
    %v6425 = vadd.f32 %v6421, %v6423
    %v6426 = vadd.f32 %v6422, %v6424
    %v6427 = vpack.c.bf16 %v6425, %v6425
    %v6428 = vpack.c.bf16 %v6426, %v6426
    %s6429 = scalar_lea.vmem [#allocation2], 48
    %6430 = vst [vmem:[%s6429] sm:$0xf] %v6427
    %6431 = vst [vmem:[%s6429 + $0x4] sm:$0xf] %v6428
    %v6432 = vpack.c.bf16 %v5918, %v5917
    %v6433 = vld [vmem:[%s1027] sm:$0xff]
    %v6434 = vld [vmem:[%s1027 + $0x8] sm:$0xf]
    %v6435 = vld [vmem:[%s1027 + $0xc] sm:$0xff]
    %v6436 = vld [vmem:[%s1027 + $0x14] sm:$0xf]
    %v6437 = vld [vmem:[%s1027 + $0x18] sm:$0xff]
    %v6438 = vld [vmem:[%s1027 + $0x20] sm:$0xf]
    %v6439 = vld [vmem:[%s1027 + $0x24] sm:$0xff]
    %v6440 = vld [vmem:[%s1027 + $0x2c] sm:$0xf]
    %v6441 = vld [vmem:[%s1027 + $0x30] sm:$0xff]
    %v6442 = vld [vmem:[%s1027 + $0x38] sm:$0xf]
    %v6443 = vld [vmem:[%s1027 + $0x3c] sm:$0xff]
    %v6444 = vld [vmem:[%s1027 + $0x44] sm:$0xf]
    %v6445 = vld [vmem:[%s1027 + $0x48] sm:$0xff]
    %v6446 = vld [vmem:[%s1027 + $0x50] sm:$0xf]
    %v6447 = vld [vmem:[%s1027 + $0x54] sm:$0xff]
    %v6448 = vld [vmem:[%s1027 + $0x5c] sm:$0xf]
    %v6449 = vld [vmem:[%s1027 + $0x60] sm:$0xff]
    %v6450 = vld [vmem:[%s1027 + $0x68] sm:$0xf]
    %v6451 = vld [vmem:[%s1027 + $0x6c] sm:$0xff]
    %v6452 = vld [vmem:[%s1027 + $0x74] sm:$0xf]
    %v6453 = vld [vmem:[%s1027 + $0x78] sm:$0xff]
    %v6454 = vld [vmem:[%s1027 + $0x80] sm:$0xf]
    %v6455 = vld [vmem:[%s1027 + $0x84] sm:$0xff]
    %v6456 = vld [vmem:[%s1027 + $0x8c] sm:$0xf]
    %v6457 = vld [vmem:[%s1027 + $0x90] sm:$0xff]
    %v6458 = vld [vmem:[%s1027 + $0x98] sm:$0xf]
    %v6459 = vld [vmem:[%s1027 + $0x9c] sm:$0xff]
    %v6460 = vld [vmem:[%s1027 + $0xa4] sm:$0xf]
    %v6461 = vld [vmem:[%s1027 + $0xa8] sm:$0xff]
    %v6462 = vld [vmem:[%s1027 + $0xb0] sm:$0xf]
    %v6463 = vld [vmem:[%s1027 + $0xb4] sm:$0xff]
    %v6464 = vld [vmem:[%s1027 + $0xbc] sm:$0xf]
    %v6497 = vunpack.c.l.b16 %v6433
    %v6498 = vunpack.c.h.b16 %v6433
    %v6499 = vunpack.c.l.b16 %v6434
    %v6500 = vunpack.c.l.b16 %v6435
    %v6501 = vunpack.c.h.b16 %v6435
    %v6502 = vunpack.c.l.b16 %v6436
    %v6503 = vunpack.c.l.b16 %v6437
    %v6504 = vunpack.c.h.b16 %v6437
    %v6505 = vunpack.c.l.b16 %v6438
    %v6506 = vunpack.c.l.b16 %v6439
    %v6507 = vunpack.c.h.b16 %v6439
    %v6508 = vunpack.c.l.b16 %v6440
    %v6509 = vunpack.c.l.b16 %v6441
    %v6510 = vunpack.c.h.b16 %v6441
    %v6511 = vunpack.c.l.b16 %v6442
    %v6512 = vunpack.c.l.b16 %v6443
    %v6513 = vunpack.c.h.b16 %v6443
    %v6514 = vunpack.c.l.b16 %v6444
    %v6515 = vunpack.c.l.b16 %v6445
    %v6516 = vunpack.c.h.b16 %v6445
    %v6517 = vunpack.c.l.b16 %v6446
    %v6518 = vunpack.c.l.b16 %v6447
    %v6519 = vunpack.c.h.b16 %v6447
    %v6520 = vunpack.c.l.b16 %v6448
    %v6521 = vunpack.c.l.b16 %v6449
    %v6522 = vunpack.c.h.b16 %v6449
    %v6523 = vunpack.c.l.b16 %v6450
    %v6524 = vunpack.c.l.b16 %v6451
    %v6525 = vunpack.c.h.b16 %v6451
    %v6526 = vunpack.c.l.b16 %v6452
    %v6527 = vunpack.c.l.b16 %v6453
    %v6528 = vunpack.c.h.b16 %v6453
    %v6529 = vunpack.c.l.b16 %v6454
    %v6530 = vunpack.c.l.b16 %v6455
    %v6531 = vunpack.c.h.b16 %v6455
    %v6532 = vunpack.c.l.b16 %v6456
    %v6533 = vunpack.c.l.b16 %v6457
    %v6534 = vunpack.c.h.b16 %v6457
    %v6535 = vunpack.c.l.b16 %v6458
    %v6536 = vunpack.c.l.b16 %v6459
    %v6537 = vunpack.c.h.b16 %v6459
    %v6538 = vunpack.c.l.b16 %v6460
    %v6539 = vunpack.c.l.b16 %v6461
    %v6540 = vunpack.c.h.b16 %v6461
    %v6541 = vunpack.c.l.b16 %v6462
    %v6542 = vunpack.c.l.b16 %v6463
    %v6543 = vunpack.c.h.b16 %v6463
    %v6544 = vunpack.c.l.b16 %v6464
    %v6545 = vpack.c.b16 %v6500, %v6497
    %v6546 = vpack.c.b16 %v6501, %v6498
    %v6547 = vpack.c.b16 %v6502, %v6499
    %v6548 = vpack.c.b16 %v6506, %v6503
    %v6549 = vpack.c.b16 %v6507, %v6504
    %v6550 = vpack.c.b16 %v6508, %v6505
    %v6551 = vpack.c.b16 %v6512, %v6509
    %v6552 = vpack.c.b16 %v6513, %v6510
    %v6553 = vpack.c.b16 %v6514, %v6511
    %v6554 = vpack.c.b16 %v6518, %v6515
    %v6555 = vpack.c.b16 %v6519, %v6516
    %v6556 = vpack.c.b16 %v6520, %v6517
    %v6557 = vpack.c.b16 %v6524, %v6521
    %v6558 = vpack.c.b16 %v6525, %v6522
    %v6559 = vpack.c.b16 %v6526, %v6523
    %v6560 = vpack.c.b16 %v6530, %v6527
    %v6561 = vpack.c.b16 %v6531, %v6528
    %v6562 = vpack.c.b16 %v6532, %v6529
    %v6563 = vpack.c.b16 %v6536, %v6533
    %v6564 = vpack.c.b16 %v6537, %v6534
    %v6565 = vpack.c.b16 %v6538, %v6535
    %v6566 = vpack.c.b16 %v6542, %v6539
    %v6567 = vpack.c.b16 %v6543, %v6540
    %v6568 = vpack.c.b16 %v6544, %v6541
    %6593 = vmatpush.bf16.msra.mxu0 %v6566
    %6594 = vmatpush.bf16.msra.mxu0 %v6563
    %6595 = vmatpush.bf16.msra.mxu0 %v6560
    %6596 = vmatpush.bf16.msra.mxu0 %v6557
    %6597 = vmatpush.bf16.msra.mxu0 %v6554
    %6598 = vmatpush.bf16.msra.mxu0 %v6551
    %6599 = vmatpush.bf16.msra.mxu0 %v6548
    %6600 = vmatpush.bf16.msra.mxu0 %v6545
    %6601 = vmatmul.bf16.gmra.mxu0 %v6432
    %v6602 = vpop.f32.mrf.mxu0
    %v6603 = vadd.f32 %v557, %v6602
    %v6604 = vpop.f32.mrf.mxu0
    %v6605 = vadd.f32 %v557, %v6604
    %6606 = vdwg.mxu0
    %6607 = vmatpush.bf16.msra.mxu0 %v6567
    %6608 = vmatpush.bf16.msra.mxu0 %v6564
    %6609 = vmatpush.bf16.msra.mxu0 %v6561
    %6610 = vmatpush.bf16.msra.mxu0 %v6558
    %6611 = vmatpush.bf16.msra.mxu0 %v6555
    %6612 = vmatpush.bf16.msra.mxu0 %v6552
    %6613 = vmatpush.bf16.msra.mxu0 %v6549
    %6614 = vmatpush.bf16.msra.mxu0 %v6546
    %6615 = vmatmul.bf16.gmra.mxu0 %v6432
    %v6616 = vpop.f32.mrf.mxu0
    %v6617 = vadd.f32 %v558, %v6616
    %v6618 = vpop.f32.mrf.mxu0
    %v6619 = vadd.f32 %v558, %v6618
    %6620 = vdwg.mxu0
    %6621 = vmatpush.bf16.msra.mxu0 %v6568
    %6622 = vmatpush.bf16.msra.mxu0 %v6565
    %6623 = vmatpush.bf16.msra.mxu0 %v6562
    %6624 = vmatpush.bf16.msra.mxu0 %v6559
    %6625 = vmatpush.bf16.msra.mxu0 %v6556
    %6626 = vmatpush.bf16.msra.mxu0 %v6553
    %6627 = vmatpush.bf16.msra.mxu0 %v6550
    %6628 = vmatpush.bf16.msra.mxu0 %v6547
    %6629 = vmatmul.bf16.gmra.mxu0 %v6432
    %v6630 = vpop.f32.mrf.mxu0
    %v6631 = vadd.f32 %v559, %v6630
    %v6632 = vpop.f32.mrf.mxu0
    %v6633 = vadd.f32 %v559, %v6632
    %6634 = vdwg.mxu0
    %v6635 = vld [vmem:[%s1231] sm:$0xff]
    %v6636 = vld [vmem:[%s1231 + $0x8] sm:$0xf]
    %v6637 = vld [vmem:[%s1231 + $0xc] sm:$0xff]
    %v6638 = vld [vmem:[%s1231 + $0x14] sm:$0xf]
    %v6639 = vld [vmem:[%s1231 + $0x18] sm:$0xff]
    %v6640 = vld [vmem:[%s1231 + $0x20] sm:$0xf]
    %v6641 = vld [vmem:[%s1231 + $0x24] sm:$0xff]
    %v6642 = vld [vmem:[%s1231 + $0x2c] sm:$0xf]
    %v6643 = vld [vmem:[%s1231 + $0x30] sm:$0xff]
    %v6644 = vld [vmem:[%s1231 + $0x38] sm:$0xf]
    %v6645 = vld [vmem:[%s1231 + $0x3c] sm:$0xff]
    %v6646 = vld [vmem:[%s1231 + $0x44] sm:$0xf]
    %v6647 = vld [vmem:[%s1231 + $0x48] sm:$0xff]
    %v6648 = vld [vmem:[%s1231 + $0x50] sm:$0xf]
    %v6649 = vld [vmem:[%s1231 + $0x54] sm:$0xff]
    %v6650 = vld [vmem:[%s1231 + $0x5c] sm:$0xf]
    %v6651 = vld [vmem:[%s1231 + $0x60] sm:$0xff]
    %v6652 = vld [vmem:[%s1231 + $0x68] sm:$0xf]
    %v6653 = vld [vmem:[%s1231 + $0x6c] sm:$0xff]
    %v6654 = vld [vmem:[%s1231 + $0x74] sm:$0xf]
    %v6655 = vld [vmem:[%s1231 + $0x78] sm:$0xff]
    %v6656 = vld [vmem:[%s1231 + $0x80] sm:$0xf]
    %v6657 = vld [vmem:[%s1231 + $0x84] sm:$0xff]
    %v6658 = vld [vmem:[%s1231 + $0x8c] sm:$0xf]
    %v6659 = vld [vmem:[%s1231 + $0x90] sm:$0xff]
    %v6660 = vld [vmem:[%s1231 + $0x98] sm:$0xf]
    %v6661 = vld [vmem:[%s1231 + $0x9c] sm:$0xff]
    %v6662 = vld [vmem:[%s1231 + $0xa4] sm:$0xf]
    %v6663 = vld [vmem:[%s1231 + $0xa8] sm:$0xff]
    %v6664 = vld [vmem:[%s1231 + $0xb0] sm:$0xf]
    %v6665 = vld [vmem:[%s1231 + $0xb4] sm:$0xff]
    %v6666 = vld [vmem:[%s1231 + $0xbc] sm:$0xf]
    %v6669 = vunpack.c.l.b16 %v6427
    %v6670 = vunpack.c.l.b16 %v6428
    %v6671 = vpack.c.b16 %v6670, %v6669
    %v6705 = vunpack.c.l.b16 %v6635
    %v6706 = vunpack.c.h.b16 %v6635
    %v6707 = vunpack.c.l.b16 %v6636
    %v6708 = vunpack.c.l.b16 %v6637
    %v6709 = vunpack.c.h.b16 %v6637
    %v6710 = vunpack.c.l.b16 %v6638
    %v6711 = vunpack.c.l.b16 %v6639
    %v6712 = vunpack.c.h.b16 %v6639
    %v6713 = vunpack.c.l.b16 %v6640
    %v6714 = vunpack.c.l.b16 %v6641
    %v6715 = vunpack.c.h.b16 %v6641
    %v6716 = vunpack.c.l.b16 %v6642
    %v6717 = vunpack.c.l.b16 %v6643
    %v6718 = vunpack.c.h.b16 %v6643
    %v6719 = vunpack.c.l.b16 %v6644
    %v6720 = vunpack.c.l.b16 %v6645
    %v6721 = vunpack.c.h.b16 %v6645
    %v6722 = vunpack.c.l.b16 %v6646
    %v6723 = vunpack.c.l.b16 %v6647
    %v6724 = vunpack.c.h.b16 %v6647
    %v6725 = vunpack.c.l.b16 %v6648
    %v6726 = vunpack.c.l.b16 %v6649
    %v6727 = vunpack.c.h.b16 %v6649
    %v6728 = vunpack.c.l.b16 %v6650
    %v6729 = vunpack.c.l.b16 %v6651
    %v6730 = vunpack.c.h.b16 %v6651
    %v6731 = vunpack.c.l.b16 %v6652
    %v6732 = vunpack.c.l.b16 %v6653
    %v6733 = vunpack.c.h.b16 %v6653
    %v6734 = vunpack.c.l.b16 %v6654
    %v6735 = vunpack.c.l.b16 %v6655
    %v6736 = vunpack.c.h.b16 %v6655
    %v6737 = vunpack.c.l.b16 %v6656
    %v6738 = vunpack.c.l.b16 %v6657
    %v6739 = vunpack.c.h.b16 %v6657
    %v6740 = vunpack.c.l.b16 %v6658
    %v6741 = vunpack.c.l.b16 %v6659
    %v6742 = vunpack.c.h.b16 %v6659
    %v6743 = vunpack.c.l.b16 %v6660
    %v6744 = vunpack.c.l.b16 %v6661
    %v6745 = vunpack.c.h.b16 %v6661
    %v6746 = vunpack.c.l.b16 %v6662
    %v6747 = vunpack.c.l.b16 %v6663
    %v6748 = vunpack.c.h.b16 %v6663
    %v6749 = vunpack.c.l.b16 %v6664
    %v6750 = vunpack.c.l.b16 %v6665
    %v6751 = vunpack.c.h.b16 %v6665
    %v6752 = vunpack.c.l.b16 %v6666
    %v6753 = vpack.c.b16 %v6708, %v6705
    %v6754 = vpack.c.b16 %v6709, %v6706
    %v6755 = vpack.c.b16 %v6710, %v6707
    %v6756 = vpack.c.b16 %v6714, %v6711
    %v6757 = vpack.c.b16 %v6715, %v6712
    %v6758 = vpack.c.b16 %v6716, %v6713
    %v6759 = vpack.c.b16 %v6720, %v6717
    %v6760 = vpack.c.b16 %v6721, %v6718
    %v6761 = vpack.c.b16 %v6722, %v6719
    %v6762 = vpack.c.b16 %v6726, %v6723
    %v6763 = vpack.c.b16 %v6727, %v6724
    %v6764 = vpack.c.b16 %v6728, %v6725
    %v6765 = vpack.c.b16 %v6732, %v6729
    %v6766 = vpack.c.b16 %v6733, %v6730
    %v6767 = vpack.c.b16 %v6734, %v6731
    %v6768 = vpack.c.b16 %v6738, %v6735
    %v6769 = vpack.c.b16 %v6739, %v6736
    %v6770 = vpack.c.b16 %v6740, %v6737
    %v6771 = vpack.c.b16 %v6744, %v6741
    %v6772 = vpack.c.b16 %v6745, %v6742
    %v6773 = vpack.c.b16 %v6746, %v6743
    %v6774 = vpack.c.b16 %v6750, %v6747
    %v6775 = vpack.c.b16 %v6751, %v6748
    %v6776 = vpack.c.b16 %v6752, %v6749
    %6801 = vmatpush.bf16.msra.mxu0 %v6774
    %6802 = vmatpush.bf16.msra.mxu0 %v6771
    %6803 = vmatpush.bf16.msra.mxu0 %v6768
    %6804 = vmatpush.bf16.msra.mxu0 %v6765
    %6805 = vmatpush.bf16.msra.mxu0 %v6762
    %6806 = vmatpush.bf16.msra.mxu0 %v6759
    %6807 = vmatpush.bf16.msra.mxu0 %v6756
    %6808 = vmatpush.bf16.msra.mxu0 %v6753
    %6809 = vmatmul.bf16.gmra.mxu0 %v6671
    %v6810 = vpop.f32.mrf.mxu0
    %v6811 = vadd.f32 0.0, %v6810
    %v6812 = vpop.f32.mrf.mxu0
    %v6813 = vadd.f32 0.0, %v6812
    %6814 = vdwg.mxu0
    %6815 = vmatpush.bf16.msra.mxu0 %v6775
    %6816 = vmatpush.bf16.msra.mxu0 %v6772
    %6817 = vmatpush.bf16.msra.mxu0 %v6769
    %6818 = vmatpush.bf16.msra.mxu0 %v6766
    %6819 = vmatpush.bf16.msra.mxu0 %v6763
    %6820 = vmatpush.bf16.msra.mxu0 %v6760
    %6821 = vmatpush.bf16.msra.mxu0 %v6757
    %6822 = vmatpush.bf16.msra.mxu0 %v6754
    %6823 = vmatmul.bf16.gmra.mxu0 %v6671
    %v6824 = vpop.f32.mrf.mxu0
    %v6825 = vadd.f32 0.0, %v6824
    %v6826 = vpop.f32.mrf.mxu0
    %v6827 = vadd.f32 0.0, %v6826
    %6828 = vdwg.mxu0
    %6829 = vmatpush.bf16.msra.mxu0 %v6776
    %6830 = vmatpush.bf16.msra.mxu0 %v6773
    %6831 = vmatpush.bf16.msra.mxu0 %v6770
    %6832 = vmatpush.bf16.msra.mxu0 %v6767
    %6833 = vmatpush.bf16.msra.mxu0 %v6764
    %6834 = vmatpush.bf16.msra.mxu0 %v6761
    %6835 = vmatpush.bf16.msra.mxu0 %v6758
    %6836 = vmatpush.bf16.msra.mxu0 %v6755
    %6837 = vmatmul.bf16.gmra.mxu0 %v6671
    %v6838 = vpop.f32.mrf.mxu0
    %v6839 = vadd.f32 0.0, %v6838
    %v6840 = vpop.f32.mrf.mxu0
    %v6841 = vadd.f32 0.0, %v6840
    %6842 = vdwg.mxu0
    %v6843 = vadd.f32 %v6603, %v6811
    %v6844 = vadd.f32 %v6605, %v6813
    %v6845 = vxor.u32 %v6843, 2147483648
    %v6846 = vxor.u32 %v6844, 2147483648
    %v6847 = vmul.f32 %v6845, 1.442695
    %v6848 = vpow.pop %v6847
    %v6849 = vmul.f32 %v6846, 1.442695
    %v6850 = vpow.pop %v6849
    %v6851 = vadd.f32 %v6848, 1.0
    %v6852 = vadd.f32 %v6850, 1.0
    %v6853 = vrcp.pop %v6851
    %v6854 = vmul.f32 %v6851, %v6853
    %v6855 = vsub.f32 1.0, %v6854
    %v6856 = vmul.f32 %v6853, %v6855
    %v6857 = vadd.f32 %v6853, %v6856
    %vm6858 = vweird.f32 %v6851
    %vm6859 = vweird.f32 %v6853
    %vm6860 = vmor %vm6858, %vm6859
    %v6861 = vsel %vm6860, %v6853, %v6857
    %v6862 = vand.u32 2147483647, %v6851
    %vm6863 = vcmp.eq.f32.partialorder %v6862, 8.507059e+37
    %v6864 = vand.u32 %v6851, 2147483648
    %v6865 = vor.u32 1.1754944e-38, %v6864
    %v6866 = vsel %vm6863, %v6865, %v6861
    %v6867 = vmul.f32 1.0, %v6866
    %v6868 = vrcp.pop %v6852
    %v6869 = vmul.f32 %v6852, %v6868
    %v6870 = vsub.f32 1.0, %v6869
    %v6871 = vmul.f32 %v6868, %v6870
    %v6872 = vadd.f32 %v6868, %v6871
    %vm6873 = vweird.f32 %v6852
    %vm6874 = vweird.f32 %v6868
    %vm6875 = vmor %vm6873, %vm6874
    %v6876 = vsel %vm6875, %v6868, %v6872
    %v6877 = vand.u32 2147483647, %v6852
    %vm6878 = vcmp.eq.f32.partialorder %v6877, 8.507059e+37
    %v6879 = vand.u32 %v6852, 2147483648
    %v6880 = vor.u32 1.1754944e-38, %v6879
    %v6881 = vsel %vm6878, %v6880, %v6876
    %v6882 = vmul.f32 1.0, %v6881
    %v6883 = vadd.f32 %v6617, %v6825
    %v6884 = vadd.f32 %v6619, %v6827
    %v6885 = vxor.u32 %v6883, 2147483648
    %v6886 = vxor.u32 %v6884, 2147483648
    %v6887 = vmul.f32 %v6885, 1.442695
    %v6888 = vpow.pop %v6887
    %v6889 = vmul.f32 %v6886, 1.442695
    %v6890 = vpow.pop %v6889
    %v6891 = vadd.f32 %v6888, 1.0
    %v6892 = vadd.f32 %v6890, 1.0
    %v6893 = vrcp.pop %v6891
    %v6894 = vmul.f32 %v6891, %v6893
    %v6895 = vsub.f32 1.0, %v6894
    %v6896 = vmul.f32 %v6893, %v6895
    %v6897 = vadd.f32 %v6893, %v6896
    %vm6898 = vweird.f32 %v6891
    %vm6899 = vweird.f32 %v6893
    %vm6900 = vmor %vm6898, %vm6899
    %v6901 = vsel %vm6900, %v6893, %v6897
    %v6902 = vand.u32 2147483647, %v6891
    %vm6903 = vcmp.eq.f32.partialorder %v6902, 8.507059e+37
    %v6904 = vand.u32 %v6891, 2147483648
    %v6905 = vor.u32 1.1754944e-38, %v6904
    %v6906 = vsel %vm6903, %v6905, %v6901
    %v6907 = vmul.f32 1.0, %v6906
    %v6908 = vrcp.pop %v6892
    %v6909 = vmul.f32 %v6892, %v6908
    %v6910 = vsub.f32 1.0, %v6909
    %v6911 = vmul.f32 %v6908, %v6910
    %v6912 = vadd.f32 %v6908, %v6911
    %vm6913 = vweird.f32 %v6892
    %vm6914 = vweird.f32 %v6908
    %vm6915 = vmor %vm6913, %vm6914
    %v6916 = vsel %vm6915, %v6908, %v6912
    %v6917 = vand.u32 2147483647, %v6892
    %vm6918 = vcmp.eq.f32.partialorder %v6917, 8.507059e+37
    %v6919 = vand.u32 %v6892, 2147483648
    %v6920 = vor.u32 1.1754944e-38, %v6919
    %v6921 = vsel %vm6918, %v6920, %v6916
    %v6922 = vmul.f32 1.0, %v6921
    %v6923 = vadd.f32 %v6839, %v570
    %v6924 = vadd.f32 %v6841, %v570
    %v6925 = vmul.f32 %v6867, %v6923
    %v6926 = vmul.f32 %v6882, %v6924
    %v6927 = vadd.f32 %v6631, %v6925
    %v6928 = vadd.f32 %v6633, %v6926
    %v6929 = vtanh.pop %v6927
    %v6930 = vtanh.pop %v6928
    %v6931 = vsub.f32 1.0, %v6907
    %v6932 = vsub.f32 1.0, %v6922
    %v6933 = vmul.f32 %v6931, %v6929
    %v6934 = vmul.f32 %v6932, %v6930
    %v6935 = vmul.f32 %v6907, %v6425
    %v6936 = vmul.f32 %v6922, %v6426
    %v6937 = vadd.f32 %v6933, %v6935
    %v6938 = vadd.f32 %v6934, %v6936
    %v6939 = vpack.c.bf16 %v6937, %v6937
    %v6940 = vpack.c.bf16 %v6938, %v6938
    %s6941 = scalar_lea.vmem [#allocation2], 56
    %6942 = vst [vmem:[%s6941] sm:$0xf] %v6939
    %6943 = vst [vmem:[%s6941 + $0x4] sm:$0xf] %v6940
    %s6944 = scalar_lea.vmem [#allocation16], 16
    %6945 = vst [vmem:[%s6944] sm:$0xff] %v6937
    %6946 = vst [vmem:[%s6944 + $0x8] sm:$0xff] %v6938
    %v6947 = vld [vmem:[#allocation2] sm:$0xf]
    %v6948 = vld [vmem:[#allocation2 + $0x4] sm:$0xf]
    %v6949 = vld [vmem:[#allocation2 + $0x8] sm:$0xf]
    %v6950 = vld [vmem:[#allocation2 + $0xc] sm:$0xf]
    %v6951 = vld [vmem:[#allocation2 + $0x10] sm:$0xf]
    %v6952 = vld [vmem:[#allocation2 + $0x14] sm:$0xf]
    %v6953 = vld [vmem:[#allocation2 + $0x18] sm:$0xf]
    %v6954 = vld [vmem:[#allocation2 + $0x1c] sm:$0xf]
    %v6955 = vld [vmem:[#allocation2 + $0x20] sm:$0xf]
    %v6956 = vld [vmem:[#allocation2 + $0x24] sm:$0xf]
    %v6957 = vld [vmem:[#allocation2 + $0x28] sm:$0xf]
    %v6958 = vld [vmem:[#allocation2 + $0x2c] sm:$0xf]
    %v6959 = vld [vmem:[#allocation2 + $0x30] sm:$0xf]
    %v6960 = vld [vmem:[#allocation2 + $0x34] sm:$0xf]
    %v6961 = vld [vmem:[#allocation2 + $0x38] sm:$0xf]
    %v6962 = vld [vmem:[#allocation2 + $0x3c] sm:$0xf]
    %v6963 = vld [vmem:[#allocation13] sm:$0xf]
    %v6964 = vld [vmem:[#allocation13 + $0x4] sm:$0xf]
    %v6965 = vld [vmem:[#allocation13 + $0x8] sm:$0xf]
    %v6966 = vld [vmem:[#allocation13 + $0xc] sm:$0xf]
    %v6967 = vld [vmem:[#allocation13 + $0x10] sm:$0xf]
    %v6968 = vld [vmem:[#allocation13 + $0x14] sm:$0xf]
    %v6969 = vld [vmem:[#allocation13 + $0x18] sm:$0xf]
    %v6970 = vld [vmem:[#allocation13 + $0x1c] sm:$0xf]
    %v6971 = vld [vmem:[#allocation13 + $0x20] sm:$0xf]
    %v6972 = vld [vmem:[#allocation13 + $0x24] sm:$0xf]
    %v6973 = vld [vmem:[#allocation13 + $0x28] sm:$0xf]
    %v6974 = vld [vmem:[#allocation13 + $0x2c] sm:$0xf]
    %v6975 = vld [vmem:[#allocation13 + $0x30] sm:$0xf]
    %v6976 = vld [vmem:[#allocation13 + $0x34] sm:$0xf]
    %v6977 = vld [vmem:[#allocation13 + $0x38] sm:$0xf]
    %v6978 = vld [vmem:[#allocation13 + $0x3c] sm:$0xf]
    %v6979 = vld [vmem:[%s7] sm:$0x1]
    %v6981 = vperm.slane %v6979, 0
    %v6999 = vunpack.c.l.b16 %v6947
    %v7000 = vunpack.c.l.b16 %v6948
    %v7001 = vunpack.c.l.b16 %v6949
    %v7002 = vunpack.c.l.b16 %v6950
    %v7003 = vunpack.c.l.b16 %v6951
    %v7004 = vunpack.c.l.b16 %v6952
    %v7005 = vunpack.c.l.b16 %v6953
    %v7006 = vunpack.c.l.b16 %v6954
    %v7007 = vunpack.c.l.b16 %v6955
    %v7008 = vunpack.c.l.b16 %v6956
    %v7009 = vunpack.c.l.b16 %v6957
    %v7010 = vunpack.c.l.b16 %v6958
    %v7011 = vunpack.c.l.b16 %v6959
    %v7012 = vunpack.c.l.b16 %v6960
    %v7013 = vunpack.c.l.b16 %v6961
    %v7014 = vunpack.c.l.b16 %v6962
    %v7015 = vpack.c.b16 %v7000, %v6999
    %v7016 = vpack.c.b16 %v7002, %v7001
    %v7017 = vpack.c.b16 %v7004, %v7003
    %v7018 = vpack.c.b16 %v7006, %v7005
    %v7019 = vpack.c.b16 %v7008, %v7007
    %v7020 = vpack.c.b16 %v7010, %v7009
    %v7021 = vpack.c.b16 %v7012, %v7011
    %v7022 = vpack.c.b16 %v7014, %v7013
    %v7047 = vunpack.c.l.b16 %v6963
    %v7048 = vunpack.c.l.b16 %v6964
    %v7049 = vunpack.c.l.b16 %v6965
    %v7050 = vunpack.c.l.b16 %v6966
    %v7051 = vunpack.c.l.b16 %v6967
    %v7052 = vunpack.c.l.b16 %v6968
    %v7053 = vunpack.c.l.b16 %v6969
    %v7054 = vunpack.c.l.b16 %v6970
    %v7055 = vunpack.c.l.b16 %v6971
    %v7056 = vunpack.c.l.b16 %v6972
    %v7057 = vunpack.c.l.b16 %v6973
    %v7058 = vunpack.c.l.b16 %v6974
    %v7059 = vunpack.c.l.b16 %v6975
    %v7060 = vunpack.c.l.b16 %v6976
    %v7061 = vunpack.c.l.b16 %v6977
    %v7062 = vunpack.c.l.b16 %v6978
    %v7063 = vpack.c.b16 %v7048, %v7047
    %v7064 = vpack.c.b16 %v7050, %v7049
    %v7065 = vpack.c.b16 %v7052, %v7051
    %v7066 = vpack.c.b16 %v7054, %v7053
    %v7067 = vpack.c.b16 %v7056, %v7055
    %v7068 = vpack.c.b16 %v7058, %v7057
    %v7069 = vpack.c.b16 %v7060, %v7059
    %v7070 = vpack.c.b16 %v7062, %v7061
    %7079 = vmatpush.bf16.msra.mxu0 %v7070
    %7080 = vmatpush.bf16.msra.mxu0 %v7069
    %7081 = vmatpush.bf16.msra.mxu0 %v7068
    %7082 = vmatpush.bf16.msra.mxu0 %v7067
    %7083 = vmatpush.bf16.msra.mxu0 %v7066
    %7084 = vmatpush.bf16.msra.mxu0 %v7065
    %7085 = vmatpush.bf16.msra.mxu0 %v7064
    %7086 = vmatpush.bf16.msra.mxu0 %v7063
    %7087 = vmatmul.bf16.gmra.mxu0 %v7015
    %v7088 = vpop.f32.mrf.mxu0
    %v7089 = vadd.f32 %v6981, %v7088
    %v7090 = vpop.f32.mrf.mxu0
    %v7091 = vadd.f32 %v6981, %v7090
    %7092 = vmatmul.bf16.gmra.mxu0 %v7016
    %v7093 = vpop.f32.mrf.mxu0
    %v7094 = vadd.f32 %v6981, %v7093
    %v7095 = vpop.f32.mrf.mxu0
    %v7096 = vadd.f32 %v6981, %v7095
    %7097 = vmatmul.bf16.gmra.mxu0 %v7017
    %v7098 = vpop.f32.mrf.mxu0
    %v7099 = vadd.f32 %v6981, %v7098
    %v7100 = vpop.f32.mrf.mxu0
    %v7101 = vadd.f32 %v6981, %v7100
    %7102 = vmatmul.bf16.gmra.mxu0 %v7018
    %v7103 = vpop.f32.mrf.mxu0
    %v7104 = vadd.f32 %v6981, %v7103
    %v7105 = vpop.f32.mrf.mxu0
    %v7106 = vadd.f32 %v6981, %v7105
    %7107 = vmatmul.bf16.gmra.mxu0 %v7019
    %v7108 = vpop.f32.mrf.mxu0
    %v7109 = vadd.f32 %v6981, %v7108
    %v7110 = vpop.f32.mrf.mxu0
    %v7111 = vadd.f32 %v6981, %v7110
    %7112 = vmatmul.bf16.gmra.mxu0 %v7020
    %v7113 = vpop.f32.mrf.mxu0
    %v7114 = vadd.f32 %v6981, %v7113
    %v7115 = vpop.f32.mrf.mxu0
    %v7116 = vadd.f32 %v6981, %v7115
    %7117 = vmatmul.bf16.gmra.mxu0 %v7021
    %v7118 = vpop.f32.mrf.mxu0
    %v7119 = vadd.f32 %v6981, %v7118
    %v7120 = vpop.f32.mrf.mxu0
    %v7121 = vadd.f32 %v6981, %v7120
    %7122 = vmatmul.bf16.gmra.mxu0 %v7022
    %v7123 = vpop.f32.mrf.mxu0
    %v7124 = vadd.f32 %v6981, %v7123
    %v7125 = vpop.f32.mrf.mxu0
    %v7126 = vadd.f32 %v6981, %v7125
    %7127 = vdwg.mxu0
    %7128 = vst [vmem:[#allocation15] sm:$0xff] %v7089
    %7129 = vst [vmem:[#allocation15 + $0x8] sm:$0xff] %v7091
    %7130 = vst [vmem:[#allocation15 + $0x10] sm:$0xff] %v7094
    %7131 = vst [vmem:[#allocation15 + $0x18] sm:$0xff] %v7096
    %7132 = vst [vmem:[#allocation15 + $0x20] sm:$0xff] %v7099
    %7133 = vst [vmem:[#allocation15 + $0x28] sm:$0xff] %v7101
    %7134 = vst [vmem:[#allocation15 + $0x30] sm:$0xff] %v7104
    %7135 = vst [vmem:[#allocation15 + $0x38] sm:$0xff] %v7106
    %7136 = vst [vmem:[#allocation15 + $0x40] sm:$0xff] %v7109
    %7137 = vst [vmem:[#allocation15 + $0x48] sm:$0xff] %v7111
    %7138 = vst [vmem:[#allocation15 + $0x50] sm:$0xff] %v7114
    %7139 = vst [vmem:[#allocation15 + $0x58] sm:$0xff] %v7116
    %7140 = vst [vmem:[#allocation15 + $0x60] sm:$0xff] %v7119
    %7141 = vst [vmem:[#allocation15 + $0x68] sm:$0xff] %v7121
    %7142 = vst [vmem:[#allocation15 + $0x70] sm:$0xff] %v7124
    %7143 = vst [vmem:[#allocation15 + $0x78] sm:$0xff] %v7126
    // Predicated region
    $region58: #{tpu_custom_call.1} parent=1 // pred_check
      _
    $region59: #{tpu_custom_call.1} parent=1 // pred_check_branch
      %7145 = sbr.rel (0) target = $region61
    $region60: #{tpu_custom_call.1} parent=1 // pred_region
      %7147 = vsyncadd [#allocation6], 0
      %s7148 = sshll.u32 [#allocation15], 4
      %s7149 = int_to_ptr.vmem [resolvable:$true] %s7148
      %s7150 = sshll.u32 %s8, 4
      %s7151 = int_to_ptr.hbm [resolvable:$true] %s7150
      %7156 = dma.vmem_to_hbm [thread:$0]  %s7149, 2048, %s7151, [#allocation6], 128, 128, 8
    $region61: #{tpu_custom_call.1} parent=1 // pred_fallthru
      _
    // Predicated region
    $region62: #{tpu_custom_call.1} parent=1 // pred_check
      _
    $region63: #{tpu_custom_call.1} parent=1 // pred_check_branch
      %7158 = sbr.rel (0) target = $region65
    $region64: #{tpu_custom_call.1} parent=1 // pred_region
      %7160 = vsyncadd [#allocation17], 0
      %s7161 = sshll.u32 [#allocation16], 4
      %s7162 = int_to_ptr.vmem [resolvable:$true] %s7161
      %s7163 = sshll.u32 %s9, 4
      %s7164 = int_to_ptr.hbm [resolvable:$true] %s7163
      %7169 = dma.vmem_to_hbm [thread:$0]  %s7162, 512, %s7164, [#allocation17], 128, 128, 8
    $region65: #{tpu_custom_call.1} parent=1 // pred_fallthru
      _
    // Predicated region
    $region66: #{tpu_custom_call.1} parent=1 // pred_check
      _
    $region67: #{tpu_custom_call.1} parent=1 // pred_check_branch
      %7171 = sbr.rel (0) target = $region69
    $region68: #{tpu_custom_call.1} parent=1 // pred_region
      %7173 = dma.done [#allocation6], 2048
    $region69: #{tpu_custom_call.1} parent=1 // pred_fallthru
      _
    // Predicated region
    $region70: #{tpu_custom_call.1} parent=1 // pred_check
      _
    $region71: #{tpu_custom_call.1} parent=1 // pred_check_branch
      %7175 = sbr.rel (0) target = $region73
    $region72: #{tpu_custom_call.1} parent=1 // pred_region
      %7177 = dma.done [#allocation17], 512
    $region73: #{tpu_custom_call.1} parent=1 // pred_fallthru
      _
    %7178 = vsyncpa [#allocation5], 1
    %7179 = vsyncpa [#allocation8], 1
    %7180 = vsyncpa [#allocation11], 1
    %7181 = vsyncpa [#allocation14], 1
    %7182 = vsyncpa [#allocation6], 1
    %7183 = vsyncpa [#allocation17], 1

</llo_original>
